<compile_context>
chip_gen: v7x
topology: tpu7x:2x2x1
jax: 0.10.0
libtpu: 0.0.40
codegen_flags: <defaults>
</compile_context>

<pallas_src>
import jax
import jax.numpy as jnp
from jax import lax
from jax.experimental import pallas as pl
from jax.experimental.pallas import tpu as pltpu

_CHUNK = 128  # rows per inner chunk == lanes per output row


def _mlp_kernel(x_ref,
                w1_ref, b1_ref,
                w2_ref, b2_ref,
                w3_ref, b3_ref,
                w4_ref, b4_ref,
                w5_ref, b5_ref,
                o_ref):
    """One batch tile (TM rows) of the 5-layer MLP, in 128-row chunks."""
    n_chunks = o_ref.shape[0]   # TM // 128 (static)
    chunk = o_ref.shape[1]      # 128

    def chunk_body(i, carry):
        row0 = pl.multiple_of(i * chunk, chunk)
        h = x_ref[pl.ds(row0, chunk), :].astype(jnp.bfloat16)

        # fc1..fc4: MXU bf16 matmul with f32 accumulation; bias + ReLU on VPU.
        h = jnp.dot(h, w1_ref[...], preferred_element_type=jnp.float32)
        h = jnp.maximum(h + b1_ref[...], 0.0)
        h = jnp.dot(h.astype(jnp.bfloat16), w2_ref[...],
                    preferred_element_type=jnp.float32)
        h = jnp.maximum(h + b2_ref[...], 0.0)
        h = jnp.dot(h.astype(jnp.bfloat16), w3_ref[...],
                    preferred_element_type=jnp.float32)
        h = jnp.maximum(h + b3_ref[...], 0.0)
        h = jnp.dot(h.astype(jnp.bfloat16), w4_ref[...],
                    preferred_element_type=jnp.float32)
        h = jnp.maximum(h + b4_ref[...], 0.0)

        # fc5 (16 -> 1): contract w5's 16-dim against h's 16-dim so the result
        # is a lane-dense (1, chunk) row for this group of 128 batch rows.
        out_row = lax.dot_general(
            w5_ref[...], h.astype(jnp.bfloat16),
            (((1,), (1,)), ((), ())),
            preferred_element_type=jnp.float32) + b5_ref[...]
        o_ref[pl.ds(i, 1), :] = out_row.astype(o_ref.dtype)
        return carry

    lax.fori_loop(0, n_chunks, chunk_body, 0, unroll=True)


def mlp_regressor_complex(x, params, *, tm=1024):
    """Forward pass of MLPRegressorComplex via a single batch-tiled pallas_call.

    x: (batch, input_dim) float32 (bf16 also accepted)
    params: dict with 'wK' of shape (in, out) and 'bK' of shape (1, out), K in 1..5.
    Returns: (batch, 1) float32
    """
    batch, input_dim = x.shape

    # ---- tile-size selection -------------------------------------------------
    # Pad batch to a multiple of 128 (lane-dense output groups 128 rows per
    # output row). Big tiles amortize the ~0.35us/step pipeline overhead; cap
    # the tile at half the work so the grid stays >= 2 for v7x megacore.
    padded_min = pl.cdiv(batch, _CHUNK) * _CHUNK
    tm = max(_CHUNK, (min(tm, padded_min) // _CHUNK) * _CHUNK)
    if padded_min >= 2 * _CHUNK:
        half = max(_CHUNK, ((padded_min // 2) // _CHUNK) * _CHUNK)
        tm = min(tm, half)
    padded = pl.cdiv(padded_min, tm) * tm
    n_tiles = padded // tm
    n_chunks = tm // _CHUNK

    if padded != batch:
        x = jnp.pad(x, ((0, padded - batch), (0, 0)))

    # ---- one-time parameter prep ----------------------------------------------
    w1 = params["w1"].astype(jnp.bfloat16)
    w2 = params["w2"].astype(jnp.bfloat16)
    w3 = params["w3"].astype(jnp.bfloat16)
    w4 = params["w4"].astype(jnp.bfloat16)
    w5 = params["w5"].reshape(1, -1).astype(jnp.bfloat16)      # (1, 16)
    b1 = params["b1"].astype(jnp.float32)
    b2 = params["b2"].astype(jnp.float32)
    b3 = params["b3"].astype(jnp.float32)
    b4 = params["b4"].astype(jnp.float32)
    b5 = params["b5"].astype(jnp.float32)                      # (1, 1)

    def resident_spec(shape):
        # Full-array block, same block every grid step -> VMEM-resident,
        # DMAed once. (No late-binding closure over a loop variable.)
        return pl.BlockSpec(shape, lambda i: (0, 0))

    in_specs = [
        pl.BlockSpec((tm, input_dim), lambda i: (i, 0)),        # x: batch-tiled
        resident_spec(w1.shape), resident_spec(b1.shape),
        resident_spec(w2.shape), resident_spec(b2.shape),
        resident_spec(w3.shape), resident_spec(b3.shape),
        resident_spec(w4.shape), resident_spec(b4.shape),
        resident_spec(w5.shape), resident_spec(b5.shape),
    ]
    # Lane-dense output: (n_tiles, TM/128, 128); trailing block dims == array dims.
    out_spec = pl.BlockSpec((None, n_chunks, _CHUNK), lambda i: (i, 0, 0))

    # Cost estimate from the actual parameter shapes (advisory only).
    layer_flops = sum(2 * params[f"w{k}"].shape[0] * params[f"w{k}"].shape[1]
                      for k in range(1, 6))
    param_bytes = sum(int(a.size) * a.dtype.itemsize
                      for a in (w1, w2, w3, w4, w5, b1, b2, b3, b4, b5))
    bytes_accessed = (padded * input_dim * x.dtype.itemsize
                      + padded * 4 + param_bytes)

    out = pl.pallas_call(
        _mlp_kernel,
        out_shape=jax.ShapeDtypeStruct((n_tiles, n_chunks, _CHUNK), jnp.float32),
        grid=(n_tiles,),
        in_specs=in_specs,
        out_specs=out_spec,
        compiler_params=pltpu.CompilerParams(
            dimension_semantics=("parallel",)),
        cost_estimate=pl.CostEstimate(
            flops=int(layer_flops) * int(padded),
            transcendentals=0,
            bytes_accessed=int(bytes_accessed)),
    )(x, w1, b1, w2, b2, w3, b3, w4, b4, w5, b5)

    # (n_tiles, TM/128, 128) row-major == batch order; back to (batch, 1).
    return out.reshape(padded, 1)[:batch]


def init_params(key, input_dim):
    """Deterministic parameter init matching nn.Linear shapes.

    PyTorch stores W as (out, in); we store the transpose (in, out) so the
    kernel can do x @ W directly. Init mimics Kaiming-uniform-ish bounds.
    """
    dims = [input_dim, 128, 64, 32, 16, 1]
    params = {}
    for i in range(5):
        fan_in, fan_out = dims[i], dims[i + 1]
        key, kw, kb = jax.random.split(key, 3)
        bound = 1.0 / jnp.sqrt(fan_in)
        params[f"w{i + 1}"] = jax.random.uniform(
            kw, (fan_in, fan_out), jnp.float32, -bound, bound)
        params[f"b{i + 1}"] = jax.random.uniform(
            kb, (1, fan_out), jnp.float32, -bound, bound)
    return params


def _reference_forward(x, params):
    """Reference mirroring the kernel's precision (bf16 matmuls, f32 accum)."""
    h = x
    for i in range(1, 5):
        w = params[f"w{i}"].astype(jnp.bfloat16)
        h = jnp.dot(h.astype(jnp.bfloat16), w,
                    preferred_element_type=jnp.float32)
        h = jnp.maximum(h + params[f"b{i}"], 0.0)
    w5 = params["w5"].astype(jnp.bfloat16)
    out = jnp.dot(h.astype(jnp.bfloat16), w5,
                  preferred_element_type=jnp.float32)
    return out + params["b5"]


if __name__ == "__main__":
    key = jax.random.PRNGKey(0)
    key, kx = jax.random.split(key)

    input_dim = 32
    params = init_params(key, input_dim)

    # Default-tile path: batch=2048 -> tm=1024, grid=(2,), 8 unrolled chunks/tile.
    x_big = jax.random.normal(kx, (2048, input_dim), jnp.float32)
    out_big = jax.block_until_ready(mlp_regressor_complex(x_big, params))
    ref_big = _reference_forward(x_big, params)
    assert out_big.shape == (2048, 1), out_big.shape
    assert jnp.allclose(out_big, ref_big, atol=2e-3, rtol=2e-3), (
        float(jnp.max(jnp.abs(out_big - ref_big))))

    # Moderate batch: tm clamps to 256 so the grid stays at 2 (v7x megacore).
    key, km = jax.random.split(key)
    x_mid = jax.random.normal(km, (512, input_dim), jnp.float32)
    out_mid = jax.block_until_ready(mlp_regressor_complex(x_mid, params))
    ref_mid = _reference_forward(x_mid, params)
    assert out_mid.shape == (512, 1), out_mid.shape
    assert jnp.allclose(out_mid, ref_mid, atol=2e-3, rtol=2e-3), (
        float(jnp.max(jnp.abs(out_mid - ref_mid))))

    # Small ragged batch exercises the pad-to-128 path (12 -> 128 rows, grid=(1,)).
    key, ks = jax.random.split(key)
    x_small = jax.random.normal(ks, (12, input_dim), jnp.float32)
    out_small = jax.block_until_ready(mlp_regressor_complex(x_small, params))
    ref_small = _reference_forward(x_small, params)
    assert out_small.shape == (12, 1), out_small.shape
    assert jnp.allclose(out_small, ref_small, atol=2e-3, rtol=2e-3), (
        float(jnp.max(jnp.abs(out_small - ref_small))))

    print("KERNEL_OK")
</pallas_src>

<mosaic_0001>
module attributes {stable_mosaic.version = 11 : i64} {
  func.func @_mlp_kernel(%arg0: i32, %arg1: memref<1024x32xf32, #tpu.memory_space<vmem>>, %arg2: memref<32x128xbf16, #tpu.memory_space<vmem>>, %arg3: memref<1x128xf32, #tpu.memory_space<vmem>>, %arg4: memref<128x64xbf16, #tpu.memory_space<vmem>>, %arg5: memref<1x64xf32, #tpu.memory_space<vmem>>, %arg6: memref<64x32xbf16, #tpu.memory_space<vmem>>, %arg7: memref<1x32xf32, #tpu.memory_space<vmem>>, %arg8: memref<32x16xbf16, #tpu.memory_space<vmem>>, %arg9: memref<1x16xf32, #tpu.memory_space<vmem>>, %arg10: memref<1x16xbf16, #tpu.memory_space<vmem>>, %arg11: memref<1x1xf32, #tpu.memory_space<vmem>>, %arg12: memref<1x8x128xf32, #tpu.memory_space<vmem>>) attributes {dimension_semantics = [#tpu.dimension_semantics<parallel>], iteration_bounds = array<i64: 2>, scalar_prefetch = 0 : i64, scratch_operands = 0 : i64, tpu.core_type = #tpu.core_type<tc>, window_params = [{transform_indices = @transform_0, window_bounds = array<i64: 1024, 32>}, {pipeline_mode = #tpu.pipeline_mode<synchronous>, transform_indices = @transform_1, window_bounds = array<i64: 32, 128>}, {pipeline_mode = #tpu.pipeline_mode<synchronous>, transform_indices = @transform_2, window_bounds = array<i64: 1, 128>}, {pipeline_mode = #tpu.pipeline_mode<synchronous>, transform_indices = @transform_3, window_bounds = array<i64: 128, 64>}, {pipeline_mode = #tpu.pipeline_mode<synchronous>, transform_indices = @transform_4, window_bounds = array<i64: 1, 64>}, {pipeline_mode = #tpu.pipeline_mode<synchronous>, transform_indices = @transform_5, window_bounds = array<i64: 64, 32>}, {pipeline_mode = #tpu.pipeline_mode<synchronous>, transform_indices = @transform_6, window_bounds = array<i64: 1, 32>}, {pipeline_mode = #tpu.pipeline_mode<synchronous>, transform_indices = @transform_7, window_bounds = array<i64: 32, 16>}, {pipeline_mode = #tpu.pipeline_mode<synchronous>, transform_indices = @transform_8, window_bounds = array<i64: 1, 16>}, {pipeline_mode = #tpu.pipeline_mode<synchronous>, transform_indices = @transform_9, window_bounds = array<i64: 1, 16>}, {pipeline_mode = #tpu.pipeline_mode<synchronous>, transform_indices = @transform_10, window_bounds = array<i64: 1, 1>}, {transform_indices = @transform_11, window_bounds = array<i64: 1, 8, 128>}]} {
    %c0_i32 = arith.constant 0 : i32
    %c128_i32 = arith.constant 128 : i32
    %0 = arith.muli %c0_i32, %c128_i32 : i32
    %1 = tpu.assume_multiple %0, 128 : i32
    %2 = arith.index_cast %1 : i32 to index
    %c0 = arith.constant 0 : index
    %3 = vector.load %arg1[%2, %c0] : memref<1024x32xf32, #tpu.memory_space<vmem>>, vector<128x32xf32>
    %4 = arith.truncf %3 : vector<128x32xf32> to vector<128x32xbf16>
    %c0_0 = arith.constant 0 : index
    %c0_1 = arith.constant 0 : index
    %5 = vector.load %arg2[%c0_0, %c0_1] : memref<32x128xbf16, #tpu.memory_space<vmem>>, vector<32x128xbf16>
    %cst = arith.constant dense<0.000000e+00> : vector<128x128xf32>
    %6 = tpu.matmul %4, %5, %cst {dimension_numbers = #tpu.dot_dimension_numbers<[1], [0], [0], [1], [0, 0, 1, 1], [], []>} : vector<128x32xbf16>, vector<32x128xbf16>, vector<128x128xf32> -> vector<128x128xf32>
    %c0_2 = arith.constant 0 : index
    %c0_3 = arith.constant 0 : index
    %7 = vector.load %arg3[%c0_2, %c0_3] : memref<1x128xf32, #tpu.memory_space<vmem>>, vector<1x128xf32>
    %8 = vector.broadcast %7 : vector<1x128xf32> to vector<128x128xf32>
    %9 = arith.addf %6, %8 : vector<128x128xf32>
    %cst_4 = arith.constant 0.000000e+00 : f32
    %10 = vector.broadcast %cst_4 : f32 to vector<128x128xf32>
    %11 = arith.maximumf %9, %10 : vector<128x128xf32>
    %12 = arith.truncf %11 : vector<128x128xf32> to vector<128x128xbf16>
    %c0_5 = arith.constant 0 : index
    %c0_6 = arith.constant 0 : index
    %13 = vector.load %arg4[%c0_5, %c0_6] : memref<128x64xbf16, #tpu.memory_space<vmem>>, vector<128x64xbf16>
    %cst_7 = arith.constant dense<0.000000e+00> : vector<128x64xf32>
    %14 = tpu.matmul %12, %13, %cst_7 {dimension_numbers = #tpu.dot_dimension_numbers<[1], [0], [0], [1], [0, 0, 1, 1], [], []>} : vector<128x128xbf16>, vector<128x64xbf16>, vector<128x64xf32> -> vector<128x64xf32>
    %c0_8 = arith.constant 0 : index
    %c0_9 = arith.constant 0 : index
    %15 = vector.load %arg5[%c0_8, %c0_9] : memref<1x64xf32, #tpu.memory_space<vmem>>, vector<1x64xf32>
    %16 = vector.broadcast %15 : vector<1x64xf32> to vector<128x64xf32>
    %17 = arith.addf %14, %16 : vector<128x64xf32>
    %cst_10 = arith.constant 0.000000e+00 : f32
    %18 = vector.broadcast %cst_10 : f32 to vector<128x64xf32>
    %19 = arith.maximumf %17, %18 : vector<128x64xf32>
    %20 = arith.truncf %19 : vector<128x64xf32> to vector<128x64xbf16>
    %c0_11 = arith.constant 0 : index
    %c0_12 = arith.constant 0 : index
    %21 = vector.load %arg6[%c0_11, %c0_12] : memref<64x32xbf16, #tpu.memory_space<vmem>>, vector<64x32xbf16>
    %cst_13 = arith.constant dense<0.000000e+00> : vector<128x32xf32>
    %22 = tpu.matmul %20, %21, %cst_13 {dimension_numbers = #tpu.dot_dimension_numbers<[1], [0], [0], [1], [0, 0, 1, 1], [], []>} : vector<128x64xbf16>, vector<64x32xbf16>, vector<128x32xf32> -> vector<128x32xf32>
    %c0_14 = arith.constant 0 : index
    %c0_15 = arith.constant 0 : index
    %23 = vector.load %arg7[%c0_14, %c0_15] : memref<1x32xf32, #tpu.memory_space<vmem>>, vector<1x32xf32>
    %24 = vector.broadcast %23 : vector<1x32xf32> to vector<128x32xf32>
    %25 = arith.addf %22, %24 : vector<128x32xf32>
    %cst_16 = arith.constant 0.000000e+00 : f32
    %26 = vector.broadcast %cst_16 : f32 to vector<128x32xf32>
    %27 = arith.maximumf %25, %26 : vector<128x32xf32>
    %28 = arith.truncf %27 : vector<128x32xf32> to vector<128x32xbf16>
    %c0_17 = arith.constant 0 : index
    %c0_18 = arith.constant 0 : index
    %29 = vector.load %arg8[%c0_17, %c0_18] : memref<32x16xbf16, #tpu.memory_space<vmem>>, vector<32x16xbf16>
    %cst_19 = arith.constant dense<0.000000e+00> : vector<128x16xf32>
    %30 = tpu.matmul %28, %29, %cst_19 {dimension_numbers = #tpu.dot_dimension_numbers<[1], [0], [0], [1], [0, 0, 1, 1], [], []>} : vector<128x32xbf16>, vector<32x16xbf16>, vector<128x16xf32> -> vector<128x16xf32>
    %c0_20 = arith.constant 0 : index
    %c0_21 = arith.constant 0 : index
    %31 = vector.load %arg9[%c0_20, %c0_21] : memref<1x16xf32, #tpu.memory_space<vmem>>, vector<1x16xf32>
    %32 = vector.broadcast %31 : vector<1x16xf32> to vector<128x16xf32>
    %33 = arith.addf %30, %32 : vector<128x16xf32>
    %cst_22 = arith.constant 0.000000e+00 : f32
    %34 = vector.broadcast %cst_22 : f32 to vector<128x16xf32>
    %35 = arith.maximumf %33, %34 : vector<128x16xf32>
    %c0_23 = arith.constant 0 : index
    %c0_24 = arith.constant 0 : index
    %36 = vector.load %arg10[%c0_23, %c0_24] : memref<1x16xbf16, #tpu.memory_space<vmem>>, vector<1x16xbf16>
    %37 = arith.truncf %35 : vector<128x16xf32> to vector<128x16xbf16>
    %cst_25 = arith.constant dense<0.000000e+00> : vector<1x128xf32>
    %38 = tpu.matmul %36, %37, %cst_25 {dimension_numbers = #tpu.dot_dimension_numbers<[1], [1], [0], [0], [0, 0, 1, 0], [], []>} : vector<1x16xbf16>, vector<128x16xbf16>, vector<1x128xf32> -> vector<1x128xf32>
    %c0_26 = arith.constant 0 : index
    %c0_27 = arith.constant 0 : index
    %39 = vector.load %arg11[%c0_26, %c0_27] : memref<1x1xf32, #tpu.memory_space<vmem>>, vector<1x1xf32>
    %40 = vector.broadcast %39 : vector<1x1xf32> to vector<1x128xf32>
    %41 = arith.addf %38, %40 : vector<1x128xf32>
    %c0_28 = arith.constant 0 : index
    %42 = arith.index_cast %c0_i32 : i32 to index
    %c0_29 = arith.constant 0 : index
    %43 = vector.load %arg12[%c0_28, %42, %c0_29] : memref<1x8x128xf32, #tpu.memory_space<vmem>>, vector<1x1x128xf32>
    %44 = vector.shape_cast %43 : vector<1x1x128xf32> to vector<1x128xf32>
    %45 = vector.shape_cast %41 : vector<1x128xf32> to vector<1x1x128xf32>
    tpu.vector_store %arg12[%c0_28, %42, %c0_29], %45 {strides = array<i32>} : memref<1x8x128xf32, #tpu.memory_space<vmem>>, vector<1x1x128xf32>,
    %c1_i32 = arith.constant 1 : i32
    %c128_i32_30 = arith.constant 128 : i32
    %46 = arith.muli %c1_i32, %c128_i32_30 : i32
    %47 = tpu.assume_multiple %46, 128 : i32
    %48 = arith.index_cast %47 : i32 to index
    %c0_31 = arith.constant 0 : index
    %49 = vector.load %arg1[%48, %c0_31] : memref<1024x32xf32, #tpu.memory_space<vmem>>, vector<128x32xf32>
    %50 = arith.truncf %49 : vector<128x32xf32> to vector<128x32xbf16>
    %c0_32 = arith.constant 0 : index
    %c0_33 = arith.constant 0 : index
    %51 = vector.load %arg2[%c0_32, %c0_33] : memref<32x128xbf16, #tpu.memory_space<vmem>>, vector<32x128xbf16>
    %cst_34 = arith.constant dense<0.000000e+00> : vector<128x128xf32>
    %52 = tpu.matmul %50, %51, %cst_34 {dimension_numbers = #tpu.dot_dimension_numbers<[1], [0], [0], [1], [0, 0, 1, 1], [], []>} : vector<128x32xbf16>, vector<32x128xbf16>, vector<128x128xf32> -> vector<128x128xf32>
    %c0_35 = arith.constant 0 : index
    %c0_36 = arith.constant 0 : index
    %53 = vector.load %arg3[%c0_35, %c0_36] : memref<1x128xf32, #tpu.memory_space<vmem>>, vector<1x128xf32>
    %54 = vector.broadcast %53 : vector<1x128xf32> to vector<128x128xf32>
    %55 = arith.addf %52, %54 : vector<128x128xf32>
    %cst_37 = arith.constant 0.000000e+00 : f32
    %56 = vector.broadcast %cst_37 : f32 to vector<128x128xf32>
    %57 = arith.maximumf %55, %56 : vector<128x128xf32>
    %58 = arith.truncf %57 : vector<128x128xf32> to vector<128x128xbf16>
    %c0_38 = arith.constant 0 : index
    %c0_39 = arith.constant 0 : index
    %59 = vector.load %arg4[%c0_38, %c0_39] : memref<128x64xbf16, #tpu.memory_space<vmem>>, vector<128x64xbf16>
    %cst_40 = arith.constant dense<0.000000e+00> : vector<128x64xf32>
    %60 = tpu.matmul %58, %59, %cst_40 {dimension_numbers = #tpu.dot_dimension_numbers<[1], [0], [0], [1], [0, 0, 1, 1], [], []>} : vector<128x128xbf16>, vector<128x64xbf16>, vector<128x64xf32> -> vector<128x64xf32>
    %c0_41 = arith.constant 0 : index
    %c0_42 = arith.constant 0 : index
    %61 = vector.load %arg5[%c0_41, %c0_42] : memref<1x64xf32, #tpu.memory_space<vmem>>, vector<1x64xf32>
    %62 = vector.broadcast %61 : vector<1x64xf32> to vector<128x64xf32>
    %63 = arith.addf %60, %62 : vector<128x64xf32>
    %cst_43 = arith.constant 0.000000e+00 : f32
    %64 = vector.broadcast %cst_43 : f32 to vector<128x64xf32>
    %65 = arith.maximumf %63, %64 : vector<128x64xf32>
    %66 = arith.truncf %65 : vector<128x64xf32> to vector<128x64xbf16>
    %c0_44 = arith.constant 0 : index
    %c0_45 = arith.constant 0 : index
    %67 = vector.load %arg6[%c0_44, %c0_45] : memref<64x32xbf16, #tpu.memory_space<vmem>>, vector<64x32xbf16>
    %cst_46 = arith.constant dense<0.000000e+00> : vector<128x32xf32>
    %68 = tpu.matmul %66, %67, %cst_46 {dimension_numbers = #tpu.dot_dimension_numbers<[1], [0], [0], [1], [0, 0, 1, 1], [], []>} : vector<128x64xbf16>, vector<64x32xbf16>, vector<128x32xf32> -> vector<128x32xf32>
    %c0_47 = arith.constant 0 : index
    %c0_48 = arith.constant 0 : index
    %69 = vector.load %arg7[%c0_47, %c0_48] : memref<1x32xf32, #tpu.memory_space<vmem>>, vector<1x32xf32>
    %70 = vector.broadcast %69 : vector<1x32xf32> to vector<128x32xf32>
    %71 = arith.addf %68, %70 : vector<128x32xf32>
    %cst_49 = arith.constant 0.000000e+00 : f32
    %72 = vector.broadcast %cst_49 : f32 to vector<128x32xf32>
    %73 = arith.maximumf %71, %72 : vector<128x32xf32>
    %74 = arith.truncf %73 : vector<128x32xf32> to vector<128x32xbf16>
    %c0_50 = arith.constant 0 : index
    %c0_51 = arith.constant 0 : index
    %75 = vector.load %arg8[%c0_50, %c0_51] : memref<32x16xbf16, #tpu.memory_space<vmem>>, vector<32x16xbf16>
    %cst_52 = arith.constant dense<0.000000e+00> : vector<128x16xf32>
    %76 = tpu.matmul %74, %75, %cst_52 {dimension_numbers = #tpu.dot_dimension_numbers<[1], [0], [0], [1], [0, 0, 1, 1], [], []>} : vector<128x32xbf16>, vector<32x16xbf16>, vector<128x16xf32> -> vector<128x16xf32>
    %c0_53 = arith.constant 0 : index
    %c0_54 = arith.constant 0 : index
    %77 = vector.load %arg9[%c0_53, %c0_54] : memref<1x16xf32, #tpu.memory_space<vmem>>, vector<1x16xf32>
    %78 = vector.broadcast %77 : vector<1x16xf32> to vector<128x16xf32>
    %79 = arith.addf %76, %78 : vector<128x16xf32>
    %cst_55 = arith.constant 0.000000e+00 : f32
    %80 = vector.broadcast %cst_55 : f32 to vector<128x16xf32>
    %81 = arith.maximumf %79, %80 : vector<128x16xf32>
    %c0_56 = arith.constant 0 : index
    %c0_57 = arith.constant 0 : index
    %82 = vector.load %arg10[%c0_56, %c0_57] : memref<1x16xbf16, #tpu.memory_space<vmem>>, vector<1x16xbf16>
    %83 = arith.truncf %81 : vector<128x16xf32> to vector<128x16xbf16>
    %cst_58 = arith.constant dense<0.000000e+00> : vector<1x128xf32>
    %84 = tpu.matmul %82, %83, %cst_58 {dimension_numbers = #tpu.dot_dimension_numbers<[1], [1], [0], [0], [0, 0, 1, 0], [], []>} : vector<1x16xbf16>, vector<128x16xbf16>, vector<1x128xf32> -> vector<1x128xf32>
    %c0_59 = arith.constant 0 : index
    %c0_60 = arith.constant 0 : index
    %85 = vector.load %arg11[%c0_59, %c0_60] : memref<1x1xf32, #tpu.memory_space<vmem>>, vector<1x1xf32>
    %86 = vector.broadcast %85 : vector<1x1xf32> to vector<1x128xf32>
    %87 = arith.addf %84, %86 : vector<1x128xf32>
    %c0_61 = arith.constant 0 : index
    %88 = arith.index_cast %c1_i32 : i32 to index
    %c0_62 = arith.constant 0 : index
    %89 = vector.load %arg12[%c0_61, %88, %c0_62] : memref<1x8x128xf32, #tpu.memory_space<vmem>>, vector<1x1x128xf32>
    %90 = vector.shape_cast %89 : vector<1x1x128xf32> to vector<1x128xf32>
    %91 = vector.shape_cast %87 : vector<1x128xf32> to vector<1x1x128xf32>
    tpu.vector_store %arg12[%c0_61, %88, %c0_62], %91 {strides = array<i32>} : memref<1x8x128xf32, #tpu.memory_space<vmem>>, vector<1x1x128xf32>,
    %c2_i32 = arith.constant 2 : i32
    %c128_i32_63 = arith.constant 128 : i32
    %92 = arith.muli %c2_i32, %c128_i32_63 : i32
    %93 = tpu.assume_multiple %92, 128 : i32
    %94 = arith.index_cast %93 : i32 to index
    %c0_64 = arith.constant 0 : index
    %95 = vector.load %arg1[%94, %c0_64] : memref<1024x32xf32, #tpu.memory_space<vmem>>, vector<128x32xf32>
    %96 = arith.truncf %95 : vector<128x32xf32> to vector<128x32xbf16>
    %c0_65 = arith.constant 0 : index
    %c0_66 = arith.constant 0 : index
    %97 = vector.load %arg2[%c0_65, %c0_66] : memref<32x128xbf16, #tpu.memory_space<vmem>>, vector<32x128xbf16>
    %cst_67 = arith.constant dense<0.000000e+00> : vector<128x128xf32>
    %98 = tpu.matmul %96, %97, %cst_67 {dimension_numbers = #tpu.dot_dimension_numbers<[1], [0], [0], [1], [0, 0, 1, 1], [], []>} : vector<128x32xbf16>, vector<32x128xbf16>, vector<128x128xf32> -> vector<128x128xf32>
    %c0_68 = arith.constant 0 : index
    %c0_69 = arith.constant 0 : index
    %99 = vector.load %arg3[%c0_68, %c0_69] : memref<1x128xf32, #tpu.memory_space<vmem>>, vector<1x128xf32>
    %100 = vector.broadcast %99 : vector<1x128xf32> to vector<128x128xf32>
    %101 = arith.addf %98, %100 : vector<128x128xf32>
    %cst_70 = arith.constant 0.000000e+00 : f32
    %102 = vector.broadcast %cst_70 : f32 to vector<128x128xf32>
    %103 = arith.maximumf %101, %102 : vector<128x128xf32>
    %104 = arith.truncf %103 : vector<128x128xf32> to vector<128x128xbf16>
    %c0_71 = arith.constant 0 : index
    %c0_72 = arith.constant 0 : index
    %105 = vector.load %arg4[%c0_71, %c0_72] : memref<128x64xbf16, #tpu.memory_space<vmem>>, vector<128x64xbf16>
    %cst_73 = arith.constant dense<0.000000e+00> : vector<128x64xf32>
    %106 = tpu.matmul %104, %105, %cst_73 {dimension_numbers = #tpu.dot_dimension_numbers<[1], [0], [0], [1], [0, 0, 1, 1], [], []>} : vector<128x128xbf16>, vector<128x64xbf16>, vector<128x64xf32> -> vector<128x64xf32>
    %c0_74 = arith.constant 0 : index
    %c0_75 = arith.constant 0 : index
    %107 = vector.load %arg5[%c0_74, %c0_75] : memref<1x64xf32, #tpu.memory_space<vmem>>, vector<1x64xf32>
    %108 = vector.broadcast %107 : vector<1x64xf32> to vector<128x64xf32>
    %109 = arith.addf %106, %108 : vector<128x64xf32>
    %cst_76 = arith.constant 0.000000e+00 : f32
    %110 = vector.broadcast %cst_76 : f32 to vector<128x64xf32>
    %111 = arith.maximumf %109, %110 : vector<128x64xf32>
    %112 = arith.truncf %111 : vector<128x64xf32> to vector<128x64xbf16>
    %c0_77 = arith.constant 0 : index
    %c0_78 = arith.constant 0 : index
    %113 = vector.load %arg6[%c0_77, %c0_78] : memref<64x32xbf16, #tpu.memory_space<vmem>>, vector<64x32xbf16>
    %cst_79 = arith.constant dense<0.000000e+00> : vector<128x32xf32>
    %114 = tpu.matmul %112, %113, %cst_79 {dimension_numbers = #tpu.dot_dimension_numbers<[1], [0], [0], [1], [0, 0, 1, 1], [], []>} : vector<128x64xbf16>, vector<64x32xbf16>, vector<128x32xf32> -> vector<128x32xf32>
    %c0_80 = arith.constant 0 : index
    %c0_81 = arith.constant 0 : index
    %115 = vector.load %arg7[%c0_80, %c0_81] : memref<1x32xf32, #tpu.memory_space<vmem>>, vector<1x32xf32>
    %116 = vector.broadcast %115 : vector<1x32xf32> to vector<128x32xf32>
    %117 = arith.addf %114, %116 : vector<128x32xf32>
    %cst_82 = arith.constant 0.000000e+00 : f32
    %118 = vector.broadcast %cst_82 : f32 to vector<128x32xf32>
    %119 = arith.maximumf %117, %118 : vector<128x32xf32>
    %120 = arith.truncf %119 : vector<128x32xf32> to vector<128x32xbf16>
    %c0_83 = arith.constant 0 : index
    %c0_84 = arith.constant 0 : index
    %121 = vector.load %arg8[%c0_83, %c0_84] : memref<32x16xbf16, #tpu.memory_space<vmem>>, vector<32x16xbf16>
    %cst_85 = arith.constant dense<0.000000e+00> : vector<128x16xf32>
    %122 = tpu.matmul %120, %121, %cst_85 {dimension_numbers = #tpu.dot_dimension_numbers<[1], [0], [0], [1], [0, 0, 1, 1], [], []>} : vector<128x32xbf16>, vector<32x16xbf16>, vector<128x16xf32> -> vector<128x16xf32>
    %c0_86 = arith.constant 0 : index
    %c0_87 = arith.constant 0 : index
    %123 = vector.load %arg9[%c0_86, %c0_87] : memref<1x16xf32, #tpu.memory_space<vmem>>, vector<1x16xf32>
    %124 = vector.broadcast %123 : vector<1x16xf32> to vector<128x16xf32>
    %125 = arith.addf %122, %124 : vector<128x16xf32>
    %cst_88 = arith.constant 0.000000e+00 : f32
    %126 = vector.broadcast %cst_88 : f32 to vector<128x16xf32>
    %127 = arith.maximumf %125, %126 : vector<128x16xf32>
    %c0_89 = arith.constant 0 : index
    %c0_90 = arith.constant 0 : index
    %128 = vector.load %arg10[%c0_89, %c0_90] : memref<1x16xbf16, #tpu.memory_space<vmem>>, vector<1x16xbf16>
    %129 = arith.truncf %127 : vector<128x16xf32> to vector<128x16xbf16>
    %cst_91 = arith.constant dense<0.000000e+00> : vector<1x128xf32>
    %130 = tpu.matmul %128, %129, %cst_91 {dimension_numbers = #tpu.dot_dimension_numbers<[1], [1], [0], [0], [0, 0, 1, 0], [], []>} : vector<1x16xbf16>, vector<128x16xbf16>, vector<1x128xf32> -> vector<1x128xf32>
    %c0_92 = arith.constant 0 : index
    %c0_93 = arith.constant 0 : index
    %131 = vector.load %arg11[%c0_92, %c0_93] : memref<1x1xf32, #tpu.memory_space<vmem>>, vector<1x1xf32>
    %132 = vector.broadcast %131 : vector<1x1xf32> to vector<1x128xf32>
    %133 = arith.addf %130, %132 : vector<1x128xf32>
    %c0_94 = arith.constant 0 : index
    %134 = arith.index_cast %c2_i32 : i32 to index
    %c0_95 = arith.constant 0 : index
    %135 = vector.load %arg12[%c0_94, %134, %c0_95] : memref<1x8x128xf32, #tpu.memory_space<vmem>>, vector<1x1x128xf32>
    %136 = vector.shape_cast %135 : vector<1x1x128xf32> to vector<1x128xf32>
    %137 = vector.shape_cast %133 : vector<1x128xf32> to vector<1x1x128xf32>
    tpu.vector_store %arg12[%c0_94, %134, %c0_95], %137 {strides = array<i32>} : memref<1x8x128xf32, #tpu.memory_space<vmem>>, vector<1x1x128xf32>,
    %c3_i32 = arith.constant 3 : i32
    %c128_i32_96 = arith.constant 128 : i32
    %138 = arith.muli %c3_i32, %c128_i32_96 : i32
    %139 = tpu.assume_multiple %138, 128 : i32
    %140 = arith.index_cast %139 : i32 to index
    %c0_97 = arith.constant 0 : index
    %141 = vector.load %arg1[%140, %c0_97] : memref<1024x32xf32, #tpu.memory_space<vmem>>, vector<128x32xf32>
    %142 = arith.truncf %141 : vector<128x32xf32> to vector<128x32xbf16>
    %c0_98 = arith.constant 0 : index
    %c0_99 = arith.constant 0 : index
    %143 = vector.load %arg2[%c0_98, %c0_99] : memref<32x128xbf16, #tpu.memory_space<vmem>>, vector<32x128xbf16>
    %cst_100 = arith.constant dense<0.000000e+00> : vector<128x128xf32>
    %144 = tpu.matmul %142, %143, %cst_100 {dimension_numbers = #tpu.dot_dimension_numbers<[1], [0], [0], [1], [0, 0, 1, 1], [], []>} : vector<128x32xbf16>, vector<32x128xbf16>, vector<128x128xf32> -> vector<128x128xf32>
    %c0_101 = arith.constant 0 : index
    %c0_102 = arith.constant 0 : index
    %145 = vector.load %arg3[%c0_101, %c0_102] : memref<1x128xf32, #tpu.memory_space<vmem>>, vector<1x128xf32>
    %146 = vector.broadcast %145 : vector<1x128xf32> to vector<128x128xf32>
    %147 = arith.addf %144, %146 : vector<128x128xf32>
    %cst_103 = arith.constant 0.000000e+00 : f32
    %148 = vector.broadcast %cst_103 : f32 to vector<128x128xf32>
    %149 = arith.maximumf %147, %148 : vector<128x128xf32>
    %150 = arith.truncf %149 : vector<128x128xf32> to vector<128x128xbf16>
    %c0_104 = arith.constant 0 : index
    %c0_105 = arith.constant 0 : index
    %151 = vector.load %arg4[%c0_104, %c0_105] : memref<128x64xbf16, #tpu.memory_space<vmem>>, vector<128x64xbf16>
    %cst_106 = arith.constant dense<0.000000e+00> : vector<128x64xf32>
    %152 = tpu.matmul %150, %151, %cst_106 {dimension_numbers = #tpu.dot_dimension_numbers<[1], [0], [0], [1], [0, 0, 1, 1], [], []>} : vector<128x128xbf16>, vector<128x64xbf16>, vector<128x64xf32> -> vector<128x64xf32>
    %c0_107 = arith.constant 0 : index
    %c0_108 = arith.constant 0 : index
    %153 = vector.load %arg5[%c0_107, %c0_108] : memref<1x64xf32, #tpu.memory_space<vmem>>, vector<1x64xf32>
    %154 = vector.broadcast %153 : vector<1x64xf32> to vector<128x64xf32>
    %155 = arith.addf %152, %154 : vector<128x64xf32>
    %cst_109 = arith.constant 0.000000e+00 : f32
    %156 = vector.broadcast %cst_109 : f32 to vector<128x64xf32>
    %157 = arith.maximumf %155, %156 : vector<128x64xf32>
    %158 = arith.truncf %157 : vector<128x64xf32> to vector<128x64xbf16>
    %c0_110 = arith.constant 0 : index
    %c0_111 = arith.constant 0 : index
    %159 = vector.load %arg6[%c0_110, %c0_111] : memref<64x32xbf16, #tpu.memory_space<vmem>>, vector<64x32xbf16>
    %cst_112 = arith.constant dense<0.000000e+00> : vector<128x32xf32>
    %160 = tpu.matmul %158, %159, %cst_112 {dimension_numbers = #tpu.dot_dimension_numbers<[1], [0], [0], [1], [0, 0, 1, 1], [], []>} : vector<128x64xbf16>, vector<64x32xbf16>, vector<128x32xf32> -> vector<128x32xf32>
    %c0_113 = arith.constant 0 : index
    %c0_114 = arith.constant 0 : index
    %161 = vector.load %arg7[%c0_113, %c0_114] : memref<1x32xf32, #tpu.memory_space<vmem>>, vector<1x32xf32>
    %162 = vector.broadcast %161 : vector<1x32xf32> to vector<128x32xf32>
    %163 = arith.addf %160, %162 : vector<128x32xf32>
    %cst_115 = arith.constant 0.000000e+00 : f32
    %164 = vector.broadcast %cst_115 : f32 to vector<128x32xf32>
    %165 = arith.maximumf %163, %164 : vector<128x32xf32>
    %166 = arith.truncf %165 : vector<128x32xf32> to vector<128x32xbf16>
    %c0_116 = arith.constant 0 : index
    %c0_117 = arith.constant 0 : index
    %167 = vector.load %arg8[%c0_116, %c0_117] : memref<32x16xbf16, #tpu.memory_space<vmem>>, vector<32x16xbf16>
    %cst_118 = arith.constant dense<0.000000e+00> : vector<128x16xf32>
    %168 = tpu.matmul %166, %167, %cst_118 {dimension_numbers = #tpu.dot_dimension_numbers<[1], [0], [0], [1], [0, 0, 1, 1], [], []>} : vector<128x32xbf16>, vector<32x16xbf16>, vector<128x16xf32> -> vector<128x16xf32>
    %c0_119 = arith.constant 0 : index
    %c0_120 = arith.constant 0 : index
    %169 = vector.load %arg9[%c0_119, %c0_120] : memref<1x16xf32, #tpu.memory_space<vmem>>, vector<1x16xf32>
    %170 = vector.broadcast %169 : vector<1x16xf32> to vector<128x16xf32>
    %171 = arith.addf %168, %170 : vector<128x16xf32>
    %cst_121 = arith.constant 0.000000e+00 : f32
    %172 = vector.broadcast %cst_121 : f32 to vector<128x16xf32>
    %173 = arith.maximumf %171, %172 : vector<128x16xf32>
    %c0_122 = arith.constant 0 : index
    %c0_123 = arith.constant 0 : index
    %174 = vector.load %arg10[%c0_122, %c0_123] : memref<1x16xbf16, #tpu.memory_space<vmem>>, vector<1x16xbf16>
    %175 = arith.truncf %173 : vector<128x16xf32> to vector<128x16xbf16>
    %cst_124 = arith.constant dense<0.000000e+00> : vector<1x128xf32>
    %176 = tpu.matmul %174, %175, %cst_124 {dimension_numbers = #tpu.dot_dimension_numbers<[1], [1], [0], [0], [0, 0, 1, 0], [], []>} : vector<1x16xbf16>, vector<128x16xbf16>, vector<1x128xf32> -> vector<1x128xf32>
    %c0_125 = arith.constant 0 : index
    %c0_126 = arith.constant 0 : index
    %177 = vector.load %arg11[%c0_125, %c0_126] : memref<1x1xf32, #tpu.memory_space<vmem>>, vector<1x1xf32>
    %178 = vector.broadcast %177 : vector<1x1xf32> to vector<1x128xf32>
    %179 = arith.addf %176, %178 : vector<1x128xf32>
    %c0_127 = arith.constant 0 : index
    %180 = arith.index_cast %c3_i32 : i32 to index
    %c0_128 = arith.constant 0 : index
    %181 = vector.load %arg12[%c0_127, %180, %c0_128] : memref<1x8x128xf32, #tpu.memory_space<vmem>>, vector<1x1x128xf32>
    %182 = vector.shape_cast %181 : vector<1x1x128xf32> to vector<1x128xf32>
    %183 = vector.shape_cast %179 : vector<1x128xf32> to vector<1x1x128xf32>
    tpu.vector_store %arg12[%c0_127, %180, %c0_128], %183 {strides = array<i32>} : memref<1x8x128xf32, #tpu.memory_space<vmem>>, vector<1x1x128xf32>,
    %c4_i32 = arith.constant 4 : i32
    %c128_i32_129 = arith.constant 128 : i32
    %184 = arith.muli %c4_i32, %c128_i32_129 : i32
    %185 = tpu.assume_multiple %184, 128 : i32
    %186 = arith.index_cast %185 : i32 to index
    %c0_130 = arith.constant 0 : index
    %187 = vector.load %arg1[%186, %c0_130] : memref<1024x32xf32, #tpu.memory_space<vmem>>, vector<128x32xf32>
    %188 = arith.truncf %187 : vector<128x32xf32> to vector<128x32xbf16>
    %c0_131 = arith.constant 0 : index
    %c0_132 = arith.constant 0 : index
    %189 = vector.load %arg2[%c0_131, %c0_132] : memref<32x128xbf16, #tpu.memory_space<vmem>>, vector<32x128xbf16>
    %cst_133 = arith.constant dense<0.000000e+00> : vector<128x128xf32>
    %190 = tpu.matmul %188, %189, %cst_133 {dimension_numbers = #tpu.dot_dimension_numbers<[1], [0], [0], [1], [0, 0, 1, 1], [], []>} : vector<128x32xbf16>, vector<32x128xbf16>, vector<128x128xf32> -> vector<128x128xf32>
    %c0_134 = arith.constant 0 : index
    %c0_135 = arith.constant 0 : index
    %191 = vector.load %arg3[%c0_134, %c0_135] : memref<1x128xf32, #tpu.memory_space<vmem>>, vector<1x128xf32>
    %192 = vector.broadcast %191 : vector<1x128xf32> to vector<128x128xf32>
    %193 = arith.addf %190, %192 : vector<128x128xf32>
    %cst_136 = arith.constant 0.000000e+00 : f32
    %194 = vector.broadcast %cst_136 : f32 to vector<128x128xf32>
    %195 = arith.maximumf %193, %194 : vector<128x128xf32>
    %196 = arith.truncf %195 : vector<128x128xf32> to vector<128x128xbf16>
    %c0_137 = arith.constant 0 : index
    %c0_138 = arith.constant 0 : index
    %197 = vector.load %arg4[%c0_137, %c0_138] : memref<128x64xbf16, #tpu.memory_space<vmem>>, vector<128x64xbf16>
    %cst_139 = arith.constant dense<0.000000e+00> : vector<128x64xf32>
    %198 = tpu.matmul %196, %197, %cst_139 {dimension_numbers = #tpu.dot_dimension_numbers<[1], [0], [0], [1], [0, 0, 1, 1], [], []>} : vector<128x128xbf16>, vector<128x64xbf16>, vector<128x64xf32> -> vector<128x64xf32>
    %c0_140 = arith.constant 0 : index
    %c0_141 = arith.constant 0 : index
    %199 = vector.load %arg5[%c0_140, %c0_141] : memref<1x64xf32, #tpu.memory_space<vmem>>, vector<1x64xf32>
    %200 = vector.broadcast %199 : vector<1x64xf32> to vector<128x64xf32>
    %201 = arith.addf %198, %200 : vector<128x64xf32>
    %cst_142 = arith.constant 0.000000e+00 : f32
    %202 = vector.broadcast %cst_142 : f32 to vector<128x64xf32>
    %203 = arith.maximumf %201, %202 : vector<128x64xf32>
    %204 = arith.truncf %203 : vector<128x64xf32> to vector<128x64xbf16>
    %c0_143 = arith.constant 0 : index
    %c0_144 = arith.constant 0 : index
    %205 = vector.load %arg6[%c0_143, %c0_144] : memref<64x32xbf16, #tpu.memory_space<vmem>>, vector<64x32xbf16>
    %cst_145 = arith.constant dense<0.000000e+00> : vector<128x32xf32>
    %206 = tpu.matmul %204, %205, %cst_145 {dimension_numbers = #tpu.dot_dimension_numbers<[1], [0], [0], [1], [0, 0, 1, 1], [], []>} : vector<128x64xbf16>, vector<64x32xbf16>, vector<128x32xf32> -> vector<128x32xf32>
    %c0_146 = arith.constant 0 : index
    %c0_147 = arith.constant 0 : index
    %207 = vector.load %arg7[%c0_146, %c0_147] : memref<1x32xf32, #tpu.memory_space<vmem>>, vector<1x32xf32>
    %208 = vector.broadcast %207 : vector<1x32xf32> to vector<128x32xf32>
    %209 = arith.addf %206, %208 : vector<128x32xf32>
    %cst_148 = arith.constant 0.000000e+00 : f32
    %210 = vector.broadcast %cst_148 : f32 to vector<128x32xf32>
    %211 = arith.maximumf %209, %210 : vector<128x32xf32>
    %212 = arith.truncf %211 : vector<128x32xf32> to vector<128x32xbf16>
    %c0_149 = arith.constant 0 : index
    %c0_150 = arith.constant 0 : index
    %213 = vector.load %arg8[%c0_149, %c0_150] : memref<32x16xbf16, #tpu.memory_space<vmem>>, vector<32x16xbf16>
    %cst_151 = arith.constant dense<0.000000e+00> : vector<128x16xf32>
    %214 = tpu.matmul %212, %213, %cst_151 {dimension_numbers = #tpu.dot_dimension_numbers<[1], [0], [0], [1], [0, 0, 1, 1], [], []>} : vector<128x32xbf16>, vector<32x16xbf16>, vector<128x16xf32> -> vector<128x16xf32>
    %c0_152 = arith.constant 0 : index
    %c0_153 = arith.constant 0 : index
    %215 = vector.load %arg9[%c0_152, %c0_153] : memref<1x16xf32, #tpu.memory_space<vmem>>, vector<1x16xf32>
    %216 = vector.broadcast %215 : vector<1x16xf32> to vector<128x16xf32>
    %217 = arith.addf %214, %216 : vector<128x16xf32>
    %cst_154 = arith.constant 0.000000e+00 : f32
    %218 = vector.broadcast %cst_154 : f32 to vector<128x16xf32>
    %219 = arith.maximumf %217, %218 : vector<128x16xf32>
    %c0_155 = arith.constant 0 : index
    %c0_156 = arith.constant 0 : index
    %220 = vector.load %arg10[%c0_155, %c0_156] : memref<1x16xbf16, #tpu.memory_space<vmem>>, vector<1x16xbf16>
    %221 = arith.truncf %219 : vector<128x16xf32> to vector<128x16xbf16>
    %cst_157 = arith.constant dense<0.000000e+00> : vector<1x128xf32>
    %222 = tpu.matmul %220, %221, %cst_157 {dimension_numbers = #tpu.dot_dimension_numbers<[1], [1], [0], [0], [0, 0, 1, 0], [], []>} : vector<1x16xbf16>, vector<128x16xbf16>, vector<1x128xf32> -> vector<1x128xf32>
    %c0_158 = arith.constant 0 : index
    %c0_159 = arith.constant 0 : index
    %223 = vector.load %arg11[%c0_158, %c0_159] : memref<1x1xf32, #tpu.memory_space<vmem>>, vector<1x1xf32>
    %224 = vector.broadcast %223 : vector<1x1xf32> to vector<1x128xf32>
    %225 = arith.addf %222, %224 : vector<1x128xf32>
    %c0_160 = arith.constant 0 : index
    %226 = arith.index_cast %c4_i32 : i32 to index
    %c0_161 = arith.constant 0 : index
    %227 = vector.load %arg12[%c0_160, %226, %c0_161] : memref<1x8x128xf32, #tpu.memory_space<vmem>>, vector<1x1x128xf32>
    %228 = vector.shape_cast %227 : vector<1x1x128xf32> to vector<1x128xf32>
    %229 = vector.shape_cast %225 : vector<1x128xf32> to vector<1x1x128xf32>
    tpu.vector_store %arg12[%c0_160, %226, %c0_161], %229 {strides = array<i32>} : memref<1x8x128xf32, #tpu.memory_space<vmem>>, vector<1x1x128xf32>,
    %c5_i32 = arith.constant 5 : i32
    %c128_i32_162 = arith.constant 128 : i32
    %230 = arith.muli %c5_i32, %c128_i32_162 : i32
    %231 = tpu.assume_multiple %230, 128 : i32
    %232 = arith.index_cast %231 : i32 to index
    %c0_163 = arith.constant 0 : index
    %233 = vector.load %arg1[%232, %c0_163] : memref<1024x32xf32, #tpu.memory_space<vmem>>, vector<128x32xf32>
    %234 = arith.truncf %233 : vector<128x32xf32> to vector<128x32xbf16>
    %c0_164 = arith.constant 0 : index
    %c0_165 = arith.constant 0 : index
    %235 = vector.load %arg2[%c0_164, %c0_165] : memref<32x128xbf16, #tpu.memory_space<vmem>>, vector<32x128xbf16>
    %cst_166 = arith.constant dense<0.000000e+00> : vector<128x128xf32>
    %236 = tpu.matmul %234, %235, %cst_166 {dimension_numbers = #tpu.dot_dimension_numbers<[1], [0], [0], [1], [0, 0, 1, 1], [], []>} : vector<128x32xbf16>, vector<32x128xbf16>, vector<128x128xf32> -> vector<128x128xf32>
    %c0_167 = arith.constant 0 : index
    %c0_168 = arith.constant 0 : index
    %237 = vector.load %arg3[%c0_167, %c0_168] : memref<1x128xf32, #tpu.memory_space<vmem>>, vector<1x128xf32>
    %238 = vector.broadcast %237 : vector<1x128xf32> to vector<128x128xf32>
    %239 = arith.addf %236, %238 : vector<128x128xf32>
    %cst_169 = arith.constant 0.000000e+00 : f32
    %240 = vector.broadcast %cst_169 : f32 to vector<128x128xf32>
    %241 = arith.maximumf %239, %240 : vector<128x128xf32>
    %242 = arith.truncf %241 : vector<128x128xf32> to vector<128x128xbf16>
    %c0_170 = arith.constant 0 : index
    %c0_171 = arith.constant 0 : index
    %243 = vector.load %arg4[%c0_170, %c0_171] : memref<128x64xbf16, #tpu.memory_space<vmem>>, vector<128x64xbf16>
    %cst_172 = arith.constant dense<0.000000e+00> : vector<128x64xf32>
    %244 = tpu.matmul %242, %243, %cst_172 {dimension_numbers = #tpu.dot_dimension_numbers<[1], [0], [0], [1], [0, 0, 1, 1], [], []>} : vector<128x128xbf16>, vector<128x64xbf16>, vector<128x64xf32> -> vector<128x64xf32>
    %c0_173 = arith.constant 0 : index
    %c0_174 = arith.constant 0 : index
    %245 = vector.load %arg5[%c0_173, %c0_174] : memref<1x64xf32, #tpu.memory_space<vmem>>, vector<1x64xf32>
    %246 = vector.broadcast %245 : vector<1x64xf32> to vector<128x64xf32>
    %247 = arith.addf %244, %246 : vector<128x64xf32>
    %cst_175 = arith.constant 0.000000e+00 : f32
    %248 = vector.broadcast %cst_175 : f32 to vector<128x64xf32>
    %249 = arith.maximumf %247, %248 : vector<128x64xf32>
    %250 = arith.truncf %249 : vector<128x64xf32> to vector<128x64xbf16>
    %c0_176 = arith.constant 0 : index
    %c0_177 = arith.constant 0 : index
    %251 = vector.load %arg6[%c0_176, %c0_177] : memref<64x32xbf16, #tpu.memory_space<vmem>>, vector<64x32xbf16>
    %cst_178 = arith.constant dense<0.000000e+00> : vector<128x32xf32>
    %252 = tpu.matmul %250, %251, %cst_178 {dimension_numbers = #tpu.dot_dimension_numbers<[1], [0], [0], [1], [0, 0, 1, 1], [], []>} : vector<128x64xbf16>, vector<64x32xbf16>, vector<128x32xf32> -> vector<128x32xf32>
    %c0_179 = arith.constant 0 : index
    %c0_180 = arith.constant 0 : index
    %253 = vector.load %arg7[%c0_179, %c0_180] : memref<1x32xf32, #tpu.memory_space<vmem>>, vector<1x32xf32>
    %254 = vector.broadcast %253 : vector<1x32xf32> to vector<128x32xf32>
    %255 = arith.addf %252, %254 : vector<128x32xf32>
    %cst_181 = arith.constant 0.000000e+00 : f32
    %256 = vector.broadcast %cst_181 : f32 to vector<128x32xf32>
    %257 = arith.maximumf %255, %256 : vector<128x32xf32>
    %258 = arith.truncf %257 : vector<128x32xf32> to vector<128x32xbf16>
    %c0_182 = arith.constant 0 : index
    %c0_183 = arith.constant 0 : index
    %259 = vector.load %arg8[%c0_182, %c0_183] : memref<32x16xbf16, #tpu.memory_space<vmem>>, vector<32x16xbf16>
    %cst_184 = arith.constant dense<0.000000e+00> : vector<128x16xf32>
    %260 = tpu.matmul %258, %259, %cst_184 {dimension_numbers = #tpu.dot_dimension_numbers<[1], [0], [0], [1], [0, 0, 1, 1], [], []>} : vector<128x32xbf16>, vector<32x16xbf16>, vector<128x16xf32> -> vector<128x16xf32>
    %c0_185 = arith.constant 0 : index
    %c0_186 = arith.constant 0 : index
    %261 = vector.load %arg9[%c0_185, %c0_186] : memref<1x16xf32, #tpu.memory_space<vmem>>, vector<1x16xf32>
    %262 = vector.broadcast %261 : vector<1x16xf32> to vector<128x16xf32>
    %263 = arith.addf %260, %262 : vector<128x16xf32>
    %cst_187 = arith.constant 0.000000e+00 : f32
    %264 = vector.broadcast %cst_187 : f32 to vector<128x16xf32>
    %265 = arith.maximumf %263, %264 : vector<128x16xf32>
    %c0_188 = arith.constant 0 : index
    %c0_189 = arith.constant 0 : index
    %266 = vector.load %arg10[%c0_188, %c0_189] : memref<1x16xbf16, #tpu.memory_space<vmem>>, vector<1x16xbf16>
    %267 = arith.truncf %265 : vector<128x16xf32> to vector<128x16xbf16>
    %cst_190 = arith.constant dense<0.000000e+00> : vector<1x128xf32>
    %268 = tpu.matmul %266, %267, %cst_190 {dimension_numbers = #tpu.dot_dimension_numbers<[1], [1], [0], [0], [0, 0, 1, 0], [], []>} : vector<1x16xbf16>, vector<128x16xbf16>, vector<1x128xf32> -> vector<1x128xf32>
    %c0_191 = arith.constant 0 : index
    %c0_192 = arith.constant 0 : index
    %269 = vector.load %arg11[%c0_191, %c0_192] : memref<1x1xf32, #tpu.memory_space<vmem>>, vector<1x1xf32>
    %270 = vector.broadcast %269 : vector<1x1xf32> to vector<1x128xf32>
    %271 = arith.addf %268, %270 : vector<1x128xf32>
    %c0_193 = arith.constant 0 : index
    %272 = arith.index_cast %c5_i32 : i32 to index
    %c0_194 = arith.constant 0 : index
    %273 = vector.load %arg12[%c0_193, %272, %c0_194] : memref<1x8x128xf32, #tpu.memory_space<vmem>>, vector<1x1x128xf32>
    %274 = vector.shape_cast %273 : vector<1x1x128xf32> to vector<1x128xf32>
    %275 = vector.shape_cast %271 : vector<1x128xf32> to vector<1x1x128xf32>
    tpu.vector_store %arg12[%c0_193, %272, %c0_194], %275 {strides = array<i32>} : memref<1x8x128xf32, #tpu.memory_space<vmem>>, vector<1x1x128xf32>,
    %c6_i32 = arith.constant 6 : i32
    %c128_i32_195 = arith.constant 128 : i32
    %276 = arith.muli %c6_i32, %c128_i32_195 : i32
    %277 = tpu.assume_multiple %276, 128 : i32
    %278 = arith.index_cast %277 : i32 to index
    %c0_196 = arith.constant 0 : index
    %279 = vector.load %arg1[%278, %c0_196] : memref<1024x32xf32, #tpu.memory_space<vmem>>, vector<128x32xf32>
    %280 = arith.truncf %279 : vector<128x32xf32> to vector<128x32xbf16>
    %c0_197 = arith.constant 0 : index
    %c0_198 = arith.constant 0 : index
    %281 = vector.load %arg2[%c0_197, %c0_198] : memref<32x128xbf16, #tpu.memory_space<vmem>>, vector<32x128xbf16>
    %cst_199 = arith.constant dense<0.000000e+00> : vector<128x128xf32>
    %282 = tpu.matmul %280, %281, %cst_199 {dimension_numbers = #tpu.dot_dimension_numbers<[1], [0], [0], [1], [0, 0, 1, 1], [], []>} : vector<128x32xbf16>, vector<32x128xbf16>, vector<128x128xf32> -> vector<128x128xf32>
    %c0_200 = arith.constant 0 : index
    %c0_201 = arith.constant 0 : index
    %283 = vector.load %arg3[%c0_200, %c0_201] : memref<1x128xf32, #tpu.memory_space<vmem>>, vector<1x128xf32>
    %284 = vector.broadcast %283 : vector<1x128xf32> to vector<128x128xf32>
    %285 = arith.addf %282, %284 : vector<128x128xf32>
    %cst_202 = arith.constant 0.000000e+00 : f32
    %286 = vector.broadcast %cst_202 : f32 to vector<128x128xf32>
    %287 = arith.maximumf %285, %286 : vector<128x128xf32>
    %288 = arith.truncf %287 : vector<128x128xf32> to vector<128x128xbf16>
    %c0_203 = arith.constant 0 : index
    %c0_204 = arith.constant 0 : index
    %289 = vector.load %arg4[%c0_203, %c0_204] : memref<128x64xbf16, #tpu.memory_space<vmem>>, vector<128x64xbf16>
    %cst_205 = arith.constant dense<0.000000e+00> : vector<128x64xf32>
    %290 = tpu.matmul %288, %289, %cst_205 {dimension_numbers = #tpu.dot_dimension_numbers<[1], [0], [0], [1], [0, 0, 1, 1], [], []>} : vector<128x128xbf16>, vector<128x64xbf16>, vector<128x64xf32> -> vector<128x64xf32>
    %c0_206 = arith.constant 0 : index
    %c0_207 = arith.constant 0 : index
    %291 = vector.load %arg5[%c0_206, %c0_207] : memref<1x64xf32, #tpu.memory_space<vmem>>, vector<1x64xf32>
    %292 = vector.broadcast %291 : vector<1x64xf32> to vector<128x64xf32>
    %293 = arith.addf %290, %292 : vector<128x64xf32>
    %cst_208 = arith.constant 0.000000e+00 : f32
    %294 = vector.broadcast %cst_208 : f32 to vector<128x64xf32>
    %295 = arith.maximumf %293, %294 : vector<128x64xf32>
    %296 = arith.truncf %295 : vector<128x64xf32> to vector<128x64xbf16>
    %c0_209 = arith.constant 0 : index
    %c0_210 = arith.constant 0 : index
    %297 = vector.load %arg6[%c0_209, %c0_210] : memref<64x32xbf16, #tpu.memory_space<vmem>>, vector<64x32xbf16>
    %cst_211 = arith.constant dense<0.000000e+00> : vector<128x32xf32>
    %298 = tpu.matmul %296, %297, %cst_211 {dimension_numbers = #tpu.dot_dimension_numbers<[1], [0], [0], [1], [0, 0, 1, 1], [], []>} : vector<128x64xbf16>, vector<64x32xbf16>, vector<128x32xf32> -> vector<128x32xf32>
    %c0_212 = arith.constant 0 : index
    %c0_213 = arith.constant 0 : index
    %299 = vector.load %arg7[%c0_212, %c0_213] : memref<1x32xf32, #tpu.memory_space<vmem>>, vector<1x32xf32>
    %300 = vector.broadcast %299 : vector<1x32xf32> to vector<128x32xf32>
    %301 = arith.addf %298, %300 : vector<128x32xf32>
    %cst_214 = arith.constant 0.000000e+00 : f32
    %302 = vector.broadcast %cst_214 : f32 to vector<128x32xf32>
    %303 = arith.maximumf %301, %302 : vector<128x32xf32>
    %304 = arith.truncf %303 : vector<128x32xf32> to vector<128x32xbf16>
    %c0_215 = arith.constant 0 : index
    %c0_216 = arith.constant 0 : index
    %305 = vector.load %arg8[%c0_215, %c0_216] : memref<32x16xbf16, #tpu.memory_space<vmem>>, vector<32x16xbf16>
    %cst_217 = arith.constant dense<0.000000e+00> : vector<128x16xf32>
    %306 = tpu.matmul %304, %305, %cst_217 {dimension_numbers = #tpu.dot_dimension_numbers<[1], [0], [0], [1], [0, 0, 1, 1], [], []>} : vector<128x32xbf16>, vector<32x16xbf16>, vector<128x16xf32> -> vector<128x16xf32>
    %c0_218 = arith.constant 0 : index
    %c0_219 = arith.constant 0 : index
    %307 = vector.load %arg9[%c0_218, %c0_219] : memref<1x16xf32, #tpu.memory_space<vmem>>, vector<1x16xf32>
    %308 = vector.broadcast %307 : vector<1x16xf32> to vector<128x16xf32>
    %309 = arith.addf %306, %308 : vector<128x16xf32>
    %cst_220 = arith.constant 0.000000e+00 : f32
    %310 = vector.broadcast %cst_220 : f32 to vector<128x16xf32>
    %311 = arith.maximumf %309, %310 : vector<128x16xf32>
    %c0_221 = arith.constant 0 : index
    %c0_222 = arith.constant 0 : index
    %312 = vector.load %arg10[%c0_221, %c0_222] : memref<1x16xbf16, #tpu.memory_space<vmem>>, vector<1x16xbf16>
    %313 = arith.truncf %311 : vector<128x16xf32> to vector<128x16xbf16>
    %cst_223 = arith.constant dense<0.000000e+00> : vector<1x128xf32>
    %314 = tpu.matmul %312, %313, %cst_223 {dimension_numbers = #tpu.dot_dimension_numbers<[1], [1], [0], [0], [0, 0, 1, 0], [], []>} : vector<1x16xbf16>, vector<128x16xbf16>, vector<1x128xf32> -> vector<1x128xf32>
    %c0_224 = arith.constant 0 : index
    %c0_225 = arith.constant 0 : index
    %315 = vector.load %arg11[%c0_224, %c0_225] : memref<1x1xf32, #tpu.memory_space<vmem>>, vector<1x1xf32>
    %316 = vector.broadcast %315 : vector<1x1xf32> to vector<1x128xf32>
    %317 = arith.addf %314, %316 : vector<1x128xf32>
    %c0_226 = arith.constant 0 : index
    %318 = arith.index_cast %c6_i32 : i32 to index
    %c0_227 = arith.constant 0 : index
    %319 = vector.load %arg12[%c0_226, %318, %c0_227] : memref<1x8x128xf32, #tpu.memory_space<vmem>>, vector<1x1x128xf32>
    %320 = vector.shape_cast %319 : vector<1x1x128xf32> to vector<1x128xf32>
    %321 = vector.shape_cast %317 : vector<1x128xf32> to vector<1x1x128xf32>
    tpu.vector_store %arg12[%c0_226, %318, %c0_227], %321 {strides = array<i32>} : memref<1x8x128xf32, #tpu.memory_space<vmem>>, vector<1x1x128xf32>,
    %c7_i32 = arith.constant 7 : i32
    %c128_i32_228 = arith.constant 128 : i32
    %322 = arith.muli %c7_i32, %c128_i32_228 : i32
    %323 = tpu.assume_multiple %322, 128 : i32
    %324 = arith.index_cast %323 : i32 to index
    %c0_229 = arith.constant 0 : index
    %325 = vector.load %arg1[%324, %c0_229] : memref<1024x32xf32, #tpu.memory_space<vmem>>, vector<128x32xf32>
    %326 = arith.truncf %325 : vector<128x32xf32> to vector<128x32xbf16>
    %c0_230 = arith.constant 0 : index
    %c0_231 = arith.constant 0 : index
    %327 = vector.load %arg2[%c0_230, %c0_231] : memref<32x128xbf16, #tpu.memory_space<vmem>>, vector<32x128xbf16>
    %cst_232 = arith.constant dense<0.000000e+00> : vector<128x128xf32>
    %328 = tpu.matmul %326, %327, %cst_232 {dimension_numbers = #tpu.dot_dimension_numbers<[1], [0], [0], [1], [0, 0, 1, 1], [], []>} : vector<128x32xbf16>, vector<32x128xbf16>, vector<128x128xf32> -> vector<128x128xf32>
    %c0_233 = arith.constant 0 : index
    %c0_234 = arith.constant 0 : index
    %329 = vector.load %arg3[%c0_233, %c0_234] : memref<1x128xf32, #tpu.memory_space<vmem>>, vector<1x128xf32>
    %330 = vector.broadcast %329 : vector<1x128xf32> to vector<128x128xf32>
    %331 = arith.addf %328, %330 : vector<128x128xf32>
    %cst_235 = arith.constant 0.000000e+00 : f32
    %332 = vector.broadcast %cst_235 : f32 to vector<128x128xf32>
    %333 = arith.maximumf %331, %332 : vector<128x128xf32>
    %334 = arith.truncf %333 : vector<128x128xf32> to vector<128x128xbf16>
    %c0_236 = arith.constant 0 : index
    %c0_237 = arith.constant 0 : index
    %335 = vector.load %arg4[%c0_236, %c0_237] : memref<128x64xbf16, #tpu.memory_space<vmem>>, vector<128x64xbf16>
    %cst_238 = arith.constant dense<0.000000e+00> : vector<128x64xf32>
    %336 = tpu.matmul %334, %335, %cst_238 {dimension_numbers = #tpu.dot_dimension_numbers<[1], [0], [0], [1], [0, 0, 1, 1], [], []>} : vector<128x128xbf16>, vector<128x64xbf16>, vector<128x64xf32> -> vector<128x64xf32>
    %c0_239 = arith.constant 0 : index
    %c0_240 = arith.constant 0 : index
    %337 = vector.load %arg5[%c0_239, %c0_240] : memref<1x64xf32, #tpu.memory_space<vmem>>, vector<1x64xf32>
    %338 = vector.broadcast %337 : vector<1x64xf32> to vector<128x64xf32>
    %339 = arith.addf %336, %338 : vector<128x64xf32>
    %cst_241 = arith.constant 0.000000e+00 : f32
    %340 = vector.broadcast %cst_241 : f32 to vector<128x64xf32>
    %341 = arith.maximumf %339, %340 : vector<128x64xf32>
    %342 = arith.truncf %341 : vector<128x64xf32> to vector<128x64xbf16>
    %c0_242 = arith.constant 0 : index
    %c0_243 = arith.constant 0 : index
    %343 = vector.load %arg6[%c0_242, %c0_243] : memref<64x32xbf16, #tpu.memory_space<vmem>>, vector<64x32xbf16>
    %cst_244 = arith.constant dense<0.000000e+00> : vector<128x32xf32>
    %344 = tpu.matmul %342, %343, %cst_244 {dimension_numbers = #tpu.dot_dimension_numbers<[1], [0], [0], [1], [0, 0, 1, 1], [], []>} : vector<128x64xbf16>, vector<64x32xbf16>, vector<128x32xf32> -> vector<128x32xf32>
    %c0_245 = arith.constant 0 : index
    %c0_246 = arith.constant 0 : index
    %345 = vector.load %arg7[%c0_245, %c0_246] : memref<1x32xf32, #tpu.memory_space<vmem>>, vector<1x32xf32>
    %346 = vector.broadcast %345 : vector<1x32xf32> to vector<128x32xf32>
    %347 = arith.addf %344, %346 : vector<128x32xf32>
    %cst_247 = arith.constant 0.000000e+00 : f32
    %348 = vector.broadcast %cst_247 : f32 to vector<128x32xf32>
    %349 = arith.maximumf %347, %348 : vector<128x32xf32>
    %350 = arith.truncf %349 : vector<128x32xf32> to vector<128x32xbf16>
    %c0_248 = arith.constant 0 : index
    %c0_249 = arith.constant 0 : index
    %351 = vector.load %arg8[%c0_248, %c0_249] : memref<32x16xbf16, #tpu.memory_space<vmem>>, vector<32x16xbf16>
    %cst_250 = arith.constant dense<0.000000e+00> : vector<128x16xf32>
    %352 = tpu.matmul %350, %351, %cst_250 {dimension_numbers = #tpu.dot_dimension_numbers<[1], [0], [0], [1], [0, 0, 1, 1], [], []>} : vector<128x32xbf16>, vector<32x16xbf16>, vector<128x16xf32> -> vector<128x16xf32>
    %c0_251 = arith.constant 0 : index
    %c0_252 = arith.constant 0 : index
    %353 = vector.load %arg9[%c0_251, %c0_252] : memref<1x16xf32, #tpu.memory_space<vmem>>, vector<1x16xf32>
    %354 = vector.broadcast %353 : vector<1x16xf32> to vector<128x16xf32>
    %355 = arith.addf %352, %354 : vector<128x16xf32>
    %cst_253 = arith.constant 0.000000e+00 : f32
    %356 = vector.broadcast %cst_253 : f32 to vector<128x16xf32>
    %357 = arith.maximumf %355, %356 : vector<128x16xf32>
    %c0_254 = arith.constant 0 : index
    %c0_255 = arith.constant 0 : index
    %358 = vector.load %arg10[%c0_254, %c0_255] : memref<1x16xbf16, #tpu.memory_space<vmem>>, vector<1x16xbf16>
    %359 = arith.truncf %357 : vector<128x16xf32> to vector<128x16xbf16>
    %cst_256 = arith.constant dense<0.000000e+00> : vector<1x128xf32>
    %360 = tpu.matmul %358, %359, %cst_256 {dimension_numbers = #tpu.dot_dimension_numbers<[1], [1], [0], [0], [0, 0, 1, 0], [], []>} : vector<1x16xbf16>, vector<128x16xbf16>, vector<1x128xf32> -> vector<1x128xf32>
    %c0_257 = arith.constant 0 : index
    %c0_258 = arith.constant 0 : index
    %361 = vector.load %arg11[%c0_257, %c0_258] : memref<1x1xf32, #tpu.memory_space<vmem>>, vector<1x1xf32>
    %362 = vector.broadcast %361 : vector<1x1xf32> to vector<1x128xf32>
    %363 = arith.addf %360, %362 : vector<1x128xf32>
    %c0_259 = arith.constant 0 : index
    %364 = arith.index_cast %c7_i32 : i32 to index
    %c0_260 = arith.constant 0 : index
    %365 = vector.load %arg12[%c0_259, %364, %c0_260] : memref<1x8x128xf32, #tpu.memory_space<vmem>>, vector<1x1x128xf32>
    %366 = vector.shape_cast %365 : vector<1x1x128xf32> to vector<1x128xf32>
    %367 = vector.shape_cast %363 : vector<1x128xf32> to vector<1x1x128xf32>
    tpu.vector_store %arg12[%c0_259, %364, %c0_260], %367 {strides = array<i32>} : memref<1x8x128xf32, #tpu.memory_space<vmem>>, vector<1x1x128xf32>,
    %c8_i32 = arith.constant 8 : i32
    return
  }
  func.func @transform_0(%arg0: i32) -> (i32, i32) {
    %c0_i32 = arith.constant 0 : i32
    %c0_i32_0 = arith.constant 0 : i32
    return %arg0, %c0_i32 : i32, i32
  }
  func.func @transform_1(%arg0: i32) -> (i32, i32) {
    %c0_i32 = arith.constant 0 : i32
    %c0_i32_0 = arith.constant 0 : i32
    %c0_i32_1 = arith.constant 0 : i32
    return %c0_i32, %c0_i32_0 : i32, i32
  }
  func.func @transform_2(%arg0: i32) -> (i32, i32) {
    %c0_i32 = arith.constant 0 : i32
    %c0_i32_0 = arith.constant 0 : i32
    %c0_i32_1 = arith.constant 0 : i32
    return %c0_i32, %c0_i32_0 : i32, i32
  }
  func.func @transform_3(%arg0: i32) -> (i32, i32) {
    %c0_i32 = arith.constant 0 : i32
    %c0_i32_0 = arith.constant 0 : i32
    %c0_i32_1 = arith.constant 0 : i32
    return %c0_i32, %c0_i32_0 : i32, i32
  }
  func.func @transform_4(%arg0: i32) -> (i32, i32) {
    %c0_i32 = arith.constant 0 : i32
    %c0_i32_0 = arith.constant 0 : i32
    %c0_i32_1 = arith.constant 0 : i32
    return %c0_i32, %c0_i32_0 : i32, i32
  }
  func.func @transform_5(%arg0: i32) -> (i32, i32) {
    %c0_i32 = arith.constant 0 : i32
    %c0_i32_0 = arith.constant 0 : i32
    %c0_i32_1 = arith.constant 0 : i32
    return %c0_i32, %c0_i32_0 : i32, i32
  }
  func.func @transform_6(%arg0: i32) -> (i32, i32) {
    %c0_i32 = arith.constant 0 : i32
    %c0_i32_0 = arith.constant 0 : i32
    %c0_i32_1 = arith.constant 0 : i32
    return %c0_i32, %c0_i32_0 : i32, i32
  }
  func.func @transform_7(%arg0: i32) -> (i32, i32) {
    %c0_i32 = arith.constant 0 : i32
    %c0_i32_0 = arith.constant 0 : i32
    %c0_i32_1 = arith.constant 0 : i32
    return %c0_i32, %c0_i32_0 : i32, i32
  }
  func.func @transform_8(%arg0: i32) -> (i32, i32) {
    %c0_i32 = arith.constant 0 : i32
    %c0_i32_0 = arith.constant 0 : i32
    %c0_i32_1 = arith.constant 0 : i32
    return %c0_i32, %c0_i32_0 : i32, i32
  }
  func.func @transform_9(%arg0: i32) -> (i32, i32) {
    %c0_i32 = arith.constant 0 : i32
    %c0_i32_0 = arith.constant 0 : i32
    %c0_i32_1 = arith.constant 0 : i32
    return %c0_i32, %c0_i32_0 : i32, i32
  }
  func.func @transform_10(%arg0: i32) -> (i32, i32) {
    %c0_i32 = arith.constant 0 : i32
    %c0_i32_0 = arith.constant 0 : i32
    %c0_i32_1 = arith.constant 0 : i32
    return %c0_i32, %c0_i32_0 : i32, i32
  }
  func.func @transform_11(%arg0: i32) -> (i32, i32, i32) {
    %c0_i32 = arith.constant 0 : i32
    %c0_i32_0 = arith.constant 0 : i32
    %c0_i32_1 = arith.constant 0 : i32
    return %arg0, %c0_i32, %c0_i32_0 : i32, i32, i32
  }
}

</mosaic_0001>

<llo_original>
// kernel: tpu_custom_call.1
$region0: #{tpu_custom_call.1}
  #allocation0 [shape = 'u32[]', space=smem, size = 0x4, offset = 0x4, fixed_abs, tag = 'smem constant byte address 0x4 - core index']
  #allocation1 [shape = 'u32[144,128]{1,0:T(1,128)}', space=vmem, size = 0x12000, scoped, tag = 'internal scratch']
  #allocation2 [shape = 'f32[1,1]{1,0:T(1,128)S(1)}', space=vmem, size = 0x200, scoped, tag = 'scoped memory for tpu_custom_call.1']
  %s0 = inlined_call_operand.vmem [shape: f32[2048,32], index: 0, kind: input, shape index: {}]
  %s1 = inlined_call_operand.vmem [shape: bf16[32,128], index: 1, kind: input, shape index: {}]
  %s2 = inlined_call_operand.vmem [shape: f32[1,128], index: 2, kind: input, shape index: {}]
  %s3 = inlined_call_operand.vmem [shape: bf16[128,64], index: 3, kind: input, shape index: {}]
  %s4 = inlined_call_operand.vmem [shape: f32[1,64], index: 4, kind: input, shape index: {}]
  %s5 = inlined_call_operand.vmem [shape: bf16[64,32], index: 5, kind: input, shape index: {}]
  %s6 = inlined_call_operand.vmem [shape: f32[1,32], index: 6, kind: input, shape index: {}]
  %s7 = inlined_call_operand.vmem [shape: bf16[32,16], index: 7, kind: input, shape index: {}]
  %s8 = inlined_call_operand.vmem [shape: f32[1,16], index: 8, kind: input, shape index: {}]
  %s9 = inlined_call_operand.vmem [shape: bf16[1,16], index: 9, kind: input, shape index: {}]
  %s10 = inlined_call_operand.<no memory space> [shape: f32[1,1], index: 10, kind: input, shape index: {}]
  %s11 = inlined_call_operand.hbm [shape: f32[2,8,128], index: 11, kind: output, shape index: {}]
  %s12 = sld [smem:[#allocation0]]
  $region77: #{tpu_custom_call.1} parent=0
    _
  %s14 = ssub.s32 1, %s12
  %s15 = scalar_select 0, %s14, %s12
  %v16 = vstv %s10
  %17 = vst [vmem:[#allocation2] sm:$0x1] %v16
  $region1: #{tpu_custom_call.1} parent=0
    #allocation3 [shape = 'u8[8192]{0}', space=vmem, size = 0x2000, scoped, tag = 'output window, operand 0']
    #allocation4 [shape = 's32[2]{0}', space=sflag, size = 0x8, scoped, tag = 'scoped memory for tpu_custom_call.1']
    %18 = vsyncpa [#allocation4], 0
    %s19 = scalar_lea.sflag [#allocation4], 1
    %20 = vsyncpa %s19, 0
    loop: start=0, step=1, limit=4
    $region2: #{tpu_custom_call.1} parent=1 // loop_pre_header
      _
    $region3: #{tpu_custom_call.1} parent=1 // loop_header
      %s22 = sphi 0, %s26
      %p23 = scmp.ge.s32.totalorder %s22, 4
      %s32 = sphi 0, %s34
      %s35 = sphi 0, %s32
      %s36 = sphi 0, %s35
      %s52 = sphi 0, %s36
      %s56 = sphi 0, %s56
      %s58 = sphi 0, %s56
      %s59 = sphi 0, %s58
      %s73 = sphi 0, %s59
      %s77 = sphi 0, %s77
      %s79 = sphi 0, %s77
      %s80 = sphi 0, %s79
      %s94 = sphi 0, %s80
      %s98 = sphi 0, %s98
      %s100 = sphi 0, %s98
      %s101 = sphi 0, %s100
      %s115 = sphi 0, %s101
      %s119 = sphi 0, %s119
      %s121 = sphi 0, %s119
      %s122 = sphi 0, %s121
      %s136 = sphi 0, %s122
      %s140 = sphi 0, %s140
      %s142 = sphi 0, %s140
      %s143 = sphi 0, %s142
      %s157 = sphi 0, %s143
      %s161 = sphi 0, %s161
      %s163 = sphi 0, %s161
      %s164 = sphi 0, %s163
      %s178 = sphi 0, %s164
      %s182 = sphi 0, %s182
      %s184 = sphi 0, %s182
      %s185 = sphi 0, %s184
      %s199 = sphi 0, %s185
      %s203 = sphi 0, %s203
      %s205 = sphi 0, %s203
      %s206 = sphi 0, %s205
      %s220 = sphi 0, %s206
      %s224 = sphi 0, %s224
      %s226 = sphi 0, %s224
      %s227 = sphi 0, %s226
      %s241 = sphi 0, %s227
      %s245 = sphi 0, %s245
      %s247 = sphi 0, %s245
      %s248 = sphi 0, %s247
      %s262 = sphi 0, %s248
      %s268 = sphi 0, %s270
      %s271 = sphi 0, %s268
      %s272 = sphi 0, %s271
      %s288 = sphi 0, %s272
    $region4: #{tpu_custom_call.1} parent=1 // loop_header_branch
      %25 = sbr.rel (%p23) target = $region8
    $region5: #{tpu_custom_call.1} parent=1 // loop_body
      %s27 = ssub.s32 %s22, 1
      %s28 = ssub.s32 %s22, 2
      %s29 = sadd.s32 %s22, 1
      %s30 = ssub.s32 %s22, %s29
      %p31 = scmp.eq.s32.totalorder %s30, 0
      %s33 = sadd.s32 %s32, 1
      %s34 = scalar_select %p31, %s32, %s33
      %p37 = pneg %p31
      %p38 = scmp.eq.s32.totalorder %s22, 1
      %p39 = por %p37, %p38
      %p40 = scmp.ne.s32.totalorder %s32, %s35
      %p41 = scmp.eq.s32.totalorder %s22, 0
      %p42 = por %p40, %p41
      %p43 = scmp.ne.s32.totalorder %s32, %s35
      %p44 = scmp.eq.s32.totalorder %s27, 1
      %p45 = por %p43, %p44
      %p46 = scmp.ne.s32.totalorder %s35, %s36
      %p47 = scmp.eq.s32.totalorder %s27, 0
      %p48 = por %p46, %p47
      %p49 = scmp.ne.s32.totalorder %s35, %s36
      %p50 = scmp.eq.s32.totalorder %s28, 1
      %p51 = por %p49, %p50
      %p53 = scmp.ne.s32.totalorder %s36, %s52
      %p54 = scmp.eq.s32.totalorder %s28, 0
      %p55 = por %p53, %p54
      %s57 = sadd.s32 %s56, 1
      %p60 = scmp.eq.s32.totalorder %s22, 1
      %p61 = scmp.ne.s32.totalorder %s56, %s58
      %p62 = scmp.eq.s32.totalorder %s22, 0
      %p63 = por %p61, %p62
      %p64 = scmp.ne.s32.totalorder %s56, %s58
      %p65 = scmp.eq.s32.totalorder %s27, 1
      %p66 = por %p64, %p65
      %p67 = scmp.ne.s32.totalorder %s58, %s59
      %p68 = scmp.eq.s32.totalorder %s27, 0
      %p69 = por %p67, %p68
      %p70 = scmp.ne.s32.totalorder %s58, %s59
      %p71 = scmp.eq.s32.totalorder %s28, 1
      %p72 = por %p70, %p71
      %p74 = scmp.ne.s32.totalorder %s59, %s73
      %p75 = scmp.eq.s32.totalorder %s28, 0
      %p76 = por %p74, %p75
      %s78 = sadd.s32 %s77, 1
      %p81 = scmp.eq.s32.totalorder %s22, 1
      %p82 = scmp.ne.s32.totalorder %s77, %s79
      %p83 = scmp.eq.s32.totalorder %s22, 0
      %p84 = por %p82, %p83
      %p85 = scmp.ne.s32.totalorder %s77, %s79
      %p86 = scmp.eq.s32.totalorder %s27, 1
      %p87 = por %p85, %p86
      %p88 = scmp.ne.s32.totalorder %s79, %s80
      %p89 = scmp.eq.s32.totalorder %s27, 0
      %p90 = por %p88, %p89
      %p91 = scmp.ne.s32.totalorder %s79, %s80
      %p92 = scmp.eq.s32.totalorder %s28, 1
      %p93 = por %p91, %p92
      %p95 = scmp.ne.s32.totalorder %s80, %s94
      %p96 = scmp.eq.s32.totalorder %s28, 0
      %p97 = por %p95, %p96
      %s99 = sadd.s32 %s98, 1
      %p102 = scmp.eq.s32.totalorder %s22, 1
      %p103 = scmp.ne.s32.totalorder %s98, %s100
      %p104 = scmp.eq.s32.totalorder %s22, 0
      %p105 = por %p103, %p104
      %p106 = scmp.ne.s32.totalorder %s98, %s100
      %p107 = scmp.eq.s32.totalorder %s27, 1
      %p108 = por %p106, %p107
      %p109 = scmp.ne.s32.totalorder %s100, %s101
      %p110 = scmp.eq.s32.totalorder %s27, 0
      %p111 = por %p109, %p110
      %p112 = scmp.ne.s32.totalorder %s100, %s101
      %p113 = scmp.eq.s32.totalorder %s28, 1
      %p114 = por %p112, %p113
      %p116 = scmp.ne.s32.totalorder %s101, %s115
      %p117 = scmp.eq.s32.totalorder %s28, 0
      %p118 = por %p116, %p117
      %s120 = sadd.s32 %s119, 1
      %p123 = scmp.eq.s32.totalorder %s22, 1
      %p124 = scmp.ne.s32.totalorder %s119, %s121
      %p125 = scmp.eq.s32.totalorder %s22, 0
      %p126 = por %p124, %p125
      %p127 = scmp.ne.s32.totalorder %s119, %s121
      %p128 = scmp.eq.s32.totalorder %s27, 1
      %p129 = por %p127, %p128
      %p130 = scmp.ne.s32.totalorder %s121, %s122
      %p131 = scmp.eq.s32.totalorder %s27, 0
      %p132 = por %p130, %p131
      %p133 = scmp.ne.s32.totalorder %s121, %s122
      %p134 = scmp.eq.s32.totalorder %s28, 1
      %p135 = por %p133, %p134
      %p137 = scmp.ne.s32.totalorder %s122, %s136
      %p138 = scmp.eq.s32.totalorder %s28, 0
      %p139 = por %p137, %p138
      %s141 = sadd.s32 %s140, 1
      %p144 = scmp.eq.s32.totalorder %s22, 1
      %p145 = scmp.ne.s32.totalorder %s140, %s142
      %p146 = scmp.eq.s32.totalorder %s22, 0
      %p147 = por %p145, %p146
      %p148 = scmp.ne.s32.totalorder %s140, %s142
      %p149 = scmp.eq.s32.totalorder %s27, 1
      %p150 = por %p148, %p149
      %p151 = scmp.ne.s32.totalorder %s142, %s143
      %p152 = scmp.eq.s32.totalorder %s27, 0
      %p153 = por %p151, %p152
      %p154 = scmp.ne.s32.totalorder %s142, %s143
      %p155 = scmp.eq.s32.totalorder %s28, 1
      %p156 = por %p154, %p155
      %p158 = scmp.ne.s32.totalorder %s143, %s157
      %p159 = scmp.eq.s32.totalorder %s28, 0
      %p160 = por %p158, %p159
      %s162 = sadd.s32 %s161, 1
      %p165 = scmp.eq.s32.totalorder %s22, 1
      %p166 = scmp.ne.s32.totalorder %s161, %s163
      %p167 = scmp.eq.s32.totalorder %s22, 0
      %p168 = por %p166, %p167
      %p169 = scmp.ne.s32.totalorder %s161, %s163
      %p170 = scmp.eq.s32.totalorder %s27, 1
      %p171 = por %p169, %p170
      %p172 = scmp.ne.s32.totalorder %s163, %s164
      %p173 = scmp.eq.s32.totalorder %s27, 0
      %p174 = por %p172, %p173
      %p175 = scmp.ne.s32.totalorder %s163, %s164
      %p176 = scmp.eq.s32.totalorder %s28, 1
      %p177 = por %p175, %p176
      %p179 = scmp.ne.s32.totalorder %s164, %s178
      %p180 = scmp.eq.s32.totalorder %s28, 0
      %p181 = por %p179, %p180
      %s183 = sadd.s32 %s182, 1
      %p186 = scmp.eq.s32.totalorder %s22, 1
      %p187 = scmp.ne.s32.totalorder %s182, %s184
      %p188 = scmp.eq.s32.totalorder %s22, 0
      %p189 = por %p187, %p188
      %p190 = scmp.ne.s32.totalorder %s182, %s184
      %p191 = scmp.eq.s32.totalorder %s27, 1
      %p192 = por %p190, %p191
      %p193 = scmp.ne.s32.totalorder %s184, %s185
      %p194 = scmp.eq.s32.totalorder %s27, 0
      %p195 = por %p193, %p194
      %p196 = scmp.ne.s32.totalorder %s184, %s185
      %p197 = scmp.eq.s32.totalorder %s28, 1
      %p198 = por %p196, %p197
      %p200 = scmp.ne.s32.totalorder %s185, %s199
      %p201 = scmp.eq.s32.totalorder %s28, 0
      %p202 = por %p200, %p201
      %s204 = sadd.s32 %s203, 1
      %p207 = scmp.eq.s32.totalorder %s22, 1
      %p208 = scmp.ne.s32.totalorder %s203, %s205
      %p209 = scmp.eq.s32.totalorder %s22, 0
      %p210 = por %p208, %p209
      %p211 = scmp.ne.s32.totalorder %s203, %s205
      %p212 = scmp.eq.s32.totalorder %s27, 1
      %p213 = por %p211, %p212
      %p214 = scmp.ne.s32.totalorder %s205, %s206
      %p215 = scmp.eq.s32.totalorder %s27, 0
      %p216 = por %p214, %p215
      %p217 = scmp.ne.s32.totalorder %s205, %s206
      %p218 = scmp.eq.s32.totalorder %s28, 1
      %p219 = por %p217, %p218
      %p221 = scmp.ne.s32.totalorder %s206, %s220
      %p222 = scmp.eq.s32.totalorder %s28, 0
      %p223 = por %p221, %p222
      %s225 = sadd.s32 %s224, 1
      %p228 = scmp.eq.s32.totalorder %s22, 1
      %p229 = scmp.ne.s32.totalorder %s224, %s226
      %p230 = scmp.eq.s32.totalorder %s22, 0
      %p231 = por %p229, %p230
      %p232 = scmp.ne.s32.totalorder %s224, %s226
      %p233 = scmp.eq.s32.totalorder %s27, 1
      %p234 = por %p232, %p233
      %p235 = scmp.ne.s32.totalorder %s226, %s227
      %p236 = scmp.eq.s32.totalorder %s27, 0
      %p237 = por %p235, %p236
      %p238 = scmp.ne.s32.totalorder %s226, %s227
      %p239 = scmp.eq.s32.totalorder %s28, 1
      %p240 = por %p238, %p239
      %p242 = scmp.ne.s32.totalorder %s227, %s241
      %p243 = scmp.eq.s32.totalorder %s28, 0
      %p244 = por %p242, %p243
      %s246 = sadd.s32 %s245, 1
      %p249 = scmp.eq.s32.totalorder %s22, 1
      %p250 = scmp.ne.s32.totalorder %s245, %s247
      %p251 = scmp.eq.s32.totalorder %s22, 0
      %p252 = por %p250, %p251
      %p253 = scmp.ne.s32.totalorder %s245, %s247
      %p254 = scmp.eq.s32.totalorder %s27, 1
      %p255 = por %p253, %p254
      %p256 = scmp.ne.s32.totalorder %s247, %s248
      %p257 = scmp.eq.s32.totalorder %s27, 0
      %p258 = por %p256, %p257
      %p259 = scmp.ne.s32.totalorder %s247, %s248
      %p260 = scmp.eq.s32.totalorder %s28, 1
      %p261 = por %p259, %p260
      %p263 = scmp.ne.s32.totalorder %s248, %s262
      %p264 = scmp.eq.s32.totalorder %s28, 0
      %p265 = por %p263, %p264
      %s266 = ssub.s32 %s22, %s29
      %p267 = scmp.eq.s32.totalorder %s266, 0
      %s269 = sadd.s32 %s268, 1
      %s270 = scalar_select %p267, %s268, %s269
      %p273 = pneg %p267
      %p274 = scmp.eq.s32.totalorder %s22, 1
      %p275 = por %p273, %p274
      %p276 = scmp.ne.s32.totalorder %s268, %s271
      %p277 = scmp.eq.s32.totalorder %s22, 0
      %p278 = por %p276, %p277
      %p279 = scmp.ne.s32.totalorder %s268, %s271
      %p280 = scmp.eq.s32.totalorder %s27, 1
      %p281 = por %p279, %p280
      %p282 = scmp.ne.s32.totalorder %s271, %s272
      %p283 = scmp.eq.s32.totalorder %s27, 0
      %p284 = por %p282, %p283
      %p285 = scmp.ne.s32.totalorder %s271, %s272
      %p286 = scmp.eq.s32.totalorder %s28, 1
      %p287 = por %p285, %p286
      %p289 = scmp.ne.s32.totalorder %s272, %s288
      %p290 = scmp.eq.s32.totalorder %s28, 0
      %p291 = por %p289, %p290
      %p292 = scmp.le.s32.totalorder 1, %s22
      %p293 = scmp.lt.s32.totalorder %s22, 3
      %p294 = pnand %p292, %p293
      %p295 = pneg %p294
      // Predicated region
      $region9: #{tpu_custom_call.1} parent=5 // pred_check
        _
      $region10: #{tpu_custom_call.1} parent=5 // pred_check_branch
        %297 = sbr.rel (%p294) target = $region12
      $region11: #{tpu_custom_call.1} parent=5 // pred_region
        %s298 = ssub.s32 %s22, 1
        // Predicated region
        $region13: #{tpu_custom_call.1} parent=11 // pred_check
          %p299 = pneg %p69
        $region14: #{tpu_custom_call.1} parent=11 // pred_check_branch
          %301 = sbr.rel (%p299) target = $region16
        $region15: #{tpu_custom_call.1} parent=11 // pred_region
          _
        $region16: #{tpu_custom_call.1} parent=11 // pred_fallthru
          _
        // Predicated region
        $region17: #{tpu_custom_call.1} parent=11 // pred_check
          %p302 = pneg %p90
        $region18: #{tpu_custom_call.1} parent=11 // pred_check_branch
          %304 = sbr.rel (%p302) target = $region20
        $region19: #{tpu_custom_call.1} parent=11 // pred_region
          _
        $region20: #{tpu_custom_call.1} parent=11 // pred_fallthru
          _
        // Predicated region
        $region21: #{tpu_custom_call.1} parent=11 // pred_check
          %p305 = pneg %p111
        $region22: #{tpu_custom_call.1} parent=11 // pred_check_branch
          %307 = sbr.rel (%p305) target = $region24
        $region23: #{tpu_custom_call.1} parent=11 // pred_region
          _
        $region24: #{tpu_custom_call.1} parent=11 // pred_fallthru
          _
        // Predicated region
        $region25: #{tpu_custom_call.1} parent=11 // pred_check
          %p308 = pneg %p132
        $region26: #{tpu_custom_call.1} parent=11 // pred_check_branch
          %310 = sbr.rel (%p308) target = $region28
        $region27: #{tpu_custom_call.1} parent=11 // pred_region
          _
        $region28: #{tpu_custom_call.1} parent=11 // pred_fallthru
          _
        // Predicated region
        $region29: #{tpu_custom_call.1} parent=11 // pred_check
          %p311 = pneg %p153
        $region30: #{tpu_custom_call.1} parent=11 // pred_check_branch
          %313 = sbr.rel (%p311) target = $region32
        $region31: #{tpu_custom_call.1} parent=11 // pred_region
          _
        $region32: #{tpu_custom_call.1} parent=11 // pred_fallthru
          _
        // Predicated region
        $region33: #{tpu_custom_call.1} parent=11 // pred_check
          %p314 = pneg %p174
        $region34: #{tpu_custom_call.1} parent=11 // pred_check_branch
          %316 = sbr.rel (%p314) target = $region36
        $region35: #{tpu_custom_call.1} parent=11 // pred_region
          _
        $region36: #{tpu_custom_call.1} parent=11 // pred_fallthru
          _
        // Predicated region
        $region37: #{tpu_custom_call.1} parent=11 // pred_check
          %p317 = pneg %p195
        $region38: #{tpu_custom_call.1} parent=11 // pred_check_branch
          %319 = sbr.rel (%p317) target = $region40
        $region39: #{tpu_custom_call.1} parent=11 // pred_region
          _
        $region40: #{tpu_custom_call.1} parent=11 // pred_fallthru
          _
        // Predicated region
        $region41: #{tpu_custom_call.1} parent=11 // pred_check
          %p320 = pneg %p216
        $region42: #{tpu_custom_call.1} parent=11 // pred_check_branch
          %322 = sbr.rel (%p320) target = $region44
        $region43: #{tpu_custom_call.1} parent=11 // pred_region
          _
        $region44: #{tpu_custom_call.1} parent=11 // pred_fallthru
          _
        // Predicated region
        $region45: #{tpu_custom_call.1} parent=11 // pred_check
          %p323 = pneg %p237
        $region46: #{tpu_custom_call.1} parent=11 // pred_check_branch
          %325 = sbr.rel (%p323) target = $region48
        $region47: #{tpu_custom_call.1} parent=11 // pred_region
          _
        $region48: #{tpu_custom_call.1} parent=11 // pred_fallthru
          _
        // Predicated region
        $region49: #{tpu_custom_call.1} parent=11 // pred_check
          %p326 = pneg %p258
        $region50: #{tpu_custom_call.1} parent=11 // pred_check_branch
          %328 = sbr.rel (%p326) target = $region52
        $region51: #{tpu_custom_call.1} parent=11 // pred_region
          _
        $region52: #{tpu_custom_call.1} parent=11 // pred_fallthru
          _
      $region12: #{tpu_custom_call.1} parent=5 // pred_fallthru
        _
      %p329 = scmp.lt.s32.totalorder %s22, 2
      // Predicated region
      $region53: #{tpu_custom_call.1} parent=5 // pred_check
        %p330 = pneg %p329
      $region54: #{tpu_custom_call.1} parent=5 // pred_check_branch
        %332 = sbr.rel (%p330) target = $region56
      $region55: #{tpu_custom_call.1} parent=5 // pred_region
        // Predicated region
        $region57: #{tpu_custom_call.1} parent=55 // pred_check
          %p333 = pneg %p42
        $region58: #{tpu_custom_call.1} parent=55 // pred_check_branch
          %335 = sbr.rel (%p333) target = $region60
        $region59: #{tpu_custom_call.1} parent=55 // pred_region
          %s336 = smul.u32 128, %s22
          %p337 = scmp.lt.s32.totalorder %s336, 255
          %s338 = scalar_select %p337, %s336, 255
          %s339 = smul.addr %s338, 8
          %s340 = scalar_lea.vmem %s0, %s339
          %s341 = smul.u32 128, %s22
        $region60: #{tpu_custom_call.1} parent=55 // pred_fallthru
          _
      $region56: #{tpu_custom_call.1} parent=5 // pred_fallthru
        _
      %p342 = scmp.le.s32.totalorder 1, %s22
      %p343 = scmp.lt.s32.totalorder %s22, 3
      %p344 = pnand %p342, %p343
      %p345 = pneg %p344
      // Predicated region
      $region61: #{tpu_custom_call.1} parent=5 // pred_check
        _
      $region62: #{tpu_custom_call.1} parent=5 // pred_check_branch
        %347 = sbr.rel (%p344) target = $region64
      $region63: #{tpu_custom_call.1} parent=5 // pred_region
        %s348 = ssub.s32 %s22, 1
        %s349 = smul.u32 128, %s27
        %p350 = scmp.lt.s32.totalorder %s349, 255
        %s351 = scalar_select %p350, %s349, 255
        %s352 = smul.addr %s351, 8
        %s353 = scalar_lea.vmem %s0, %s352
        %p354 = pneg %p48
        %p355 = pneg %p45
        %p356 = pneg %p69
        %p357 = pneg %p66
        %p358 = pneg %p90
        %p359 = pneg %p87
        %p360 = pneg %p111
        %p361 = pneg %p108
        %p362 = pneg %p132
        %p363 = pneg %p129
        %p364 = pneg %p153
        %p365 = pneg %p150
        %p366 = pneg %p174
        %p367 = pneg %p171
        %p368 = pneg %p195
        %p369 = pneg %p192
        %p370 = pneg %p216
        %p371 = pneg %p213
        %p372 = pneg %p237
        %p373 = pneg %p234
        %p374 = pneg %p258
        %p375 = pneg %p255
        %p376 = pneg %p284
        %p377 = pneg %p281
        %s378 = sand.u32 %s271, 1
        %s379 = scalar_lea.sflag [#allocation4], %s378
        %s380 = sand.u32 %s271, 1
        %s381 = smul.addr %s380, 8
        %s382 = scalar_lea.vmem [#allocation3], %s381
        %s383 = smul.u32 128, %s27
        %p384 = scmp.lt.s32.totalorder %s383, 255
        %s385 = scalar_select %p384, %s383, 255
        %s386 = smul.addr %s385, 8
        %s387 = scalar_lea.vmem %s0, %s386
        %s388 = smul.u32 128, %s27
        %v390 = vld [vmem:[%s387] sm:$0xff]
        %v391 = vld [vmem:[%s387 + $0x8] sm:$0xff]
        %v392 = vld [vmem:[%s387 + $0x10] sm:$0xff]
        %v393 = vld [vmem:[%s387 + $0x18] sm:$0xff]
        %v394 = vld [vmem:[%s387 + $0x20] sm:$0xff]
        %v395 = vld [vmem:[%s387 + $0x28] sm:$0xff]
        %v396 = vld [vmem:[%s387 + $0x30] sm:$0xff]
        %v397 = vld [vmem:[%s387 + $0x38] sm:$0xff]
        %v398 = vld [vmem:[%s387 + $0x40] sm:$0xff]
        %v399 = vld [vmem:[%s387 + $0x48] sm:$0xff]
        %v400 = vld [vmem:[%s387 + $0x50] sm:$0xff]
        %v401 = vld [vmem:[%s387 + $0x58] sm:$0xff]
        %v402 = vld [vmem:[%s387 + $0x60] sm:$0xff]
        %v403 = vld [vmem:[%s387 + $0x68] sm:$0xff]
        %v404 = vld [vmem:[%s387 + $0x70] sm:$0xff]
        %v405 = vld [vmem:[%s387 + $0x78] sm:$0xff]
        %v406 = vpack.c.bf16 %v391, %v390
        %v407 = vpack.c.bf16 %v393, %v392
        %v408 = vpack.c.bf16 %v395, %v394
        %v409 = vpack.c.bf16 %v397, %v396
        %v410 = vpack.c.bf16 %v399, %v398
        %v411 = vpack.c.bf16 %v401, %v400
        %v412 = vpack.c.bf16 %v403, %v402
        %v413 = vpack.c.bf16 %v405, %v404
        %v414 = vld [vmem:[%s1] sm:$0xf]
        %v415 = vld [vmem:[%s1 + $0x4] sm:$0xf]
        %v416 = vld [vmem:[%s1 + $0x8] sm:$0xf]
        %v417 = vld [vmem:[%s1 + $0xc] sm:$0xf]
        %v418 = vld [vmem:[%s2] sm:$0x1]
        %v420 = vlaneseq
        %v421 = vshrl.u32 %v420, 7
        %v422 = vsub.s32 0, %v421
        %v423 = vrot.slane %v418, %v422
        %v429 = vunpack.c.l.b16 %v414
        %v430 = vunpack.c.l.b16 %v415
        %v431 = vunpack.c.l.b16 %v416
        %v432 = vunpack.c.l.b16 %v417
        %v433 = vpack.c.b16 %v430, %v429
        %v434 = vpack.c.b16 %v432, %v431
        %vm437 = vcmask 261120
        %v439 = vsel %vm437, %v406, 0
        %v442 = vsel %vm437, %v407, 0
        %v445 = vsel %vm437, %v408, 0
        %v448 = vsel %vm437, %v409, 0
        %v451 = vsel %vm437, %v410, 0
        %v454 = vsel %vm437, %v411, 0
        %v457 = vsel %vm437, %v412, 0
        %v460 = vsel %vm437, %v413, 0
        %462 = vmatprep.subr.bf16.mxu0 0
        %463 = vmatpush1.bf16.msra.mxu0 %v433
        %464 = vmatprep.subr.bf16.mxu0 0
        %465 = vmatpush1.bf16.msra.mxu0 %v434
        %466 = vmatprep.subr.bf16.mxu0 0
        %467 = vmatpush1.bf16.msra.mxu0 0
        %468 = vmatprep.subr.bf16.mxu0 0
        %469 = vmatpush1.bf16.msra.mxu0 0
        %470 = vmatprep.subr.bf16.mxu0 0
        %471 = vmatpush1.bf16.msra.mxu0 0
        %472 = vmatprep.subr.bf16.mxu0 0
        %473 = vmatpush1.bf16.msra.mxu0 0
        %474 = vmatprep.subr.bf16.mxu0 0
        %475 = vmatpush1.bf16.msra.mxu0 0
        %476 = vmatprep.subr.bf16.mxu0 0
        %477 = vmatpush1.bf16.msra.mxu0 0
        %478 = vmatprep.subr.bf16.mxu0 0
        %479 = vmatpush1.bf16.msra.mxu0 0
        %480 = vmatprep.subr.bf16.mxu0 0
        %481 = vmatpush1.bf16.msra.mxu0 0
        %482 = vmatprep.subr.bf16.mxu0 0
        %483 = vmatpush1.bf16.msra.mxu0 0
        %484 = vmatprep.subr.bf16.mxu0 0
        %485 = vmatpush1.bf16.msra.mxu0 0
        %486 = vmatprep.subr.bf16.mxu0 0
        %487 = vmatpush1.bf16.msra.mxu0 0
        %488 = vmatprep.subr.bf16.mxu0 0
        %489 = vmatpush1.bf16.msra.mxu0 0
        %490 = vmatprep.subr.bf16.mxu0 0
        %491 = vmatpush1.bf16.msra.mxu0 0
        %492 = vmatprep.subr.bf16.mxu0 0
        %493 = vmatpush1.bf16.msra.mxu0 0
        %494 = vmatprep.mubr.bf16.mxu0 0
        %495 = vmatmul.mubr.bf16.gmra.mrb[0].mxu0 %v439
        %v496 = vpop.f32.mrb[0].mxu0
        %v497 = vadd.f32 %v423, %v496
        %v498 = vpop.f32.mrb[0].mxu0
        %v499 = vpop.f32.mrb[0].mxu0
        %v500 = vadd.f32 %v423, %v499
        %v501 = vpop.f32.mrb[0].mxu0
        %502 = vmatprep.mubr.bf16.mxu0 0
        %503 = vmatmul.mubr.bf16.gmra.mrb[0].mxu0 %v442
        %v504 = vpop.f32.mrb[0].mxu0
        %v505 = vadd.f32 %v423, %v504
        %v506 = vpop.f32.mrb[0].mxu0
        %v507 = vpop.f32.mrb[0].mxu0
        %v508 = vadd.f32 %v423, %v507
        %v509 = vpop.f32.mrb[0].mxu0
        %510 = vmatprep.mubr.bf16.mxu0 0
        %511 = vmatmul.mubr.bf16.gmra.mrb[0].mxu0 %v445
        %v512 = vpop.f32.mrb[0].mxu0
        %v513 = vadd.f32 %v423, %v512
        %v514 = vpop.f32.mrb[0].mxu0
        %v515 = vpop.f32.mrb[0].mxu0
        %v516 = vadd.f32 %v423, %v515
        %v517 = vpop.f32.mrb[0].mxu0
        %518 = vmatprep.mubr.bf16.mxu0 0
        %519 = vmatmul.mubr.bf16.gmra.mrb[0].mxu0 %v448
        %v520 = vpop.f32.mrb[0].mxu0
        %v521 = vadd.f32 %v423, %v520
        %v522 = vpop.f32.mrb[0].mxu0
        %v523 = vpop.f32.mrb[0].mxu0
        %v524 = vadd.f32 %v423, %v523
        %v525 = vpop.f32.mrb[0].mxu0
        %526 = vmatprep.mubr.bf16.mxu0 0
        %527 = vmatmul.mubr.bf16.gmra.mrb[0].mxu0 %v451
        %v528 = vpop.f32.mrb[0].mxu0
        %v529 = vadd.f32 %v423, %v528
        %v530 = vpop.f32.mrb[0].mxu0
        %v531 = vpop.f32.mrb[0].mxu0
        %v532 = vadd.f32 %v423, %v531
        %v533 = vpop.f32.mrb[0].mxu0
        %534 = vmatprep.mubr.bf16.mxu0 0
        %535 = vmatmul.mubr.bf16.gmra.mrb[0].mxu0 %v454
        %v536 = vpop.f32.mrb[0].mxu0
        %v537 = vadd.f32 %v423, %v536
        %v538 = vpop.f32.mrb[0].mxu0
        %v539 = vpop.f32.mrb[0].mxu0
        %v540 = vadd.f32 %v423, %v539
        %v541 = vpop.f32.mrb[0].mxu0
        %542 = vmatprep.mubr.bf16.mxu0 0
        %543 = vmatmul.mubr.bf16.gmra.mrb[0].mxu0 %v457
        %v544 = vpop.f32.mrb[0].mxu0
        %v545 = vadd.f32 %v423, %v544
        %v546 = vpop.f32.mrb[0].mxu0
        %v547 = vpop.f32.mrb[0].mxu0
        %v548 = vadd.f32 %v423, %v547
        %v549 = vpop.f32.mrb[0].mxu0
        %550 = vmatprep.mubr.bf16.mxu0 0
        %551 = vmatmul.mubr.bf16.gmra.mrb[0].mxu0 %v460
        %v552 = vpop.f32.mrb[0].mxu0
        %v553 = vadd.f32 %v423, %v552
        %v554 = vpop.f32.mrb[0].mxu0
        %v555 = vpop.f32.mrb[0].mxu0
        %v556 = vadd.f32 %v423, %v555
        %v557 = vpop.f32.mrb[0].mxu0
        %558 = vdwg.mxu0
        %v559 = vmax.f32 %v497, 0.0
        %v560 = vmax.f32 %v500, 0.0
        %v561 = vmax.f32 %v505, 0.0
        %v562 = vmax.f32 %v508, 0.0
        %v563 = vmax.f32 %v513, 0.0
        %v564 = vmax.f32 %v516, 0.0
        %v565 = vmax.f32 %v521, 0.0
        %v566 = vmax.f32 %v524, 0.0
        %v567 = vmax.f32 %v529, 0.0
        %v568 = vmax.f32 %v532, 0.0
        %v569 = vmax.f32 %v537, 0.0
        %v570 = vmax.f32 %v540, 0.0
        %v571 = vmax.f32 %v545, 0.0
        %v572 = vmax.f32 %v548, 0.0
        %v573 = vmax.f32 %v553, 0.0
        %v574 = vmax.f32 %v556, 0.0
        %v575 = vpack.c.bf16 %v560, %v559
        %v576 = vpack.c.bf16 %v562, %v561
        %v577 = vpack.c.bf16 %v564, %v563
        %v578 = vpack.c.bf16 %v566, %v565
        %v579 = vpack.c.bf16 %v568, %v567
        %v580 = vpack.c.bf16 %v570, %v569
        %v581 = vpack.c.bf16 %v572, %v571
        %v582 = vpack.c.bf16 %v574, %v573
        %v583 = vld [vmem:[%s3] sm:$0xf]
        %v584 = vld [vmem:[%s3 + $0x4] sm:$0xf]
        %v585 = vld [vmem:[%s3 + $0x8] sm:$0xf]
        %v586 = vld [vmem:[%s3 + $0xc] sm:$0xf]
        %v587 = vld [vmem:[%s3 + $0x10] sm:$0xf]
        %v588 = vld [vmem:[%s3 + $0x14] sm:$0xf]
        %v589 = vld [vmem:[%s3 + $0x18] sm:$0xf]
        %v590 = vld [vmem:[%s3 + $0x1c] sm:$0xf]
        %v591 = vld [vmem:[%s3 + $0x20] sm:$0xf]
        %v592 = vld [vmem:[%s3 + $0x24] sm:$0xf]
        %v593 = vld [vmem:[%s3 + $0x28] sm:$0xf]
        %v594 = vld [vmem:[%s3 + $0x2c] sm:$0xf]
        %v595 = vld [vmem:[%s3 + $0x30] sm:$0xf]
        %v596 = vld [vmem:[%s3 + $0x34] sm:$0xf]
        %v597 = vld [vmem:[%s3 + $0x38] sm:$0xf]
        %v598 = vld [vmem:[%s3 + $0x3c] sm:$0xf]
        %v599 = vld [vmem:[%s4] sm:$0x1]
        %v601 = vlaneseq
        %v602 = vshrl.u32 %v601, 7
        %v603 = vsub.s32 0, %v602
        %v604 = vrot.slane %v599, %v603
        %v622 = vunpack.c.l.b16 %v583
        %v623 = vunpack.c.l.b16 %v584
        %v624 = vunpack.c.l.b16 %v585
        %v625 = vunpack.c.l.b16 %v586
        %v626 = vunpack.c.l.b16 %v587
        %v627 = vunpack.c.l.b16 %v588
        %v628 = vunpack.c.l.b16 %v589
        %v629 = vunpack.c.l.b16 %v590
        %v630 = vunpack.c.l.b16 %v591
        %v631 = vunpack.c.l.b16 %v592
        %v632 = vunpack.c.l.b16 %v593
        %v633 = vunpack.c.l.b16 %v594
        %v634 = vunpack.c.l.b16 %v595
        %v635 = vunpack.c.l.b16 %v596
        %v636 = vunpack.c.l.b16 %v597
        %v637 = vunpack.c.l.b16 %v598
        %v638 = vpack.c.b16 %v623, %v622
        %v639 = vpack.c.b16 %v625, %v624
        %v640 = vpack.c.b16 %v627, %v626
        %v641 = vpack.c.b16 %v629, %v628
        %v642 = vpack.c.b16 %v631, %v630
        %v643 = vpack.c.b16 %v633, %v632
        %v644 = vpack.c.b16 %v635, %v634
        %v645 = vpack.c.b16 %v637, %v636
        %654 = vmatprep.subr.bf16.mxu0 0
        %655 = vmatpush1.bf16.msra.mxu0 %v638
        %656 = vmatprep.subr.bf16.mxu0 0
        %657 = vmatpush1.bf16.msra.mxu0 %v639
        %658 = vmatprep.subr.bf16.mxu0 0
        %659 = vmatpush1.bf16.msra.mxu0 %v640
        %660 = vmatprep.subr.bf16.mxu0 0
        %661 = vmatpush1.bf16.msra.mxu0 %v641
        %662 = vmatprep.subr.bf16.mxu0 0
        %663 = vmatpush1.bf16.msra.mxu0 %v642
        %664 = vmatprep.subr.bf16.mxu0 0
        %665 = vmatpush1.bf16.msra.mxu0 %v643
        %666 = vmatprep.subr.bf16.mxu0 0
        %667 = vmatpush1.bf16.msra.mxu0 %v644
        %668 = vmatprep.subr.bf16.mxu0 0
        %669 = vmatpush1.bf16.msra.mxu0 %v645
        %670 = vmatprep.subr.bf16.mxu0 0
        %671 = vmatpush1.bf16.msra.mxu0 0
        %672 = vmatprep.subr.bf16.mxu0 0
        %673 = vmatpush1.bf16.msra.mxu0 0
        %674 = vmatprep.subr.bf16.mxu0 0
        %675 = vmatpush1.bf16.msra.mxu0 0
        %676 = vmatprep.subr.bf16.mxu0 0
        %677 = vmatpush1.bf16.msra.mxu0 0
        %678 = vmatprep.subr.bf16.mxu0 0
        %679 = vmatpush1.bf16.msra.mxu0 0
        %680 = vmatprep.subr.bf16.mxu0 0
        %681 = vmatpush1.bf16.msra.mxu0 0
        %682 = vmatprep.subr.bf16.mxu0 0
        %683 = vmatpush1.bf16.msra.mxu0 0
        %684 = vmatprep.subr.bf16.mxu0 0
        %685 = vmatpush1.bf16.msra.mxu0 0
        %686 = vmatprep.mubr.bf16.mxu0 0
        %687 = vmatmul.mubr.bf16.gmra.mrb[0].mxu0 %v575
        %v688 = vpop.f32.mrb[0].mxu0
        %v689 = vadd.f32 %v604, %v688
        %v690 = vpop.f32.mrb[0].mxu0
        %v691 = vpop.f32.mrb[0].mxu0
        %v692 = vadd.f32 %v604, %v691
        %v693 = vpop.f32.mrb[0].mxu0
        %694 = vmatprep.mubr.bf16.mxu0 0
        %695 = vmatmul.mubr.bf16.gmra.mrb[0].mxu0 %v576
        %v696 = vpop.f32.mrb[0].mxu0
        %v697 = vadd.f32 %v604, %v696
        %v698 = vpop.f32.mrb[0].mxu0
        %v699 = vpop.f32.mrb[0].mxu0
        %v700 = vadd.f32 %v604, %v699
        %v701 = vpop.f32.mrb[0].mxu0
        %702 = vmatprep.mubr.bf16.mxu0 0
        %703 = vmatmul.mubr.bf16.gmra.mrb[0].mxu0 %v577
        %v704 = vpop.f32.mrb[0].mxu0
        %v705 = vadd.f32 %v604, %v704
        %v706 = vpop.f32.mrb[0].mxu0
        %v707 = vpop.f32.mrb[0].mxu0
        %v708 = vadd.f32 %v604, %v707
        %v709 = vpop.f32.mrb[0].mxu0
        %710 = vmatprep.mubr.bf16.mxu0 0
        %711 = vmatmul.mubr.bf16.gmra.mrb[0].mxu0 %v578
        %v712 = vpop.f32.mrb[0].mxu0
        %v713 = vadd.f32 %v604, %v712
        %v714 = vpop.f32.mrb[0].mxu0
        %v715 = vpop.f32.mrb[0].mxu0
        %v716 = vadd.f32 %v604, %v715
        %v717 = vpop.f32.mrb[0].mxu0
        %718 = vmatprep.mubr.bf16.mxu0 0
        %719 = vmatmul.mubr.bf16.gmra.mrb[0].mxu0 %v579
        %v720 = vpop.f32.mrb[0].mxu0
        %v721 = vadd.f32 %v604, %v720
        %v722 = vpop.f32.mrb[0].mxu0
        %v723 = vpop.f32.mrb[0].mxu0
        %v724 = vadd.f32 %v604, %v723
        %v725 = vpop.f32.mrb[0].mxu0
        %726 = vmatprep.mubr.bf16.mxu0 0
        %727 = vmatmul.mubr.bf16.gmra.mrb[0].mxu0 %v580
        %v728 = vpop.f32.mrb[0].mxu0
        %v729 = vadd.f32 %v604, %v728
        %v730 = vpop.f32.mrb[0].mxu0
        %v731 = vpop.f32.mrb[0].mxu0
        %v732 = vadd.f32 %v604, %v731
        %v733 = vpop.f32.mrb[0].mxu0
        %734 = vmatprep.mubr.bf16.mxu0 0
        %735 = vmatmul.mubr.bf16.gmra.mrb[0].mxu0 %v581
        %v736 = vpop.f32.mrb[0].mxu0
        %v737 = vadd.f32 %v604, %v736
        %v738 = vpop.f32.mrb[0].mxu0
        %v739 = vpop.f32.mrb[0].mxu0
        %v740 = vadd.f32 %v604, %v739
        %v741 = vpop.f32.mrb[0].mxu0
        %742 = vmatprep.mubr.bf16.mxu0 0
        %743 = vmatmul.mubr.bf16.gmra.mrb[0].mxu0 %v582
        %v744 = vpop.f32.mrb[0].mxu0
        %v745 = vadd.f32 %v604, %v744
        %v746 = vpop.f32.mrb[0].mxu0
        %v747 = vpop.f32.mrb[0].mxu0
        %v748 = vadd.f32 %v604, %v747
        %v749 = vpop.f32.mrb[0].mxu0
        %750 = vdwg.mxu0
        %v751 = vmax.f32 %v689, 0.0
        %v752 = vmax.f32 %v692, 0.0
        %v753 = vmax.f32 %v697, 0.0
        %v754 = vmax.f32 %v700, 0.0
        %v755 = vmax.f32 %v705, 0.0
        %v756 = vmax.f32 %v708, 0.0
        %v757 = vmax.f32 %v713, 0.0
        %v758 = vmax.f32 %v716, 0.0
        %v759 = vmax.f32 %v721, 0.0
        %v760 = vmax.f32 %v724, 0.0
        %v761 = vmax.f32 %v729, 0.0
        %v762 = vmax.f32 %v732, 0.0
        %v763 = vmax.f32 %v737, 0.0
        %v764 = vmax.f32 %v740, 0.0
        %v765 = vmax.f32 %v745, 0.0
        %v766 = vmax.f32 %v748, 0.0
        %v767 = vpack.c.bf16 %v752, %v751
        %v768 = vpack.c.bf16 %v754, %v753
        %v769 = vpack.c.bf16 %v756, %v755
        %v770 = vpack.c.bf16 %v758, %v757
        %v771 = vpack.c.bf16 %v760, %v759
        %v772 = vpack.c.bf16 %v762, %v761
        %v773 = vpack.c.bf16 %v764, %v763
        %v774 = vpack.c.bf16 %v766, %v765
        %v775 = vld [vmem:[%s5] sm:$0xf]
        %v776 = vld [vmem:[%s5 + $0x4] sm:$0xf]
        %v777 = vld [vmem:[%s5 + $0x8] sm:$0xf]
        %v778 = vld [vmem:[%s5 + $0xc] sm:$0xf]
        %v779 = vld [vmem:[%s5 + $0x10] sm:$0xf]
        %v780 = vld [vmem:[%s5 + $0x14] sm:$0xf]
        %v781 = vld [vmem:[%s5 + $0x18] sm:$0xf]
        %v782 = vld [vmem:[%s5 + $0x1c] sm:$0xf]
        %v783 = vld [vmem:[%s6] sm:$0x1]
        %v785 = vlaneseq
        %v786 = vshrl.u32 %v785, 7
        %v787 = vsub.s32 0, %v786
        %v788 = vrot.slane %v783, %v787
        %v798 = vunpack.c.l.b16 %v775
        %v799 = vunpack.c.l.b16 %v776
        %v800 = vunpack.c.l.b16 %v777
        %v801 = vunpack.c.l.b16 %v778
        %v802 = vunpack.c.l.b16 %v779
        %v803 = vunpack.c.l.b16 %v780
        %v804 = vunpack.c.l.b16 %v781
        %v805 = vunpack.c.l.b16 %v782
        %v806 = vpack.c.b16 %v799, %v798
        %v807 = vpack.c.b16 %v801, %v800
        %v808 = vpack.c.b16 %v803, %v802
        %v809 = vpack.c.b16 %v805, %v804
        %vm814 = vcmask 523264
        %v816 = vsel %vm814, %v767, 0
        %v819 = vsel %vm814, %v768, 0
        %v822 = vsel %vm814, %v769, 0
        %v825 = vsel %vm814, %v770, 0
        %v828 = vsel %vm814, %v771, 0
        %v831 = vsel %vm814, %v772, 0
        %v834 = vsel %vm814, %v773, 0
        %v837 = vsel %vm814, %v774, 0
        %839 = vmatprep.subr.bf16.mxu0 0
        %840 = vmatpush1.bf16.msra.mxu0 %v806
        %841 = vmatprep.subr.bf16.mxu0 0
        %842 = vmatpush1.bf16.msra.mxu0 %v807
        %843 = vmatprep.subr.bf16.mxu0 0
        %844 = vmatpush1.bf16.msra.mxu0 %v808
        %845 = vmatprep.subr.bf16.mxu0 0
        %846 = vmatpush1.bf16.msra.mxu0 %v809
        %847 = vmatprep.subr.bf16.mxu0 0
        %848 = vmatpush1.bf16.msra.mxu0 0
        %849 = vmatprep.subr.bf16.mxu0 0
        %850 = vmatpush1.bf16.msra.mxu0 0
        %851 = vmatprep.subr.bf16.mxu0 0
        %852 = vmatpush1.bf16.msra.mxu0 0
        %853 = vmatprep.subr.bf16.mxu0 0
        %854 = vmatpush1.bf16.msra.mxu0 0
        %855 = vmatprep.subr.bf16.mxu0 0
        %856 = vmatpush1.bf16.msra.mxu0 0
        %857 = vmatprep.subr.bf16.mxu0 0
        %858 = vmatpush1.bf16.msra.mxu0 0
        %859 = vmatprep.subr.bf16.mxu0 0
        %860 = vmatpush1.bf16.msra.mxu0 0
        %861 = vmatprep.subr.bf16.mxu0 0
        %862 = vmatpush1.bf16.msra.mxu0 0
        %863 = vmatprep.subr.bf16.mxu0 0
        %864 = vmatpush1.bf16.msra.mxu0 0
        %865 = vmatprep.subr.bf16.mxu0 0
        %866 = vmatpush1.bf16.msra.mxu0 0
        %867 = vmatprep.subr.bf16.mxu0 0
        %868 = vmatpush1.bf16.msra.mxu0 0
        %869 = vmatprep.subr.bf16.mxu0 0
        %870 = vmatpush1.bf16.msra.mxu0 0
        %871 = vmatprep.mubr.bf16.mxu0 0
        %872 = vmatmul.mubr.bf16.gmra.mrb[0].mxu0 %v816
        %v873 = vpop.f32.mrb[0].mxu0
        %v874 = vadd.f32 %v788, %v873
        %v875 = vpop.f32.mrb[0].mxu0
        %v876 = vpop.f32.mrb[0].mxu0
        %v877 = vadd.f32 %v788, %v876
        %v878 = vpop.f32.mrb[0].mxu0
        %879 = vmatprep.mubr.bf16.mxu0 0
        %880 = vmatmul.mubr.bf16.gmra.mrb[0].mxu0 %v819
        %v881 = vpop.f32.mrb[0].mxu0
        %v882 = vadd.f32 %v788, %v881
        %v883 = vpop.f32.mrb[0].mxu0
        %v884 = vpop.f32.mrb[0].mxu0
        %v885 = vadd.f32 %v788, %v884
        %v886 = vpop.f32.mrb[0].mxu0
        %887 = vmatprep.mubr.bf16.mxu0 0
        %888 = vmatmul.mubr.bf16.gmra.mrb[0].mxu0 %v822
        %v889 = vpop.f32.mrb[0].mxu0
        %v890 = vadd.f32 %v788, %v889
        %v891 = vpop.f32.mrb[0].mxu0
        %v892 = vpop.f32.mrb[0].mxu0
        %v893 = vadd.f32 %v788, %v892
        %v894 = vpop.f32.mrb[0].mxu0
        %895 = vmatprep.mubr.bf16.mxu0 0
        %896 = vmatmul.mubr.bf16.gmra.mrb[0].mxu0 %v825
        %v897 = vpop.f32.mrb[0].mxu0
        %v898 = vadd.f32 %v788, %v897
        %v899 = vpop.f32.mrb[0].mxu0
        %v900 = vpop.f32.mrb[0].mxu0
        %v901 = vadd.f32 %v788, %v900
        %v902 = vpop.f32.mrb[0].mxu0
        %903 = vmatprep.mubr.bf16.mxu0 0
        %904 = vmatmul.mubr.bf16.gmra.mrb[0].mxu0 %v828
        %v905 = vpop.f32.mrb[0].mxu0
        %v906 = vadd.f32 %v788, %v905
        %v907 = vpop.f32.mrb[0].mxu0
        %v908 = vpop.f32.mrb[0].mxu0
        %v909 = vadd.f32 %v788, %v908
        %v910 = vpop.f32.mrb[0].mxu0
        %911 = vmatprep.mubr.bf16.mxu0 0
        %912 = vmatmul.mubr.bf16.gmra.mrb[0].mxu0 %v831
        %v913 = vpop.f32.mrb[0].mxu0
        %v914 = vadd.f32 %v788, %v913
        %v915 = vpop.f32.mrb[0].mxu0
        %v916 = vpop.f32.mrb[0].mxu0
        %v917 = vadd.f32 %v788, %v916
        %v918 = vpop.f32.mrb[0].mxu0
        %919 = vmatprep.mubr.bf16.mxu0 0
        %920 = vmatmul.mubr.bf16.gmra.mrb[0].mxu0 %v834
        %v921 = vpop.f32.mrb[0].mxu0
        %v922 = vadd.f32 %v788, %v921
        %v923 = vpop.f32.mrb[0].mxu0
        %v924 = vpop.f32.mrb[0].mxu0
        %v925 = vadd.f32 %v788, %v924
        %v926 = vpop.f32.mrb[0].mxu0
        %927 = vmatprep.mubr.bf16.mxu0 0
        %928 = vmatmul.mubr.bf16.gmra.mrb[0].mxu0 %v837
        %v929 = vpop.f32.mrb[0].mxu0
        %v930 = vadd.f32 %v788, %v929
        %v931 = vpop.f32.mrb[0].mxu0
        %v932 = vpop.f32.mrb[0].mxu0
        %v933 = vadd.f32 %v788, %v932
        %v934 = vpop.f32.mrb[0].mxu0
        %935 = vdwg.mxu0
        %v936 = vmax.f32 %v874, 0.0
        %v937 = vmax.f32 %v877, 0.0
        %v938 = vmax.f32 %v882, 0.0
        %v939 = vmax.f32 %v885, 0.0
        %v940 = vmax.f32 %v890, 0.0
        %v941 = vmax.f32 %v893, 0.0
        %v942 = vmax.f32 %v898, 0.0
        %v943 = vmax.f32 %v901, 0.0
        %v944 = vmax.f32 %v906, 0.0
        %v945 = vmax.f32 %v909, 0.0
        %v946 = vmax.f32 %v914, 0.0
        %v947 = vmax.f32 %v917, 0.0
        %v948 = vmax.f32 %v922, 0.0
        %v949 = vmax.f32 %v925, 0.0
        %v950 = vmax.f32 %v930, 0.0
        %v951 = vmax.f32 %v933, 0.0
        %v952 = vpack.c.bf16 %v937, %v936
        %v953 = vpack.c.bf16 %v939, %v938
        %v954 = vpack.c.bf16 %v941, %v940
        %v955 = vpack.c.bf16 %v943, %v942
        %v956 = vpack.c.bf16 %v945, %v944
        %v957 = vpack.c.bf16 %v947, %v946
        %v958 = vpack.c.bf16 %v949, %v948
        %v959 = vpack.c.bf16 %v951, %v950
        %v960 = vld [vmem:[%s7] sm:$0xf]
        %v961 = vld [vmem:[%s7 + $0x4] sm:$0xf]
        %v962 = vld [vmem:[%s7 + $0x8] sm:$0xf]
        %v963 = vld [vmem:[%s7 + $0xc] sm:$0xf]
        %v964 = vld [vmem:[%s8] sm:$0x1]
        %v966 = vlaneseq
        %v967 = vshrl.u32 %v966, 7
        %v968 = vsub.s32 0, %v967
        %v969 = vrot.slane %v964, %v968
        %v975 = vunpack.c.l.b16 %v960
        %v976 = vunpack.c.l.b16 %v961
        %v977 = vunpack.c.l.b16 %v962
        %v978 = vunpack.c.l.b16 %v963
        %v979 = vpack.c.b16 %v976, %v975
        %v980 = vpack.c.b16 %v978, %v977
        %v984 = vsel %vm437, %v952, 0
        %v987 = vsel %vm437, %v953, 0
        %v990 = vsel %vm437, %v954, 0
        %v993 = vsel %vm437, %v955, 0
        %v996 = vsel %vm437, %v956, 0
        %v999 = vsel %vm437, %v957, 0
        %v1002 = vsel %vm437, %v958, 0
        %v1005 = vsel %vm437, %v959, 0
        %1007 = vmatprep.subr.bf16.mxu0 0
        %1008 = vmatpush1.bf16.msra.mxu0 %v979
        %1009 = vmatprep.subr.bf16.mxu0 0
        %1010 = vmatpush1.bf16.msra.mxu0 %v980
        %1011 = vmatprep.subr.bf16.mxu0 0
        %1012 = vmatpush1.bf16.msra.mxu0 0
        %1013 = vmatprep.subr.bf16.mxu0 0
        %1014 = vmatpush1.bf16.msra.mxu0 0
        %1015 = vmatprep.subr.bf16.mxu0 0
        %1016 = vmatpush1.bf16.msra.mxu0 0
        %1017 = vmatprep.subr.bf16.mxu0 0
        %1018 = vmatpush1.bf16.msra.mxu0 0
        %1019 = vmatprep.subr.bf16.mxu0 0
        %1020 = vmatpush1.bf16.msra.mxu0 0
        %1021 = vmatprep.subr.bf16.mxu0 0
        %1022 = vmatpush1.bf16.msra.mxu0 0
        %1023 = vmatprep.subr.bf16.mxu0 0
        %1024 = vmatpush1.bf16.msra.mxu0 0
        %1025 = vmatprep.subr.bf16.mxu0 0
        %1026 = vmatpush1.bf16.msra.mxu0 0
        %1027 = vmatprep.subr.bf16.mxu0 0
        %1028 = vmatpush1.bf16.msra.mxu0 0
        %1029 = vmatprep.subr.bf16.mxu0 0
        %1030 = vmatpush1.bf16.msra.mxu0 0
        %1031 = vmatprep.subr.bf16.mxu0 0
        %1032 = vmatpush1.bf16.msra.mxu0 0
        %1033 = vmatprep.subr.bf16.mxu0 0
        %1034 = vmatpush1.bf16.msra.mxu0 0
        %1035 = vmatprep.subr.bf16.mxu0 0
        %1036 = vmatpush1.bf16.msra.mxu0 0
        %1037 = vmatprep.subr.bf16.mxu0 0
        %1038 = vmatpush1.bf16.msra.mxu0 0
        %1039 = vmatprep.mubr.bf16.mxu0 0
        %1040 = vmatmul.mubr.bf16.gmra.mrb[0].mxu0 %v984
        %v1041 = vpop.f32.mrb[0].mxu0
        %v1042 = vadd.f32 %v969, %v1041
        %v1043 = vpop.f32.mrb[0].mxu0
        %v1044 = vpop.f32.mrb[0].mxu0
        %v1045 = vadd.f32 %v969, %v1044
        %v1046 = vpop.f32.mrb[0].mxu0
        %1047 = vmatprep.mubr.bf16.mxu0 0
        %1048 = vmatmul.mubr.bf16.gmra.mrb[0].mxu0 %v987
        %v1049 = vpop.f32.mrb[0].mxu0
        %v1050 = vadd.f32 %v969, %v1049
        %v1051 = vpop.f32.mrb[0].mxu0
        %v1052 = vpop.f32.mrb[0].mxu0
        %v1053 = vadd.f32 %v969, %v1052
        %v1054 = vpop.f32.mrb[0].mxu0
        %1055 = vmatprep.mubr.bf16.mxu0 0
        %1056 = vmatmul.mubr.bf16.gmra.mrb[0].mxu0 %v990
        %v1057 = vpop.f32.mrb[0].mxu0
        %v1058 = vadd.f32 %v969, %v1057
        %v1059 = vpop.f32.mrb[0].mxu0
        %v1060 = vpop.f32.mrb[0].mxu0
        %v1061 = vadd.f32 %v969, %v1060
        %v1062 = vpop.f32.mrb[0].mxu0
        %1063 = vmatprep.mubr.bf16.mxu0 0
        %1064 = vmatmul.mubr.bf16.gmra.mrb[0].mxu0 %v993
        %v1065 = vpop.f32.mrb[0].mxu0
        %v1066 = vadd.f32 %v969, %v1065
        %v1067 = vpop.f32.mrb[0].mxu0
        %v1068 = vpop.f32.mrb[0].mxu0
        %v1069 = vadd.f32 %v969, %v1068
        %v1070 = vpop.f32.mrb[0].mxu0
        %1071 = vmatprep.mubr.bf16.mxu0 0
        %1072 = vmatmul.mubr.bf16.gmra.mrb[0].mxu0 %v996
        %v1073 = vpop.f32.mrb[0].mxu0
        %v1074 = vadd.f32 %v969, %v1073
        %v1075 = vpop.f32.mrb[0].mxu0
        %v1076 = vpop.f32.mrb[0].mxu0
        %v1077 = vadd.f32 %v969, %v1076
        %v1078 = vpop.f32.mrb[0].mxu0
        %1079 = vmatprep.mubr.bf16.mxu0 0
        %1080 = vmatmul.mubr.bf16.gmra.mrb[0].mxu0 %v999
        %v1081 = vpop.f32.mrb[0].mxu0
        %v1082 = vadd.f32 %v969, %v1081
        %v1083 = vpop.f32.mrb[0].mxu0
        %v1084 = vpop.f32.mrb[0].mxu0
        %v1085 = vadd.f32 %v969, %v1084
        %v1086 = vpop.f32.mrb[0].mxu0
        %1087 = vmatprep.mubr.bf16.mxu0 0
        %1088 = vmatmul.mubr.bf16.gmra.mrb[0].mxu0 %v1002
        %v1089 = vpop.f32.mrb[0].mxu0
        %v1090 = vadd.f32 %v969, %v1089
        %v1091 = vpop.f32.mrb[0].mxu0
        %v1092 = vpop.f32.mrb[0].mxu0
        %v1093 = vadd.f32 %v969, %v1092
        %v1094 = vpop.f32.mrb[0].mxu0
        %1095 = vmatprep.mubr.bf16.mxu0 0
        %1096 = vmatmul.mubr.bf16.gmra.mrb[0].mxu0 %v1005
        %v1097 = vpop.f32.mrb[0].mxu0
        %v1098 = vadd.f32 %v969, %v1097
        %v1099 = vpop.f32.mrb[0].mxu0
        %v1100 = vpop.f32.mrb[0].mxu0
        %v1101 = vadd.f32 %v969, %v1100
        %v1102 = vpop.f32.mrb[0].mxu0
        %1103 = vdwg.mxu0
        %v1104 = vmax.f32 %v1042, 0.0
        %v1105 = vmax.f32 %v1045, 0.0
        %v1106 = vmax.f32 %v1050, 0.0
        %v1107 = vmax.f32 %v1053, 0.0
        %v1108 = vmax.f32 %v1058, 0.0
        %v1109 = vmax.f32 %v1061, 0.0
        %v1110 = vmax.f32 %v1066, 0.0
        %v1111 = vmax.f32 %v1069, 0.0
        %v1112 = vmax.f32 %v1074, 0.0
        %v1113 = vmax.f32 %v1077, 0.0
        %v1114 = vmax.f32 %v1082, 0.0
        %v1115 = vmax.f32 %v1085, 0.0
        %v1116 = vmax.f32 %v1090, 0.0
        %v1117 = vmax.f32 %v1093, 0.0
        %v1118 = vmax.f32 %v1098, 0.0
        %v1119 = vmax.f32 %v1101, 0.0
        %v1120 = vld [vmem:[%s9] sm:$0x1]
        %v1121 = vpack.c.bf16 %v1105, %v1104
        %v1122 = vpack.c.bf16 %v1107, %v1106
        %v1123 = vpack.c.bf16 %v1109, %v1108
        %v1124 = vpack.c.bf16 %v1111, %v1110
        %v1125 = vpack.c.bf16 %v1113, %v1112
        %v1126 = vpack.c.bf16 %v1115, %v1114
        %v1127 = vpack.c.bf16 %v1117, %v1116
        %v1128 = vpack.c.bf16 %v1119, %v1118
        %v1129 = vld [vmem:[#allocation2] sm:$0x1]
        %1131 = vset.pattern.permute.xlu0 0
        %1132 = vperm.xlu0 %1131, %v1129
        %v1133 = vpop.permute.xlu0 %1132
        %v1135 = vlaneseq
        %v1136 = vshrl.u32 %v1135, 7
        %v1137 = vsub.s32 0, %v1136
        %v1138 = vrot.slane %v1133, %v1137
        %vm1139 = vcmask 130048
        %v1141 = vsel %vm1139, %v1120, 0
        %v1144 = vsel %vm1139, %v1121, 0
        %v1147 = vsel %vm1139, %v1122, 0
        %v1150 = vsel %vm1139, %v1123, 0
        %v1153 = vsel %vm1139, %v1124, 0
        %v1156 = vsel %vm1139, %v1125, 0
        %v1159 = vsel %vm1139, %v1126, 0
        %v1162 = vsel %vm1139, %v1127, 0
        %v1165 = vsel %vm1139, %v1128, 0
        %1167 = vmatprep.subr.bf16.mxu0 0
        %1168 = vmatpush1.bf16.xpose.msra.mxu0 %v1144
        %1169 = vmatprep.subr.bf16.mxu0 0
        %1170 = vmatpush1.bf16.xpose.msra.mxu0 %v1147
        %1171 = vmatprep.subr.bf16.mxu0 0
        %1172 = vmatpush1.bf16.xpose.msra.mxu0 %v1150
        %1173 = vmatprep.subr.bf16.mxu0 0
        %1174 = vmatpush1.bf16.xpose.msra.mxu0 %v1153
        %1175 = vmatprep.subr.bf16.mxu0 0
        %1176 = vmatpush1.bf16.xpose.msra.mxu0 %v1156
        %1177 = vmatprep.subr.bf16.mxu0 0
        %1178 = vmatpush1.bf16.xpose.msra.mxu0 %v1159
        %1179 = vmatprep.subr.bf16.mxu0 0
        %1180 = vmatpush1.bf16.xpose.msra.mxu0 %v1162
        %1181 = vmatprep.subr.bf16.mxu0 0
        %1182 = vmatpush1.bf16.xpose.msra.mxu0 %v1165
        %1183 = vmatprep.subr.bf16.mxu0 0
        %1184 = vmatpush1.bf16.xpose.msra.mxu0 0
        %1185 = vmatprep.subr.bf16.mxu0 0
        %1186 = vmatpush1.bf16.xpose.msra.mxu0 0
        %1187 = vmatprep.subr.bf16.mxu0 0
        %1188 = vmatpush1.bf16.xpose.msra.mxu0 0
        %1189 = vmatprep.subr.bf16.mxu0 0
        %1190 = vmatpush1.bf16.xpose.msra.mxu0 0
        %1191 = vmatprep.subr.bf16.mxu0 0
        %1192 = vmatpush1.bf16.xpose.msra.mxu0 0
        %1193 = vmatprep.subr.bf16.mxu0 0
        %1194 = vmatpush1.bf16.xpose.msra.mxu0 0
        %1195 = vmatprep.subr.bf16.mxu0 0
        %1196 = vmatpush1.bf16.xpose.msra.mxu0 0
        %1197 = vmatprep.subr.bf16.mxu0 0
        %1198 = vmatpush1.bf16.xpose.msra.mxu0 0
        %1199 = vmatprep.mubr.bf16.mxu0 0
        %1200 = vmatmul.mubr.bf16.gmra.mrb[0].mxu0 %v1141
        %v1201 = vpop.f32.mrb[0].mxu0
        %v1202 = vadd.f32 %v1138, %v1201
        %v1203 = vpop.f32.mrb[0].mxu0
        %v1204 = vpop.f32.mrb[0].mxu0
        %v1205 = vpop.f32.mrb[0].mxu0
        %1206 = vdwg.mxu0
        %1207 = vst [vmem:[%s382] sm:$0x1] %v1202
        %s1208 = scalar_lea.vmem %s387, 128
        %v1209 = vld [vmem:[%s1208] sm:$0xff]
        %v1210 = vld [vmem:[%s1208 + $0x8] sm:$0xff]
        %v1211 = vld [vmem:[%s1208 + $0x10] sm:$0xff]
        %v1212 = vld [vmem:[%s1208 + $0x18] sm:$0xff]
        %v1213 = vld [vmem:[%s1208 + $0x20] sm:$0xff]
        %v1214 = vld [vmem:[%s1208 + $0x28] sm:$0xff]
        %v1215 = vld [vmem:[%s1208 + $0x30] sm:$0xff]
        %v1216 = vld [vmem:[%s1208 + $0x38] sm:$0xff]
        %v1217 = vld [vmem:[%s1208 + $0x40] sm:$0xff]
        %v1218 = vld [vmem:[%s1208 + $0x48] sm:$0xff]
        %v1219 = vld [vmem:[%s1208 + $0x50] sm:$0xff]
        %v1220 = vld [vmem:[%s1208 + $0x58] sm:$0xff]
        %v1221 = vld [vmem:[%s1208 + $0x60] sm:$0xff]
        %v1222 = vld [vmem:[%s1208 + $0x68] sm:$0xff]
        %v1223 = vld [vmem:[%s1208 + $0x70] sm:$0xff]
        %v1224 = vld [vmem:[%s1208 + $0x78] sm:$0xff]
        %v1225 = vpack.c.bf16 %v1210, %v1209
        %v1226 = vpack.c.bf16 %v1212, %v1211
        %v1227 = vpack.c.bf16 %v1214, %v1213
        %v1228 = vpack.c.bf16 %v1216, %v1215
        %v1229 = vpack.c.bf16 %v1218, %v1217
        %v1230 = vpack.c.bf16 %v1220, %v1219
        %v1231 = vpack.c.bf16 %v1222, %v1221
        %v1232 = vpack.c.bf16 %v1224, %v1223
        %v1233 = vld [vmem:[%s1] sm:$0xf]
        %v1234 = vld [vmem:[%s1 + $0x4] sm:$0xf]
        %v1235 = vld [vmem:[%s1 + $0x8] sm:$0xf]
        %v1236 = vld [vmem:[%s1 + $0xc] sm:$0xf]
        %v1237 = vld [vmem:[%s2] sm:$0x1]
        %v1239 = vlaneseq
        %v1240 = vshrl.u32 %v1239, 7
        %v1241 = vsub.s32 0, %v1240
        %v1242 = vrot.slane %v1237, %v1241
        %v1248 = vunpack.c.l.b16 %v1233
        %v1249 = vunpack.c.l.b16 %v1234
        %v1250 = vunpack.c.l.b16 %v1235
        %v1251 = vunpack.c.l.b16 %v1236
        %v1252 = vpack.c.b16 %v1249, %v1248
        %v1253 = vpack.c.b16 %v1251, %v1250
        %v1257 = vsel %vm437, %v1225, 0
        %v1260 = vsel %vm437, %v1226, 0
        %v1263 = vsel %vm437, %v1227, 0
        %v1266 = vsel %vm437, %v1228, 0
        %v1269 = vsel %vm437, %v1229, 0
        %v1272 = vsel %vm437, %v1230, 0
        %v1275 = vsel %vm437, %v1231, 0
        %v1278 = vsel %vm437, %v1232, 0
        %1280 = vmatprep.subr.bf16.mxu0 0
        %1281 = vmatpush1.bf16.msra.mxu0 %v1252
        %1282 = vmatprep.subr.bf16.mxu0 0
        %1283 = vmatpush1.bf16.msra.mxu0 %v1253
        %1284 = vmatprep.subr.bf16.mxu0 0
        %1285 = vmatpush1.bf16.msra.mxu0 0
        %1286 = vmatprep.subr.bf16.mxu0 0
        %1287 = vmatpush1.bf16.msra.mxu0 0
        %1288 = vmatprep.subr.bf16.mxu0 0
        %1289 = vmatpush1.bf16.msra.mxu0 0
        %1290 = vmatprep.subr.bf16.mxu0 0
        %1291 = vmatpush1.bf16.msra.mxu0 0
        %1292 = vmatprep.subr.bf16.mxu0 0
        %1293 = vmatpush1.bf16.msra.mxu0 0
        %1294 = vmatprep.subr.bf16.mxu0 0
        %1295 = vmatpush1.bf16.msra.mxu0 0
        %1296 = vmatprep.subr.bf16.mxu0 0
        %1297 = vmatpush1.bf16.msra.mxu0 0
        %1298 = vmatprep.subr.bf16.mxu0 0
        %1299 = vmatpush1.bf16.msra.mxu0 0
        %1300 = vmatprep.subr.bf16.mxu0 0
        %1301 = vmatpush1.bf16.msra.mxu0 0
        %1302 = vmatprep.subr.bf16.mxu0 0
        %1303 = vmatpush1.bf16.msra.mxu0 0
        %1304 = vmatprep.subr.bf16.mxu0 0
        %1305 = vmatpush1.bf16.msra.mxu0 0
        %1306 = vmatprep.subr.bf16.mxu0 0
        %1307 = vmatpush1.bf16.msra.mxu0 0
        %1308 = vmatprep.subr.bf16.mxu0 0
        %1309 = vmatpush1.bf16.msra.mxu0 0
        %1310 = vmatprep.subr.bf16.mxu0 0
        %1311 = vmatpush1.bf16.msra.mxu0 0
        %1312 = vmatprep.mubr.bf16.mxu0 0
        %1313 = vmatmul.mubr.bf16.gmra.mrb[0].mxu0 %v1257
        %v1314 = vpop.f32.mrb[0].mxu0
        %v1315 = vadd.f32 %v1242, %v1314
        %v1316 = vpop.f32.mrb[0].mxu0
        %v1317 = vpop.f32.mrb[0].mxu0
        %v1318 = vadd.f32 %v1242, %v1317
        %v1319 = vpop.f32.mrb[0].mxu0
        %1320 = vmatprep.mubr.bf16.mxu0 0
        %1321 = vmatmul.mubr.bf16.gmra.mrb[0].mxu0 %v1260
        %v1322 = vpop.f32.mrb[0].mxu0
        %v1323 = vadd.f32 %v1242, %v1322
        %v1324 = vpop.f32.mrb[0].mxu0
        %v1325 = vpop.f32.mrb[0].mxu0
        %v1326 = vadd.f32 %v1242, %v1325
        %v1327 = vpop.f32.mrb[0].mxu0
        %1328 = vmatprep.mubr.bf16.mxu0 0
        %1329 = vmatmul.mubr.bf16.gmra.mrb[0].mxu0 %v1263
        %v1330 = vpop.f32.mrb[0].mxu0
        %v1331 = vadd.f32 %v1242, %v1330
        %v1332 = vpop.f32.mrb[0].mxu0
        %v1333 = vpop.f32.mrb[0].mxu0
        %v1334 = vadd.f32 %v1242, %v1333
        %v1335 = vpop.f32.mrb[0].mxu0
        %1336 = vmatprep.mubr.bf16.mxu0 0
        %1337 = vmatmul.mubr.bf16.gmra.mrb[0].mxu0 %v1266
        %v1338 = vpop.f32.mrb[0].mxu0
        %v1339 = vadd.f32 %v1242, %v1338
        %v1340 = vpop.f32.mrb[0].mxu0
        %v1341 = vpop.f32.mrb[0].mxu0
        %v1342 = vadd.f32 %v1242, %v1341
        %v1343 = vpop.f32.mrb[0].mxu0
        %1344 = vmatprep.mubr.bf16.mxu0 0
        %1345 = vmatmul.mubr.bf16.gmra.mrb[0].mxu0 %v1269
        %v1346 = vpop.f32.mrb[0].mxu0
        %v1347 = vadd.f32 %v1242, %v1346
        %v1348 = vpop.f32.mrb[0].mxu0
        %v1349 = vpop.f32.mrb[0].mxu0
        %v1350 = vadd.f32 %v1242, %v1349
        %v1351 = vpop.f32.mrb[0].mxu0
        %1352 = vmatprep.mubr.bf16.mxu0 0
        %1353 = vmatmul.mubr.bf16.gmra.mrb[0].mxu0 %v1272
        %v1354 = vpop.f32.mrb[0].mxu0
        %v1355 = vadd.f32 %v1242, %v1354
        %v1356 = vpop.f32.mrb[0].mxu0
        %v1357 = vpop.f32.mrb[0].mxu0
        %v1358 = vadd.f32 %v1242, %v1357
        %v1359 = vpop.f32.mrb[0].mxu0
        %1360 = vmatprep.mubr.bf16.mxu0 0
        %1361 = vmatmul.mubr.bf16.gmra.mrb[0].mxu0 %v1275
        %v1362 = vpop.f32.mrb[0].mxu0
        %v1363 = vadd.f32 %v1242, %v1362
        %v1364 = vpop.f32.mrb[0].mxu0
        %v1365 = vpop.f32.mrb[0].mxu0
        %v1366 = vadd.f32 %v1242, %v1365
        %v1367 = vpop.f32.mrb[0].mxu0
        %1368 = vmatprep.mubr.bf16.mxu0 0
        %1369 = vmatmul.mubr.bf16.gmra.mrb[0].mxu0 %v1278
        %v1370 = vpop.f32.mrb[0].mxu0
        %v1371 = vadd.f32 %v1242, %v1370
        %v1372 = vpop.f32.mrb[0].mxu0
        %v1373 = vpop.f32.mrb[0].mxu0
        %v1374 = vadd.f32 %v1242, %v1373
        %v1375 = vpop.f32.mrb[0].mxu0
        %1376 = vdwg.mxu0
        %v1377 = vmax.f32 %v1315, 0.0
        %v1378 = vmax.f32 %v1318, 0.0
        %v1379 = vmax.f32 %v1323, 0.0
        %v1380 = vmax.f32 %v1326, 0.0
        %v1381 = vmax.f32 %v1331, 0.0
        %v1382 = vmax.f32 %v1334, 0.0
        %v1383 = vmax.f32 %v1339, 0.0
        %v1384 = vmax.f32 %v1342, 0.0
        %v1385 = vmax.f32 %v1347, 0.0
        %v1386 = vmax.f32 %v1350, 0.0
        %v1387 = vmax.f32 %v1355, 0.0
        %v1388 = vmax.f32 %v1358, 0.0
        %v1389 = vmax.f32 %v1363, 0.0
        %v1390 = vmax.f32 %v1366, 0.0
        %v1391 = vmax.f32 %v1371, 0.0
        %v1392 = vmax.f32 %v1374, 0.0
        %v1393 = vpack.c.bf16 %v1378, %v1377
        %v1394 = vpack.c.bf16 %v1380, %v1379
        %v1395 = vpack.c.bf16 %v1382, %v1381
        %v1396 = vpack.c.bf16 %v1384, %v1383
        %v1397 = vpack.c.bf16 %v1386, %v1385
        %v1398 = vpack.c.bf16 %v1388, %v1387
        %v1399 = vpack.c.bf16 %v1390, %v1389
        %v1400 = vpack.c.bf16 %v1392, %v1391
        %v1401 = vld [vmem:[%s3] sm:$0xf]
        %v1402 = vld [vmem:[%s3 + $0x4] sm:$0xf]
        %v1403 = vld [vmem:[%s3 + $0x8] sm:$0xf]
        %v1404 = vld [vmem:[%s3 + $0xc] sm:$0xf]
        %v1405 = vld [vmem:[%s3 + $0x10] sm:$0xf]
        %v1406 = vld [vmem:[%s3 + $0x14] sm:$0xf]
        %v1407 = vld [vmem:[%s3 + $0x18] sm:$0xf]
        %v1408 = vld [vmem:[%s3 + $0x1c] sm:$0xf]
        %v1409 = vld [vmem:[%s3 + $0x20] sm:$0xf]
        %v1410 = vld [vmem:[%s3 + $0x24] sm:$0xf]
        %v1411 = vld [vmem:[%s3 + $0x28] sm:$0xf]
        %v1412 = vld [vmem:[%s3 + $0x2c] sm:$0xf]
        %v1413 = vld [vmem:[%s3 + $0x30] sm:$0xf]
        %v1414 = vld [vmem:[%s3 + $0x34] sm:$0xf]
        %v1415 = vld [vmem:[%s3 + $0x38] sm:$0xf]
        %v1416 = vld [vmem:[%s3 + $0x3c] sm:$0xf]
        %v1417 = vld [vmem:[%s4] sm:$0x1]
        %v1419 = vlaneseq
        %v1420 = vshrl.u32 %v1419, 7
        %v1421 = vsub.s32 0, %v1420
        %v1422 = vrot.slane %v1417, %v1421
        %v1440 = vunpack.c.l.b16 %v1401
        %v1441 = vunpack.c.l.b16 %v1402
        %v1442 = vunpack.c.l.b16 %v1403
        %v1443 = vunpack.c.l.b16 %v1404
        %v1444 = vunpack.c.l.b16 %v1405
        %v1445 = vunpack.c.l.b16 %v1406
        %v1446 = vunpack.c.l.b16 %v1407
        %v1447 = vunpack.c.l.b16 %v1408
        %v1448 = vunpack.c.l.b16 %v1409
        %v1449 = vunpack.c.l.b16 %v1410
        %v1450 = vunpack.c.l.b16 %v1411
        %v1451 = vunpack.c.l.b16 %v1412
        %v1452 = vunpack.c.l.b16 %v1413
        %v1453 = vunpack.c.l.b16 %v1414
        %v1454 = vunpack.c.l.b16 %v1415
        %v1455 = vunpack.c.l.b16 %v1416
        %v1456 = vpack.c.b16 %v1441, %v1440
        %v1457 = vpack.c.b16 %v1443, %v1442
        %v1458 = vpack.c.b16 %v1445, %v1444
        %v1459 = vpack.c.b16 %v1447, %v1446
        %v1460 = vpack.c.b16 %v1449, %v1448
        %v1461 = vpack.c.b16 %v1451, %v1450
        %v1462 = vpack.c.b16 %v1453, %v1452
        %v1463 = vpack.c.b16 %v1455, %v1454
        %1472 = vmatprep.subr.bf16.mxu0 0
        %1473 = vmatpush1.bf16.msra.mxu0 %v1456
        %1474 = vmatprep.subr.bf16.mxu0 0
        %1475 = vmatpush1.bf16.msra.mxu0 %v1457
        %1476 = vmatprep.subr.bf16.mxu0 0
        %1477 = vmatpush1.bf16.msra.mxu0 %v1458
        %1478 = vmatprep.subr.bf16.mxu0 0
        %1479 = vmatpush1.bf16.msra.mxu0 %v1459
        %1480 = vmatprep.subr.bf16.mxu0 0
        %1481 = vmatpush1.bf16.msra.mxu0 %v1460
        %1482 = vmatprep.subr.bf16.mxu0 0
        %1483 = vmatpush1.bf16.msra.mxu0 %v1461
        %1484 = vmatprep.subr.bf16.mxu0 0
        %1485 = vmatpush1.bf16.msra.mxu0 %v1462
        %1486 = vmatprep.subr.bf16.mxu0 0
        %1487 = vmatpush1.bf16.msra.mxu0 %v1463
        %1488 = vmatprep.subr.bf16.mxu0 0
        %1489 = vmatpush1.bf16.msra.mxu0 0
        %1490 = vmatprep.subr.bf16.mxu0 0
        %1491 = vmatpush1.bf16.msra.mxu0 0
        %1492 = vmatprep.subr.bf16.mxu0 0
        %1493 = vmatpush1.bf16.msra.mxu0 0
        %1494 = vmatprep.subr.bf16.mxu0 0
        %1495 = vmatpush1.bf16.msra.mxu0 0
        %1496 = vmatprep.subr.bf16.mxu0 0
        %1497 = vmatpush1.bf16.msra.mxu0 0
        %1498 = vmatprep.subr.bf16.mxu0 0
        %1499 = vmatpush1.bf16.msra.mxu0 0
        %1500 = vmatprep.subr.bf16.mxu0 0
        %1501 = vmatpush1.bf16.msra.mxu0 0
        %1502 = vmatprep.subr.bf16.mxu0 0
        %1503 = vmatpush1.bf16.msra.mxu0 0
        %1504 = vmatprep.mubr.bf16.mxu0 0
        %1505 = vmatmul.mubr.bf16.gmra.mrb[0].mxu0 %v1393
        %v1506 = vpop.f32.mrb[0].mxu0
        %v1507 = vadd.f32 %v1422, %v1506
        %v1508 = vpop.f32.mrb[0].mxu0
        %v1509 = vpop.f32.mrb[0].mxu0
        %v1510 = vadd.f32 %v1422, %v1509
        %v1511 = vpop.f32.mrb[0].mxu0
        %1512 = vmatprep.mubr.bf16.mxu0 0
        %1513 = vmatmul.mubr.bf16.gmra.mrb[0].mxu0 %v1394
        %v1514 = vpop.f32.mrb[0].mxu0
        %v1515 = vadd.f32 %v1422, %v1514
        %v1516 = vpop.f32.mrb[0].mxu0
        %v1517 = vpop.f32.mrb[0].mxu0
        %v1518 = vadd.f32 %v1422, %v1517
        %v1519 = vpop.f32.mrb[0].mxu0
        %1520 = vmatprep.mubr.bf16.mxu0 0
        %1521 = vmatmul.mubr.bf16.gmra.mrb[0].mxu0 %v1395
        %v1522 = vpop.f32.mrb[0].mxu0
        %v1523 = vadd.f32 %v1422, %v1522
        %v1524 = vpop.f32.mrb[0].mxu0
        %v1525 = vpop.f32.mrb[0].mxu0
        %v1526 = vadd.f32 %v1422, %v1525
        %v1527 = vpop.f32.mrb[0].mxu0
        %1528 = vmatprep.mubr.bf16.mxu0 0
        %1529 = vmatmul.mubr.bf16.gmra.mrb[0].mxu0 %v1396
        %v1530 = vpop.f32.mrb[0].mxu0
        %v1531 = vadd.f32 %v1422, %v1530
        %v1532 = vpop.f32.mrb[0].mxu0
        %v1533 = vpop.f32.mrb[0].mxu0
        %v1534 = vadd.f32 %v1422, %v1533
        %v1535 = vpop.f32.mrb[0].mxu0
        %1536 = vmatprep.mubr.bf16.mxu0 0
        %1537 = vmatmul.mubr.bf16.gmra.mrb[0].mxu0 %v1397
        %v1538 = vpop.f32.mrb[0].mxu0
        %v1539 = vadd.f32 %v1422, %v1538
        %v1540 = vpop.f32.mrb[0].mxu0
        %v1541 = vpop.f32.mrb[0].mxu0
        %v1542 = vadd.f32 %v1422, %v1541
        %v1543 = vpop.f32.mrb[0].mxu0
        %1544 = vmatprep.mubr.bf16.mxu0 0
        %1545 = vmatmul.mubr.bf16.gmra.mrb[0].mxu0 %v1398
        %v1546 = vpop.f32.mrb[0].mxu0
        %v1547 = vadd.f32 %v1422, %v1546
        %v1548 = vpop.f32.mrb[0].mxu0
        %v1549 = vpop.f32.mrb[0].mxu0
        %v1550 = vadd.f32 %v1422, %v1549
        %v1551 = vpop.f32.mrb[0].mxu0
        %1552 = vmatprep.mubr.bf16.mxu0 0
        %1553 = vmatmul.mubr.bf16.gmra.mrb[0].mxu0 %v1399
        %v1554 = vpop.f32.mrb[0].mxu0
        %v1555 = vadd.f32 %v1422, %v1554
        %v1556 = vpop.f32.mrb[0].mxu0
        %v1557 = vpop.f32.mrb[0].mxu0
        %v1558 = vadd.f32 %v1422, %v1557
        %v1559 = vpop.f32.mrb[0].mxu0
        %1560 = vmatprep.mubr.bf16.mxu0 0
        %1561 = vmatmul.mubr.bf16.gmra.mrb[0].mxu0 %v1400
        %v1562 = vpop.f32.mrb[0].mxu0
        %v1563 = vadd.f32 %v1422, %v1562
        %v1564 = vpop.f32.mrb[0].mxu0
        %v1565 = vpop.f32.mrb[0].mxu0
        %v1566 = vadd.f32 %v1422, %v1565
        %v1567 = vpop.f32.mrb[0].mxu0
        %1568 = vdwg.mxu0
        %v1569 = vmax.f32 %v1507, 0.0
        %v1570 = vmax.f32 %v1510, 0.0
        %v1571 = vmax.f32 %v1515, 0.0
        %v1572 = vmax.f32 %v1518, 0.0
        %v1573 = vmax.f32 %v1523, 0.0
        %v1574 = vmax.f32 %v1526, 0.0
        %v1575 = vmax.f32 %v1531, 0.0
        %v1576 = vmax.f32 %v1534, 0.0
        %v1577 = vmax.f32 %v1539, 0.0
        %v1578 = vmax.f32 %v1542, 0.0
        %v1579 = vmax.f32 %v1547, 0.0
        %v1580 = vmax.f32 %v1550, 0.0
        %v1581 = vmax.f32 %v1555, 0.0
        %v1582 = vmax.f32 %v1558, 0.0
        %v1583 = vmax.f32 %v1563, 0.0
        %v1584 = vmax.f32 %v1566, 0.0
        %v1585 = vpack.c.bf16 %v1570, %v1569
        %v1586 = vpack.c.bf16 %v1572, %v1571
        %v1587 = vpack.c.bf16 %v1574, %v1573
        %v1588 = vpack.c.bf16 %v1576, %v1575
        %v1589 = vpack.c.bf16 %v1578, %v1577
        %v1590 = vpack.c.bf16 %v1580, %v1579
        %v1591 = vpack.c.bf16 %v1582, %v1581
        %v1592 = vpack.c.bf16 %v1584, %v1583
        %v1593 = vld [vmem:[%s5] sm:$0xf]
        %v1594 = vld [vmem:[%s5 + $0x4] sm:$0xf]
        %v1595 = vld [vmem:[%s5 + $0x8] sm:$0xf]
        %v1596 = vld [vmem:[%s5 + $0xc] sm:$0xf]
        %v1597 = vld [vmem:[%s5 + $0x10] sm:$0xf]
        %v1598 = vld [vmem:[%s5 + $0x14] sm:$0xf]
        %v1599 = vld [vmem:[%s5 + $0x18] sm:$0xf]
        %v1600 = vld [vmem:[%s5 + $0x1c] sm:$0xf]
        %v1601 = vld [vmem:[%s6] sm:$0x1]
        %v1603 = vlaneseq
        %v1604 = vshrl.u32 %v1603, 7
        %v1605 = vsub.s32 0, %v1604
        %v1606 = vrot.slane %v1601, %v1605
        %v1616 = vunpack.c.l.b16 %v1593
        %v1617 = vunpack.c.l.b16 %v1594
        %v1618 = vunpack.c.l.b16 %v1595
        %v1619 = vunpack.c.l.b16 %v1596
        %v1620 = vunpack.c.l.b16 %v1597
        %v1621 = vunpack.c.l.b16 %v1598
        %v1622 = vunpack.c.l.b16 %v1599
        %v1623 = vunpack.c.l.b16 %v1600
        %v1624 = vpack.c.b16 %v1617, %v1616
        %v1625 = vpack.c.b16 %v1619, %v1618
        %v1626 = vpack.c.b16 %v1621, %v1620
        %v1627 = vpack.c.b16 %v1623, %v1622
        %v1633 = vsel %vm814, %v1585, 0
        %v1636 = vsel %vm814, %v1586, 0
        %v1639 = vsel %vm814, %v1587, 0
        %v1642 = vsel %vm814, %v1588, 0
        %v1645 = vsel %vm814, %v1589, 0
        %v1648 = vsel %vm814, %v1590, 0
        %v1651 = vsel %vm814, %v1591, 0
        %v1654 = vsel %vm814, %v1592, 0
        %1656 = vmatprep.subr.bf16.mxu0 0
        %1657 = vmatpush1.bf16.msra.mxu0 %v1624
        %1658 = vmatprep.subr.bf16.mxu0 0
        %1659 = vmatpush1.bf16.msra.mxu0 %v1625
        %1660 = vmatprep.subr.bf16.mxu0 0
        %1661 = vmatpush1.bf16.msra.mxu0 %v1626
        %1662 = vmatprep.subr.bf16.mxu0 0
        %1663 = vmatpush1.bf16.msra.mxu0 %v1627
        %1664 = vmatprep.subr.bf16.mxu0 0
        %1665 = vmatpush1.bf16.msra.mxu0 0
        %1666 = vmatprep.subr.bf16.mxu0 0
        %1667 = vmatpush1.bf16.msra.mxu0 0
        %1668 = vmatprep.subr.bf16.mxu0 0
        %1669 = vmatpush1.bf16.msra.mxu0 0
        %1670 = vmatprep.subr.bf16.mxu0 0
        %1671 = vmatpush1.bf16.msra.mxu0 0
        %1672 = vmatprep.subr.bf16.mxu0 0
        %1673 = vmatpush1.bf16.msra.mxu0 0
        %1674 = vmatprep.subr.bf16.mxu0 0
        %1675 = vmatpush1.bf16.msra.mxu0 0
        %1676 = vmatprep.subr.bf16.mxu0 0
        %1677 = vmatpush1.bf16.msra.mxu0 0
        %1678 = vmatprep.subr.bf16.mxu0 0
        %1679 = vmatpush1.bf16.msra.mxu0 0
        %1680 = vmatprep.subr.bf16.mxu0 0
        %1681 = vmatpush1.bf16.msra.mxu0 0
        %1682 = vmatprep.subr.bf16.mxu0 0
        %1683 = vmatpush1.bf16.msra.mxu0 0
        %1684 = vmatprep.subr.bf16.mxu0 0
        %1685 = vmatpush1.bf16.msra.mxu0 0
        %1686 = vmatprep.subr.bf16.mxu0 0
        %1687 = vmatpush1.bf16.msra.mxu0 0
        %1688 = vmatprep.mubr.bf16.mxu0 0
        %1689 = vmatmul.mubr.bf16.gmra.mrb[0].mxu0 %v1633
        %v1690 = vpop.f32.mrb[0].mxu0
        %v1691 = vadd.f32 %v1606, %v1690
        %v1692 = vpop.f32.mrb[0].mxu0
        %v1693 = vpop.f32.mrb[0].mxu0
        %v1694 = vadd.f32 %v1606, %v1693
        %v1695 = vpop.f32.mrb[0].mxu0
        %1696 = vmatprep.mubr.bf16.mxu0 0
        %1697 = vmatmul.mubr.bf16.gmra.mrb[0].mxu0 %v1636
        %v1698 = vpop.f32.mrb[0].mxu0
        %v1699 = vadd.f32 %v1606, %v1698
        %v1700 = vpop.f32.mrb[0].mxu0
        %v1701 = vpop.f32.mrb[0].mxu0
        %v1702 = vadd.f32 %v1606, %v1701
        %v1703 = vpop.f32.mrb[0].mxu0
        %1704 = vmatprep.mubr.bf16.mxu0 0
        %1705 = vmatmul.mubr.bf16.gmra.mrb[0].mxu0 %v1639
        %v1706 = vpop.f32.mrb[0].mxu0
        %v1707 = vadd.f32 %v1606, %v1706
        %v1708 = vpop.f32.mrb[0].mxu0
        %v1709 = vpop.f32.mrb[0].mxu0
        %v1710 = vadd.f32 %v1606, %v1709
        %v1711 = vpop.f32.mrb[0].mxu0
        %1712 = vmatprep.mubr.bf16.mxu0 0
        %1713 = vmatmul.mubr.bf16.gmra.mrb[0].mxu0 %v1642
        %v1714 = vpop.f32.mrb[0].mxu0
        %v1715 = vadd.f32 %v1606, %v1714
        %v1716 = vpop.f32.mrb[0].mxu0
        %v1717 = vpop.f32.mrb[0].mxu0
        %v1718 = vadd.f32 %v1606, %v1717
        %v1719 = vpop.f32.mrb[0].mxu0
        %1720 = vmatprep.mubr.bf16.mxu0 0
        %1721 = vmatmul.mubr.bf16.gmra.mrb[0].mxu0 %v1645
        %v1722 = vpop.f32.mrb[0].mxu0
        %v1723 = vadd.f32 %v1606, %v1722
        %v1724 = vpop.f32.mrb[0].mxu0
        %v1725 = vpop.f32.mrb[0].mxu0
        %v1726 = vadd.f32 %v1606, %v1725
        %v1727 = vpop.f32.mrb[0].mxu0
        %1728 = vmatprep.mubr.bf16.mxu0 0
        %1729 = vmatmul.mubr.bf16.gmra.mrb[0].mxu0 %v1648
        %v1730 = vpop.f32.mrb[0].mxu0
        %v1731 = vadd.f32 %v1606, %v1730
        %v1732 = vpop.f32.mrb[0].mxu0
        %v1733 = vpop.f32.mrb[0].mxu0
        %v1734 = vadd.f32 %v1606, %v1733
        %v1735 = vpop.f32.mrb[0].mxu0
        %1736 = vmatprep.mubr.bf16.mxu0 0
        %1737 = vmatmul.mubr.bf16.gmra.mrb[0].mxu0 %v1651
        %v1738 = vpop.f32.mrb[0].mxu0
        %v1739 = vadd.f32 %v1606, %v1738
        %v1740 = vpop.f32.mrb[0].mxu0
        %v1741 = vpop.f32.mrb[0].mxu0
        %v1742 = vadd.f32 %v1606, %v1741
        %v1743 = vpop.f32.mrb[0].mxu0
        %1744 = vmatprep.mubr.bf16.mxu0 0
        %1745 = vmatmul.mubr.bf16.gmra.mrb[0].mxu0 %v1654
        %v1746 = vpop.f32.mrb[0].mxu0
        %v1747 = vadd.f32 %v1606, %v1746
        %v1748 = vpop.f32.mrb[0].mxu0
        %v1749 = vpop.f32.mrb[0].mxu0
        %v1750 = vadd.f32 %v1606, %v1749
        %v1751 = vpop.f32.mrb[0].mxu0
        %1752 = vdwg.mxu0
        %v1753 = vmax.f32 %v1691, 0.0
        %v1754 = vmax.f32 %v1694, 0.0
        %v1755 = vmax.f32 %v1699, 0.0
        %v1756 = vmax.f32 %v1702, 0.0
        %v1757 = vmax.f32 %v1707, 0.0
        %v1758 = vmax.f32 %v1710, 0.0
        %v1759 = vmax.f32 %v1715, 0.0
        %v1760 = vmax.f32 %v1718, 0.0
        %v1761 = vmax.f32 %v1723, 0.0
        %v1762 = vmax.f32 %v1726, 0.0
        %v1763 = vmax.f32 %v1731, 0.0
        %v1764 = vmax.f32 %v1734, 0.0
        %v1765 = vmax.f32 %v1739, 0.0
        %v1766 = vmax.f32 %v1742, 0.0
        %v1767 = vmax.f32 %v1747, 0.0
        %v1768 = vmax.f32 %v1750, 0.0
        %v1769 = vpack.c.bf16 %v1754, %v1753
        %v1770 = vpack.c.bf16 %v1756, %v1755
        %v1771 = vpack.c.bf16 %v1758, %v1757
        %v1772 = vpack.c.bf16 %v1760, %v1759
        %v1773 = vpack.c.bf16 %v1762, %v1761
        %v1774 = vpack.c.bf16 %v1764, %v1763
        %v1775 = vpack.c.bf16 %v1766, %v1765
        %v1776 = vpack.c.bf16 %v1768, %v1767
        %v1777 = vld [vmem:[%s7] sm:$0xf]
        %v1778 = vld [vmem:[%s7 + $0x4] sm:$0xf]
        %v1779 = vld [vmem:[%s7 + $0x8] sm:$0xf]
        %v1780 = vld [vmem:[%s7 + $0xc] sm:$0xf]
        %v1781 = vld [vmem:[%s8] sm:$0x1]
        %v1783 = vlaneseq
        %v1784 = vshrl.u32 %v1783, 7
        %v1785 = vsub.s32 0, %v1784
        %v1786 = vrot.slane %v1781, %v1785
        %v1792 = vunpack.c.l.b16 %v1777
        %v1793 = vunpack.c.l.b16 %v1778
        %v1794 = vunpack.c.l.b16 %v1779
        %v1795 = vunpack.c.l.b16 %v1780
        %v1796 = vpack.c.b16 %v1793, %v1792
        %v1797 = vpack.c.b16 %v1795, %v1794
        %v1801 = vsel %vm437, %v1769, 0
        %v1804 = vsel %vm437, %v1770, 0
        %v1807 = vsel %vm437, %v1771, 0
        %v1810 = vsel %vm437, %v1772, 0
        %v1813 = vsel %vm437, %v1773, 0
        %v1816 = vsel %vm437, %v1774, 0
        %v1819 = vsel %vm437, %v1775, 0
        %v1822 = vsel %vm437, %v1776, 0
        %1824 = vmatprep.subr.bf16.mxu0 0
        %1825 = vmatpush1.bf16.msra.mxu0 %v1796
        %1826 = vmatprep.subr.bf16.mxu0 0
        %1827 = vmatpush1.bf16.msra.mxu0 %v1797
        %1828 = vmatprep.subr.bf16.mxu0 0
        %1829 = vmatpush1.bf16.msra.mxu0 0
        %1830 = vmatprep.subr.bf16.mxu0 0
        %1831 = vmatpush1.bf16.msra.mxu0 0
        %1832 = vmatprep.subr.bf16.mxu0 0
        %1833 = vmatpush1.bf16.msra.mxu0 0
        %1834 = vmatprep.subr.bf16.mxu0 0
        %1835 = vmatpush1.bf16.msra.mxu0 0
        %1836 = vmatprep.subr.bf16.mxu0 0
        %1837 = vmatpush1.bf16.msra.mxu0 0
        %1838 = vmatprep.subr.bf16.mxu0 0
        %1839 = vmatpush1.bf16.msra.mxu0 0
        %1840 = vmatprep.subr.bf16.mxu0 0
        %1841 = vmatpush1.bf16.msra.mxu0 0
        %1842 = vmatprep.subr.bf16.mxu0 0
        %1843 = vmatpush1.bf16.msra.mxu0 0
        %1844 = vmatprep.subr.bf16.mxu0 0
        %1845 = vmatpush1.bf16.msra.mxu0 0
        %1846 = vmatprep.subr.bf16.mxu0 0
        %1847 = vmatpush1.bf16.msra.mxu0 0
        %1848 = vmatprep.subr.bf16.mxu0 0
        %1849 = vmatpush1.bf16.msra.mxu0 0
        %1850 = vmatprep.subr.bf16.mxu0 0
        %1851 = vmatpush1.bf16.msra.mxu0 0
        %1852 = vmatprep.subr.bf16.mxu0 0
        %1853 = vmatpush1.bf16.msra.mxu0 0
        %1854 = vmatprep.subr.bf16.mxu0 0
        %1855 = vmatpush1.bf16.msra.mxu0 0
        %1856 = vmatprep.mubr.bf16.mxu0 0
        %1857 = vmatmul.mubr.bf16.gmra.mrb[0].mxu0 %v1801
        %v1858 = vpop.f32.mrb[0].mxu0
        %v1859 = vadd.f32 %v1786, %v1858
        %v1860 = vpop.f32.mrb[0].mxu0
        %v1861 = vpop.f32.mrb[0].mxu0
        %v1862 = vadd.f32 %v1786, %v1861
        %v1863 = vpop.f32.mrb[0].mxu0
        %1864 = vmatprep.mubr.bf16.mxu0 0
        %1865 = vmatmul.mubr.bf16.gmra.mrb[0].mxu0 %v1804
        %v1866 = vpop.f32.mrb[0].mxu0
        %v1867 = vadd.f32 %v1786, %v1866
        %v1868 = vpop.f32.mrb[0].mxu0
        %v1869 = vpop.f32.mrb[0].mxu0
        %v1870 = vadd.f32 %v1786, %v1869
        %v1871 = vpop.f32.mrb[0].mxu0
        %1872 = vmatprep.mubr.bf16.mxu0 0
        %1873 = vmatmul.mubr.bf16.gmra.mrb[0].mxu0 %v1807
        %v1874 = vpop.f32.mrb[0].mxu0
        %v1875 = vadd.f32 %v1786, %v1874
        %v1876 = vpop.f32.mrb[0].mxu0
        %v1877 = vpop.f32.mrb[0].mxu0
        %v1878 = vadd.f32 %v1786, %v1877
        %v1879 = vpop.f32.mrb[0].mxu0
        %1880 = vmatprep.mubr.bf16.mxu0 0
        %1881 = vmatmul.mubr.bf16.gmra.mrb[0].mxu0 %v1810
        %v1882 = vpop.f32.mrb[0].mxu0
        %v1883 = vadd.f32 %v1786, %v1882
        %v1884 = vpop.f32.mrb[0].mxu0
        %v1885 = vpop.f32.mrb[0].mxu0
        %v1886 = vadd.f32 %v1786, %v1885
        %v1887 = vpop.f32.mrb[0].mxu0
        %1888 = vmatprep.mubr.bf16.mxu0 0
        %1889 = vmatmul.mubr.bf16.gmra.mrb[0].mxu0 %v1813
        %v1890 = vpop.f32.mrb[0].mxu0
        %v1891 = vadd.f32 %v1786, %v1890
        %v1892 = vpop.f32.mrb[0].mxu0
        %v1893 = vpop.f32.mrb[0].mxu0
        %v1894 = vadd.f32 %v1786, %v1893
        %v1895 = vpop.f32.mrb[0].mxu0
        %1896 = vmatprep.mubr.bf16.mxu0 0
        %1897 = vmatmul.mubr.bf16.gmra.mrb[0].mxu0 %v1816
        %v1898 = vpop.f32.mrb[0].mxu0
        %v1899 = vadd.f32 %v1786, %v1898
        %v1900 = vpop.f32.mrb[0].mxu0
        %v1901 = vpop.f32.mrb[0].mxu0
        %v1902 = vadd.f32 %v1786, %v1901
        %v1903 = vpop.f32.mrb[0].mxu0
        %1904 = vmatprep.mubr.bf16.mxu0 0
        %1905 = vmatmul.mubr.bf16.gmra.mrb[0].mxu0 %v1819
        %v1906 = vpop.f32.mrb[0].mxu0
        %v1907 = vadd.f32 %v1786, %v1906
        %v1908 = vpop.f32.mrb[0].mxu0
        %v1909 = vpop.f32.mrb[0].mxu0
        %v1910 = vadd.f32 %v1786, %v1909
        %v1911 = vpop.f32.mrb[0].mxu0
        %1912 = vmatprep.mubr.bf16.mxu0 0
        %1913 = vmatmul.mubr.bf16.gmra.mrb[0].mxu0 %v1822
        %v1914 = vpop.f32.mrb[0].mxu0
        %v1915 = vadd.f32 %v1786, %v1914
        %v1916 = vpop.f32.mrb[0].mxu0
        %v1917 = vpop.f32.mrb[0].mxu0
        %v1918 = vadd.f32 %v1786, %v1917
        %v1919 = vpop.f32.mrb[0].mxu0
        %1920 = vdwg.mxu0
        %v1921 = vmax.f32 %v1859, 0.0
        %v1922 = vmax.f32 %v1862, 0.0
        %v1923 = vmax.f32 %v1867, 0.0
        %v1924 = vmax.f32 %v1870, 0.0
        %v1925 = vmax.f32 %v1875, 0.0
        %v1926 = vmax.f32 %v1878, 0.0
        %v1927 = vmax.f32 %v1883, 0.0
        %v1928 = vmax.f32 %v1886, 0.0
        %v1929 = vmax.f32 %v1891, 0.0
        %v1930 = vmax.f32 %v1894, 0.0
        %v1931 = vmax.f32 %v1899, 0.0
        %v1932 = vmax.f32 %v1902, 0.0
        %v1933 = vmax.f32 %v1907, 0.0
        %v1934 = vmax.f32 %v1910, 0.0
        %v1935 = vmax.f32 %v1915, 0.0
        %v1936 = vmax.f32 %v1918, 0.0
        %v1937 = vld [vmem:[%s9] sm:$0x1]
        %v1938 = vpack.c.bf16 %v1922, %v1921
        %v1939 = vpack.c.bf16 %v1924, %v1923
        %v1940 = vpack.c.bf16 %v1926, %v1925
        %v1941 = vpack.c.bf16 %v1928, %v1927
        %v1942 = vpack.c.bf16 %v1930, %v1929
        %v1943 = vpack.c.bf16 %v1932, %v1931
        %v1944 = vpack.c.bf16 %v1934, %v1933
        %v1945 = vpack.c.bf16 %v1936, %v1935
        %v1946 = vld [vmem:[#allocation2] sm:$0x1]
        %1948 = vset.pattern.permute.xlu0 0
        %1949 = vperm.xlu0 %1948, %v1946
        %v1950 = vpop.permute.xlu0 %1949
        %v1952 = vlaneseq
        %v1953 = vshrl.u32 %v1952, 7
        %v1954 = vsub.s32 0, %v1953
        %v1955 = vrot.slane %v1950, %v1954
        %v1957 = vsel %vm1139, %v1937, 0
        %v1960 = vsel %vm1139, %v1938, 0
        %v1963 = vsel %vm1139, %v1939, 0
        %v1966 = vsel %vm1139, %v1940, 0
        %v1969 = vsel %vm1139, %v1941, 0
        %v1972 = vsel %vm1139, %v1942, 0
        %v1975 = vsel %vm1139, %v1943, 0
        %v1978 = vsel %vm1139, %v1944, 0
        %v1981 = vsel %vm1139, %v1945, 0
        %1983 = vmatprep.subr.bf16.mxu0 0
        %1984 = vmatpush1.bf16.xpose.msra.mxu0 %v1960
        %1985 = vmatprep.subr.bf16.mxu0 0
        %1986 = vmatpush1.bf16.xpose.msra.mxu0 %v1963
        %1987 = vmatprep.subr.bf16.mxu0 0
        %1988 = vmatpush1.bf16.xpose.msra.mxu0 %v1966
        %1989 = vmatprep.subr.bf16.mxu0 0
        %1990 = vmatpush1.bf16.xpose.msra.mxu0 %v1969
        %1991 = vmatprep.subr.bf16.mxu0 0
        %1992 = vmatpush1.bf16.xpose.msra.mxu0 %v1972
        %1993 = vmatprep.subr.bf16.mxu0 0
        %1994 = vmatpush1.bf16.xpose.msra.mxu0 %v1975
        %1995 = vmatprep.subr.bf16.mxu0 0
        %1996 = vmatpush1.bf16.xpose.msra.mxu0 %v1978
        %1997 = vmatprep.subr.bf16.mxu0 0
        %1998 = vmatpush1.bf16.xpose.msra.mxu0 %v1981
        %1999 = vmatprep.subr.bf16.mxu0 0
        %2000 = vmatpush1.bf16.xpose.msra.mxu0 0
        %2001 = vmatprep.subr.bf16.mxu0 0
        %2002 = vmatpush1.bf16.xpose.msra.mxu0 0
        %2003 = vmatprep.subr.bf16.mxu0 0
        %2004 = vmatpush1.bf16.xpose.msra.mxu0 0
        %2005 = vmatprep.subr.bf16.mxu0 0
        %2006 = vmatpush1.bf16.xpose.msra.mxu0 0
        %2007 = vmatprep.subr.bf16.mxu0 0
        %2008 = vmatpush1.bf16.xpose.msra.mxu0 0
        %2009 = vmatprep.subr.bf16.mxu0 0
        %2010 = vmatpush1.bf16.xpose.msra.mxu0 0
        %2011 = vmatprep.subr.bf16.mxu0 0
        %2012 = vmatpush1.bf16.xpose.msra.mxu0 0
        %2013 = vmatprep.subr.bf16.mxu0 0
        %2014 = vmatpush1.bf16.xpose.msra.mxu0 0
        %2015 = vmatprep.mubr.bf16.mxu0 0
        %2016 = vmatmul.mubr.bf16.gmra.mrb[0].mxu0 %v1957
        %v2017 = vpop.f32.mrb[0].mxu0
        %v2018 = vadd.f32 %v1955, %v2017
        %v2019 = vpop.f32.mrb[0].mxu0
        %v2020 = vpop.f32.mrb[0].mxu0
        %v2021 = vpop.f32.mrb[0].mxu0
        %2022 = vdwg.mxu0
        %2023 = vst [vmem:[%s382 + $0x1] sm:$0x1] %v2018
        %s2024 = scalar_lea.vmem %s387, 256
        %v2025 = vld [vmem:[%s2024] sm:$0xff]
        %v2026 = vld [vmem:[%s2024 + $0x8] sm:$0xff]
        %v2027 = vld [vmem:[%s2024 + $0x10] sm:$0xff]
        %v2028 = vld [vmem:[%s2024 + $0x18] sm:$0xff]
        %v2029 = vld [vmem:[%s2024 + $0x20] sm:$0xff]
        %v2030 = vld [vmem:[%s2024 + $0x28] sm:$0xff]
        %v2031 = vld [vmem:[%s2024 + $0x30] sm:$0xff]
        %v2032 = vld [vmem:[%s2024 + $0x38] sm:$0xff]
        %v2033 = vld [vmem:[%s2024 + $0x40] sm:$0xff]
        %v2034 = vld [vmem:[%s2024 + $0x48] sm:$0xff]
        %v2035 = vld [vmem:[%s2024 + $0x50] sm:$0xff]
        %v2036 = vld [vmem:[%s2024 + $0x58] sm:$0xff]
        %v2037 = vld [vmem:[%s2024 + $0x60] sm:$0xff]
        %v2038 = vld [vmem:[%s2024 + $0x68] sm:$0xff]
        %v2039 = vld [vmem:[%s2024 + $0x70] sm:$0xff]
        %v2040 = vld [vmem:[%s2024 + $0x78] sm:$0xff]
        %v2041 = vpack.c.bf16 %v2026, %v2025
        %v2042 = vpack.c.bf16 %v2028, %v2027
        %v2043 = vpack.c.bf16 %v2030, %v2029
        %v2044 = vpack.c.bf16 %v2032, %v2031
        %v2045 = vpack.c.bf16 %v2034, %v2033
        %v2046 = vpack.c.bf16 %v2036, %v2035
        %v2047 = vpack.c.bf16 %v2038, %v2037
        %v2048 = vpack.c.bf16 %v2040, %v2039
        %v2049 = vld [vmem:[%s1] sm:$0xf]
        %v2050 = vld [vmem:[%s1 + $0x4] sm:$0xf]
        %v2051 = vld [vmem:[%s1 + $0x8] sm:$0xf]
        %v2052 = vld [vmem:[%s1 + $0xc] sm:$0xf]
        %v2053 = vld [vmem:[%s2] sm:$0x1]
        %v2055 = vlaneseq
        %v2056 = vshrl.u32 %v2055, 7
        %v2057 = vsub.s32 0, %v2056
        %v2058 = vrot.slane %v2053, %v2057
        %v2064 = vunpack.c.l.b16 %v2049
        %v2065 = vunpack.c.l.b16 %v2050
        %v2066 = vunpack.c.l.b16 %v2051
        %v2067 = vunpack.c.l.b16 %v2052
        %v2068 = vpack.c.b16 %v2065, %v2064
        %v2069 = vpack.c.b16 %v2067, %v2066
        %v2073 = vsel %vm437, %v2041, 0
        %v2076 = vsel %vm437, %v2042, 0
        %v2079 = vsel %vm437, %v2043, 0
        %v2082 = vsel %vm437, %v2044, 0
        %v2085 = vsel %vm437, %v2045, 0
        %v2088 = vsel %vm437, %v2046, 0
        %v2091 = vsel %vm437, %v2047, 0
        %v2094 = vsel %vm437, %v2048, 0
        %2096 = vmatprep.subr.bf16.mxu0 0
        %2097 = vmatpush1.bf16.msra.mxu0 %v2068
        %2098 = vmatprep.subr.bf16.mxu0 0
        %2099 = vmatpush1.bf16.msra.mxu0 %v2069
        %2100 = vmatprep.subr.bf16.mxu0 0
        %2101 = vmatpush1.bf16.msra.mxu0 0
        %2102 = vmatprep.subr.bf16.mxu0 0
        %2103 = vmatpush1.bf16.msra.mxu0 0
        %2104 = vmatprep.subr.bf16.mxu0 0
        %2105 = vmatpush1.bf16.msra.mxu0 0
        %2106 = vmatprep.subr.bf16.mxu0 0
        %2107 = vmatpush1.bf16.msra.mxu0 0
        %2108 = vmatprep.subr.bf16.mxu0 0
        %2109 = vmatpush1.bf16.msra.mxu0 0
        %2110 = vmatprep.subr.bf16.mxu0 0
        %2111 = vmatpush1.bf16.msra.mxu0 0
        %2112 = vmatprep.subr.bf16.mxu0 0
        %2113 = vmatpush1.bf16.msra.mxu0 0
        %2114 = vmatprep.subr.bf16.mxu0 0
        %2115 = vmatpush1.bf16.msra.mxu0 0
        %2116 = vmatprep.subr.bf16.mxu0 0
        %2117 = vmatpush1.bf16.msra.mxu0 0
        %2118 = vmatprep.subr.bf16.mxu0 0
        %2119 = vmatpush1.bf16.msra.mxu0 0
        %2120 = vmatprep.subr.bf16.mxu0 0
        %2121 = vmatpush1.bf16.msra.mxu0 0
        %2122 = vmatprep.subr.bf16.mxu0 0
        %2123 = vmatpush1.bf16.msra.mxu0 0
        %2124 = vmatprep.subr.bf16.mxu0 0
        %2125 = vmatpush1.bf16.msra.mxu0 0
        %2126 = vmatprep.subr.bf16.mxu0 0
        %2127 = vmatpush1.bf16.msra.mxu0 0
        %2128 = vmatprep.mubr.bf16.mxu0 0
        %2129 = vmatmul.mubr.bf16.gmra.mrb[0].mxu0 %v2073
        %v2130 = vpop.f32.mrb[0].mxu0
        %v2131 = vadd.f32 %v2058, %v2130
        %v2132 = vpop.f32.mrb[0].mxu0
        %v2133 = vpop.f32.mrb[0].mxu0
        %v2134 = vadd.f32 %v2058, %v2133
        %v2135 = vpop.f32.mrb[0].mxu0
        %2136 = vmatprep.mubr.bf16.mxu0 0
        %2137 = vmatmul.mubr.bf16.gmra.mrb[0].mxu0 %v2076
        %v2138 = vpop.f32.mrb[0].mxu0
        %v2139 = vadd.f32 %v2058, %v2138
        %v2140 = vpop.f32.mrb[0].mxu0
        %v2141 = vpop.f32.mrb[0].mxu0
        %v2142 = vadd.f32 %v2058, %v2141
        %v2143 = vpop.f32.mrb[0].mxu0
        %2144 = vmatprep.mubr.bf16.mxu0 0
        %2145 = vmatmul.mubr.bf16.gmra.mrb[0].mxu0 %v2079
        %v2146 = vpop.f32.mrb[0].mxu0
        %v2147 = vadd.f32 %v2058, %v2146
        %v2148 = vpop.f32.mrb[0].mxu0
        %v2149 = vpop.f32.mrb[0].mxu0
        %v2150 = vadd.f32 %v2058, %v2149
        %v2151 = vpop.f32.mrb[0].mxu0
        %2152 = vmatprep.mubr.bf16.mxu0 0
        %2153 = vmatmul.mubr.bf16.gmra.mrb[0].mxu0 %v2082
        %v2154 = vpop.f32.mrb[0].mxu0
        %v2155 = vadd.f32 %v2058, %v2154
        %v2156 = vpop.f32.mrb[0].mxu0
        %v2157 = vpop.f32.mrb[0].mxu0
        %v2158 = vadd.f32 %v2058, %v2157
        %v2159 = vpop.f32.mrb[0].mxu0
        %2160 = vmatprep.mubr.bf16.mxu0 0
        %2161 = vmatmul.mubr.bf16.gmra.mrb[0].mxu0 %v2085
        %v2162 = vpop.f32.mrb[0].mxu0
        %v2163 = vadd.f32 %v2058, %v2162
        %v2164 = vpop.f32.mrb[0].mxu0
        %v2165 = vpop.f32.mrb[0].mxu0
        %v2166 = vadd.f32 %v2058, %v2165
        %v2167 = vpop.f32.mrb[0].mxu0
        %2168 = vmatprep.mubr.bf16.mxu0 0
        %2169 = vmatmul.mubr.bf16.gmra.mrb[0].mxu0 %v2088
        %v2170 = vpop.f32.mrb[0].mxu0
        %v2171 = vadd.f32 %v2058, %v2170
        %v2172 = vpop.f32.mrb[0].mxu0
        %v2173 = vpop.f32.mrb[0].mxu0
        %v2174 = vadd.f32 %v2058, %v2173
        %v2175 = vpop.f32.mrb[0].mxu0
        %2176 = vmatprep.mubr.bf16.mxu0 0
        %2177 = vmatmul.mubr.bf16.gmra.mrb[0].mxu0 %v2091
        %v2178 = vpop.f32.mrb[0].mxu0
        %v2179 = vadd.f32 %v2058, %v2178
        %v2180 = vpop.f32.mrb[0].mxu0
        %v2181 = vpop.f32.mrb[0].mxu0
        %v2182 = vadd.f32 %v2058, %v2181
        %v2183 = vpop.f32.mrb[0].mxu0
        %2184 = vmatprep.mubr.bf16.mxu0 0
        %2185 = vmatmul.mubr.bf16.gmra.mrb[0].mxu0 %v2094
        %v2186 = vpop.f32.mrb[0].mxu0
        %v2187 = vadd.f32 %v2058, %v2186
        %v2188 = vpop.f32.mrb[0].mxu0
        %v2189 = vpop.f32.mrb[0].mxu0
        %v2190 = vadd.f32 %v2058, %v2189
        %v2191 = vpop.f32.mrb[0].mxu0
        %2192 = vdwg.mxu0
        %v2193 = vmax.f32 %v2131, 0.0
        %v2194 = vmax.f32 %v2134, 0.0
        %v2195 = vmax.f32 %v2139, 0.0
        %v2196 = vmax.f32 %v2142, 0.0
        %v2197 = vmax.f32 %v2147, 0.0
        %v2198 = vmax.f32 %v2150, 0.0
        %v2199 = vmax.f32 %v2155, 0.0
        %v2200 = vmax.f32 %v2158, 0.0
        %v2201 = vmax.f32 %v2163, 0.0
        %v2202 = vmax.f32 %v2166, 0.0
        %v2203 = vmax.f32 %v2171, 0.0
        %v2204 = vmax.f32 %v2174, 0.0
        %v2205 = vmax.f32 %v2179, 0.0
        %v2206 = vmax.f32 %v2182, 0.0
        %v2207 = vmax.f32 %v2187, 0.0
        %v2208 = vmax.f32 %v2190, 0.0
        %v2209 = vpack.c.bf16 %v2194, %v2193
        %v2210 = vpack.c.bf16 %v2196, %v2195
        %v2211 = vpack.c.bf16 %v2198, %v2197
        %v2212 = vpack.c.bf16 %v2200, %v2199
        %v2213 = vpack.c.bf16 %v2202, %v2201
        %v2214 = vpack.c.bf16 %v2204, %v2203
        %v2215 = vpack.c.bf16 %v2206, %v2205
        %v2216 = vpack.c.bf16 %v2208, %v2207
        %v2217 = vld [vmem:[%s3] sm:$0xf]
        %v2218 = vld [vmem:[%s3 + $0x4] sm:$0xf]
        %v2219 = vld [vmem:[%s3 + $0x8] sm:$0xf]
        %v2220 = vld [vmem:[%s3 + $0xc] sm:$0xf]
        %v2221 = vld [vmem:[%s3 + $0x10] sm:$0xf]
        %v2222 = vld [vmem:[%s3 + $0x14] sm:$0xf]
        %v2223 = vld [vmem:[%s3 + $0x18] sm:$0xf]
        %v2224 = vld [vmem:[%s3 + $0x1c] sm:$0xf]
        %v2225 = vld [vmem:[%s3 + $0x20] sm:$0xf]
        %v2226 = vld [vmem:[%s3 + $0x24] sm:$0xf]
        %v2227 = vld [vmem:[%s3 + $0x28] sm:$0xf]
        %v2228 = vld [vmem:[%s3 + $0x2c] sm:$0xf]
        %v2229 = vld [vmem:[%s3 + $0x30] sm:$0xf]
        %v2230 = vld [vmem:[%s3 + $0x34] sm:$0xf]
        %v2231 = vld [vmem:[%s3 + $0x38] sm:$0xf]
        %v2232 = vld [vmem:[%s3 + $0x3c] sm:$0xf]
        %v2233 = vld [vmem:[%s4] sm:$0x1]
        %v2235 = vlaneseq
        %v2236 = vshrl.u32 %v2235, 7
        %v2237 = vsub.s32 0, %v2236
        %v2238 = vrot.slane %v2233, %v2237
        %v2256 = vunpack.c.l.b16 %v2217
        %v2257 = vunpack.c.l.b16 %v2218
        %v2258 = vunpack.c.l.b16 %v2219
        %v2259 = vunpack.c.l.b16 %v2220
        %v2260 = vunpack.c.l.b16 %v2221
        %v2261 = vunpack.c.l.b16 %v2222
        %v2262 = vunpack.c.l.b16 %v2223
        %v2263 = vunpack.c.l.b16 %v2224
        %v2264 = vunpack.c.l.b16 %v2225
        %v2265 = vunpack.c.l.b16 %v2226
        %v2266 = vunpack.c.l.b16 %v2227
        %v2267 = vunpack.c.l.b16 %v2228
        %v2268 = vunpack.c.l.b16 %v2229
        %v2269 = vunpack.c.l.b16 %v2230
        %v2270 = vunpack.c.l.b16 %v2231
        %v2271 = vunpack.c.l.b16 %v2232
        %v2272 = vpack.c.b16 %v2257, %v2256
        %v2273 = vpack.c.b16 %v2259, %v2258
        %v2274 = vpack.c.b16 %v2261, %v2260
        %v2275 = vpack.c.b16 %v2263, %v2262
        %v2276 = vpack.c.b16 %v2265, %v2264
        %v2277 = vpack.c.b16 %v2267, %v2266
        %v2278 = vpack.c.b16 %v2269, %v2268
        %v2279 = vpack.c.b16 %v2271, %v2270
        %2288 = vmatprep.subr.bf16.mxu0 0
        %2289 = vmatpush1.bf16.msra.mxu0 %v2272
        %2290 = vmatprep.subr.bf16.mxu0 0
        %2291 = vmatpush1.bf16.msra.mxu0 %v2273
        %2292 = vmatprep.subr.bf16.mxu0 0
        %2293 = vmatpush1.bf16.msra.mxu0 %v2274
        %2294 = vmatprep.subr.bf16.mxu0 0
        %2295 = vmatpush1.bf16.msra.mxu0 %v2275
        %2296 = vmatprep.subr.bf16.mxu0 0
        %2297 = vmatpush1.bf16.msra.mxu0 %v2276
        %2298 = vmatprep.subr.bf16.mxu0 0
        %2299 = vmatpush1.bf16.msra.mxu0 %v2277
        %2300 = vmatprep.subr.bf16.mxu0 0
        %2301 = vmatpush1.bf16.msra.mxu0 %v2278
        %2302 = vmatprep.subr.bf16.mxu0 0
        %2303 = vmatpush1.bf16.msra.mxu0 %v2279
        %2304 = vmatprep.subr.bf16.mxu0 0
        %2305 = vmatpush1.bf16.msra.mxu0 0
        %2306 = vmatprep.subr.bf16.mxu0 0
        %2307 = vmatpush1.bf16.msra.mxu0 0
        %2308 = vmatprep.subr.bf16.mxu0 0
        %2309 = vmatpush1.bf16.msra.mxu0 0
        %2310 = vmatprep.subr.bf16.mxu0 0
        %2311 = vmatpush1.bf16.msra.mxu0 0
        %2312 = vmatprep.subr.bf16.mxu0 0
        %2313 = vmatpush1.bf16.msra.mxu0 0
        %2314 = vmatprep.subr.bf16.mxu0 0
        %2315 = vmatpush1.bf16.msra.mxu0 0
        %2316 = vmatprep.subr.bf16.mxu0 0
        %2317 = vmatpush1.bf16.msra.mxu0 0
        %2318 = vmatprep.subr.bf16.mxu0 0
        %2319 = vmatpush1.bf16.msra.mxu0 0
        %2320 = vmatprep.mubr.bf16.mxu0 0
        %2321 = vmatmul.mubr.bf16.gmra.mrb[0].mxu0 %v2209
        %v2322 = vpop.f32.mrb[0].mxu0
        %v2323 = vadd.f32 %v2238, %v2322
        %v2324 = vpop.f32.mrb[0].mxu0
        %v2325 = vpop.f32.mrb[0].mxu0
        %v2326 = vadd.f32 %v2238, %v2325
        %v2327 = vpop.f32.mrb[0].mxu0
        %2328 = vmatprep.mubr.bf16.mxu0 0
        %2329 = vmatmul.mubr.bf16.gmra.mrb[0].mxu0 %v2210
        %v2330 = vpop.f32.mrb[0].mxu0
        %v2331 = vadd.f32 %v2238, %v2330
        %v2332 = vpop.f32.mrb[0].mxu0
        %v2333 = vpop.f32.mrb[0].mxu0
        %v2334 = vadd.f32 %v2238, %v2333
        %v2335 = vpop.f32.mrb[0].mxu0
        %2336 = vmatprep.mubr.bf16.mxu0 0
        %2337 = vmatmul.mubr.bf16.gmra.mrb[0].mxu0 %v2211
        %v2338 = vpop.f32.mrb[0].mxu0
        %v2339 = vadd.f32 %v2238, %v2338
        %v2340 = vpop.f32.mrb[0].mxu0
        %v2341 = vpop.f32.mrb[0].mxu0
        %v2342 = vadd.f32 %v2238, %v2341
        %v2343 = vpop.f32.mrb[0].mxu0
        %2344 = vmatprep.mubr.bf16.mxu0 0
        %2345 = vmatmul.mubr.bf16.gmra.mrb[0].mxu0 %v2212
        %v2346 = vpop.f32.mrb[0].mxu0
        %v2347 = vadd.f32 %v2238, %v2346
        %v2348 = vpop.f32.mrb[0].mxu0
        %v2349 = vpop.f32.mrb[0].mxu0
        %v2350 = vadd.f32 %v2238, %v2349
        %v2351 = vpop.f32.mrb[0].mxu0
        %2352 = vmatprep.mubr.bf16.mxu0 0
        %2353 = vmatmul.mubr.bf16.gmra.mrb[0].mxu0 %v2213
        %v2354 = vpop.f32.mrb[0].mxu0
        %v2355 = vadd.f32 %v2238, %v2354
        %v2356 = vpop.f32.mrb[0].mxu0
        %v2357 = vpop.f32.mrb[0].mxu0
        %v2358 = vadd.f32 %v2238, %v2357
        %v2359 = vpop.f32.mrb[0].mxu0
        %2360 = vmatprep.mubr.bf16.mxu0 0
        %2361 = vmatmul.mubr.bf16.gmra.mrb[0].mxu0 %v2214
        %v2362 = vpop.f32.mrb[0].mxu0
        %v2363 = vadd.f32 %v2238, %v2362
        %v2364 = vpop.f32.mrb[0].mxu0
        %v2365 = vpop.f32.mrb[0].mxu0
        %v2366 = vadd.f32 %v2238, %v2365
        %v2367 = vpop.f32.mrb[0].mxu0
        %2368 = vmatprep.mubr.bf16.mxu0 0
        %2369 = vmatmul.mubr.bf16.gmra.mrb[0].mxu0 %v2215
        %v2370 = vpop.f32.mrb[0].mxu0
        %v2371 = vadd.f32 %v2238, %v2370
        %v2372 = vpop.f32.mrb[0].mxu0
        %v2373 = vpop.f32.mrb[0].mxu0
        %v2374 = vadd.f32 %v2238, %v2373
        %v2375 = vpop.f32.mrb[0].mxu0
        %2376 = vmatprep.mubr.bf16.mxu0 0
        %2377 = vmatmul.mubr.bf16.gmra.mrb[0].mxu0 %v2216
        %v2378 = vpop.f32.mrb[0].mxu0
        %v2379 = vadd.f32 %v2238, %v2378
        %v2380 = vpop.f32.mrb[0].mxu0
        %v2381 = vpop.f32.mrb[0].mxu0
        %v2382 = vadd.f32 %v2238, %v2381
        %v2383 = vpop.f32.mrb[0].mxu0
        %2384 = vdwg.mxu0
        %v2385 = vmax.f32 %v2323, 0.0
        %v2386 = vmax.f32 %v2326, 0.0
        %v2387 = vmax.f32 %v2331, 0.0
        %v2388 = vmax.f32 %v2334, 0.0
        %v2389 = vmax.f32 %v2339, 0.0
        %v2390 = vmax.f32 %v2342, 0.0
        %v2391 = vmax.f32 %v2347, 0.0
        %v2392 = vmax.f32 %v2350, 0.0
        %v2393 = vmax.f32 %v2355, 0.0
        %v2394 = vmax.f32 %v2358, 0.0
        %v2395 = vmax.f32 %v2363, 0.0
        %v2396 = vmax.f32 %v2366, 0.0
        %v2397 = vmax.f32 %v2371, 0.0
        %v2398 = vmax.f32 %v2374, 0.0
        %v2399 = vmax.f32 %v2379, 0.0
        %v2400 = vmax.f32 %v2382, 0.0
        %v2401 = vpack.c.bf16 %v2386, %v2385
        %v2402 = vpack.c.bf16 %v2388, %v2387
        %v2403 = vpack.c.bf16 %v2390, %v2389
        %v2404 = vpack.c.bf16 %v2392, %v2391
        %v2405 = vpack.c.bf16 %v2394, %v2393
        %v2406 = vpack.c.bf16 %v2396, %v2395
        %v2407 = vpack.c.bf16 %v2398, %v2397
        %v2408 = vpack.c.bf16 %v2400, %v2399
        %v2409 = vld [vmem:[%s5] sm:$0xf]
        %v2410 = vld [vmem:[%s5 + $0x4] sm:$0xf]
        %v2411 = vld [vmem:[%s5 + $0x8] sm:$0xf]
        %v2412 = vld [vmem:[%s5 + $0xc] sm:$0xf]
        %v2413 = vld [vmem:[%s5 + $0x10] sm:$0xf]
        %v2414 = vld [vmem:[%s5 + $0x14] sm:$0xf]
        %v2415 = vld [vmem:[%s5 + $0x18] sm:$0xf]
        %v2416 = vld [vmem:[%s5 + $0x1c] sm:$0xf]
        %v2417 = vld [vmem:[%s6] sm:$0x1]
        %v2419 = vlaneseq
        %v2420 = vshrl.u32 %v2419, 7
        %v2421 = vsub.s32 0, %v2420
        %v2422 = vrot.slane %v2417, %v2421
        %v2432 = vunpack.c.l.b16 %v2409
        %v2433 = vunpack.c.l.b16 %v2410
        %v2434 = vunpack.c.l.b16 %v2411
        %v2435 = vunpack.c.l.b16 %v2412
        %v2436 = vunpack.c.l.b16 %v2413
        %v2437 = vunpack.c.l.b16 %v2414
        %v2438 = vunpack.c.l.b16 %v2415
        %v2439 = vunpack.c.l.b16 %v2416
        %v2440 = vpack.c.b16 %v2433, %v2432
        %v2441 = vpack.c.b16 %v2435, %v2434
        %v2442 = vpack.c.b16 %v2437, %v2436
        %v2443 = vpack.c.b16 %v2439, %v2438
        %v2449 = vsel %vm814, %v2401, 0
        %v2452 = vsel %vm814, %v2402, 0
        %v2455 = vsel %vm814, %v2403, 0
        %v2458 = vsel %vm814, %v2404, 0
        %v2461 = vsel %vm814, %v2405, 0
        %v2464 = vsel %vm814, %v2406, 0
        %v2467 = vsel %vm814, %v2407, 0
        %v2470 = vsel %vm814, %v2408, 0
        %2472 = vmatprep.subr.bf16.mxu0 0
        %2473 = vmatpush1.bf16.msra.mxu0 %v2440
        %2474 = vmatprep.subr.bf16.mxu0 0
        %2475 = vmatpush1.bf16.msra.mxu0 %v2441
        %2476 = vmatprep.subr.bf16.mxu0 0
        %2477 = vmatpush1.bf16.msra.mxu0 %v2442
        %2478 = vmatprep.subr.bf16.mxu0 0
        %2479 = vmatpush1.bf16.msra.mxu0 %v2443
        %2480 = vmatprep.subr.bf16.mxu0 0
        %2481 = vmatpush1.bf16.msra.mxu0 0
        %2482 = vmatprep.subr.bf16.mxu0 0
        %2483 = vmatpush1.bf16.msra.mxu0 0
        %2484 = vmatprep.subr.bf16.mxu0 0
        %2485 = vmatpush1.bf16.msra.mxu0 0
        %2486 = vmatprep.subr.bf16.mxu0 0
        %2487 = vmatpush1.bf16.msra.mxu0 0
        %2488 = vmatprep.subr.bf16.mxu0 0
        %2489 = vmatpush1.bf16.msra.mxu0 0
        %2490 = vmatprep.subr.bf16.mxu0 0
        %2491 = vmatpush1.bf16.msra.mxu0 0
        %2492 = vmatprep.subr.bf16.mxu0 0
        %2493 = vmatpush1.bf16.msra.mxu0 0
        %2494 = vmatprep.subr.bf16.mxu0 0
        %2495 = vmatpush1.bf16.msra.mxu0 0
        %2496 = vmatprep.subr.bf16.mxu0 0
        %2497 = vmatpush1.bf16.msra.mxu0 0
        %2498 = vmatprep.subr.bf16.mxu0 0
        %2499 = vmatpush1.bf16.msra.mxu0 0
        %2500 = vmatprep.subr.bf16.mxu0 0
        %2501 = vmatpush1.bf16.msra.mxu0 0
        %2502 = vmatprep.subr.bf16.mxu0 0
        %2503 = vmatpush1.bf16.msra.mxu0 0
        %2504 = vmatprep.mubr.bf16.mxu0 0
        %2505 = vmatmul.mubr.bf16.gmra.mrb[0].mxu0 %v2449
        %v2506 = vpop.f32.mrb[0].mxu0
        %v2507 = vadd.f32 %v2422, %v2506
        %v2508 = vpop.f32.mrb[0].mxu0
        %v2509 = vpop.f32.mrb[0].mxu0
        %v2510 = vadd.f32 %v2422, %v2509
        %v2511 = vpop.f32.mrb[0].mxu0
        %2512 = vmatprep.mubr.bf16.mxu0 0
        %2513 = vmatmul.mubr.bf16.gmra.mrb[0].mxu0 %v2452
        %v2514 = vpop.f32.mrb[0].mxu0
        %v2515 = vadd.f32 %v2422, %v2514
        %v2516 = vpop.f32.mrb[0].mxu0
        %v2517 = vpop.f32.mrb[0].mxu0
        %v2518 = vadd.f32 %v2422, %v2517
        %v2519 = vpop.f32.mrb[0].mxu0
        %2520 = vmatprep.mubr.bf16.mxu0 0
        %2521 = vmatmul.mubr.bf16.gmra.mrb[0].mxu0 %v2455
        %v2522 = vpop.f32.mrb[0].mxu0
        %v2523 = vadd.f32 %v2422, %v2522
        %v2524 = vpop.f32.mrb[0].mxu0
        %v2525 = vpop.f32.mrb[0].mxu0
        %v2526 = vadd.f32 %v2422, %v2525
        %v2527 = vpop.f32.mrb[0].mxu0
        %2528 = vmatprep.mubr.bf16.mxu0 0
        %2529 = vmatmul.mubr.bf16.gmra.mrb[0].mxu0 %v2458
        %v2530 = vpop.f32.mrb[0].mxu0
        %v2531 = vadd.f32 %v2422, %v2530
        %v2532 = vpop.f32.mrb[0].mxu0
        %v2533 = vpop.f32.mrb[0].mxu0
        %v2534 = vadd.f32 %v2422, %v2533
        %v2535 = vpop.f32.mrb[0].mxu0
        %2536 = vmatprep.mubr.bf16.mxu0 0
        %2537 = vmatmul.mubr.bf16.gmra.mrb[0].mxu0 %v2461
        %v2538 = vpop.f32.mrb[0].mxu0
        %v2539 = vadd.f32 %v2422, %v2538
        %v2540 = vpop.f32.mrb[0].mxu0
        %v2541 = vpop.f32.mrb[0].mxu0
        %v2542 = vadd.f32 %v2422, %v2541
        %v2543 = vpop.f32.mrb[0].mxu0
        %2544 = vmatprep.mubr.bf16.mxu0 0
        %2545 = vmatmul.mubr.bf16.gmra.mrb[0].mxu0 %v2464
        %v2546 = vpop.f32.mrb[0].mxu0
        %v2547 = vadd.f32 %v2422, %v2546
        %v2548 = vpop.f32.mrb[0].mxu0
        %v2549 = vpop.f32.mrb[0].mxu0
        %v2550 = vadd.f32 %v2422, %v2549
        %v2551 = vpop.f32.mrb[0].mxu0
        %2552 = vmatprep.mubr.bf16.mxu0 0
        %2553 = vmatmul.mubr.bf16.gmra.mrb[0].mxu0 %v2467
        %v2554 = vpop.f32.mrb[0].mxu0
        %v2555 = vadd.f32 %v2422, %v2554
        %v2556 = vpop.f32.mrb[0].mxu0
        %v2557 = vpop.f32.mrb[0].mxu0
        %v2558 = vadd.f32 %v2422, %v2557
        %v2559 = vpop.f32.mrb[0].mxu0
        %2560 = vmatprep.mubr.bf16.mxu0 0
        %2561 = vmatmul.mubr.bf16.gmra.mrb[0].mxu0 %v2470
        %v2562 = vpop.f32.mrb[0].mxu0
        %v2563 = vadd.f32 %v2422, %v2562
        %v2564 = vpop.f32.mrb[0].mxu0
        %v2565 = vpop.f32.mrb[0].mxu0
        %v2566 = vadd.f32 %v2422, %v2565
        %v2567 = vpop.f32.mrb[0].mxu0
        %2568 = vdwg.mxu0
        %v2569 = vmax.f32 %v2507, 0.0
        %v2570 = vmax.f32 %v2510, 0.0
        %v2571 = vmax.f32 %v2515, 0.0
        %v2572 = vmax.f32 %v2518, 0.0
        %v2573 = vmax.f32 %v2523, 0.0
        %v2574 = vmax.f32 %v2526, 0.0
        %v2575 = vmax.f32 %v2531, 0.0
        %v2576 = vmax.f32 %v2534, 0.0
        %v2577 = vmax.f32 %v2539, 0.0
        %v2578 = vmax.f32 %v2542, 0.0
        %v2579 = vmax.f32 %v2547, 0.0
        %v2580 = vmax.f32 %v2550, 0.0
        %v2581 = vmax.f32 %v2555, 0.0
        %v2582 = vmax.f32 %v2558, 0.0
        %v2583 = vmax.f32 %v2563, 0.0
        %v2584 = vmax.f32 %v2566, 0.0
        %v2585 = vpack.c.bf16 %v2570, %v2569
        %v2586 = vpack.c.bf16 %v2572, %v2571
        %v2587 = vpack.c.bf16 %v2574, %v2573
        %v2588 = vpack.c.bf16 %v2576, %v2575
        %v2589 = vpack.c.bf16 %v2578, %v2577
        %v2590 = vpack.c.bf16 %v2580, %v2579
        %v2591 = vpack.c.bf16 %v2582, %v2581
        %v2592 = vpack.c.bf16 %v2584, %v2583
        %v2593 = vld [vmem:[%s7] sm:$0xf]
        %v2594 = vld [vmem:[%s7 + $0x4] sm:$0xf]
        %v2595 = vld [vmem:[%s7 + $0x8] sm:$0xf]
        %v2596 = vld [vmem:[%s7 + $0xc] sm:$0xf]
        %v2597 = vld [vmem:[%s8] sm:$0x1]
        %v2599 = vlaneseq
        %v2600 = vshrl.u32 %v2599, 7
        %v2601 = vsub.s32 0, %v2600
        %v2602 = vrot.slane %v2597, %v2601
        %v2608 = vunpack.c.l.b16 %v2593
        %v2609 = vunpack.c.l.b16 %v2594
        %v2610 = vunpack.c.l.b16 %v2595
        %v2611 = vunpack.c.l.b16 %v2596
        %v2612 = vpack.c.b16 %v2609, %v2608
        %v2613 = vpack.c.b16 %v2611, %v2610
        %v2617 = vsel %vm437, %v2585, 0
        %v2620 = vsel %vm437, %v2586, 0
        %v2623 = vsel %vm437, %v2587, 0
        %v2626 = vsel %vm437, %v2588, 0
        %v2629 = vsel %vm437, %v2589, 0
        %v2632 = vsel %vm437, %v2590, 0
        %v2635 = vsel %vm437, %v2591, 0
        %v2638 = vsel %vm437, %v2592, 0
        %2640 = vmatprep.subr.bf16.mxu0 0
        %2641 = vmatpush1.bf16.msra.mxu0 %v2612
        %2642 = vmatprep.subr.bf16.mxu0 0
        %2643 = vmatpush1.bf16.msra.mxu0 %v2613
        %2644 = vmatprep.subr.bf16.mxu0 0
        %2645 = vmatpush1.bf16.msra.mxu0 0
        %2646 = vmatprep.subr.bf16.mxu0 0
        %2647 = vmatpush1.bf16.msra.mxu0 0
        %2648 = vmatprep.subr.bf16.mxu0 0
        %2649 = vmatpush1.bf16.msra.mxu0 0
        %2650 = vmatprep.subr.bf16.mxu0 0
        %2651 = vmatpush1.bf16.msra.mxu0 0
        %2652 = vmatprep.subr.bf16.mxu0 0
        %2653 = vmatpush1.bf16.msra.mxu0 0
        %2654 = vmatprep.subr.bf16.mxu0 0
        %2655 = vmatpush1.bf16.msra.mxu0 0
        %2656 = vmatprep.subr.bf16.mxu0 0
        %2657 = vmatpush1.bf16.msra.mxu0 0
        %2658 = vmatprep.subr.bf16.mxu0 0
        %2659 = vmatpush1.bf16.msra.mxu0 0
        %2660 = vmatprep.subr.bf16.mxu0 0
        %2661 = vmatpush1.bf16.msra.mxu0 0
        %2662 = vmatprep.subr.bf16.mxu0 0
        %2663 = vmatpush1.bf16.msra.mxu0 0
        %2664 = vmatprep.subr.bf16.mxu0 0
        %2665 = vmatpush1.bf16.msra.mxu0 0
        %2666 = vmatprep.subr.bf16.mxu0 0
        %2667 = vmatpush1.bf16.msra.mxu0 0
        %2668 = vmatprep.subr.bf16.mxu0 0
        %2669 = vmatpush1.bf16.msra.mxu0 0
        %2670 = vmatprep.subr.bf16.mxu0 0
        %2671 = vmatpush1.bf16.msra.mxu0 0
        %2672 = vmatprep.mubr.bf16.mxu0 0
        %2673 = vmatmul.mubr.bf16.gmra.mrb[0].mxu0 %v2617
        %v2674 = vpop.f32.mrb[0].mxu0
        %v2675 = vadd.f32 %v2602, %v2674
        %v2676 = vpop.f32.mrb[0].mxu0
        %v2677 = vpop.f32.mrb[0].mxu0
        %v2678 = vadd.f32 %v2602, %v2677
        %v2679 = vpop.f32.mrb[0].mxu0
        %2680 = vmatprep.mubr.bf16.mxu0 0
        %2681 = vmatmul.mubr.bf16.gmra.mrb[0].mxu0 %v2620
        %v2682 = vpop.f32.mrb[0].mxu0
        %v2683 = vadd.f32 %v2602, %v2682
        %v2684 = vpop.f32.mrb[0].mxu0
        %v2685 = vpop.f32.mrb[0].mxu0
        %v2686 = vadd.f32 %v2602, %v2685
        %v2687 = vpop.f32.mrb[0].mxu0
        %2688 = vmatprep.mubr.bf16.mxu0 0
        %2689 = vmatmul.mubr.bf16.gmra.mrb[0].mxu0 %v2623
        %v2690 = vpop.f32.mrb[0].mxu0
        %v2691 = vadd.f32 %v2602, %v2690
        %v2692 = vpop.f32.mrb[0].mxu0
        %v2693 = vpop.f32.mrb[0].mxu0
        %v2694 = vadd.f32 %v2602, %v2693
        %v2695 = vpop.f32.mrb[0].mxu0
        %2696 = vmatprep.mubr.bf16.mxu0 0
        %2697 = vmatmul.mubr.bf16.gmra.mrb[0].mxu0 %v2626
        %v2698 = vpop.f32.mrb[0].mxu0
        %v2699 = vadd.f32 %v2602, %v2698
        %v2700 = vpop.f32.mrb[0].mxu0
        %v2701 = vpop.f32.mrb[0].mxu0
        %v2702 = vadd.f32 %v2602, %v2701
        %v2703 = vpop.f32.mrb[0].mxu0
        %2704 = vmatprep.mubr.bf16.mxu0 0
        %2705 = vmatmul.mubr.bf16.gmra.mrb[0].mxu0 %v2629
        %v2706 = vpop.f32.mrb[0].mxu0
        %v2707 = vadd.f32 %v2602, %v2706
        %v2708 = vpop.f32.mrb[0].mxu0
        %v2709 = vpop.f32.mrb[0].mxu0
        %v2710 = vadd.f32 %v2602, %v2709
        %v2711 = vpop.f32.mrb[0].mxu0
        %2712 = vmatprep.mubr.bf16.mxu0 0
        %2713 = vmatmul.mubr.bf16.gmra.mrb[0].mxu0 %v2632
        %v2714 = vpop.f32.mrb[0].mxu0
        %v2715 = vadd.f32 %v2602, %v2714
        %v2716 = vpop.f32.mrb[0].mxu0
        %v2717 = vpop.f32.mrb[0].mxu0
        %v2718 = vadd.f32 %v2602, %v2717
        %v2719 = vpop.f32.mrb[0].mxu0
        %2720 = vmatprep.mubr.bf16.mxu0 0
        %2721 = vmatmul.mubr.bf16.gmra.mrb[0].mxu0 %v2635
        %v2722 = vpop.f32.mrb[0].mxu0
        %v2723 = vadd.f32 %v2602, %v2722
        %v2724 = vpop.f32.mrb[0].mxu0
        %v2725 = vpop.f32.mrb[0].mxu0
        %v2726 = vadd.f32 %v2602, %v2725
        %v2727 = vpop.f32.mrb[0].mxu0
        %2728 = vmatprep.mubr.bf16.mxu0 0
        %2729 = vmatmul.mubr.bf16.gmra.mrb[0].mxu0 %v2638
        %v2730 = vpop.f32.mrb[0].mxu0
        %v2731 = vadd.f32 %v2602, %v2730
        %v2732 = vpop.f32.mrb[0].mxu0
        %v2733 = vpop.f32.mrb[0].mxu0
        %v2734 = vadd.f32 %v2602, %v2733
        %v2735 = vpop.f32.mrb[0].mxu0
        %2736 = vdwg.mxu0
        %v2737 = vmax.f32 %v2675, 0.0
        %v2738 = vmax.f32 %v2678, 0.0
        %v2739 = vmax.f32 %v2683, 0.0
        %v2740 = vmax.f32 %v2686, 0.0
        %v2741 = vmax.f32 %v2691, 0.0
        %v2742 = vmax.f32 %v2694, 0.0
        %v2743 = vmax.f32 %v2699, 0.0
        %v2744 = vmax.f32 %v2702, 0.0
        %v2745 = vmax.f32 %v2707, 0.0
        %v2746 = vmax.f32 %v2710, 0.0
        %v2747 = vmax.f32 %v2715, 0.0
        %v2748 = vmax.f32 %v2718, 0.0
        %v2749 = vmax.f32 %v2723, 0.0
        %v2750 = vmax.f32 %v2726, 0.0
        %v2751 = vmax.f32 %v2731, 0.0
        %v2752 = vmax.f32 %v2734, 0.0
        %v2753 = vld [vmem:[%s9] sm:$0x1]
        %v2754 = vpack.c.bf16 %v2738, %v2737
        %v2755 = vpack.c.bf16 %v2740, %v2739
        %v2756 = vpack.c.bf16 %v2742, %v2741
        %v2757 = vpack.c.bf16 %v2744, %v2743
        %v2758 = vpack.c.bf16 %v2746, %v2745
        %v2759 = vpack.c.bf16 %v2748, %v2747
        %v2760 = vpack.c.bf16 %v2750, %v2749
        %v2761 = vpack.c.bf16 %v2752, %v2751
        %v2762 = vld [vmem:[#allocation2] sm:$0x1]
        %2764 = vset.pattern.permute.xlu0 0
        %2765 = vperm.xlu0 %2764, %v2762
        %v2766 = vpop.permute.xlu0 %2765
        %v2768 = vlaneseq
        %v2769 = vshrl.u32 %v2768, 7
        %v2770 = vsub.s32 0, %v2769
        %v2771 = vrot.slane %v2766, %v2770
        %v2773 = vsel %vm1139, %v2753, 0
        %v2776 = vsel %vm1139, %v2754, 0
        %v2779 = vsel %vm1139, %v2755, 0
        %v2782 = vsel %vm1139, %v2756, 0
        %v2785 = vsel %vm1139, %v2757, 0
        %v2788 = vsel %vm1139, %v2758, 0
        %v2791 = vsel %vm1139, %v2759, 0
        %v2794 = vsel %vm1139, %v2760, 0
        %v2797 = vsel %vm1139, %v2761, 0
        %2799 = vmatprep.subr.bf16.mxu0 0
        %2800 = vmatpush1.bf16.xpose.msra.mxu0 %v2776
        %2801 = vmatprep.subr.bf16.mxu0 0
        %2802 = vmatpush1.bf16.xpose.msra.mxu0 %v2779
        %2803 = vmatprep.subr.bf16.mxu0 0
        %2804 = vmatpush1.bf16.xpose.msra.mxu0 %v2782
        %2805 = vmatprep.subr.bf16.mxu0 0
        %2806 = vmatpush1.bf16.xpose.msra.mxu0 %v2785
        %2807 = vmatprep.subr.bf16.mxu0 0
        %2808 = vmatpush1.bf16.xpose.msra.mxu0 %v2788
        %2809 = vmatprep.subr.bf16.mxu0 0
        %2810 = vmatpush1.bf16.xpose.msra.mxu0 %v2791
        %2811 = vmatprep.subr.bf16.mxu0 0
        %2812 = vmatpush1.bf16.xpose.msra.mxu0 %v2794
        %2813 = vmatprep.subr.bf16.mxu0 0
        %2814 = vmatpush1.bf16.xpose.msra.mxu0 %v2797
        %2815 = vmatprep.subr.bf16.mxu0 0
        %2816 = vmatpush1.bf16.xpose.msra.mxu0 0
        %2817 = vmatprep.subr.bf16.mxu0 0
        %2818 = vmatpush1.bf16.xpose.msra.mxu0 0
        %2819 = vmatprep.subr.bf16.mxu0 0
        %2820 = vmatpush1.bf16.xpose.msra.mxu0 0
        %2821 = vmatprep.subr.bf16.mxu0 0
        %2822 = vmatpush1.bf16.xpose.msra.mxu0 0
        %2823 = vmatprep.subr.bf16.mxu0 0
        %2824 = vmatpush1.bf16.xpose.msra.mxu0 0
        %2825 = vmatprep.subr.bf16.mxu0 0
        %2826 = vmatpush1.bf16.xpose.msra.mxu0 0
        %2827 = vmatprep.subr.bf16.mxu0 0
        %2828 = vmatpush1.bf16.xpose.msra.mxu0 0
        %2829 = vmatprep.subr.bf16.mxu0 0
        %2830 = vmatpush1.bf16.xpose.msra.mxu0 0
        %2831 = vmatprep.mubr.bf16.mxu0 0
        %2832 = vmatmul.mubr.bf16.gmra.mrb[0].mxu0 %v2773
        %v2833 = vpop.f32.mrb[0].mxu0
        %v2834 = vadd.f32 %v2771, %v2833
        %v2835 = vpop.f32.mrb[0].mxu0
        %v2836 = vpop.f32.mrb[0].mxu0
        %v2837 = vpop.f32.mrb[0].mxu0
        %2838 = vdwg.mxu0
        %2839 = vst [vmem:[%s382 + $0x2] sm:$0x1] %v2834
        %s2840 = scalar_lea.vmem %s387, 384
        %v2841 = vld [vmem:[%s2840] sm:$0xff]
        %v2842 = vld [vmem:[%s2840 + $0x8] sm:$0xff]
        %v2843 = vld [vmem:[%s2840 + $0x10] sm:$0xff]
        %v2844 = vld [vmem:[%s2840 + $0x18] sm:$0xff]
        %v2845 = vld [vmem:[%s2840 + $0x20] sm:$0xff]
        %v2846 = vld [vmem:[%s2840 + $0x28] sm:$0xff]
        %v2847 = vld [vmem:[%s2840 + $0x30] sm:$0xff]
        %v2848 = vld [vmem:[%s2840 + $0x38] sm:$0xff]
        %v2849 = vld [vmem:[%s2840 + $0x40] sm:$0xff]
        %v2850 = vld [vmem:[%s2840 + $0x48] sm:$0xff]
        %v2851 = vld [vmem:[%s2840 + $0x50] sm:$0xff]
        %v2852 = vld [vmem:[%s2840 + $0x58] sm:$0xff]
        %v2853 = vld [vmem:[%s2840 + $0x60] sm:$0xff]
        %v2854 = vld [vmem:[%s2840 + $0x68] sm:$0xff]
        %v2855 = vld [vmem:[%s2840 + $0x70] sm:$0xff]
        %v2856 = vld [vmem:[%s2840 + $0x78] sm:$0xff]
        %v2857 = vpack.c.bf16 %v2842, %v2841
        %v2858 = vpack.c.bf16 %v2844, %v2843
        %v2859 = vpack.c.bf16 %v2846, %v2845
        %v2860 = vpack.c.bf16 %v2848, %v2847
        %v2861 = vpack.c.bf16 %v2850, %v2849
        %v2862 = vpack.c.bf16 %v2852, %v2851
        %v2863 = vpack.c.bf16 %v2854, %v2853
        %v2864 = vpack.c.bf16 %v2856, %v2855
        %v2865 = vld [vmem:[%s1] sm:$0xf]
        %v2866 = vld [vmem:[%s1 + $0x4] sm:$0xf]
        %v2867 = vld [vmem:[%s1 + $0x8] sm:$0xf]
        %v2868 = vld [vmem:[%s1 + $0xc] sm:$0xf]
        %v2869 = vld [vmem:[%s2] sm:$0x1]
        %v2871 = vlaneseq
        %v2872 = vshrl.u32 %v2871, 7
        %v2873 = vsub.s32 0, %v2872
        %v2874 = vrot.slane %v2869, %v2873
        %v2880 = vunpack.c.l.b16 %v2865
        %v2881 = vunpack.c.l.b16 %v2866
        %v2882 = vunpack.c.l.b16 %v2867
        %v2883 = vunpack.c.l.b16 %v2868
        %v2884 = vpack.c.b16 %v2881, %v2880
        %v2885 = vpack.c.b16 %v2883, %v2882
        %v2889 = vsel %vm437, %v2857, 0
        %v2892 = vsel %vm437, %v2858, 0
        %v2895 = vsel %vm437, %v2859, 0
        %v2898 = vsel %vm437, %v2860, 0
        %v2901 = vsel %vm437, %v2861, 0
        %v2904 = vsel %vm437, %v2862, 0
        %v2907 = vsel %vm437, %v2863, 0
        %v2910 = vsel %vm437, %v2864, 0
        %2912 = vmatprep.subr.bf16.mxu0 0
        %2913 = vmatpush1.bf16.msra.mxu0 %v2884
        %2914 = vmatprep.subr.bf16.mxu0 0
        %2915 = vmatpush1.bf16.msra.mxu0 %v2885
        %2916 = vmatprep.subr.bf16.mxu0 0
        %2917 = vmatpush1.bf16.msra.mxu0 0
        %2918 = vmatprep.subr.bf16.mxu0 0
        %2919 = vmatpush1.bf16.msra.mxu0 0
        %2920 = vmatprep.subr.bf16.mxu0 0
        %2921 = vmatpush1.bf16.msra.mxu0 0
        %2922 = vmatprep.subr.bf16.mxu0 0
        %2923 = vmatpush1.bf16.msra.mxu0 0
        %2924 = vmatprep.subr.bf16.mxu0 0
        %2925 = vmatpush1.bf16.msra.mxu0 0
        %2926 = vmatprep.subr.bf16.mxu0 0
        %2927 = vmatpush1.bf16.msra.mxu0 0
        %2928 = vmatprep.subr.bf16.mxu0 0
        %2929 = vmatpush1.bf16.msra.mxu0 0
        %2930 = vmatprep.subr.bf16.mxu0 0
        %2931 = vmatpush1.bf16.msra.mxu0 0
        %2932 = vmatprep.subr.bf16.mxu0 0
        %2933 = vmatpush1.bf16.msra.mxu0 0
        %2934 = vmatprep.subr.bf16.mxu0 0
        %2935 = vmatpush1.bf16.msra.mxu0 0
        %2936 = vmatprep.subr.bf16.mxu0 0
        %2937 = vmatpush1.bf16.msra.mxu0 0
        %2938 = vmatprep.subr.bf16.mxu0 0
        %2939 = vmatpush1.bf16.msra.mxu0 0
        %2940 = vmatprep.subr.bf16.mxu0 0
        %2941 = vmatpush1.bf16.msra.mxu0 0
        %2942 = vmatprep.subr.bf16.mxu0 0
        %2943 = vmatpush1.bf16.msra.mxu0 0
        %2944 = vmatprep.mubr.bf16.mxu0 0
        %2945 = vmatmul.mubr.bf16.gmra.mrb[0].mxu0 %v2889
        %v2946 = vpop.f32.mrb[0].mxu0
        %v2947 = vadd.f32 %v2874, %v2946
        %v2948 = vpop.f32.mrb[0].mxu0
        %v2949 = vpop.f32.mrb[0].mxu0
        %v2950 = vadd.f32 %v2874, %v2949
        %v2951 = vpop.f32.mrb[0].mxu0
        %2952 = vmatprep.mubr.bf16.mxu0 0
        %2953 = vmatmul.mubr.bf16.gmra.mrb[0].mxu0 %v2892
        %v2954 = vpop.f32.mrb[0].mxu0
        %v2955 = vadd.f32 %v2874, %v2954
        %v2956 = vpop.f32.mrb[0].mxu0
        %v2957 = vpop.f32.mrb[0].mxu0
        %v2958 = vadd.f32 %v2874, %v2957
        %v2959 = vpop.f32.mrb[0].mxu0
        %2960 = vmatprep.mubr.bf16.mxu0 0
        %2961 = vmatmul.mubr.bf16.gmra.mrb[0].mxu0 %v2895
        %v2962 = vpop.f32.mrb[0].mxu0
        %v2963 = vadd.f32 %v2874, %v2962
        %v2964 = vpop.f32.mrb[0].mxu0
        %v2965 = vpop.f32.mrb[0].mxu0
        %v2966 = vadd.f32 %v2874, %v2965
        %v2967 = vpop.f32.mrb[0].mxu0
        %2968 = vmatprep.mubr.bf16.mxu0 0
        %2969 = vmatmul.mubr.bf16.gmra.mrb[0].mxu0 %v2898
        %v2970 = vpop.f32.mrb[0].mxu0
        %v2971 = vadd.f32 %v2874, %v2970
        %v2972 = vpop.f32.mrb[0].mxu0
        %v2973 = vpop.f32.mrb[0].mxu0
        %v2974 = vadd.f32 %v2874, %v2973
        %v2975 = vpop.f32.mrb[0].mxu0
        %2976 = vmatprep.mubr.bf16.mxu0 0
        %2977 = vmatmul.mubr.bf16.gmra.mrb[0].mxu0 %v2901
        %v2978 = vpop.f32.mrb[0].mxu0
        %v2979 = vadd.f32 %v2874, %v2978
        %v2980 = vpop.f32.mrb[0].mxu0
        %v2981 = vpop.f32.mrb[0].mxu0
        %v2982 = vadd.f32 %v2874, %v2981
        %v2983 = vpop.f32.mrb[0].mxu0
        %2984 = vmatprep.mubr.bf16.mxu0 0
        %2985 = vmatmul.mubr.bf16.gmra.mrb[0].mxu0 %v2904
        %v2986 = vpop.f32.mrb[0].mxu0
        %v2987 = vadd.f32 %v2874, %v2986
        %v2988 = vpop.f32.mrb[0].mxu0
        %v2989 = vpop.f32.mrb[0].mxu0
        %v2990 = vadd.f32 %v2874, %v2989
        %v2991 = vpop.f32.mrb[0].mxu0
        %2992 = vmatprep.mubr.bf16.mxu0 0
        %2993 = vmatmul.mubr.bf16.gmra.mrb[0].mxu0 %v2907
        %v2994 = vpop.f32.mrb[0].mxu0
        %v2995 = vadd.f32 %v2874, %v2994
        %v2996 = vpop.f32.mrb[0].mxu0
        %v2997 = vpop.f32.mrb[0].mxu0
        %v2998 = vadd.f32 %v2874, %v2997
        %v2999 = vpop.f32.mrb[0].mxu0
        %3000 = vmatprep.mubr.bf16.mxu0 0
        %3001 = vmatmul.mubr.bf16.gmra.mrb[0].mxu0 %v2910
        %v3002 = vpop.f32.mrb[0].mxu0
        %v3003 = vadd.f32 %v2874, %v3002
        %v3004 = vpop.f32.mrb[0].mxu0
        %v3005 = vpop.f32.mrb[0].mxu0
        %v3006 = vadd.f32 %v2874, %v3005
        %v3007 = vpop.f32.mrb[0].mxu0
        %3008 = vdwg.mxu0
        %v3009 = vmax.f32 %v2947, 0.0
        %v3010 = vmax.f32 %v2950, 0.0
        %v3011 = vmax.f32 %v2955, 0.0
        %v3012 = vmax.f32 %v2958, 0.0
        %v3013 = vmax.f32 %v2963, 0.0
        %v3014 = vmax.f32 %v2966, 0.0
        %v3015 = vmax.f32 %v2971, 0.0
        %v3016 = vmax.f32 %v2974, 0.0
        %v3017 = vmax.f32 %v2979, 0.0
        %v3018 = vmax.f32 %v2982, 0.0
        %v3019 = vmax.f32 %v2987, 0.0
        %v3020 = vmax.f32 %v2990, 0.0
        %v3021 = vmax.f32 %v2995, 0.0
        %v3022 = vmax.f32 %v2998, 0.0
        %v3023 = vmax.f32 %v3003, 0.0
        %v3024 = vmax.f32 %v3006, 0.0
        %v3025 = vpack.c.bf16 %v3010, %v3009
        %v3026 = vpack.c.bf16 %v3012, %v3011
        %v3027 = vpack.c.bf16 %v3014, %v3013
        %v3028 = vpack.c.bf16 %v3016, %v3015
        %v3029 = vpack.c.bf16 %v3018, %v3017
        %v3030 = vpack.c.bf16 %v3020, %v3019
        %v3031 = vpack.c.bf16 %v3022, %v3021
        %v3032 = vpack.c.bf16 %v3024, %v3023
        %v3033 = vld [vmem:[%s3] sm:$0xf]
        %v3034 = vld [vmem:[%s3 + $0x4] sm:$0xf]
        %v3035 = vld [vmem:[%s3 + $0x8] sm:$0xf]
        %v3036 = vld [vmem:[%s3 + $0xc] sm:$0xf]
        %v3037 = vld [vmem:[%s3 + $0x10] sm:$0xf]
        %v3038 = vld [vmem:[%s3 + $0x14] sm:$0xf]
        %v3039 = vld [vmem:[%s3 + $0x18] sm:$0xf]
        %v3040 = vld [vmem:[%s3 + $0x1c] sm:$0xf]
        %v3041 = vld [vmem:[%s3 + $0x20] sm:$0xf]
        %v3042 = vld [vmem:[%s3 + $0x24] sm:$0xf]
        %v3043 = vld [vmem:[%s3 + $0x28] sm:$0xf]
        %v3044 = vld [vmem:[%s3 + $0x2c] sm:$0xf]
        %v3045 = vld [vmem:[%s3 + $0x30] sm:$0xf]
        %v3046 = vld [vmem:[%s3 + $0x34] sm:$0xf]
        %v3047 = vld [vmem:[%s3 + $0x38] sm:$0xf]
        %v3048 = vld [vmem:[%s3 + $0x3c] sm:$0xf]
        %v3049 = vld [vmem:[%s4] sm:$0x1]
        %v3051 = vlaneseq
        %v3052 = vshrl.u32 %v3051, 7
        %v3053 = vsub.s32 0, %v3052
        %v3054 = vrot.slane %v3049, %v3053
        %v3072 = vunpack.c.l.b16 %v3033
        %v3073 = vunpack.c.l.b16 %v3034
        %v3074 = vunpack.c.l.b16 %v3035
        %v3075 = vunpack.c.l.b16 %v3036
        %v3076 = vunpack.c.l.b16 %v3037
        %v3077 = vunpack.c.l.b16 %v3038
        %v3078 = vunpack.c.l.b16 %v3039
        %v3079 = vunpack.c.l.b16 %v3040
        %v3080 = vunpack.c.l.b16 %v3041
        %v3081 = vunpack.c.l.b16 %v3042
        %v3082 = vunpack.c.l.b16 %v3043
        %v3083 = vunpack.c.l.b16 %v3044
        %v3084 = vunpack.c.l.b16 %v3045
        %v3085 = vunpack.c.l.b16 %v3046
        %v3086 = vunpack.c.l.b16 %v3047
        %v3087 = vunpack.c.l.b16 %v3048
        %v3088 = vpack.c.b16 %v3073, %v3072
        %v3089 = vpack.c.b16 %v3075, %v3074
        %v3090 = vpack.c.b16 %v3077, %v3076
        %v3091 = vpack.c.b16 %v3079, %v3078
        %v3092 = vpack.c.b16 %v3081, %v3080
        %v3093 = vpack.c.b16 %v3083, %v3082
        %v3094 = vpack.c.b16 %v3085, %v3084
        %v3095 = vpack.c.b16 %v3087, %v3086
        %3104 = vmatprep.subr.bf16.mxu0 0
        %3105 = vmatpush1.bf16.msra.mxu0 %v3088
        %3106 = vmatprep.subr.bf16.mxu0 0
        %3107 = vmatpush1.bf16.msra.mxu0 %v3089
        %3108 = vmatprep.subr.bf16.mxu0 0
        %3109 = vmatpush1.bf16.msra.mxu0 %v3090
        %3110 = vmatprep.subr.bf16.mxu0 0
        %3111 = vmatpush1.bf16.msra.mxu0 %v3091
        %3112 = vmatprep.subr.bf16.mxu0 0
        %3113 = vmatpush1.bf16.msra.mxu0 %v3092
        %3114 = vmatprep.subr.bf16.mxu0 0
        %3115 = vmatpush1.bf16.msra.mxu0 %v3093
        %3116 = vmatprep.subr.bf16.mxu0 0
        %3117 = vmatpush1.bf16.msra.mxu0 %v3094
        %3118 = vmatprep.subr.bf16.mxu0 0
        %3119 = vmatpush1.bf16.msra.mxu0 %v3095
        %3120 = vmatprep.subr.bf16.mxu0 0
        %3121 = vmatpush1.bf16.msra.mxu0 0
        %3122 = vmatprep.subr.bf16.mxu0 0
        %3123 = vmatpush1.bf16.msra.mxu0 0
        %3124 = vmatprep.subr.bf16.mxu0 0
        %3125 = vmatpush1.bf16.msra.mxu0 0
        %3126 = vmatprep.subr.bf16.mxu0 0
        %3127 = vmatpush1.bf16.msra.mxu0 0
        %3128 = vmatprep.subr.bf16.mxu0 0
        %3129 = vmatpush1.bf16.msra.mxu0 0
        %3130 = vmatprep.subr.bf16.mxu0 0
        %3131 = vmatpush1.bf16.msra.mxu0 0
        %3132 = vmatprep.subr.bf16.mxu0 0
        %3133 = vmatpush1.bf16.msra.mxu0 0
        %3134 = vmatprep.subr.bf16.mxu0 0
        %3135 = vmatpush1.bf16.msra.mxu0 0
        %3136 = vmatprep.mubr.bf16.mxu0 0
        %3137 = vmatmul.mubr.bf16.gmra.mrb[0].mxu0 %v3025
        %v3138 = vpop.f32.mrb[0].mxu0
        %v3139 = vadd.f32 %v3054, %v3138
        %v3140 = vpop.f32.mrb[0].mxu0
        %v3141 = vpop.f32.mrb[0].mxu0
        %v3142 = vadd.f32 %v3054, %v3141
        %v3143 = vpop.f32.mrb[0].mxu0
        %3144 = vmatprep.mubr.bf16.mxu0 0
        %3145 = vmatmul.mubr.bf16.gmra.mrb[0].mxu0 %v3026
        %v3146 = vpop.f32.mrb[0].mxu0
        %v3147 = vadd.f32 %v3054, %v3146
        %v3148 = vpop.f32.mrb[0].mxu0
        %v3149 = vpop.f32.mrb[0].mxu0
        %v3150 = vadd.f32 %v3054, %v3149
        %v3151 = vpop.f32.mrb[0].mxu0
        %3152 = vmatprep.mubr.bf16.mxu0 0
        %3153 = vmatmul.mubr.bf16.gmra.mrb[0].mxu0 %v3027
        %v3154 = vpop.f32.mrb[0].mxu0
        %v3155 = vadd.f32 %v3054, %v3154
        %v3156 = vpop.f32.mrb[0].mxu0
        %v3157 = vpop.f32.mrb[0].mxu0
        %v3158 = vadd.f32 %v3054, %v3157
        %v3159 = vpop.f32.mrb[0].mxu0
        %3160 = vmatprep.mubr.bf16.mxu0 0
        %3161 = vmatmul.mubr.bf16.gmra.mrb[0].mxu0 %v3028
        %v3162 = vpop.f32.mrb[0].mxu0
        %v3163 = vadd.f32 %v3054, %v3162
        %v3164 = vpop.f32.mrb[0].mxu0
        %v3165 = vpop.f32.mrb[0].mxu0
        %v3166 = vadd.f32 %v3054, %v3165
        %v3167 = vpop.f32.mrb[0].mxu0
        %3168 = vmatprep.mubr.bf16.mxu0 0
        %3169 = vmatmul.mubr.bf16.gmra.mrb[0].mxu0 %v3029
        %v3170 = vpop.f32.mrb[0].mxu0
        %v3171 = vadd.f32 %v3054, %v3170
        %v3172 = vpop.f32.mrb[0].mxu0
        %v3173 = vpop.f32.mrb[0].mxu0
        %v3174 = vadd.f32 %v3054, %v3173
        %v3175 = vpop.f32.mrb[0].mxu0
        %3176 = vmatprep.mubr.bf16.mxu0 0
        %3177 = vmatmul.mubr.bf16.gmra.mrb[0].mxu0 %v3030
        %v3178 = vpop.f32.mrb[0].mxu0
        %v3179 = vadd.f32 %v3054, %v3178
        %v3180 = vpop.f32.mrb[0].mxu0
        %v3181 = vpop.f32.mrb[0].mxu0
        %v3182 = vadd.f32 %v3054, %v3181
        %v3183 = vpop.f32.mrb[0].mxu0
        %3184 = vmatprep.mubr.bf16.mxu0 0
        %3185 = vmatmul.mubr.bf16.gmra.mrb[0].mxu0 %v3031
        %v3186 = vpop.f32.mrb[0].mxu0
        %v3187 = vadd.f32 %v3054, %v3186
        %v3188 = vpop.f32.mrb[0].mxu0
        %v3189 = vpop.f32.mrb[0].mxu0
        %v3190 = vadd.f32 %v3054, %v3189
        %v3191 = vpop.f32.mrb[0].mxu0
        %3192 = vmatprep.mubr.bf16.mxu0 0
        %3193 = vmatmul.mubr.bf16.gmra.mrb[0].mxu0 %v3032
        %v3194 = vpop.f32.mrb[0].mxu0
        %v3195 = vadd.f32 %v3054, %v3194
        %v3196 = vpop.f32.mrb[0].mxu0
        %v3197 = vpop.f32.mrb[0].mxu0
        %v3198 = vadd.f32 %v3054, %v3197
        %v3199 = vpop.f32.mrb[0].mxu0
        %3200 = vdwg.mxu0
        %v3201 = vmax.f32 %v3139, 0.0
        %v3202 = vmax.f32 %v3142, 0.0
        %v3203 = vmax.f32 %v3147, 0.0
        %v3204 = vmax.f32 %v3150, 0.0
        %v3205 = vmax.f32 %v3155, 0.0
        %v3206 = vmax.f32 %v3158, 0.0
        %v3207 = vmax.f32 %v3163, 0.0
        %v3208 = vmax.f32 %v3166, 0.0
        %v3209 = vmax.f32 %v3171, 0.0
        %v3210 = vmax.f32 %v3174, 0.0
        %v3211 = vmax.f32 %v3179, 0.0
        %v3212 = vmax.f32 %v3182, 0.0
        %v3213 = vmax.f32 %v3187, 0.0
        %v3214 = vmax.f32 %v3190, 0.0
        %v3215 = vmax.f32 %v3195, 0.0
        %v3216 = vmax.f32 %v3198, 0.0
        %v3217 = vpack.c.bf16 %v3202, %v3201
        %v3218 = vpack.c.bf16 %v3204, %v3203
        %v3219 = vpack.c.bf16 %v3206, %v3205
        %v3220 = vpack.c.bf16 %v3208, %v3207
        %v3221 = vpack.c.bf16 %v3210, %v3209
        %v3222 = vpack.c.bf16 %v3212, %v3211
        %v3223 = vpack.c.bf16 %v3214, %v3213
        %v3224 = vpack.c.bf16 %v3216, %v3215
        %v3225 = vld [vmem:[%s5] sm:$0xf]
        %v3226 = vld [vmem:[%s5 + $0x4] sm:$0xf]
        %v3227 = vld [vmem:[%s5 + $0x8] sm:$0xf]
        %v3228 = vld [vmem:[%s5 + $0xc] sm:$0xf]
        %v3229 = vld [vmem:[%s5 + $0x10] sm:$0xf]
        %v3230 = vld [vmem:[%s5 + $0x14] sm:$0xf]
        %v3231 = vld [vmem:[%s5 + $0x18] sm:$0xf]
        %v3232 = vld [vmem:[%s5 + $0x1c] sm:$0xf]
        %v3233 = vld [vmem:[%s6] sm:$0x1]
        %v3235 = vlaneseq
        %v3236 = vshrl.u32 %v3235, 7
        %v3237 = vsub.s32 0, %v3236
        %v3238 = vrot.slane %v3233, %v3237
        %v3248 = vunpack.c.l.b16 %v3225
        %v3249 = vunpack.c.l.b16 %v3226
        %v3250 = vunpack.c.l.b16 %v3227
        %v3251 = vunpack.c.l.b16 %v3228
        %v3252 = vunpack.c.l.b16 %v3229
        %v3253 = vunpack.c.l.b16 %v3230
        %v3254 = vunpack.c.l.b16 %v3231
        %v3255 = vunpack.c.l.b16 %v3232
        %v3256 = vpack.c.b16 %v3249, %v3248
        %v3257 = vpack.c.b16 %v3251, %v3250
        %v3258 = vpack.c.b16 %v3253, %v3252
        %v3259 = vpack.c.b16 %v3255, %v3254
        %v3265 = vsel %vm814, %v3217, 0
        %v3268 = vsel %vm814, %v3218, 0
        %v3271 = vsel %vm814, %v3219, 0
        %v3274 = vsel %vm814, %v3220, 0
        %v3277 = vsel %vm814, %v3221, 0
        %v3280 = vsel %vm814, %v3222, 0
        %v3283 = vsel %vm814, %v3223, 0
        %v3286 = vsel %vm814, %v3224, 0
        %3288 = vmatprep.subr.bf16.mxu0 0
        %3289 = vmatpush1.bf16.msra.mxu0 %v3256
        %3290 = vmatprep.subr.bf16.mxu0 0
        %3291 = vmatpush1.bf16.msra.mxu0 %v3257
        %3292 = vmatprep.subr.bf16.mxu0 0
        %3293 = vmatpush1.bf16.msra.mxu0 %v3258
        %3294 = vmatprep.subr.bf16.mxu0 0
        %3295 = vmatpush1.bf16.msra.mxu0 %v3259
        %3296 = vmatprep.subr.bf16.mxu0 0
        %3297 = vmatpush1.bf16.msra.mxu0 0
        %3298 = vmatprep.subr.bf16.mxu0 0
        %3299 = vmatpush1.bf16.msra.mxu0 0
        %3300 = vmatprep.subr.bf16.mxu0 0
        %3301 = vmatpush1.bf16.msra.mxu0 0
        %3302 = vmatprep.subr.bf16.mxu0 0
        %3303 = vmatpush1.bf16.msra.mxu0 0
        %3304 = vmatprep.subr.bf16.mxu0 0
        %3305 = vmatpush1.bf16.msra.mxu0 0
        %3306 = vmatprep.subr.bf16.mxu0 0
        %3307 = vmatpush1.bf16.msra.mxu0 0
        %3308 = vmatprep.subr.bf16.mxu0 0
        %3309 = vmatpush1.bf16.msra.mxu0 0
        %3310 = vmatprep.subr.bf16.mxu0 0
        %3311 = vmatpush1.bf16.msra.mxu0 0
        %3312 = vmatprep.subr.bf16.mxu0 0
        %3313 = vmatpush1.bf16.msra.mxu0 0
        %3314 = vmatprep.subr.bf16.mxu0 0
        %3315 = vmatpush1.bf16.msra.mxu0 0
        %3316 = vmatprep.subr.bf16.mxu0 0
        %3317 = vmatpush1.bf16.msra.mxu0 0
        %3318 = vmatprep.subr.bf16.mxu0 0
        %3319 = vmatpush1.bf16.msra.mxu0 0
        %3320 = vmatprep.mubr.bf16.mxu0 0
        %3321 = vmatmul.mubr.bf16.gmra.mrb[0].mxu0 %v3265
        %v3322 = vpop.f32.mrb[0].mxu0
        %v3323 = vadd.f32 %v3238, %v3322
        %v3324 = vpop.f32.mrb[0].mxu0
        %v3325 = vpop.f32.mrb[0].mxu0
        %v3326 = vadd.f32 %v3238, %v3325
        %v3327 = vpop.f32.mrb[0].mxu0
        %3328 = vmatprep.mubr.bf16.mxu0 0
        %3329 = vmatmul.mubr.bf16.gmra.mrb[0].mxu0 %v3268
        %v3330 = vpop.f32.mrb[0].mxu0
        %v3331 = vadd.f32 %v3238, %v3330
        %v3332 = vpop.f32.mrb[0].mxu0
        %v3333 = vpop.f32.mrb[0].mxu0
        %v3334 = vadd.f32 %v3238, %v3333
        %v3335 = vpop.f32.mrb[0].mxu0
        %3336 = vmatprep.mubr.bf16.mxu0 0
        %3337 = vmatmul.mubr.bf16.gmra.mrb[0].mxu0 %v3271
        %v3338 = vpop.f32.mrb[0].mxu0
        %v3339 = vadd.f32 %v3238, %v3338
        %v3340 = vpop.f32.mrb[0].mxu0
        %v3341 = vpop.f32.mrb[0].mxu0
        %v3342 = vadd.f32 %v3238, %v3341
        %v3343 = vpop.f32.mrb[0].mxu0
        %3344 = vmatprep.mubr.bf16.mxu0 0
        %3345 = vmatmul.mubr.bf16.gmra.mrb[0].mxu0 %v3274
        %v3346 = vpop.f32.mrb[0].mxu0
        %v3347 = vadd.f32 %v3238, %v3346
        %v3348 = vpop.f32.mrb[0].mxu0
        %v3349 = vpop.f32.mrb[0].mxu0
        %v3350 = vadd.f32 %v3238, %v3349
        %v3351 = vpop.f32.mrb[0].mxu0
        %3352 = vmatprep.mubr.bf16.mxu0 0
        %3353 = vmatmul.mubr.bf16.gmra.mrb[0].mxu0 %v3277
        %v3354 = vpop.f32.mrb[0].mxu0
        %v3355 = vadd.f32 %v3238, %v3354
        %v3356 = vpop.f32.mrb[0].mxu0
        %v3357 = vpop.f32.mrb[0].mxu0
        %v3358 = vadd.f32 %v3238, %v3357
        %v3359 = vpop.f32.mrb[0].mxu0
        %3360 = vmatprep.mubr.bf16.mxu0 0
        %3361 = vmatmul.mubr.bf16.gmra.mrb[0].mxu0 %v3280
        %v3362 = vpop.f32.mrb[0].mxu0
        %v3363 = vadd.f32 %v3238, %v3362
        %v3364 = vpop.f32.mrb[0].mxu0
        %v3365 = vpop.f32.mrb[0].mxu0
        %v3366 = vadd.f32 %v3238, %v3365
        %v3367 = vpop.f32.mrb[0].mxu0
        %3368 = vmatprep.mubr.bf16.mxu0 0
        %3369 = vmatmul.mubr.bf16.gmra.mrb[0].mxu0 %v3283
        %v3370 = vpop.f32.mrb[0].mxu0
        %v3371 = vadd.f32 %v3238, %v3370
        %v3372 = vpop.f32.mrb[0].mxu0
        %v3373 = vpop.f32.mrb[0].mxu0
        %v3374 = vadd.f32 %v3238, %v3373
        %v3375 = vpop.f32.mrb[0].mxu0
        %3376 = vmatprep.mubr.bf16.mxu0 0
        %3377 = vmatmul.mubr.bf16.gmra.mrb[0].mxu0 %v3286
        %v3378 = vpop.f32.mrb[0].mxu0
        %v3379 = vadd.f32 %v3238, %v3378
        %v3380 = vpop.f32.mrb[0].mxu0
        %v3381 = vpop.f32.mrb[0].mxu0
        %v3382 = vadd.f32 %v3238, %v3381
        %v3383 = vpop.f32.mrb[0].mxu0
        %3384 = vdwg.mxu0
        %v3385 = vmax.f32 %v3323, 0.0
        %v3386 = vmax.f32 %v3326, 0.0
        %v3387 = vmax.f32 %v3331, 0.0
        %v3388 = vmax.f32 %v3334, 0.0
        %v3389 = vmax.f32 %v3339, 0.0
        %v3390 = vmax.f32 %v3342, 0.0
        %v3391 = vmax.f32 %v3347, 0.0
        %v3392 = vmax.f32 %v3350, 0.0
        %v3393 = vmax.f32 %v3355, 0.0
        %v3394 = vmax.f32 %v3358, 0.0
        %v3395 = vmax.f32 %v3363, 0.0
        %v3396 = vmax.f32 %v3366, 0.0
        %v3397 = vmax.f32 %v3371, 0.0
        %v3398 = vmax.f32 %v3374, 0.0
        %v3399 = vmax.f32 %v3379, 0.0
        %v3400 = vmax.f32 %v3382, 0.0
        %v3401 = vpack.c.bf16 %v3386, %v3385
        %v3402 = vpack.c.bf16 %v3388, %v3387
        %v3403 = vpack.c.bf16 %v3390, %v3389
        %v3404 = vpack.c.bf16 %v3392, %v3391
        %v3405 = vpack.c.bf16 %v3394, %v3393
        %v3406 = vpack.c.bf16 %v3396, %v3395
        %v3407 = vpack.c.bf16 %v3398, %v3397
        %v3408 = vpack.c.bf16 %v3400, %v3399
        %v3409 = vld [vmem:[%s7] sm:$0xf]
        %v3410 = vld [vmem:[%s7 + $0x4] sm:$0xf]
        %v3411 = vld [vmem:[%s7 + $0x8] sm:$0xf]
        %v3412 = vld [vmem:[%s7 + $0xc] sm:$0xf]
        %v3413 = vld [vmem:[%s8] sm:$0x1]
        %v3415 = vlaneseq
        %v3416 = vshrl.u32 %v3415, 7
        %v3417 = vsub.s32 0, %v3416
        %v3418 = vrot.slane %v3413, %v3417
        %v3424 = vunpack.c.l.b16 %v3409
        %v3425 = vunpack.c.l.b16 %v3410
        %v3426 = vunpack.c.l.b16 %v3411
        %v3427 = vunpack.c.l.b16 %v3412
        %v3428 = vpack.c.b16 %v3425, %v3424
        %v3429 = vpack.c.b16 %v3427, %v3426
        %v3433 = vsel %vm437, %v3401, 0
        %v3436 = vsel %vm437, %v3402, 0
        %v3439 = vsel %vm437, %v3403, 0
        %v3442 = vsel %vm437, %v3404, 0
        %v3445 = vsel %vm437, %v3405, 0
        %v3448 = vsel %vm437, %v3406, 0
        %v3451 = vsel %vm437, %v3407, 0
        %v3454 = vsel %vm437, %v3408, 0
        %3456 = vmatprep.subr.bf16.mxu0 0
        %3457 = vmatpush1.bf16.msra.mxu0 %v3428
        %3458 = vmatprep.subr.bf16.mxu0 0
        %3459 = vmatpush1.bf16.msra.mxu0 %v3429
        %3460 = vmatprep.subr.bf16.mxu0 0
        %3461 = vmatpush1.bf16.msra.mxu0 0
        %3462 = vmatprep.subr.bf16.mxu0 0
        %3463 = vmatpush1.bf16.msra.mxu0 0
        %3464 = vmatprep.subr.bf16.mxu0 0
        %3465 = vmatpush1.bf16.msra.mxu0 0
        %3466 = vmatprep.subr.bf16.mxu0 0
        %3467 = vmatpush1.bf16.msra.mxu0 0
        %3468 = vmatprep.subr.bf16.mxu0 0
        %3469 = vmatpush1.bf16.msra.mxu0 0
        %3470 = vmatprep.subr.bf16.mxu0 0
        %3471 = vmatpush1.bf16.msra.mxu0 0
        %3472 = vmatprep.subr.bf16.mxu0 0
        %3473 = vmatpush1.bf16.msra.mxu0 0
        %3474 = vmatprep.subr.bf16.mxu0 0
        %3475 = vmatpush1.bf16.msra.mxu0 0
        %3476 = vmatprep.subr.bf16.mxu0 0
        %3477 = vmatpush1.bf16.msra.mxu0 0
        %3478 = vmatprep.subr.bf16.mxu0 0
        %3479 = vmatpush1.bf16.msra.mxu0 0
        %3480 = vmatprep.subr.bf16.mxu0 0
        %3481 = vmatpush1.bf16.msra.mxu0 0
        %3482 = vmatprep.subr.bf16.mxu0 0
        %3483 = vmatpush1.bf16.msra.mxu0 0
        %3484 = vmatprep.subr.bf16.mxu0 0
        %3485 = vmatpush1.bf16.msra.mxu0 0
        %3486 = vmatprep.subr.bf16.mxu0 0
        %3487 = vmatpush1.bf16.msra.mxu0 0
        %3488 = vmatprep.mubr.bf16.mxu0 0
        %3489 = vmatmul.mubr.bf16.gmra.mrb[0].mxu0 %v3433
        %v3490 = vpop.f32.mrb[0].mxu0
        %v3491 = vadd.f32 %v3418, %v3490
        %v3492 = vpop.f32.mrb[0].mxu0
        %v3493 = vpop.f32.mrb[0].mxu0
        %v3494 = vadd.f32 %v3418, %v3493
        %v3495 = vpop.f32.mrb[0].mxu0
        %3496 = vmatprep.mubr.bf16.mxu0 0
        %3497 = vmatmul.mubr.bf16.gmra.mrb[0].mxu0 %v3436
        %v3498 = vpop.f32.mrb[0].mxu0
        %v3499 = vadd.f32 %v3418, %v3498
        %v3500 = vpop.f32.mrb[0].mxu0
        %v3501 = vpop.f32.mrb[0].mxu0
        %v3502 = vadd.f32 %v3418, %v3501
        %v3503 = vpop.f32.mrb[0].mxu0
        %3504 = vmatprep.mubr.bf16.mxu0 0
        %3505 = vmatmul.mubr.bf16.gmra.mrb[0].mxu0 %v3439
        %v3506 = vpop.f32.mrb[0].mxu0
        %v3507 = vadd.f32 %v3418, %v3506
        %v3508 = vpop.f32.mrb[0].mxu0
        %v3509 = vpop.f32.mrb[0].mxu0
        %v3510 = vadd.f32 %v3418, %v3509
        %v3511 = vpop.f32.mrb[0].mxu0
        %3512 = vmatprep.mubr.bf16.mxu0 0
        %3513 = vmatmul.mubr.bf16.gmra.mrb[0].mxu0 %v3442
        %v3514 = vpop.f32.mrb[0].mxu0
        %v3515 = vadd.f32 %v3418, %v3514
        %v3516 = vpop.f32.mrb[0].mxu0
        %v3517 = vpop.f32.mrb[0].mxu0
        %v3518 = vadd.f32 %v3418, %v3517
        %v3519 = vpop.f32.mrb[0].mxu0
        %3520 = vmatprep.mubr.bf16.mxu0 0
        %3521 = vmatmul.mubr.bf16.gmra.mrb[0].mxu0 %v3445
        %v3522 = vpop.f32.mrb[0].mxu0
        %v3523 = vadd.f32 %v3418, %v3522
        %v3524 = vpop.f32.mrb[0].mxu0
        %v3525 = vpop.f32.mrb[0].mxu0
        %v3526 = vadd.f32 %v3418, %v3525
        %v3527 = vpop.f32.mrb[0].mxu0
        %3528 = vmatprep.mubr.bf16.mxu0 0
        %3529 = vmatmul.mubr.bf16.gmra.mrb[0].mxu0 %v3448
        %v3530 = vpop.f32.mrb[0].mxu0
        %v3531 = vadd.f32 %v3418, %v3530
        %v3532 = vpop.f32.mrb[0].mxu0
        %v3533 = vpop.f32.mrb[0].mxu0
        %v3534 = vadd.f32 %v3418, %v3533
        %v3535 = vpop.f32.mrb[0].mxu0
        %3536 = vmatprep.mubr.bf16.mxu0 0
        %3537 = vmatmul.mubr.bf16.gmra.mrb[0].mxu0 %v3451
        %v3538 = vpop.f32.mrb[0].mxu0
        %v3539 = vadd.f32 %v3418, %v3538
        %v3540 = vpop.f32.mrb[0].mxu0
        %v3541 = vpop.f32.mrb[0].mxu0
        %v3542 = vadd.f32 %v3418, %v3541
        %v3543 = vpop.f32.mrb[0].mxu0
        %3544 = vmatprep.mubr.bf16.mxu0 0
        %3545 = vmatmul.mubr.bf16.gmra.mrb[0].mxu0 %v3454
        %v3546 = vpop.f32.mrb[0].mxu0
        %v3547 = vadd.f32 %v3418, %v3546
        %v3548 = vpop.f32.mrb[0].mxu0
        %v3549 = vpop.f32.mrb[0].mxu0
        %v3550 = vadd.f32 %v3418, %v3549
        %v3551 = vpop.f32.mrb[0].mxu0
        %3552 = vdwg.mxu0
        %v3553 = vmax.f32 %v3491, 0.0
        %v3554 = vmax.f32 %v3494, 0.0
        %v3555 = vmax.f32 %v3499, 0.0
        %v3556 = vmax.f32 %v3502, 0.0
        %v3557 = vmax.f32 %v3507, 0.0
        %v3558 = vmax.f32 %v3510, 0.0
        %v3559 = vmax.f32 %v3515, 0.0
        %v3560 = vmax.f32 %v3518, 0.0
        %v3561 = vmax.f32 %v3523, 0.0
        %v3562 = vmax.f32 %v3526, 0.0
        %v3563 = vmax.f32 %v3531, 0.0
        %v3564 = vmax.f32 %v3534, 0.0
        %v3565 = vmax.f32 %v3539, 0.0
        %v3566 = vmax.f32 %v3542, 0.0
        %v3567 = vmax.f32 %v3547, 0.0
        %v3568 = vmax.f32 %v3550, 0.0
        %v3569 = vld [vmem:[%s9] sm:$0x1]
        %v3570 = vpack.c.bf16 %v3554, %v3553
        %v3571 = vpack.c.bf16 %v3556, %v3555
        %v3572 = vpack.c.bf16 %v3558, %v3557
        %v3573 = vpack.c.bf16 %v3560, %v3559
        %v3574 = vpack.c.bf16 %v3562, %v3561
        %v3575 = vpack.c.bf16 %v3564, %v3563
        %v3576 = vpack.c.bf16 %v3566, %v3565
        %v3577 = vpack.c.bf16 %v3568, %v3567
        %v3578 = vld [vmem:[#allocation2] sm:$0x1]
        %3580 = vset.pattern.permute.xlu0 0
        %3581 = vperm.xlu0 %3580, %v3578
        %v3582 = vpop.permute.xlu0 %3581
        %v3584 = vlaneseq
        %v3585 = vshrl.u32 %v3584, 7
        %v3586 = vsub.s32 0, %v3585
        %v3587 = vrot.slane %v3582, %v3586
        %v3589 = vsel %vm1139, %v3569, 0
        %v3592 = vsel %vm1139, %v3570, 0
        %v3595 = vsel %vm1139, %v3571, 0
        %v3598 = vsel %vm1139, %v3572, 0
        %v3601 = vsel %vm1139, %v3573, 0
        %v3604 = vsel %vm1139, %v3574, 0
        %v3607 = vsel %vm1139, %v3575, 0
        %v3610 = vsel %vm1139, %v3576, 0
        %v3613 = vsel %vm1139, %v3577, 0
        %3615 = vmatprep.subr.bf16.mxu0 0
        %3616 = vmatpush1.bf16.xpose.msra.mxu0 %v3592
        %3617 = vmatprep.subr.bf16.mxu0 0
        %3618 = vmatpush1.bf16.xpose.msra.mxu0 %v3595
        %3619 = vmatprep.subr.bf16.mxu0 0
        %3620 = vmatpush1.bf16.xpose.msra.mxu0 %v3598
        %3621 = vmatprep.subr.bf16.mxu0 0
        %3622 = vmatpush1.bf16.xpose.msra.mxu0 %v3601
        %3623 = vmatprep.subr.bf16.mxu0 0
        %3624 = vmatpush1.bf16.xpose.msra.mxu0 %v3604
        %3625 = vmatprep.subr.bf16.mxu0 0
        %3626 = vmatpush1.bf16.xpose.msra.mxu0 %v3607
        %3627 = vmatprep.subr.bf16.mxu0 0
        %3628 = vmatpush1.bf16.xpose.msra.mxu0 %v3610
        %3629 = vmatprep.subr.bf16.mxu0 0
        %3630 = vmatpush1.bf16.xpose.msra.mxu0 %v3613
        %3631 = vmatprep.subr.bf16.mxu0 0
        %3632 = vmatpush1.bf16.xpose.msra.mxu0 0
        %3633 = vmatprep.subr.bf16.mxu0 0
        %3634 = vmatpush1.bf16.xpose.msra.mxu0 0
        %3635 = vmatprep.subr.bf16.mxu0 0
        %3636 = vmatpush1.bf16.xpose.msra.mxu0 0
        %3637 = vmatprep.subr.bf16.mxu0 0
        %3638 = vmatpush1.bf16.xpose.msra.mxu0 0
        %3639 = vmatprep.subr.bf16.mxu0 0
        %3640 = vmatpush1.bf16.xpose.msra.mxu0 0
        %3641 = vmatprep.subr.bf16.mxu0 0
        %3642 = vmatpush1.bf16.xpose.msra.mxu0 0
        %3643 = vmatprep.subr.bf16.mxu0 0
        %3644 = vmatpush1.bf16.xpose.msra.mxu0 0
        %3645 = vmatprep.subr.bf16.mxu0 0
        %3646 = vmatpush1.bf16.xpose.msra.mxu0 0
        %3647 = vmatprep.mubr.bf16.mxu0 0
        %3648 = vmatmul.mubr.bf16.gmra.mrb[0].mxu0 %v3589
        %v3649 = vpop.f32.mrb[0].mxu0
        %v3650 = vadd.f32 %v3587, %v3649
        %v3651 = vpop.f32.mrb[0].mxu0
        %v3652 = vpop.f32.mrb[0].mxu0
        %v3653 = vpop.f32.mrb[0].mxu0
        %3654 = vdwg.mxu0
        %3655 = vst [vmem:[%s382 + $0x3] sm:$0x1] %v3650
        %s3656 = scalar_lea.vmem %s387, 512
        %v3657 = vld [vmem:[%s3656] sm:$0xff]
        %v3658 = vld [vmem:[%s3656 + $0x8] sm:$0xff]
        %v3659 = vld [vmem:[%s3656 + $0x10] sm:$0xff]
        %v3660 = vld [vmem:[%s3656 + $0x18] sm:$0xff]
        %v3661 = vld [vmem:[%s3656 + $0x20] sm:$0xff]
        %v3662 = vld [vmem:[%s3656 + $0x28] sm:$0xff]
        %v3663 = vld [vmem:[%s3656 + $0x30] sm:$0xff]
        %v3664 = vld [vmem:[%s3656 + $0x38] sm:$0xff]
        %v3665 = vld [vmem:[%s3656 + $0x40] sm:$0xff]
        %v3666 = vld [vmem:[%s3656 + $0x48] sm:$0xff]
        %v3667 = vld [vmem:[%s3656 + $0x50] sm:$0xff]
        %v3668 = vld [vmem:[%s3656 + $0x58] sm:$0xff]
        %v3669 = vld [vmem:[%s3656 + $0x60] sm:$0xff]
        %v3670 = vld [vmem:[%s3656 + $0x68] sm:$0xff]
        %v3671 = vld [vmem:[%s3656 + $0x70] sm:$0xff]
        %v3672 = vld [vmem:[%s3656 + $0x78] sm:$0xff]
        %v3673 = vpack.c.bf16 %v3658, %v3657
        %v3674 = vpack.c.bf16 %v3660, %v3659
        %v3675 = vpack.c.bf16 %v3662, %v3661
        %v3676 = vpack.c.bf16 %v3664, %v3663
        %v3677 = vpack.c.bf16 %v3666, %v3665
        %v3678 = vpack.c.bf16 %v3668, %v3667
        %v3679 = vpack.c.bf16 %v3670, %v3669
        %v3680 = vpack.c.bf16 %v3672, %v3671
        %v3681 = vld [vmem:[%s1] sm:$0xf]
        %v3682 = vld [vmem:[%s1 + $0x4] sm:$0xf]
        %v3683 = vld [vmem:[%s1 + $0x8] sm:$0xf]
        %v3684 = vld [vmem:[%s1 + $0xc] sm:$0xf]
        %v3685 = vld [vmem:[%s2] sm:$0x1]
        %v3687 = vlaneseq
        %v3688 = vshrl.u32 %v3687, 7
        %v3689 = vsub.s32 0, %v3688
        %v3690 = vrot.slane %v3685, %v3689
        %v3696 = vunpack.c.l.b16 %v3681
        %v3697 = vunpack.c.l.b16 %v3682
        %v3698 = vunpack.c.l.b16 %v3683
        %v3699 = vunpack.c.l.b16 %v3684
        %v3700 = vpack.c.b16 %v3697, %v3696
        %v3701 = vpack.c.b16 %v3699, %v3698
        %v3705 = vsel %vm437, %v3673, 0
        %v3708 = vsel %vm437, %v3674, 0
        %v3711 = vsel %vm437, %v3675, 0
        %v3714 = vsel %vm437, %v3676, 0
        %v3717 = vsel %vm437, %v3677, 0
        %v3720 = vsel %vm437, %v3678, 0
        %v3723 = vsel %vm437, %v3679, 0
        %v3726 = vsel %vm437, %v3680, 0
        %3728 = vmatprep.subr.bf16.mxu0 0
        %3729 = vmatpush1.bf16.msra.mxu0 %v3700
        %3730 = vmatprep.subr.bf16.mxu0 0
        %3731 = vmatpush1.bf16.msra.mxu0 %v3701
        %3732 = vmatprep.subr.bf16.mxu0 0
        %3733 = vmatpush1.bf16.msra.mxu0 0
        %3734 = vmatprep.subr.bf16.mxu0 0
        %3735 = vmatpush1.bf16.msra.mxu0 0
        %3736 = vmatprep.subr.bf16.mxu0 0
        %3737 = vmatpush1.bf16.msra.mxu0 0
        %3738 = vmatprep.subr.bf16.mxu0 0
        %3739 = vmatpush1.bf16.msra.mxu0 0
        %3740 = vmatprep.subr.bf16.mxu0 0
        %3741 = vmatpush1.bf16.msra.mxu0 0
        %3742 = vmatprep.subr.bf16.mxu0 0
        %3743 = vmatpush1.bf16.msra.mxu0 0
        %3744 = vmatprep.subr.bf16.mxu0 0
        %3745 = vmatpush1.bf16.msra.mxu0 0
        %3746 = vmatprep.subr.bf16.mxu0 0
        %3747 = vmatpush1.bf16.msra.mxu0 0
        %3748 = vmatprep.subr.bf16.mxu0 0
        %3749 = vmatpush1.bf16.msra.mxu0 0
        %3750 = vmatprep.subr.bf16.mxu0 0
        %3751 = vmatpush1.bf16.msra.mxu0 0
        %3752 = vmatprep.subr.bf16.mxu0 0
        %3753 = vmatpush1.bf16.msra.mxu0 0
        %3754 = vmatprep.subr.bf16.mxu0 0
        %3755 = vmatpush1.bf16.msra.mxu0 0
        %3756 = vmatprep.subr.bf16.mxu0 0
        %3757 = vmatpush1.bf16.msra.mxu0 0
        %3758 = vmatprep.subr.bf16.mxu0 0
        %3759 = vmatpush1.bf16.msra.mxu0 0
        %3760 = vmatprep.mubr.bf16.mxu0 0
        %3761 = vmatmul.mubr.bf16.gmra.mrb[0].mxu0 %v3705
        %v3762 = vpop.f32.mrb[0].mxu0
        %v3763 = vadd.f32 %v3690, %v3762
        %v3764 = vpop.f32.mrb[0].mxu0
        %v3765 = vpop.f32.mrb[0].mxu0
        %v3766 = vadd.f32 %v3690, %v3765
        %v3767 = vpop.f32.mrb[0].mxu0
        %3768 = vmatprep.mubr.bf16.mxu0 0
        %3769 = vmatmul.mubr.bf16.gmra.mrb[0].mxu0 %v3708
        %v3770 = vpop.f32.mrb[0].mxu0
        %v3771 = vadd.f32 %v3690, %v3770
        %v3772 = vpop.f32.mrb[0].mxu0
        %v3773 = vpop.f32.mrb[0].mxu0
        %v3774 = vadd.f32 %v3690, %v3773
        %v3775 = vpop.f32.mrb[0].mxu0
        %3776 = vmatprep.mubr.bf16.mxu0 0
        %3777 = vmatmul.mubr.bf16.gmra.mrb[0].mxu0 %v3711
        %v3778 = vpop.f32.mrb[0].mxu0
        %v3779 = vadd.f32 %v3690, %v3778
        %v3780 = vpop.f32.mrb[0].mxu0
        %v3781 = vpop.f32.mrb[0].mxu0
        %v3782 = vadd.f32 %v3690, %v3781
        %v3783 = vpop.f32.mrb[0].mxu0
        %3784 = vmatprep.mubr.bf16.mxu0 0
        %3785 = vmatmul.mubr.bf16.gmra.mrb[0].mxu0 %v3714
        %v3786 = vpop.f32.mrb[0].mxu0
        %v3787 = vadd.f32 %v3690, %v3786
        %v3788 = vpop.f32.mrb[0].mxu0
        %v3789 = vpop.f32.mrb[0].mxu0
        %v3790 = vadd.f32 %v3690, %v3789
        %v3791 = vpop.f32.mrb[0].mxu0
        %3792 = vmatprep.mubr.bf16.mxu0 0
        %3793 = vmatmul.mubr.bf16.gmra.mrb[0].mxu0 %v3717
        %v3794 = vpop.f32.mrb[0].mxu0
        %v3795 = vadd.f32 %v3690, %v3794
        %v3796 = vpop.f32.mrb[0].mxu0
        %v3797 = vpop.f32.mrb[0].mxu0
        %v3798 = vadd.f32 %v3690, %v3797
        %v3799 = vpop.f32.mrb[0].mxu0
        %3800 = vmatprep.mubr.bf16.mxu0 0
        %3801 = vmatmul.mubr.bf16.gmra.mrb[0].mxu0 %v3720
        %v3802 = vpop.f32.mrb[0].mxu0
        %v3803 = vadd.f32 %v3690, %v3802
        %v3804 = vpop.f32.mrb[0].mxu0
        %v3805 = vpop.f32.mrb[0].mxu0
        %v3806 = vadd.f32 %v3690, %v3805
        %v3807 = vpop.f32.mrb[0].mxu0
        %3808 = vmatprep.mubr.bf16.mxu0 0
        %3809 = vmatmul.mubr.bf16.gmra.mrb[0].mxu0 %v3723
        %v3810 = vpop.f32.mrb[0].mxu0
        %v3811 = vadd.f32 %v3690, %v3810
        %v3812 = vpop.f32.mrb[0].mxu0
        %v3813 = vpop.f32.mrb[0].mxu0
        %v3814 = vadd.f32 %v3690, %v3813
        %v3815 = vpop.f32.mrb[0].mxu0
        %3816 = vmatprep.mubr.bf16.mxu0 0
        %3817 = vmatmul.mubr.bf16.gmra.mrb[0].mxu0 %v3726
        %v3818 = vpop.f32.mrb[0].mxu0
        %v3819 = vadd.f32 %v3690, %v3818
        %v3820 = vpop.f32.mrb[0].mxu0
        %v3821 = vpop.f32.mrb[0].mxu0
        %v3822 = vadd.f32 %v3690, %v3821
        %v3823 = vpop.f32.mrb[0].mxu0
        %3824 = vdwg.mxu0
        %v3825 = vmax.f32 %v3763, 0.0
        %v3826 = vmax.f32 %v3766, 0.0
        %v3827 = vmax.f32 %v3771, 0.0
        %v3828 = vmax.f32 %v3774, 0.0
        %v3829 = vmax.f32 %v3779, 0.0
        %v3830 = vmax.f32 %v3782, 0.0
        %v3831 = vmax.f32 %v3787, 0.0
        %v3832 = vmax.f32 %v3790, 0.0
        %v3833 = vmax.f32 %v3795, 0.0
        %v3834 = vmax.f32 %v3798, 0.0
        %v3835 = vmax.f32 %v3803, 0.0
        %v3836 = vmax.f32 %v3806, 0.0
        %v3837 = vmax.f32 %v3811, 0.0
        %v3838 = vmax.f32 %v3814, 0.0
        %v3839 = vmax.f32 %v3819, 0.0
        %v3840 = vmax.f32 %v3822, 0.0
        %v3841 = vpack.c.bf16 %v3826, %v3825
        %v3842 = vpack.c.bf16 %v3828, %v3827
        %v3843 = vpack.c.bf16 %v3830, %v3829
        %v3844 = vpack.c.bf16 %v3832, %v3831
        %v3845 = vpack.c.bf16 %v3834, %v3833
        %v3846 = vpack.c.bf16 %v3836, %v3835
        %v3847 = vpack.c.bf16 %v3838, %v3837
        %v3848 = vpack.c.bf16 %v3840, %v3839
        %v3849 = vld [vmem:[%s3] sm:$0xf]
        %v3850 = vld [vmem:[%s3 + $0x4] sm:$0xf]
        %v3851 = vld [vmem:[%s3 + $0x8] sm:$0xf]
        %v3852 = vld [vmem:[%s3 + $0xc] sm:$0xf]
        %v3853 = vld [vmem:[%s3 + $0x10] sm:$0xf]
        %v3854 = vld [vmem:[%s3 + $0x14] sm:$0xf]
        %v3855 = vld [vmem:[%s3 + $0x18] sm:$0xf]
        %v3856 = vld [vmem:[%s3 + $0x1c] sm:$0xf]
        %v3857 = vld [vmem:[%s3 + $0x20] sm:$0xf]
        %v3858 = vld [vmem:[%s3 + $0x24] sm:$0xf]
        %v3859 = vld [vmem:[%s3 + $0x28] sm:$0xf]
        %v3860 = vld [vmem:[%s3 + $0x2c] sm:$0xf]
        %v3861 = vld [vmem:[%s3 + $0x30] sm:$0xf]
        %v3862 = vld [vmem:[%s3 + $0x34] sm:$0xf]
        %v3863 = vld [vmem:[%s3 + $0x38] sm:$0xf]
        %v3864 = vld [vmem:[%s3 + $0x3c] sm:$0xf]
        %v3865 = vld [vmem:[%s4] sm:$0x1]
        %v3867 = vlaneseq
        %v3868 = vshrl.u32 %v3867, 7
        %v3869 = vsub.s32 0, %v3868
        %v3870 = vrot.slane %v3865, %v3869
        %v3888 = vunpack.c.l.b16 %v3849
        %v3889 = vunpack.c.l.b16 %v3850
        %v3890 = vunpack.c.l.b16 %v3851
        %v3891 = vunpack.c.l.b16 %v3852
        %v3892 = vunpack.c.l.b16 %v3853
        %v3893 = vunpack.c.l.b16 %v3854
        %v3894 = vunpack.c.l.b16 %v3855
        %v3895 = vunpack.c.l.b16 %v3856
        %v3896 = vunpack.c.l.b16 %v3857
        %v3897 = vunpack.c.l.b16 %v3858
        %v3898 = vunpack.c.l.b16 %v3859
        %v3899 = vunpack.c.l.b16 %v3860
        %v3900 = vunpack.c.l.b16 %v3861
        %v3901 = vunpack.c.l.b16 %v3862
        %v3902 = vunpack.c.l.b16 %v3863
        %v3903 = vunpack.c.l.b16 %v3864
        %v3904 = vpack.c.b16 %v3889, %v3888
        %v3905 = vpack.c.b16 %v3891, %v3890
        %v3906 = vpack.c.b16 %v3893, %v3892
        %v3907 = vpack.c.b16 %v3895, %v3894
        %v3908 = vpack.c.b16 %v3897, %v3896
        %v3909 = vpack.c.b16 %v3899, %v3898
        %v3910 = vpack.c.b16 %v3901, %v3900
        %v3911 = vpack.c.b16 %v3903, %v3902
        %3920 = vmatprep.subr.bf16.mxu0 0
        %3921 = vmatpush1.bf16.msra.mxu0 %v3904
        %3922 = vmatprep.subr.bf16.mxu0 0
        %3923 = vmatpush1.bf16.msra.mxu0 %v3905
        %3924 = vmatprep.subr.bf16.mxu0 0
        %3925 = vmatpush1.bf16.msra.mxu0 %v3906
        %3926 = vmatprep.subr.bf16.mxu0 0
        %3927 = vmatpush1.bf16.msra.mxu0 %v3907
        %3928 = vmatprep.subr.bf16.mxu0 0
        %3929 = vmatpush1.bf16.msra.mxu0 %v3908
        %3930 = vmatprep.subr.bf16.mxu0 0
        %3931 = vmatpush1.bf16.msra.mxu0 %v3909
        %3932 = vmatprep.subr.bf16.mxu0 0
        %3933 = vmatpush1.bf16.msra.mxu0 %v3910
        %3934 = vmatprep.subr.bf16.mxu0 0
        %3935 = vmatpush1.bf16.msra.mxu0 %v3911
        %3936 = vmatprep.subr.bf16.mxu0 0
        %3937 = vmatpush1.bf16.msra.mxu0 0
        %3938 = vmatprep.subr.bf16.mxu0 0
        %3939 = vmatpush1.bf16.msra.mxu0 0
        %3940 = vmatprep.subr.bf16.mxu0 0
        %3941 = vmatpush1.bf16.msra.mxu0 0
        %3942 = vmatprep.subr.bf16.mxu0 0
        %3943 = vmatpush1.bf16.msra.mxu0 0
        %3944 = vmatprep.subr.bf16.mxu0 0
        %3945 = vmatpush1.bf16.msra.mxu0 0
        %3946 = vmatprep.subr.bf16.mxu0 0
        %3947 = vmatpush1.bf16.msra.mxu0 0
        %3948 = vmatprep.subr.bf16.mxu0 0
        %3949 = vmatpush1.bf16.msra.mxu0 0
        %3950 = vmatprep.subr.bf16.mxu0 0
        %3951 = vmatpush1.bf16.msra.mxu0 0
        %3952 = vmatprep.mubr.bf16.mxu0 0
        %3953 = vmatmul.mubr.bf16.gmra.mrb[0].mxu0 %v3841
        %v3954 = vpop.f32.mrb[0].mxu0
        %v3955 = vadd.f32 %v3870, %v3954
        %v3956 = vpop.f32.mrb[0].mxu0
        %v3957 = vpop.f32.mrb[0].mxu0
        %v3958 = vadd.f32 %v3870, %v3957
        %v3959 = vpop.f32.mrb[0].mxu0
        %3960 = vmatprep.mubr.bf16.mxu0 0
        %3961 = vmatmul.mubr.bf16.gmra.mrb[0].mxu0 %v3842
        %v3962 = vpop.f32.mrb[0].mxu0
        %v3963 = vadd.f32 %v3870, %v3962
        %v3964 = vpop.f32.mrb[0].mxu0
        %v3965 = vpop.f32.mrb[0].mxu0
        %v3966 = vadd.f32 %v3870, %v3965
        %v3967 = vpop.f32.mrb[0].mxu0
        %3968 = vmatprep.mubr.bf16.mxu0 0
        %3969 = vmatmul.mubr.bf16.gmra.mrb[0].mxu0 %v3843
        %v3970 = vpop.f32.mrb[0].mxu0
        %v3971 = vadd.f32 %v3870, %v3970
        %v3972 = vpop.f32.mrb[0].mxu0
        %v3973 = vpop.f32.mrb[0].mxu0
        %v3974 = vadd.f32 %v3870, %v3973
        %v3975 = vpop.f32.mrb[0].mxu0
        %3976 = vmatprep.mubr.bf16.mxu0 0
        %3977 = vmatmul.mubr.bf16.gmra.mrb[0].mxu0 %v3844
        %v3978 = vpop.f32.mrb[0].mxu0
        %v3979 = vadd.f32 %v3870, %v3978
        %v3980 = vpop.f32.mrb[0].mxu0
        %v3981 = vpop.f32.mrb[0].mxu0
        %v3982 = vadd.f32 %v3870, %v3981
        %v3983 = vpop.f32.mrb[0].mxu0
        %3984 = vmatprep.mubr.bf16.mxu0 0
        %3985 = vmatmul.mubr.bf16.gmra.mrb[0].mxu0 %v3845
        %v3986 = vpop.f32.mrb[0].mxu0
        %v3987 = vadd.f32 %v3870, %v3986
        %v3988 = vpop.f32.mrb[0].mxu0
        %v3989 = vpop.f32.mrb[0].mxu0
        %v3990 = vadd.f32 %v3870, %v3989
        %v3991 = vpop.f32.mrb[0].mxu0
        %3992 = vmatprep.mubr.bf16.mxu0 0
        %3993 = vmatmul.mubr.bf16.gmra.mrb[0].mxu0 %v3846
        %v3994 = vpop.f32.mrb[0].mxu0
        %v3995 = vadd.f32 %v3870, %v3994
        %v3996 = vpop.f32.mrb[0].mxu0
        %v3997 = vpop.f32.mrb[0].mxu0
        %v3998 = vadd.f32 %v3870, %v3997
        %v3999 = vpop.f32.mrb[0].mxu0
        %4000 = vmatprep.mubr.bf16.mxu0 0
        %4001 = vmatmul.mubr.bf16.gmra.mrb[0].mxu0 %v3847
        %v4002 = vpop.f32.mrb[0].mxu0
        %v4003 = vadd.f32 %v3870, %v4002
        %v4004 = vpop.f32.mrb[0].mxu0
        %v4005 = vpop.f32.mrb[0].mxu0
        %v4006 = vadd.f32 %v3870, %v4005
        %v4007 = vpop.f32.mrb[0].mxu0
        %4008 = vmatprep.mubr.bf16.mxu0 0
        %4009 = vmatmul.mubr.bf16.gmra.mrb[0].mxu0 %v3848
        %v4010 = vpop.f32.mrb[0].mxu0
        %v4011 = vadd.f32 %v3870, %v4010
        %v4012 = vpop.f32.mrb[0].mxu0
        %v4013 = vpop.f32.mrb[0].mxu0
        %v4014 = vadd.f32 %v3870, %v4013
        %v4015 = vpop.f32.mrb[0].mxu0
        %4016 = vdwg.mxu0
        %v4017 = vmax.f32 %v3955, 0.0
        %v4018 = vmax.f32 %v3958, 0.0
        %v4019 = vmax.f32 %v3963, 0.0
        %v4020 = vmax.f32 %v3966, 0.0
        %v4021 = vmax.f32 %v3971, 0.0
        %v4022 = vmax.f32 %v3974, 0.0
        %v4023 = vmax.f32 %v3979, 0.0
        %v4024 = vmax.f32 %v3982, 0.0
        %v4025 = vmax.f32 %v3987, 0.0
        %v4026 = vmax.f32 %v3990, 0.0
        %v4027 = vmax.f32 %v3995, 0.0
        %v4028 = vmax.f32 %v3998, 0.0
        %v4029 = vmax.f32 %v4003, 0.0
        %v4030 = vmax.f32 %v4006, 0.0
        %v4031 = vmax.f32 %v4011, 0.0
        %v4032 = vmax.f32 %v4014, 0.0
        %v4033 = vpack.c.bf16 %v4018, %v4017
        %v4034 = vpack.c.bf16 %v4020, %v4019
        %v4035 = vpack.c.bf16 %v4022, %v4021
        %v4036 = vpack.c.bf16 %v4024, %v4023
        %v4037 = vpack.c.bf16 %v4026, %v4025
        %v4038 = vpack.c.bf16 %v4028, %v4027
        %v4039 = vpack.c.bf16 %v4030, %v4029
        %v4040 = vpack.c.bf16 %v4032, %v4031
        %v4041 = vld [vmem:[%s5] sm:$0xf]
        %v4042 = vld [vmem:[%s5 + $0x4] sm:$0xf]
        %v4043 = vld [vmem:[%s5 + $0x8] sm:$0xf]
        %v4044 = vld [vmem:[%s5 + $0xc] sm:$0xf]
        %v4045 = vld [vmem:[%s5 + $0x10] sm:$0xf]
        %v4046 = vld [vmem:[%s5 + $0x14] sm:$0xf]
        %v4047 = vld [vmem:[%s5 + $0x18] sm:$0xf]
        %v4048 = vld [vmem:[%s5 + $0x1c] sm:$0xf]
        %v4049 = vld [vmem:[%s6] sm:$0x1]
        %v4051 = vlaneseq
        %v4052 = vshrl.u32 %v4051, 7
        %v4053 = vsub.s32 0, %v4052
        %v4054 = vrot.slane %v4049, %v4053
        %v4064 = vunpack.c.l.b16 %v4041
        %v4065 = vunpack.c.l.b16 %v4042
        %v4066 = vunpack.c.l.b16 %v4043
        %v4067 = vunpack.c.l.b16 %v4044
        %v4068 = vunpack.c.l.b16 %v4045
        %v4069 = vunpack.c.l.b16 %v4046
        %v4070 = vunpack.c.l.b16 %v4047
        %v4071 = vunpack.c.l.b16 %v4048
        %v4072 = vpack.c.b16 %v4065, %v4064
        %v4073 = vpack.c.b16 %v4067, %v4066
        %v4074 = vpack.c.b16 %v4069, %v4068
        %v4075 = vpack.c.b16 %v4071, %v4070
        %v4081 = vsel %vm814, %v4033, 0
        %v4084 = vsel %vm814, %v4034, 0
        %v4087 = vsel %vm814, %v4035, 0
        %v4090 = vsel %vm814, %v4036, 0
        %v4093 = vsel %vm814, %v4037, 0
        %v4096 = vsel %vm814, %v4038, 0
        %v4099 = vsel %vm814, %v4039, 0
        %v4102 = vsel %vm814, %v4040, 0
        %4104 = vmatprep.subr.bf16.mxu0 0
        %4105 = vmatpush1.bf16.msra.mxu0 %v4072
        %4106 = vmatprep.subr.bf16.mxu0 0
        %4107 = vmatpush1.bf16.msra.mxu0 %v4073
        %4108 = vmatprep.subr.bf16.mxu0 0
        %4109 = vmatpush1.bf16.msra.mxu0 %v4074
        %4110 = vmatprep.subr.bf16.mxu0 0
        %4111 = vmatpush1.bf16.msra.mxu0 %v4075
        %4112 = vmatprep.subr.bf16.mxu0 0
        %4113 = vmatpush1.bf16.msra.mxu0 0
        %4114 = vmatprep.subr.bf16.mxu0 0
        %4115 = vmatpush1.bf16.msra.mxu0 0
        %4116 = vmatprep.subr.bf16.mxu0 0
        %4117 = vmatpush1.bf16.msra.mxu0 0
        %4118 = vmatprep.subr.bf16.mxu0 0
        %4119 = vmatpush1.bf16.msra.mxu0 0
        %4120 = vmatprep.subr.bf16.mxu0 0
        %4121 = vmatpush1.bf16.msra.mxu0 0
        %4122 = vmatprep.subr.bf16.mxu0 0
        %4123 = vmatpush1.bf16.msra.mxu0 0
        %4124 = vmatprep.subr.bf16.mxu0 0
        %4125 = vmatpush1.bf16.msra.mxu0 0
        %4126 = vmatprep.subr.bf16.mxu0 0
        %4127 = vmatpush1.bf16.msra.mxu0 0
        %4128 = vmatprep.subr.bf16.mxu0 0
        %4129 = vmatpush1.bf16.msra.mxu0 0
        %4130 = vmatprep.subr.bf16.mxu0 0
        %4131 = vmatpush1.bf16.msra.mxu0 0
        %4132 = vmatprep.subr.bf16.mxu0 0
        %4133 = vmatpush1.bf16.msra.mxu0 0
        %4134 = vmatprep.subr.bf16.mxu0 0
        %4135 = vmatpush1.bf16.msra.mxu0 0
        %4136 = vmatprep.mubr.bf16.mxu0 0
        %4137 = vmatmul.mubr.bf16.gmra.mrb[0].mxu0 %v4081
        %v4138 = vpop.f32.mrb[0].mxu0
        %v4139 = vadd.f32 %v4054, %v4138
        %v4140 = vpop.f32.mrb[0].mxu0
        %v4141 = vpop.f32.mrb[0].mxu0
        %v4142 = vadd.f32 %v4054, %v4141
        %v4143 = vpop.f32.mrb[0].mxu0
        %4144 = vmatprep.mubr.bf16.mxu0 0
        %4145 = vmatmul.mubr.bf16.gmra.mrb[0].mxu0 %v4084
        %v4146 = vpop.f32.mrb[0].mxu0
        %v4147 = vadd.f32 %v4054, %v4146
        %v4148 = vpop.f32.mrb[0].mxu0
        %v4149 = vpop.f32.mrb[0].mxu0
        %v4150 = vadd.f32 %v4054, %v4149
        %v4151 = vpop.f32.mrb[0].mxu0
        %4152 = vmatprep.mubr.bf16.mxu0 0
        %4153 = vmatmul.mubr.bf16.gmra.mrb[0].mxu0 %v4087
        %v4154 = vpop.f32.mrb[0].mxu0
        %v4155 = vadd.f32 %v4054, %v4154
        %v4156 = vpop.f32.mrb[0].mxu0
        %v4157 = vpop.f32.mrb[0].mxu0
        %v4158 = vadd.f32 %v4054, %v4157
        %v4159 = vpop.f32.mrb[0].mxu0
        %4160 = vmatprep.mubr.bf16.mxu0 0
        %4161 = vmatmul.mubr.bf16.gmra.mrb[0].mxu0 %v4090
        %v4162 = vpop.f32.mrb[0].mxu0
        %v4163 = vadd.f32 %v4054, %v4162
        %v4164 = vpop.f32.mrb[0].mxu0
        %v4165 = vpop.f32.mrb[0].mxu0
        %v4166 = vadd.f32 %v4054, %v4165
        %v4167 = vpop.f32.mrb[0].mxu0
        %4168 = vmatprep.mubr.bf16.mxu0 0
        %4169 = vmatmul.mubr.bf16.gmra.mrb[0].mxu0 %v4093
        %v4170 = vpop.f32.mrb[0].mxu0
        %v4171 = vadd.f32 %v4054, %v4170
        %v4172 = vpop.f32.mrb[0].mxu0
        %v4173 = vpop.f32.mrb[0].mxu0
        %v4174 = vadd.f32 %v4054, %v4173
        %v4175 = vpop.f32.mrb[0].mxu0
        %4176 = vmatprep.mubr.bf16.mxu0 0
        %4177 = vmatmul.mubr.bf16.gmra.mrb[0].mxu0 %v4096
        %v4178 = vpop.f32.mrb[0].mxu0
        %v4179 = vadd.f32 %v4054, %v4178
        %v4180 = vpop.f32.mrb[0].mxu0
        %v4181 = vpop.f32.mrb[0].mxu0
        %v4182 = vadd.f32 %v4054, %v4181
        %v4183 = vpop.f32.mrb[0].mxu0
        %4184 = vmatprep.mubr.bf16.mxu0 0
        %4185 = vmatmul.mubr.bf16.gmra.mrb[0].mxu0 %v4099
        %v4186 = vpop.f32.mrb[0].mxu0
        %v4187 = vadd.f32 %v4054, %v4186
        %v4188 = vpop.f32.mrb[0].mxu0
        %v4189 = vpop.f32.mrb[0].mxu0
        %v4190 = vadd.f32 %v4054, %v4189
        %v4191 = vpop.f32.mrb[0].mxu0
        %4192 = vmatprep.mubr.bf16.mxu0 0
        %4193 = vmatmul.mubr.bf16.gmra.mrb[0].mxu0 %v4102
        %v4194 = vpop.f32.mrb[0].mxu0
        %v4195 = vadd.f32 %v4054, %v4194
        %v4196 = vpop.f32.mrb[0].mxu0
        %v4197 = vpop.f32.mrb[0].mxu0
        %v4198 = vadd.f32 %v4054, %v4197
        %v4199 = vpop.f32.mrb[0].mxu0
        %4200 = vdwg.mxu0
        %v4201 = vmax.f32 %v4139, 0.0
        %v4202 = vmax.f32 %v4142, 0.0
        %v4203 = vmax.f32 %v4147, 0.0
        %v4204 = vmax.f32 %v4150, 0.0
        %v4205 = vmax.f32 %v4155, 0.0
        %v4206 = vmax.f32 %v4158, 0.0
        %v4207 = vmax.f32 %v4163, 0.0
        %v4208 = vmax.f32 %v4166, 0.0
        %v4209 = vmax.f32 %v4171, 0.0
        %v4210 = vmax.f32 %v4174, 0.0
        %v4211 = vmax.f32 %v4179, 0.0
        %v4212 = vmax.f32 %v4182, 0.0
        %v4213 = vmax.f32 %v4187, 0.0
        %v4214 = vmax.f32 %v4190, 0.0
        %v4215 = vmax.f32 %v4195, 0.0
        %v4216 = vmax.f32 %v4198, 0.0
        %v4217 = vpack.c.bf16 %v4202, %v4201
        %v4218 = vpack.c.bf16 %v4204, %v4203
        %v4219 = vpack.c.bf16 %v4206, %v4205
        %v4220 = vpack.c.bf16 %v4208, %v4207
        %v4221 = vpack.c.bf16 %v4210, %v4209
        %v4222 = vpack.c.bf16 %v4212, %v4211
        %v4223 = vpack.c.bf16 %v4214, %v4213
        %v4224 = vpack.c.bf16 %v4216, %v4215
        %v4225 = vld [vmem:[%s7] sm:$0xf]
        %v4226 = vld [vmem:[%s7 + $0x4] sm:$0xf]
        %v4227 = vld [vmem:[%s7 + $0x8] sm:$0xf]
        %v4228 = vld [vmem:[%s7 + $0xc] sm:$0xf]
        %v4229 = vld [vmem:[%s8] sm:$0x1]
        %v4231 = vlaneseq
        %v4232 = vshrl.u32 %v4231, 7
        %v4233 = vsub.s32 0, %v4232
        %v4234 = vrot.slane %v4229, %v4233
        %v4240 = vunpack.c.l.b16 %v4225
        %v4241 = vunpack.c.l.b16 %v4226
        %v4242 = vunpack.c.l.b16 %v4227
        %v4243 = vunpack.c.l.b16 %v4228
        %v4244 = vpack.c.b16 %v4241, %v4240
        %v4245 = vpack.c.b16 %v4243, %v4242
        %v4249 = vsel %vm437, %v4217, 0
        %v4252 = vsel %vm437, %v4218, 0
        %v4255 = vsel %vm437, %v4219, 0
        %v4258 = vsel %vm437, %v4220, 0
        %v4261 = vsel %vm437, %v4221, 0
        %v4264 = vsel %vm437, %v4222, 0
        %v4267 = vsel %vm437, %v4223, 0
        %v4270 = vsel %vm437, %v4224, 0
        %4272 = vmatprep.subr.bf16.mxu0 0
        %4273 = vmatpush1.bf16.msra.mxu0 %v4244
        %4274 = vmatprep.subr.bf16.mxu0 0
        %4275 = vmatpush1.bf16.msra.mxu0 %v4245
        %4276 = vmatprep.subr.bf16.mxu0 0
        %4277 = vmatpush1.bf16.msra.mxu0 0
        %4278 = vmatprep.subr.bf16.mxu0 0
        %4279 = vmatpush1.bf16.msra.mxu0 0
        %4280 = vmatprep.subr.bf16.mxu0 0
        %4281 = vmatpush1.bf16.msra.mxu0 0
        %4282 = vmatprep.subr.bf16.mxu0 0
        %4283 = vmatpush1.bf16.msra.mxu0 0
        %4284 = vmatprep.subr.bf16.mxu0 0
        %4285 = vmatpush1.bf16.msra.mxu0 0
        %4286 = vmatprep.subr.bf16.mxu0 0
        %4287 = vmatpush1.bf16.msra.mxu0 0
        %4288 = vmatprep.subr.bf16.mxu0 0
        %4289 = vmatpush1.bf16.msra.mxu0 0
        %4290 = vmatprep.subr.bf16.mxu0 0
        %4291 = vmatpush1.bf16.msra.mxu0 0
        %4292 = vmatprep.subr.bf16.mxu0 0
        %4293 = vmatpush1.bf16.msra.mxu0 0
        %4294 = vmatprep.subr.bf16.mxu0 0
        %4295 = vmatpush1.bf16.msra.mxu0 0
        %4296 = vmatprep.subr.bf16.mxu0 0
        %4297 = vmatpush1.bf16.msra.mxu0 0
        %4298 = vmatprep.subr.bf16.mxu0 0
        %4299 = vmatpush1.bf16.msra.mxu0 0
        %4300 = vmatprep.subr.bf16.mxu0 0
        %4301 = vmatpush1.bf16.msra.mxu0 0
        %4302 = vmatprep.subr.bf16.mxu0 0
        %4303 = vmatpush1.bf16.msra.mxu0 0
        %4304 = vmatprep.mubr.bf16.mxu0 0
        %4305 = vmatmul.mubr.bf16.gmra.mrb[0].mxu0 %v4249
        %v4306 = vpop.f32.mrb[0].mxu0
        %v4307 = vadd.f32 %v4234, %v4306
        %v4308 = vpop.f32.mrb[0].mxu0
        %v4309 = vpop.f32.mrb[0].mxu0
        %v4310 = vadd.f32 %v4234, %v4309
        %v4311 = vpop.f32.mrb[0].mxu0
        %4312 = vmatprep.mubr.bf16.mxu0 0
        %4313 = vmatmul.mubr.bf16.gmra.mrb[0].mxu0 %v4252
        %v4314 = vpop.f32.mrb[0].mxu0
        %v4315 = vadd.f32 %v4234, %v4314
        %v4316 = vpop.f32.mrb[0].mxu0
        %v4317 = vpop.f32.mrb[0].mxu0
        %v4318 = vadd.f32 %v4234, %v4317
        %v4319 = vpop.f32.mrb[0].mxu0
        %4320 = vmatprep.mubr.bf16.mxu0 0
        %4321 = vmatmul.mubr.bf16.gmra.mrb[0].mxu0 %v4255
        %v4322 = vpop.f32.mrb[0].mxu0
        %v4323 = vadd.f32 %v4234, %v4322
        %v4324 = vpop.f32.mrb[0].mxu0
        %v4325 = vpop.f32.mrb[0].mxu0
        %v4326 = vadd.f32 %v4234, %v4325
        %v4327 = vpop.f32.mrb[0].mxu0
        %4328 = vmatprep.mubr.bf16.mxu0 0
        %4329 = vmatmul.mubr.bf16.gmra.mrb[0].mxu0 %v4258
        %v4330 = vpop.f32.mrb[0].mxu0
        %v4331 = vadd.f32 %v4234, %v4330
        %v4332 = vpop.f32.mrb[0].mxu0
        %v4333 = vpop.f32.mrb[0].mxu0
        %v4334 = vadd.f32 %v4234, %v4333
        %v4335 = vpop.f32.mrb[0].mxu0
        %4336 = vmatprep.mubr.bf16.mxu0 0
        %4337 = vmatmul.mubr.bf16.gmra.mrb[0].mxu0 %v4261
        %v4338 = vpop.f32.mrb[0].mxu0
        %v4339 = vadd.f32 %v4234, %v4338
        %v4340 = vpop.f32.mrb[0].mxu0
        %v4341 = vpop.f32.mrb[0].mxu0
        %v4342 = vadd.f32 %v4234, %v4341
        %v4343 = vpop.f32.mrb[0].mxu0
        %4344 = vmatprep.mubr.bf16.mxu0 0
        %4345 = vmatmul.mubr.bf16.gmra.mrb[0].mxu0 %v4264
        %v4346 = vpop.f32.mrb[0].mxu0
        %v4347 = vadd.f32 %v4234, %v4346
        %v4348 = vpop.f32.mrb[0].mxu0
        %v4349 = vpop.f32.mrb[0].mxu0
        %v4350 = vadd.f32 %v4234, %v4349
        %v4351 = vpop.f32.mrb[0].mxu0
        %4352 = vmatprep.mubr.bf16.mxu0 0
        %4353 = vmatmul.mubr.bf16.gmra.mrb[0].mxu0 %v4267
        %v4354 = vpop.f32.mrb[0].mxu0
        %v4355 = vadd.f32 %v4234, %v4354
        %v4356 = vpop.f32.mrb[0].mxu0
        %v4357 = vpop.f32.mrb[0].mxu0
        %v4358 = vadd.f32 %v4234, %v4357
        %v4359 = vpop.f32.mrb[0].mxu0
        %4360 = vmatprep.mubr.bf16.mxu0 0
        %4361 = vmatmul.mubr.bf16.gmra.mrb[0].mxu0 %v4270
        %v4362 = vpop.f32.mrb[0].mxu0
        %v4363 = vadd.f32 %v4234, %v4362
        %v4364 = vpop.f32.mrb[0].mxu0
        %v4365 = vpop.f32.mrb[0].mxu0
        %v4366 = vadd.f32 %v4234, %v4365
        %v4367 = vpop.f32.mrb[0].mxu0
        %4368 = vdwg.mxu0
        %v4369 = vmax.f32 %v4307, 0.0
        %v4370 = vmax.f32 %v4310, 0.0
        %v4371 = vmax.f32 %v4315, 0.0
        %v4372 = vmax.f32 %v4318, 0.0
        %v4373 = vmax.f32 %v4323, 0.0
        %v4374 = vmax.f32 %v4326, 0.0
        %v4375 = vmax.f32 %v4331, 0.0
        %v4376 = vmax.f32 %v4334, 0.0
        %v4377 = vmax.f32 %v4339, 0.0
        %v4378 = vmax.f32 %v4342, 0.0
        %v4379 = vmax.f32 %v4347, 0.0
        %v4380 = vmax.f32 %v4350, 0.0
        %v4381 = vmax.f32 %v4355, 0.0
        %v4382 = vmax.f32 %v4358, 0.0
        %v4383 = vmax.f32 %v4363, 0.0
        %v4384 = vmax.f32 %v4366, 0.0
        %v4385 = vld [vmem:[%s9] sm:$0x1]
        %v4386 = vpack.c.bf16 %v4370, %v4369
        %v4387 = vpack.c.bf16 %v4372, %v4371
        %v4388 = vpack.c.bf16 %v4374, %v4373
        %v4389 = vpack.c.bf16 %v4376, %v4375
        %v4390 = vpack.c.bf16 %v4378, %v4377
        %v4391 = vpack.c.bf16 %v4380, %v4379
        %v4392 = vpack.c.bf16 %v4382, %v4381
        %v4393 = vpack.c.bf16 %v4384, %v4383
        %v4394 = vld [vmem:[#allocation2] sm:$0x1]
        %4396 = vset.pattern.permute.xlu0 0
        %4397 = vperm.xlu0 %4396, %v4394
        %v4398 = vpop.permute.xlu0 %4397
        %v4400 = vlaneseq
        %v4401 = vshrl.u32 %v4400, 7
        %v4402 = vsub.s32 0, %v4401
        %v4403 = vrot.slane %v4398, %v4402
        %v4405 = vsel %vm1139, %v4385, 0
        %v4408 = vsel %vm1139, %v4386, 0
        %v4411 = vsel %vm1139, %v4387, 0
        %v4414 = vsel %vm1139, %v4388, 0
        %v4417 = vsel %vm1139, %v4389, 0
        %v4420 = vsel %vm1139, %v4390, 0
        %v4423 = vsel %vm1139, %v4391, 0
        %v4426 = vsel %vm1139, %v4392, 0
        %v4429 = vsel %vm1139, %v4393, 0
        %4431 = vmatprep.subr.bf16.mxu0 0
        %4432 = vmatpush1.bf16.xpose.msra.mxu0 %v4408
        %4433 = vmatprep.subr.bf16.mxu0 0
        %4434 = vmatpush1.bf16.xpose.msra.mxu0 %v4411
        %4435 = vmatprep.subr.bf16.mxu0 0
        %4436 = vmatpush1.bf16.xpose.msra.mxu0 %v4414
        %4437 = vmatprep.subr.bf16.mxu0 0
        %4438 = vmatpush1.bf16.xpose.msra.mxu0 %v4417
        %4439 = vmatprep.subr.bf16.mxu0 0
        %4440 = vmatpush1.bf16.xpose.msra.mxu0 %v4420
        %4441 = vmatprep.subr.bf16.mxu0 0
        %4442 = vmatpush1.bf16.xpose.msra.mxu0 %v4423
        %4443 = vmatprep.subr.bf16.mxu0 0
        %4444 = vmatpush1.bf16.xpose.msra.mxu0 %v4426
        %4445 = vmatprep.subr.bf16.mxu0 0
        %4446 = vmatpush1.bf16.xpose.msra.mxu0 %v4429
        %4447 = vmatprep.subr.bf16.mxu0 0
        %4448 = vmatpush1.bf16.xpose.msra.mxu0 0
        %4449 = vmatprep.subr.bf16.mxu0 0
        %4450 = vmatpush1.bf16.xpose.msra.mxu0 0
        %4451 = vmatprep.subr.bf16.mxu0 0
        %4452 = vmatpush1.bf16.xpose.msra.mxu0 0
        %4453 = vmatprep.subr.bf16.mxu0 0
        %4454 = vmatpush1.bf16.xpose.msra.mxu0 0
        %4455 = vmatprep.subr.bf16.mxu0 0
        %4456 = vmatpush1.bf16.xpose.msra.mxu0 0
        %4457 = vmatprep.subr.bf16.mxu0 0
        %4458 = vmatpush1.bf16.xpose.msra.mxu0 0
        %4459 = vmatprep.subr.bf16.mxu0 0
        %4460 = vmatpush1.bf16.xpose.msra.mxu0 0
        %4461 = vmatprep.subr.bf16.mxu0 0
        %4462 = vmatpush1.bf16.xpose.msra.mxu0 0
        %4463 = vmatprep.mubr.bf16.mxu0 0
        %4464 = vmatmul.mubr.bf16.gmra.mrb[0].mxu0 %v4405
        %v4465 = vpop.f32.mrb[0].mxu0
        %v4466 = vadd.f32 %v4403, %v4465
        %v4467 = vpop.f32.mrb[0].mxu0
        %v4468 = vpop.f32.mrb[0].mxu0
        %v4469 = vpop.f32.mrb[0].mxu0
        %4470 = vdwg.mxu0
        %4471 = vst [vmem:[%s382 + $0x4] sm:$0x1] %v4466
        %s4472 = scalar_lea.vmem %s387, 640
        %v4473 = vld [vmem:[%s4472] sm:$0xff]
        %v4474 = vld [vmem:[%s4472 + $0x8] sm:$0xff]
        %v4475 = vld [vmem:[%s4472 + $0x10] sm:$0xff]
        %v4476 = vld [vmem:[%s4472 + $0x18] sm:$0xff]
        %v4477 = vld [vmem:[%s4472 + $0x20] sm:$0xff]
        %v4478 = vld [vmem:[%s4472 + $0x28] sm:$0xff]
        %v4479 = vld [vmem:[%s4472 + $0x30] sm:$0xff]
        %v4480 = vld [vmem:[%s4472 + $0x38] sm:$0xff]
        %v4481 = vld [vmem:[%s4472 + $0x40] sm:$0xff]
        %v4482 = vld [vmem:[%s4472 + $0x48] sm:$0xff]
        %v4483 = vld [vmem:[%s4472 + $0x50] sm:$0xff]
        %v4484 = vld [vmem:[%s4472 + $0x58] sm:$0xff]
        %v4485 = vld [vmem:[%s4472 + $0x60] sm:$0xff]
        %v4486 = vld [vmem:[%s4472 + $0x68] sm:$0xff]
        %v4487 = vld [vmem:[%s4472 + $0x70] sm:$0xff]
        %v4488 = vld [vmem:[%s4472 + $0x78] sm:$0xff]
        %v4489 = vpack.c.bf16 %v4474, %v4473
        %v4490 = vpack.c.bf16 %v4476, %v4475
        %v4491 = vpack.c.bf16 %v4478, %v4477
        %v4492 = vpack.c.bf16 %v4480, %v4479
        %v4493 = vpack.c.bf16 %v4482, %v4481
        %v4494 = vpack.c.bf16 %v4484, %v4483
        %v4495 = vpack.c.bf16 %v4486, %v4485
        %v4496 = vpack.c.bf16 %v4488, %v4487
        %v4497 = vld [vmem:[%s1] sm:$0xf]
        %v4498 = vld [vmem:[%s1 + $0x4] sm:$0xf]
        %v4499 = vld [vmem:[%s1 + $0x8] sm:$0xf]
        %v4500 = vld [vmem:[%s1 + $0xc] sm:$0xf]
        %v4501 = vld [vmem:[%s2] sm:$0x1]
        %v4503 = vlaneseq
        %v4504 = vshrl.u32 %v4503, 7
        %v4505 = vsub.s32 0, %v4504
        %v4506 = vrot.slane %v4501, %v4505
        %v4512 = vunpack.c.l.b16 %v4497
        %v4513 = vunpack.c.l.b16 %v4498
        %v4514 = vunpack.c.l.b16 %v4499
        %v4515 = vunpack.c.l.b16 %v4500
        %v4516 = vpack.c.b16 %v4513, %v4512
        %v4517 = vpack.c.b16 %v4515, %v4514
        %v4521 = vsel %vm437, %v4489, 0
        %v4524 = vsel %vm437, %v4490, 0
        %v4527 = vsel %vm437, %v4491, 0
        %v4530 = vsel %vm437, %v4492, 0
        %v4533 = vsel %vm437, %v4493, 0
        %v4536 = vsel %vm437, %v4494, 0
        %v4539 = vsel %vm437, %v4495, 0
        %v4542 = vsel %vm437, %v4496, 0
        %4544 = vmatprep.subr.bf16.mxu0 0
        %4545 = vmatpush1.bf16.msra.mxu0 %v4516
        %4546 = vmatprep.subr.bf16.mxu0 0
        %4547 = vmatpush1.bf16.msra.mxu0 %v4517
        %4548 = vmatprep.subr.bf16.mxu0 0
        %4549 = vmatpush1.bf16.msra.mxu0 0
        %4550 = vmatprep.subr.bf16.mxu0 0
        %4551 = vmatpush1.bf16.msra.mxu0 0
        %4552 = vmatprep.subr.bf16.mxu0 0
        %4553 = vmatpush1.bf16.msra.mxu0 0
        %4554 = vmatprep.subr.bf16.mxu0 0
        %4555 = vmatpush1.bf16.msra.mxu0 0
        %4556 = vmatprep.subr.bf16.mxu0 0
        %4557 = vmatpush1.bf16.msra.mxu0 0
        %4558 = vmatprep.subr.bf16.mxu0 0
        %4559 = vmatpush1.bf16.msra.mxu0 0
        %4560 = vmatprep.subr.bf16.mxu0 0
        %4561 = vmatpush1.bf16.msra.mxu0 0
        %4562 = vmatprep.subr.bf16.mxu0 0
        %4563 = vmatpush1.bf16.msra.mxu0 0
        %4564 = vmatprep.subr.bf16.mxu0 0
        %4565 = vmatpush1.bf16.msra.mxu0 0
        %4566 = vmatprep.subr.bf16.mxu0 0
        %4567 = vmatpush1.bf16.msra.mxu0 0
        %4568 = vmatprep.subr.bf16.mxu0 0
        %4569 = vmatpush1.bf16.msra.mxu0 0
        %4570 = vmatprep.subr.bf16.mxu0 0
        %4571 = vmatpush1.bf16.msra.mxu0 0
        %4572 = vmatprep.subr.bf16.mxu0 0
        %4573 = vmatpush1.bf16.msra.mxu0 0
        %4574 = vmatprep.subr.bf16.mxu0 0
        %4575 = vmatpush1.bf16.msra.mxu0 0
        %4576 = vmatprep.mubr.bf16.mxu0 0
        %4577 = vmatmul.mubr.bf16.gmra.mrb[0].mxu0 %v4521
        %v4578 = vpop.f32.mrb[0].mxu0
        %v4579 = vadd.f32 %v4506, %v4578
        %v4580 = vpop.f32.mrb[0].mxu0
        %v4581 = vpop.f32.mrb[0].mxu0
        %v4582 = vadd.f32 %v4506, %v4581
        %v4583 = vpop.f32.mrb[0].mxu0
        %4584 = vmatprep.mubr.bf16.mxu0 0
        %4585 = vmatmul.mubr.bf16.gmra.mrb[0].mxu0 %v4524
        %v4586 = vpop.f32.mrb[0].mxu0
        %v4587 = vadd.f32 %v4506, %v4586
        %v4588 = vpop.f32.mrb[0].mxu0
        %v4589 = vpop.f32.mrb[0].mxu0
        %v4590 = vadd.f32 %v4506, %v4589
        %v4591 = vpop.f32.mrb[0].mxu0
        %4592 = vmatprep.mubr.bf16.mxu0 0
        %4593 = vmatmul.mubr.bf16.gmra.mrb[0].mxu0 %v4527
        %v4594 = vpop.f32.mrb[0].mxu0
        %v4595 = vadd.f32 %v4506, %v4594
        %v4596 = vpop.f32.mrb[0].mxu0
        %v4597 = vpop.f32.mrb[0].mxu0
        %v4598 = vadd.f32 %v4506, %v4597
        %v4599 = vpop.f32.mrb[0].mxu0
        %4600 = vmatprep.mubr.bf16.mxu0 0
        %4601 = vmatmul.mubr.bf16.gmra.mrb[0].mxu0 %v4530
        %v4602 = vpop.f32.mrb[0].mxu0
        %v4603 = vadd.f32 %v4506, %v4602
        %v4604 = vpop.f32.mrb[0].mxu0
        %v4605 = vpop.f32.mrb[0].mxu0
        %v4606 = vadd.f32 %v4506, %v4605
        %v4607 = vpop.f32.mrb[0].mxu0
        %4608 = vmatprep.mubr.bf16.mxu0 0
        %4609 = vmatmul.mubr.bf16.gmra.mrb[0].mxu0 %v4533
        %v4610 = vpop.f32.mrb[0].mxu0
        %v4611 = vadd.f32 %v4506, %v4610
        %v4612 = vpop.f32.mrb[0].mxu0
        %v4613 = vpop.f32.mrb[0].mxu0
        %v4614 = vadd.f32 %v4506, %v4613
        %v4615 = vpop.f32.mrb[0].mxu0
        %4616 = vmatprep.mubr.bf16.mxu0 0
        %4617 = vmatmul.mubr.bf16.gmra.mrb[0].mxu0 %v4536
        %v4618 = vpop.f32.mrb[0].mxu0
        %v4619 = vadd.f32 %v4506, %v4618
        %v4620 = vpop.f32.mrb[0].mxu0
        %v4621 = vpop.f32.mrb[0].mxu0
        %v4622 = vadd.f32 %v4506, %v4621
        %v4623 = vpop.f32.mrb[0].mxu0
        %4624 = vmatprep.mubr.bf16.mxu0 0
        %4625 = vmatmul.mubr.bf16.gmra.mrb[0].mxu0 %v4539
        %v4626 = vpop.f32.mrb[0].mxu0
        %v4627 = vadd.f32 %v4506, %v4626
        %v4628 = vpop.f32.mrb[0].mxu0
        %v4629 = vpop.f32.mrb[0].mxu0
        %v4630 = vadd.f32 %v4506, %v4629
        %v4631 = vpop.f32.mrb[0].mxu0
        %4632 = vmatprep.mubr.bf16.mxu0 0
        %4633 = vmatmul.mubr.bf16.gmra.mrb[0].mxu0 %v4542
        %v4634 = vpop.f32.mrb[0].mxu0
        %v4635 = vadd.f32 %v4506, %v4634
        %v4636 = vpop.f32.mrb[0].mxu0
        %v4637 = vpop.f32.mrb[0].mxu0
        %v4638 = vadd.f32 %v4506, %v4637
        %v4639 = vpop.f32.mrb[0].mxu0
        %4640 = vdwg.mxu0
        %v4641 = vmax.f32 %v4579, 0.0
        %v4642 = vmax.f32 %v4582, 0.0
        %v4643 = vmax.f32 %v4587, 0.0
        %v4644 = vmax.f32 %v4590, 0.0
        %v4645 = vmax.f32 %v4595, 0.0
        %v4646 = vmax.f32 %v4598, 0.0
        %v4647 = vmax.f32 %v4603, 0.0
        %v4648 = vmax.f32 %v4606, 0.0
        %v4649 = vmax.f32 %v4611, 0.0
        %v4650 = vmax.f32 %v4614, 0.0
        %v4651 = vmax.f32 %v4619, 0.0
        %v4652 = vmax.f32 %v4622, 0.0
        %v4653 = vmax.f32 %v4627, 0.0
        %v4654 = vmax.f32 %v4630, 0.0
        %v4655 = vmax.f32 %v4635, 0.0
        %v4656 = vmax.f32 %v4638, 0.0
        %v4657 = vpack.c.bf16 %v4642, %v4641
        %v4658 = vpack.c.bf16 %v4644, %v4643
        %v4659 = vpack.c.bf16 %v4646, %v4645
        %v4660 = vpack.c.bf16 %v4648, %v4647
        %v4661 = vpack.c.bf16 %v4650, %v4649
        %v4662 = vpack.c.bf16 %v4652, %v4651
        %v4663 = vpack.c.bf16 %v4654, %v4653
        %v4664 = vpack.c.bf16 %v4656, %v4655
        %v4665 = vld [vmem:[%s3] sm:$0xf]
        %v4666 = vld [vmem:[%s3 + $0x4] sm:$0xf]
        %v4667 = vld [vmem:[%s3 + $0x8] sm:$0xf]
        %v4668 = vld [vmem:[%s3 + $0xc] sm:$0xf]
        %v4669 = vld [vmem:[%s3 + $0x10] sm:$0xf]
        %v4670 = vld [vmem:[%s3 + $0x14] sm:$0xf]
        %v4671 = vld [vmem:[%s3 + $0x18] sm:$0xf]
        %v4672 = vld [vmem:[%s3 + $0x1c] sm:$0xf]
        %v4673 = vld [vmem:[%s3 + $0x20] sm:$0xf]
        %v4674 = vld [vmem:[%s3 + $0x24] sm:$0xf]
        %v4675 = vld [vmem:[%s3 + $0x28] sm:$0xf]
        %v4676 = vld [vmem:[%s3 + $0x2c] sm:$0xf]
        %v4677 = vld [vmem:[%s3 + $0x30] sm:$0xf]
        %v4678 = vld [vmem:[%s3 + $0x34] sm:$0xf]
        %v4679 = vld [vmem:[%s3 + $0x38] sm:$0xf]
        %v4680 = vld [vmem:[%s3 + $0x3c] sm:$0xf]
        %v4681 = vld [vmem:[%s4] sm:$0x1]
        %v4683 = vlaneseq
        %v4684 = vshrl.u32 %v4683, 7
        %v4685 = vsub.s32 0, %v4684
        %v4686 = vrot.slane %v4681, %v4685
        %v4704 = vunpack.c.l.b16 %v4665
        %v4705 = vunpack.c.l.b16 %v4666
        %v4706 = vunpack.c.l.b16 %v4667
        %v4707 = vunpack.c.l.b16 %v4668
        %v4708 = vunpack.c.l.b16 %v4669
        %v4709 = vunpack.c.l.b16 %v4670
        %v4710 = vunpack.c.l.b16 %v4671
        %v4711 = vunpack.c.l.b16 %v4672
        %v4712 = vunpack.c.l.b16 %v4673
        %v4713 = vunpack.c.l.b16 %v4674
        %v4714 = vunpack.c.l.b16 %v4675
        %v4715 = vunpack.c.l.b16 %v4676
        %v4716 = vunpack.c.l.b16 %v4677
        %v4717 = vunpack.c.l.b16 %v4678
        %v4718 = vunpack.c.l.b16 %v4679
        %v4719 = vunpack.c.l.b16 %v4680
        %v4720 = vpack.c.b16 %v4705, %v4704
        %v4721 = vpack.c.b16 %v4707, %v4706
        %v4722 = vpack.c.b16 %v4709, %v4708
        %v4723 = vpack.c.b16 %v4711, %v4710
        %v4724 = vpack.c.b16 %v4713, %v4712
        %v4725 = vpack.c.b16 %v4715, %v4714
        %v4726 = vpack.c.b16 %v4717, %v4716
        %v4727 = vpack.c.b16 %v4719, %v4718
        %4736 = vmatprep.subr.bf16.mxu0 0
        %4737 = vmatpush1.bf16.msra.mxu0 %v4720
        %4738 = vmatprep.subr.bf16.mxu0 0
        %4739 = vmatpush1.bf16.msra.mxu0 %v4721
        %4740 = vmatprep.subr.bf16.mxu0 0
        %4741 = vmatpush1.bf16.msra.mxu0 %v4722
        %4742 = vmatprep.subr.bf16.mxu0 0
        %4743 = vmatpush1.bf16.msra.mxu0 %v4723
        %4744 = vmatprep.subr.bf16.mxu0 0
        %4745 = vmatpush1.bf16.msra.mxu0 %v4724
        %4746 = vmatprep.subr.bf16.mxu0 0
        %4747 = vmatpush1.bf16.msra.mxu0 %v4725
        %4748 = vmatprep.subr.bf16.mxu0 0
        %4749 = vmatpush1.bf16.msra.mxu0 %v4726
        %4750 = vmatprep.subr.bf16.mxu0 0
        %4751 = vmatpush1.bf16.msra.mxu0 %v4727
        %4752 = vmatprep.subr.bf16.mxu0 0
        %4753 = vmatpush1.bf16.msra.mxu0 0
        %4754 = vmatprep.subr.bf16.mxu0 0
        %4755 = vmatpush1.bf16.msra.mxu0 0
        %4756 = vmatprep.subr.bf16.mxu0 0
        %4757 = vmatpush1.bf16.msra.mxu0 0
        %4758 = vmatprep.subr.bf16.mxu0 0
        %4759 = vmatpush1.bf16.msra.mxu0 0
        %4760 = vmatprep.subr.bf16.mxu0 0
        %4761 = vmatpush1.bf16.msra.mxu0 0
        %4762 = vmatprep.subr.bf16.mxu0 0
        %4763 = vmatpush1.bf16.msra.mxu0 0
        %4764 = vmatprep.subr.bf16.mxu0 0
        %4765 = vmatpush1.bf16.msra.mxu0 0
        %4766 = vmatprep.subr.bf16.mxu0 0
        %4767 = vmatpush1.bf16.msra.mxu0 0
        %4768 = vmatprep.mubr.bf16.mxu0 0
        %4769 = vmatmul.mubr.bf16.gmra.mrb[0].mxu0 %v4657
        %v4770 = vpop.f32.mrb[0].mxu0
        %v4771 = vadd.f32 %v4686, %v4770
        %v4772 = vpop.f32.mrb[0].mxu0
        %v4773 = vpop.f32.mrb[0].mxu0
        %v4774 = vadd.f32 %v4686, %v4773
        %v4775 = vpop.f32.mrb[0].mxu0
        %4776 = vmatprep.mubr.bf16.mxu0 0
        %4777 = vmatmul.mubr.bf16.gmra.mrb[0].mxu0 %v4658
        %v4778 = vpop.f32.mrb[0].mxu0
        %v4779 = vadd.f32 %v4686, %v4778
        %v4780 = vpop.f32.mrb[0].mxu0
        %v4781 = vpop.f32.mrb[0].mxu0
        %v4782 = vadd.f32 %v4686, %v4781
        %v4783 = vpop.f32.mrb[0].mxu0
        %4784 = vmatprep.mubr.bf16.mxu0 0
        %4785 = vmatmul.mubr.bf16.gmra.mrb[0].mxu0 %v4659
        %v4786 = vpop.f32.mrb[0].mxu0
        %v4787 = vadd.f32 %v4686, %v4786
        %v4788 = vpop.f32.mrb[0].mxu0
        %v4789 = vpop.f32.mrb[0].mxu0
        %v4790 = vadd.f32 %v4686, %v4789
        %v4791 = vpop.f32.mrb[0].mxu0
        %4792 = vmatprep.mubr.bf16.mxu0 0
        %4793 = vmatmul.mubr.bf16.gmra.mrb[0].mxu0 %v4660
        %v4794 = vpop.f32.mrb[0].mxu0
        %v4795 = vadd.f32 %v4686, %v4794
        %v4796 = vpop.f32.mrb[0].mxu0
        %v4797 = vpop.f32.mrb[0].mxu0
        %v4798 = vadd.f32 %v4686, %v4797
        %v4799 = vpop.f32.mrb[0].mxu0
        %4800 = vmatprep.mubr.bf16.mxu0 0
        %4801 = vmatmul.mubr.bf16.gmra.mrb[0].mxu0 %v4661
        %v4802 = vpop.f32.mrb[0].mxu0
        %v4803 = vadd.f32 %v4686, %v4802
        %v4804 = vpop.f32.mrb[0].mxu0
        %v4805 = vpop.f32.mrb[0].mxu0
        %v4806 = vadd.f32 %v4686, %v4805
        %v4807 = vpop.f32.mrb[0].mxu0
        %4808 = vmatprep.mubr.bf16.mxu0 0
        %4809 = vmatmul.mubr.bf16.gmra.mrb[0].mxu0 %v4662
        %v4810 = vpop.f32.mrb[0].mxu0
        %v4811 = vadd.f32 %v4686, %v4810
        %v4812 = vpop.f32.mrb[0].mxu0
        %v4813 = vpop.f32.mrb[0].mxu0
        %v4814 = vadd.f32 %v4686, %v4813
        %v4815 = vpop.f32.mrb[0].mxu0
        %4816 = vmatprep.mubr.bf16.mxu0 0
        %4817 = vmatmul.mubr.bf16.gmra.mrb[0].mxu0 %v4663
        %v4818 = vpop.f32.mrb[0].mxu0
        %v4819 = vadd.f32 %v4686, %v4818
        %v4820 = vpop.f32.mrb[0].mxu0
        %v4821 = vpop.f32.mrb[0].mxu0
        %v4822 = vadd.f32 %v4686, %v4821
        %v4823 = vpop.f32.mrb[0].mxu0
        %4824 = vmatprep.mubr.bf16.mxu0 0
        %4825 = vmatmul.mubr.bf16.gmra.mrb[0].mxu0 %v4664
        %v4826 = vpop.f32.mrb[0].mxu0
        %v4827 = vadd.f32 %v4686, %v4826
        %v4828 = vpop.f32.mrb[0].mxu0
        %v4829 = vpop.f32.mrb[0].mxu0
        %v4830 = vadd.f32 %v4686, %v4829
        %v4831 = vpop.f32.mrb[0].mxu0
        %4832 = vdwg.mxu0
        %v4833 = vmax.f32 %v4771, 0.0
        %v4834 = vmax.f32 %v4774, 0.0
        %v4835 = vmax.f32 %v4779, 0.0
        %v4836 = vmax.f32 %v4782, 0.0
        %v4837 = vmax.f32 %v4787, 0.0
        %v4838 = vmax.f32 %v4790, 0.0
        %v4839 = vmax.f32 %v4795, 0.0
        %v4840 = vmax.f32 %v4798, 0.0
        %v4841 = vmax.f32 %v4803, 0.0
        %v4842 = vmax.f32 %v4806, 0.0
        %v4843 = vmax.f32 %v4811, 0.0
        %v4844 = vmax.f32 %v4814, 0.0
        %v4845 = vmax.f32 %v4819, 0.0
        %v4846 = vmax.f32 %v4822, 0.0
        %v4847 = vmax.f32 %v4827, 0.0
        %v4848 = vmax.f32 %v4830, 0.0
        %v4849 = vpack.c.bf16 %v4834, %v4833
        %v4850 = vpack.c.bf16 %v4836, %v4835
        %v4851 = vpack.c.bf16 %v4838, %v4837
        %v4852 = vpack.c.bf16 %v4840, %v4839
        %v4853 = vpack.c.bf16 %v4842, %v4841
        %v4854 = vpack.c.bf16 %v4844, %v4843
        %v4855 = vpack.c.bf16 %v4846, %v4845
        %v4856 = vpack.c.bf16 %v4848, %v4847
        %v4857 = vld [vmem:[%s5] sm:$0xf]
        %v4858 = vld [vmem:[%s5 + $0x4] sm:$0xf]
        %v4859 = vld [vmem:[%s5 + $0x8] sm:$0xf]
        %v4860 = vld [vmem:[%s5 + $0xc] sm:$0xf]
        %v4861 = vld [vmem:[%s5 + $0x10] sm:$0xf]
        %v4862 = vld [vmem:[%s5 + $0x14] sm:$0xf]
        %v4863 = vld [vmem:[%s5 + $0x18] sm:$0xf]
        %v4864 = vld [vmem:[%s5 + $0x1c] sm:$0xf]
        %v4865 = vld [vmem:[%s6] sm:$0x1]
        %v4867 = vlaneseq
        %v4868 = vshrl.u32 %v4867, 7
        %v4869 = vsub.s32 0, %v4868
        %v4870 = vrot.slane %v4865, %v4869
        %v4880 = vunpack.c.l.b16 %v4857
        %v4881 = vunpack.c.l.b16 %v4858
        %v4882 = vunpack.c.l.b16 %v4859
        %v4883 = vunpack.c.l.b16 %v4860
        %v4884 = vunpack.c.l.b16 %v4861
        %v4885 = vunpack.c.l.b16 %v4862
        %v4886 = vunpack.c.l.b16 %v4863
        %v4887 = vunpack.c.l.b16 %v4864
        %v4888 = vpack.c.b16 %v4881, %v4880
        %v4889 = vpack.c.b16 %v4883, %v4882
        %v4890 = vpack.c.b16 %v4885, %v4884
        %v4891 = vpack.c.b16 %v4887, %v4886
        %v4897 = vsel %vm814, %v4849, 0
        %v4900 = vsel %vm814, %v4850, 0
        %v4903 = vsel %vm814, %v4851, 0
        %v4906 = vsel %vm814, %v4852, 0
        %v4909 = vsel %vm814, %v4853, 0
        %v4912 = vsel %vm814, %v4854, 0
        %v4915 = vsel %vm814, %v4855, 0
        %v4918 = vsel %vm814, %v4856, 0
        %4920 = vmatprep.subr.bf16.mxu0 0
        %4921 = vmatpush1.bf16.msra.mxu0 %v4888
        %4922 = vmatprep.subr.bf16.mxu0 0
        %4923 = vmatpush1.bf16.msra.mxu0 %v4889
        %4924 = vmatprep.subr.bf16.mxu0 0
        %4925 = vmatpush1.bf16.msra.mxu0 %v4890
        %4926 = vmatprep.subr.bf16.mxu0 0
        %4927 = vmatpush1.bf16.msra.mxu0 %v4891
        %4928 = vmatprep.subr.bf16.mxu0 0
        %4929 = vmatpush1.bf16.msra.mxu0 0
        %4930 = vmatprep.subr.bf16.mxu0 0
        %4931 = vmatpush1.bf16.msra.mxu0 0
        %4932 = vmatprep.subr.bf16.mxu0 0
        %4933 = vmatpush1.bf16.msra.mxu0 0
        %4934 = vmatprep.subr.bf16.mxu0 0
        %4935 = vmatpush1.bf16.msra.mxu0 0
        %4936 = vmatprep.subr.bf16.mxu0 0
        %4937 = vmatpush1.bf16.msra.mxu0 0
        %4938 = vmatprep.subr.bf16.mxu0 0
        %4939 = vmatpush1.bf16.msra.mxu0 0
        %4940 = vmatprep.subr.bf16.mxu0 0
        %4941 = vmatpush1.bf16.msra.mxu0 0
        %4942 = vmatprep.subr.bf16.mxu0 0
        %4943 = vmatpush1.bf16.msra.mxu0 0
        %4944 = vmatprep.subr.bf16.mxu0 0
        %4945 = vmatpush1.bf16.msra.mxu0 0
        %4946 = vmatprep.subr.bf16.mxu0 0
        %4947 = vmatpush1.bf16.msra.mxu0 0
        %4948 = vmatprep.subr.bf16.mxu0 0
        %4949 = vmatpush1.bf16.msra.mxu0 0
        %4950 = vmatprep.subr.bf16.mxu0 0
        %4951 = vmatpush1.bf16.msra.mxu0 0
        %4952 = vmatprep.mubr.bf16.mxu0 0
        %4953 = vmatmul.mubr.bf16.gmra.mrb[0].mxu0 %v4897
        %v4954 = vpop.f32.mrb[0].mxu0
        %v4955 = vadd.f32 %v4870, %v4954
        %v4956 = vpop.f32.mrb[0].mxu0
        %v4957 = vpop.f32.mrb[0].mxu0
        %v4958 = vadd.f32 %v4870, %v4957
        %v4959 = vpop.f32.mrb[0].mxu0
        %4960 = vmatprep.mubr.bf16.mxu0 0
        %4961 = vmatmul.mubr.bf16.gmra.mrb[0].mxu0 %v4900
        %v4962 = vpop.f32.mrb[0].mxu0
        %v4963 = vadd.f32 %v4870, %v4962
        %v4964 = vpop.f32.mrb[0].mxu0
        %v4965 = vpop.f32.mrb[0].mxu0
        %v4966 = vadd.f32 %v4870, %v4965
        %v4967 = vpop.f32.mrb[0].mxu0
        %4968 = vmatprep.mubr.bf16.mxu0 0
        %4969 = vmatmul.mubr.bf16.gmra.mrb[0].mxu0 %v4903
        %v4970 = vpop.f32.mrb[0].mxu0
        %v4971 = vadd.f32 %v4870, %v4970
        %v4972 = vpop.f32.mrb[0].mxu0
        %v4973 = vpop.f32.mrb[0].mxu0
        %v4974 = vadd.f32 %v4870, %v4973
        %v4975 = vpop.f32.mrb[0].mxu0
        %4976 = vmatprep.mubr.bf16.mxu0 0
        %4977 = vmatmul.mubr.bf16.gmra.mrb[0].mxu0 %v4906
        %v4978 = vpop.f32.mrb[0].mxu0
        %v4979 = vadd.f32 %v4870, %v4978
        %v4980 = vpop.f32.mrb[0].mxu0
        %v4981 = vpop.f32.mrb[0].mxu0
        %v4982 = vadd.f32 %v4870, %v4981
        %v4983 = vpop.f32.mrb[0].mxu0
        %4984 = vmatprep.mubr.bf16.mxu0 0
        %4985 = vmatmul.mubr.bf16.gmra.mrb[0].mxu0 %v4909
        %v4986 = vpop.f32.mrb[0].mxu0
        %v4987 = vadd.f32 %v4870, %v4986
        %v4988 = vpop.f32.mrb[0].mxu0
        %v4989 = vpop.f32.mrb[0].mxu0
        %v4990 = vadd.f32 %v4870, %v4989
        %v4991 = vpop.f32.mrb[0].mxu0
        %4992 = vmatprep.mubr.bf16.mxu0 0
        %4993 = vmatmul.mubr.bf16.gmra.mrb[0].mxu0 %v4912
        %v4994 = vpop.f32.mrb[0].mxu0
        %v4995 = vadd.f32 %v4870, %v4994
        %v4996 = vpop.f32.mrb[0].mxu0
        %v4997 = vpop.f32.mrb[0].mxu0
        %v4998 = vadd.f32 %v4870, %v4997
        %v4999 = vpop.f32.mrb[0].mxu0
        %5000 = vmatprep.mubr.bf16.mxu0 0
        %5001 = vmatmul.mubr.bf16.gmra.mrb[0].mxu0 %v4915
        %v5002 = vpop.f32.mrb[0].mxu0
        %v5003 = vadd.f32 %v4870, %v5002
        %v5004 = vpop.f32.mrb[0].mxu0
        %v5005 = vpop.f32.mrb[0].mxu0
        %v5006 = vadd.f32 %v4870, %v5005
        %v5007 = vpop.f32.mrb[0].mxu0
        %5008 = vmatprep.mubr.bf16.mxu0 0
        %5009 = vmatmul.mubr.bf16.gmra.mrb[0].mxu0 %v4918
        %v5010 = vpop.f32.mrb[0].mxu0
        %v5011 = vadd.f32 %v4870, %v5010
        %v5012 = vpop.f32.mrb[0].mxu0
        %v5013 = vpop.f32.mrb[0].mxu0
        %v5014 = vadd.f32 %v4870, %v5013
        %v5015 = vpop.f32.mrb[0].mxu0
        %5016 = vdwg.mxu0
        %v5017 = vmax.f32 %v4955, 0.0
        %v5018 = vmax.f32 %v4958, 0.0
        %v5019 = vmax.f32 %v4963, 0.0
        %v5020 = vmax.f32 %v4966, 0.0
        %v5021 = vmax.f32 %v4971, 0.0
        %v5022 = vmax.f32 %v4974, 0.0
        %v5023 = vmax.f32 %v4979, 0.0
        %v5024 = vmax.f32 %v4982, 0.0
        %v5025 = vmax.f32 %v4987, 0.0
        %v5026 = vmax.f32 %v4990, 0.0
        %v5027 = vmax.f32 %v4995, 0.0
        %v5028 = vmax.f32 %v4998, 0.0
        %v5029 = vmax.f32 %v5003, 0.0
        %v5030 = vmax.f32 %v5006, 0.0
        %v5031 = vmax.f32 %v5011, 0.0
        %v5032 = vmax.f32 %v5014, 0.0
        %v5033 = vpack.c.bf16 %v5018, %v5017
        %v5034 = vpack.c.bf16 %v5020, %v5019
        %v5035 = vpack.c.bf16 %v5022, %v5021
        %v5036 = vpack.c.bf16 %v5024, %v5023
        %v5037 = vpack.c.bf16 %v5026, %v5025
        %v5038 = vpack.c.bf16 %v5028, %v5027
        %v5039 = vpack.c.bf16 %v5030, %v5029
        %v5040 = vpack.c.bf16 %v5032, %v5031
        %v5041 = vld [vmem:[%s7] sm:$0xf]
        %v5042 = vld [vmem:[%s7 + $0x4] sm:$0xf]
        %v5043 = vld [vmem:[%s7 + $0x8] sm:$0xf]
        %v5044 = vld [vmem:[%s7 + $0xc] sm:$0xf]
        %v5045 = vld [vmem:[%s8] sm:$0x1]
        %v5047 = vlaneseq
        %v5048 = vshrl.u32 %v5047, 7
        %v5049 = vsub.s32 0, %v5048
        %v5050 = vrot.slane %v5045, %v5049
        %v5056 = vunpack.c.l.b16 %v5041
        %v5057 = vunpack.c.l.b16 %v5042
        %v5058 = vunpack.c.l.b16 %v5043
        %v5059 = vunpack.c.l.b16 %v5044
        %v5060 = vpack.c.b16 %v5057, %v5056
        %v5061 = vpack.c.b16 %v5059, %v5058
        %v5065 = vsel %vm437, %v5033, 0
        %v5068 = vsel %vm437, %v5034, 0
        %v5071 = vsel %vm437, %v5035, 0
        %v5074 = vsel %vm437, %v5036, 0
        %v5077 = vsel %vm437, %v5037, 0
        %v5080 = vsel %vm437, %v5038, 0
        %v5083 = vsel %vm437, %v5039, 0
        %v5086 = vsel %vm437, %v5040, 0
        %5088 = vmatprep.subr.bf16.mxu0 0
        %5089 = vmatpush1.bf16.msra.mxu0 %v5060
        %5090 = vmatprep.subr.bf16.mxu0 0
        %5091 = vmatpush1.bf16.msra.mxu0 %v5061
        %5092 = vmatprep.subr.bf16.mxu0 0
        %5093 = vmatpush1.bf16.msra.mxu0 0
        %5094 = vmatprep.subr.bf16.mxu0 0
        %5095 = vmatpush1.bf16.msra.mxu0 0
        %5096 = vmatprep.subr.bf16.mxu0 0
        %5097 = vmatpush1.bf16.msra.mxu0 0
        %5098 = vmatprep.subr.bf16.mxu0 0
        %5099 = vmatpush1.bf16.msra.mxu0 0
        %5100 = vmatprep.subr.bf16.mxu0 0
        %5101 = vmatpush1.bf16.msra.mxu0 0
        %5102 = vmatprep.subr.bf16.mxu0 0
        %5103 = vmatpush1.bf16.msra.mxu0 0
        %5104 = vmatprep.subr.bf16.mxu0 0
        %5105 = vmatpush1.bf16.msra.mxu0 0
        %5106 = vmatprep.subr.bf16.mxu0 0
        %5107 = vmatpush1.bf16.msra.mxu0 0
        %5108 = vmatprep.subr.bf16.mxu0 0
        %5109 = vmatpush1.bf16.msra.mxu0 0
        %5110 = vmatprep.subr.bf16.mxu0 0
        %5111 = vmatpush1.bf16.msra.mxu0 0
        %5112 = vmatprep.subr.bf16.mxu0 0
        %5113 = vmatpush1.bf16.msra.mxu0 0
        %5114 = vmatprep.subr.bf16.mxu0 0
        %5115 = vmatpush1.bf16.msra.mxu0 0
        %5116 = vmatprep.subr.bf16.mxu0 0
        %5117 = vmatpush1.bf16.msra.mxu0 0
        %5118 = vmatprep.subr.bf16.mxu0 0
        %5119 = vmatpush1.bf16.msra.mxu0 0
        %5120 = vmatprep.mubr.bf16.mxu0 0
        %5121 = vmatmul.mubr.bf16.gmra.mrb[0].mxu0 %v5065
        %v5122 = vpop.f32.mrb[0].mxu0
        %v5123 = vadd.f32 %v5050, %v5122
        %v5124 = vpop.f32.mrb[0].mxu0
        %v5125 = vpop.f32.mrb[0].mxu0
        %v5126 = vadd.f32 %v5050, %v5125
        %v5127 = vpop.f32.mrb[0].mxu0
        %5128 = vmatprep.mubr.bf16.mxu0 0
        %5129 = vmatmul.mubr.bf16.gmra.mrb[0].mxu0 %v5068
        %v5130 = vpop.f32.mrb[0].mxu0
        %v5131 = vadd.f32 %v5050, %v5130
        %v5132 = vpop.f32.mrb[0].mxu0
        %v5133 = vpop.f32.mrb[0].mxu0
        %v5134 = vadd.f32 %v5050, %v5133
        %v5135 = vpop.f32.mrb[0].mxu0
        %5136 = vmatprep.mubr.bf16.mxu0 0
        %5137 = vmatmul.mubr.bf16.gmra.mrb[0].mxu0 %v5071
        %v5138 = vpop.f32.mrb[0].mxu0
        %v5139 = vadd.f32 %v5050, %v5138
        %v5140 = vpop.f32.mrb[0].mxu0
        %v5141 = vpop.f32.mrb[0].mxu0
        %v5142 = vadd.f32 %v5050, %v5141
        %v5143 = vpop.f32.mrb[0].mxu0
        %5144 = vmatprep.mubr.bf16.mxu0 0
        %5145 = vmatmul.mubr.bf16.gmra.mrb[0].mxu0 %v5074
        %v5146 = vpop.f32.mrb[0].mxu0
        %v5147 = vadd.f32 %v5050, %v5146
        %v5148 = vpop.f32.mrb[0].mxu0
        %v5149 = vpop.f32.mrb[0].mxu0
        %v5150 = vadd.f32 %v5050, %v5149
        %v5151 = vpop.f32.mrb[0].mxu0
        %5152 = vmatprep.mubr.bf16.mxu0 0
        %5153 = vmatmul.mubr.bf16.gmra.mrb[0].mxu0 %v5077
        %v5154 = vpop.f32.mrb[0].mxu0
        %v5155 = vadd.f32 %v5050, %v5154
        %v5156 = vpop.f32.mrb[0].mxu0
        %v5157 = vpop.f32.mrb[0].mxu0
        %v5158 = vadd.f32 %v5050, %v5157
        %v5159 = vpop.f32.mrb[0].mxu0
        %5160 = vmatprep.mubr.bf16.mxu0 0
        %5161 = vmatmul.mubr.bf16.gmra.mrb[0].mxu0 %v5080
        %v5162 = vpop.f32.mrb[0].mxu0
        %v5163 = vadd.f32 %v5050, %v5162
        %v5164 = vpop.f32.mrb[0].mxu0
        %v5165 = vpop.f32.mrb[0].mxu0
        %v5166 = vadd.f32 %v5050, %v5165
        %v5167 = vpop.f32.mrb[0].mxu0
        %5168 = vmatprep.mubr.bf16.mxu0 0
        %5169 = vmatmul.mubr.bf16.gmra.mrb[0].mxu0 %v5083
        %v5170 = vpop.f32.mrb[0].mxu0
        %v5171 = vadd.f32 %v5050, %v5170
        %v5172 = vpop.f32.mrb[0].mxu0
        %v5173 = vpop.f32.mrb[0].mxu0
        %v5174 = vadd.f32 %v5050, %v5173
        %v5175 = vpop.f32.mrb[0].mxu0
        %5176 = vmatprep.mubr.bf16.mxu0 0
        %5177 = vmatmul.mubr.bf16.gmra.mrb[0].mxu0 %v5086
        %v5178 = vpop.f32.mrb[0].mxu0
        %v5179 = vadd.f32 %v5050, %v5178
        %v5180 = vpop.f32.mrb[0].mxu0
        %v5181 = vpop.f32.mrb[0].mxu0
        %v5182 = vadd.f32 %v5050, %v5181
        %v5183 = vpop.f32.mrb[0].mxu0
        %5184 = vdwg.mxu0
        %v5185 = vmax.f32 %v5123, 0.0
        %v5186 = vmax.f32 %v5126, 0.0
        %v5187 = vmax.f32 %v5131, 0.0
        %v5188 = vmax.f32 %v5134, 0.0
        %v5189 = vmax.f32 %v5139, 0.0
        %v5190 = vmax.f32 %v5142, 0.0
        %v5191 = vmax.f32 %v5147, 0.0
        %v5192 = vmax.f32 %v5150, 0.0
        %v5193 = vmax.f32 %v5155, 0.0
        %v5194 = vmax.f32 %v5158, 0.0
        %v5195 = vmax.f32 %v5163, 0.0
        %v5196 = vmax.f32 %v5166, 0.0
        %v5197 = vmax.f32 %v5171, 0.0
        %v5198 = vmax.f32 %v5174, 0.0
        %v5199 = vmax.f32 %v5179, 0.0
        %v5200 = vmax.f32 %v5182, 0.0
        %v5201 = vld [vmem:[%s9] sm:$0x1]
        %v5202 = vpack.c.bf16 %v5186, %v5185
        %v5203 = vpack.c.bf16 %v5188, %v5187
        %v5204 = vpack.c.bf16 %v5190, %v5189
        %v5205 = vpack.c.bf16 %v5192, %v5191
        %v5206 = vpack.c.bf16 %v5194, %v5193
        %v5207 = vpack.c.bf16 %v5196, %v5195
        %v5208 = vpack.c.bf16 %v5198, %v5197
        %v5209 = vpack.c.bf16 %v5200, %v5199
        %v5210 = vld [vmem:[#allocation2] sm:$0x1]
        %5212 = vset.pattern.permute.xlu0 0
        %5213 = vperm.xlu0 %5212, %v5210
        %v5214 = vpop.permute.xlu0 %5213
        %v5216 = vlaneseq
        %v5217 = vshrl.u32 %v5216, 7
        %v5218 = vsub.s32 0, %v5217
        %v5219 = vrot.slane %v5214, %v5218
        %v5221 = vsel %vm1139, %v5201, 0
        %v5224 = vsel %vm1139, %v5202, 0
        %v5227 = vsel %vm1139, %v5203, 0
        %v5230 = vsel %vm1139, %v5204, 0
        %v5233 = vsel %vm1139, %v5205, 0
        %v5236 = vsel %vm1139, %v5206, 0
        %v5239 = vsel %vm1139, %v5207, 0
        %v5242 = vsel %vm1139, %v5208, 0
        %v5245 = vsel %vm1139, %v5209, 0
        %5247 = vmatprep.subr.bf16.mxu0 0
        %5248 = vmatpush1.bf16.xpose.msra.mxu0 %v5224
        %5249 = vmatprep.subr.bf16.mxu0 0
        %5250 = vmatpush1.bf16.xpose.msra.mxu0 %v5227
        %5251 = vmatprep.subr.bf16.mxu0 0
        %5252 = vmatpush1.bf16.xpose.msra.mxu0 %v5230
        %5253 = vmatprep.subr.bf16.mxu0 0
        %5254 = vmatpush1.bf16.xpose.msra.mxu0 %v5233
        %5255 = vmatprep.subr.bf16.mxu0 0
        %5256 = vmatpush1.bf16.xpose.msra.mxu0 %v5236
        %5257 = vmatprep.subr.bf16.mxu0 0
        %5258 = vmatpush1.bf16.xpose.msra.mxu0 %v5239
        %5259 = vmatprep.subr.bf16.mxu0 0
        %5260 = vmatpush1.bf16.xpose.msra.mxu0 %v5242
        %5261 = vmatprep.subr.bf16.mxu0 0
        %5262 = vmatpush1.bf16.xpose.msra.mxu0 %v5245
        %5263 = vmatprep.subr.bf16.mxu0 0
        %5264 = vmatpush1.bf16.xpose.msra.mxu0 0
        %5265 = vmatprep.subr.bf16.mxu0 0
        %5266 = vmatpush1.bf16.xpose.msra.mxu0 0
        %5267 = vmatprep.subr.bf16.mxu0 0
        %5268 = vmatpush1.bf16.xpose.msra.mxu0 0
        %5269 = vmatprep.subr.bf16.mxu0 0
        %5270 = vmatpush1.bf16.xpose.msra.mxu0 0
        %5271 = vmatprep.subr.bf16.mxu0 0
        %5272 = vmatpush1.bf16.xpose.msra.mxu0 0
        %5273 = vmatprep.subr.bf16.mxu0 0
        %5274 = vmatpush1.bf16.xpose.msra.mxu0 0
        %5275 = vmatprep.subr.bf16.mxu0 0
        %5276 = vmatpush1.bf16.xpose.msra.mxu0 0
        %5277 = vmatprep.subr.bf16.mxu0 0
        %5278 = vmatpush1.bf16.xpose.msra.mxu0 0
        %5279 = vmatprep.mubr.bf16.mxu0 0
        %5280 = vmatmul.mubr.bf16.gmra.mrb[0].mxu0 %v5221
        %v5281 = vpop.f32.mrb[0].mxu0
        %v5282 = vadd.f32 %v5219, %v5281
        %v5283 = vpop.f32.mrb[0].mxu0
        %v5284 = vpop.f32.mrb[0].mxu0
        %v5285 = vpop.f32.mrb[0].mxu0
        %5286 = vdwg.mxu0
        %5287 = vst [vmem:[%s382 + $0x5] sm:$0x1] %v5282
        %s5288 = scalar_lea.vmem %s387, 768
        %v5289 = vld [vmem:[%s5288] sm:$0xff]
        %v5290 = vld [vmem:[%s5288 + $0x8] sm:$0xff]
        %v5291 = vld [vmem:[%s5288 + $0x10] sm:$0xff]
        %v5292 = vld [vmem:[%s5288 + $0x18] sm:$0xff]
        %v5293 = vld [vmem:[%s5288 + $0x20] sm:$0xff]
        %v5294 = vld [vmem:[%s5288 + $0x28] sm:$0xff]
        %v5295 = vld [vmem:[%s5288 + $0x30] sm:$0xff]
        %v5296 = vld [vmem:[%s5288 + $0x38] sm:$0xff]
        %v5297 = vld [vmem:[%s5288 + $0x40] sm:$0xff]
        %v5298 = vld [vmem:[%s5288 + $0x48] sm:$0xff]
        %v5299 = vld [vmem:[%s5288 + $0x50] sm:$0xff]
        %v5300 = vld [vmem:[%s5288 + $0x58] sm:$0xff]
        %v5301 = vld [vmem:[%s5288 + $0x60] sm:$0xff]
        %v5302 = vld [vmem:[%s5288 + $0x68] sm:$0xff]
        %v5303 = vld [vmem:[%s5288 + $0x70] sm:$0xff]
        %v5304 = vld [vmem:[%s5288 + $0x78] sm:$0xff]
        %v5305 = vpack.c.bf16 %v5290, %v5289
        %v5306 = vpack.c.bf16 %v5292, %v5291
        %v5307 = vpack.c.bf16 %v5294, %v5293
        %v5308 = vpack.c.bf16 %v5296, %v5295
        %v5309 = vpack.c.bf16 %v5298, %v5297
        %v5310 = vpack.c.bf16 %v5300, %v5299
        %v5311 = vpack.c.bf16 %v5302, %v5301
        %v5312 = vpack.c.bf16 %v5304, %v5303
        %v5313 = vld [vmem:[%s1] sm:$0xf]
        %v5314 = vld [vmem:[%s1 + $0x4] sm:$0xf]
        %v5315 = vld [vmem:[%s1 + $0x8] sm:$0xf]
        %v5316 = vld [vmem:[%s1 + $0xc] sm:$0xf]
        %v5317 = vld [vmem:[%s2] sm:$0x1]
        %v5319 = vlaneseq
        %v5320 = vshrl.u32 %v5319, 7
        %v5321 = vsub.s32 0, %v5320
        %v5322 = vrot.slane %v5317, %v5321
        %v5328 = vunpack.c.l.b16 %v5313
        %v5329 = vunpack.c.l.b16 %v5314
        %v5330 = vunpack.c.l.b16 %v5315
        %v5331 = vunpack.c.l.b16 %v5316
        %v5332 = vpack.c.b16 %v5329, %v5328
        %v5333 = vpack.c.b16 %v5331, %v5330
        %v5337 = vsel %vm437, %v5305, 0
        %v5340 = vsel %vm437, %v5306, 0
        %v5343 = vsel %vm437, %v5307, 0
        %v5346 = vsel %vm437, %v5308, 0
        %v5349 = vsel %vm437, %v5309, 0
        %v5352 = vsel %vm437, %v5310, 0
        %v5355 = vsel %vm437, %v5311, 0
        %v5358 = vsel %vm437, %v5312, 0
        %5360 = vmatprep.subr.bf16.mxu0 0
        %5361 = vmatpush1.bf16.msra.mxu0 %v5332
        %5362 = vmatprep.subr.bf16.mxu0 0
        %5363 = vmatpush1.bf16.msra.mxu0 %v5333
        %5364 = vmatprep.subr.bf16.mxu0 0
        %5365 = vmatpush1.bf16.msra.mxu0 0
        %5366 = vmatprep.subr.bf16.mxu0 0
        %5367 = vmatpush1.bf16.msra.mxu0 0
        %5368 = vmatprep.subr.bf16.mxu0 0
        %5369 = vmatpush1.bf16.msra.mxu0 0
        %5370 = vmatprep.subr.bf16.mxu0 0
        %5371 = vmatpush1.bf16.msra.mxu0 0
        %5372 = vmatprep.subr.bf16.mxu0 0
        %5373 = vmatpush1.bf16.msra.mxu0 0
        %5374 = vmatprep.subr.bf16.mxu0 0
        %5375 = vmatpush1.bf16.msra.mxu0 0
        %5376 = vmatprep.subr.bf16.mxu0 0
        %5377 = vmatpush1.bf16.msra.mxu0 0
        %5378 = vmatprep.subr.bf16.mxu0 0
        %5379 = vmatpush1.bf16.msra.mxu0 0
        %5380 = vmatprep.subr.bf16.mxu0 0
        %5381 = vmatpush1.bf16.msra.mxu0 0
        %5382 = vmatprep.subr.bf16.mxu0 0
        %5383 = vmatpush1.bf16.msra.mxu0 0
        %5384 = vmatprep.subr.bf16.mxu0 0
        %5385 = vmatpush1.bf16.msra.mxu0 0
        %5386 = vmatprep.subr.bf16.mxu0 0
        %5387 = vmatpush1.bf16.msra.mxu0 0
        %5388 = vmatprep.subr.bf16.mxu0 0
        %5389 = vmatpush1.bf16.msra.mxu0 0
        %5390 = vmatprep.subr.bf16.mxu0 0
        %5391 = vmatpush1.bf16.msra.mxu0 0
        %5392 = vmatprep.mubr.bf16.mxu0 0
        %5393 = vmatmul.mubr.bf16.gmra.mrb[0].mxu0 %v5337
        %v5394 = vpop.f32.mrb[0].mxu0
        %v5395 = vadd.f32 %v5322, %v5394
        %v5396 = vpop.f32.mrb[0].mxu0
        %v5397 = vpop.f32.mrb[0].mxu0
        %v5398 = vadd.f32 %v5322, %v5397
        %v5399 = vpop.f32.mrb[0].mxu0
        %5400 = vmatprep.mubr.bf16.mxu0 0
        %5401 = vmatmul.mubr.bf16.gmra.mrb[0].mxu0 %v5340
        %v5402 = vpop.f32.mrb[0].mxu0
        %v5403 = vadd.f32 %v5322, %v5402
        %v5404 = vpop.f32.mrb[0].mxu0
        %v5405 = vpop.f32.mrb[0].mxu0
        %v5406 = vadd.f32 %v5322, %v5405
        %v5407 = vpop.f32.mrb[0].mxu0
        %5408 = vmatprep.mubr.bf16.mxu0 0
        %5409 = vmatmul.mubr.bf16.gmra.mrb[0].mxu0 %v5343
        %v5410 = vpop.f32.mrb[0].mxu0
        %v5411 = vadd.f32 %v5322, %v5410
        %v5412 = vpop.f32.mrb[0].mxu0
        %v5413 = vpop.f32.mrb[0].mxu0
        %v5414 = vadd.f32 %v5322, %v5413
        %v5415 = vpop.f32.mrb[0].mxu0
        %5416 = vmatprep.mubr.bf16.mxu0 0
        %5417 = vmatmul.mubr.bf16.gmra.mrb[0].mxu0 %v5346
        %v5418 = vpop.f32.mrb[0].mxu0
        %v5419 = vadd.f32 %v5322, %v5418
        %v5420 = vpop.f32.mrb[0].mxu0
        %v5421 = vpop.f32.mrb[0].mxu0
        %v5422 = vadd.f32 %v5322, %v5421
        %v5423 = vpop.f32.mrb[0].mxu0
        %5424 = vmatprep.mubr.bf16.mxu0 0
        %5425 = vmatmul.mubr.bf16.gmra.mrb[0].mxu0 %v5349
        %v5426 = vpop.f32.mrb[0].mxu0
        %v5427 = vadd.f32 %v5322, %v5426
        %v5428 = vpop.f32.mrb[0].mxu0
        %v5429 = vpop.f32.mrb[0].mxu0
        %v5430 = vadd.f32 %v5322, %v5429
        %v5431 = vpop.f32.mrb[0].mxu0
        %5432 = vmatprep.mubr.bf16.mxu0 0
        %5433 = vmatmul.mubr.bf16.gmra.mrb[0].mxu0 %v5352
        %v5434 = vpop.f32.mrb[0].mxu0
        %v5435 = vadd.f32 %v5322, %v5434
        %v5436 = vpop.f32.mrb[0].mxu0
        %v5437 = vpop.f32.mrb[0].mxu0
        %v5438 = vadd.f32 %v5322, %v5437
        %v5439 = vpop.f32.mrb[0].mxu0
        %5440 = vmatprep.mubr.bf16.mxu0 0
        %5441 = vmatmul.mubr.bf16.gmra.mrb[0].mxu0 %v5355
        %v5442 = vpop.f32.mrb[0].mxu0
        %v5443 = vadd.f32 %v5322, %v5442
        %v5444 = vpop.f32.mrb[0].mxu0
        %v5445 = vpop.f32.mrb[0].mxu0
        %v5446 = vadd.f32 %v5322, %v5445
        %v5447 = vpop.f32.mrb[0].mxu0
        %5448 = vmatprep.mubr.bf16.mxu0 0
        %5449 = vmatmul.mubr.bf16.gmra.mrb[0].mxu0 %v5358
        %v5450 = vpop.f32.mrb[0].mxu0
        %v5451 = vadd.f32 %v5322, %v5450
        %v5452 = vpop.f32.mrb[0].mxu0
        %v5453 = vpop.f32.mrb[0].mxu0
        %v5454 = vadd.f32 %v5322, %v5453
        %v5455 = vpop.f32.mrb[0].mxu0
        %5456 = vdwg.mxu0
        %v5457 = vmax.f32 %v5395, 0.0
        %v5458 = vmax.f32 %v5398, 0.0
        %v5459 = vmax.f32 %v5403, 0.0
        %v5460 = vmax.f32 %v5406, 0.0
        %v5461 = vmax.f32 %v5411, 0.0
        %v5462 = vmax.f32 %v5414, 0.0
        %v5463 = vmax.f32 %v5419, 0.0
        %v5464 = vmax.f32 %v5422, 0.0
        %v5465 = vmax.f32 %v5427, 0.0
        %v5466 = vmax.f32 %v5430, 0.0
        %v5467 = vmax.f32 %v5435, 0.0
        %v5468 = vmax.f32 %v5438, 0.0
        %v5469 = vmax.f32 %v5443, 0.0
        %v5470 = vmax.f32 %v5446, 0.0
        %v5471 = vmax.f32 %v5451, 0.0
        %v5472 = vmax.f32 %v5454, 0.0
        %v5473 = vpack.c.bf16 %v5458, %v5457
        %v5474 = vpack.c.bf16 %v5460, %v5459
        %v5475 = vpack.c.bf16 %v5462, %v5461
        %v5476 = vpack.c.bf16 %v5464, %v5463
        %v5477 = vpack.c.bf16 %v5466, %v5465
        %v5478 = vpack.c.bf16 %v5468, %v5467
        %v5479 = vpack.c.bf16 %v5470, %v5469
        %v5480 = vpack.c.bf16 %v5472, %v5471
        %v5481 = vld [vmem:[%s3] sm:$0xf]
        %v5482 = vld [vmem:[%s3 + $0x4] sm:$0xf]
        %v5483 = vld [vmem:[%s3 + $0x8] sm:$0xf]
        %v5484 = vld [vmem:[%s3 + $0xc] sm:$0xf]
        %v5485 = vld [vmem:[%s3 + $0x10] sm:$0xf]
        %v5486 = vld [vmem:[%s3 + $0x14] sm:$0xf]
        %v5487 = vld [vmem:[%s3 + $0x18] sm:$0xf]
        %v5488 = vld [vmem:[%s3 + $0x1c] sm:$0xf]
        %v5489 = vld [vmem:[%s3 + $0x20] sm:$0xf]
        %v5490 = vld [vmem:[%s3 + $0x24] sm:$0xf]
        %v5491 = vld [vmem:[%s3 + $0x28] sm:$0xf]
        %v5492 = vld [vmem:[%s3 + $0x2c] sm:$0xf]
        %v5493 = vld [vmem:[%s3 + $0x30] sm:$0xf]
        %v5494 = vld [vmem:[%s3 + $0x34] sm:$0xf]
        %v5495 = vld [vmem:[%s3 + $0x38] sm:$0xf]
        %v5496 = vld [vmem:[%s3 + $0x3c] sm:$0xf]
        %v5497 = vld [vmem:[%s4] sm:$0x1]
        %v5499 = vlaneseq
        %v5500 = vshrl.u32 %v5499, 7
        %v5501 = vsub.s32 0, %v5500
        %v5502 = vrot.slane %v5497, %v5501
        %v5520 = vunpack.c.l.b16 %v5481
        %v5521 = vunpack.c.l.b16 %v5482
        %v5522 = vunpack.c.l.b16 %v5483
        %v5523 = vunpack.c.l.b16 %v5484
        %v5524 = vunpack.c.l.b16 %v5485
        %v5525 = vunpack.c.l.b16 %v5486
        %v5526 = vunpack.c.l.b16 %v5487
        %v5527 = vunpack.c.l.b16 %v5488
        %v5528 = vunpack.c.l.b16 %v5489
        %v5529 = vunpack.c.l.b16 %v5490
        %v5530 = vunpack.c.l.b16 %v5491
        %v5531 = vunpack.c.l.b16 %v5492
        %v5532 = vunpack.c.l.b16 %v5493
        %v5533 = vunpack.c.l.b16 %v5494
        %v5534 = vunpack.c.l.b16 %v5495
        %v5535 = vunpack.c.l.b16 %v5496
        %v5536 = vpack.c.b16 %v5521, %v5520
        %v5537 = vpack.c.b16 %v5523, %v5522
        %v5538 = vpack.c.b16 %v5525, %v5524
        %v5539 = vpack.c.b16 %v5527, %v5526
        %v5540 = vpack.c.b16 %v5529, %v5528
        %v5541 = vpack.c.b16 %v5531, %v5530
        %v5542 = vpack.c.b16 %v5533, %v5532
        %v5543 = vpack.c.b16 %v5535, %v5534
        %5552 = vmatprep.subr.bf16.mxu0 0
        %5553 = vmatpush1.bf16.msra.mxu0 %v5536
        %5554 = vmatprep.subr.bf16.mxu0 0
        %5555 = vmatpush1.bf16.msra.mxu0 %v5537
        %5556 = vmatprep.subr.bf16.mxu0 0
        %5557 = vmatpush1.bf16.msra.mxu0 %v5538
        %5558 = vmatprep.subr.bf16.mxu0 0
        %5559 = vmatpush1.bf16.msra.mxu0 %v5539
        %5560 = vmatprep.subr.bf16.mxu0 0
        %5561 = vmatpush1.bf16.msra.mxu0 %v5540
        %5562 = vmatprep.subr.bf16.mxu0 0
        %5563 = vmatpush1.bf16.msra.mxu0 %v5541
        %5564 = vmatprep.subr.bf16.mxu0 0
        %5565 = vmatpush1.bf16.msra.mxu0 %v5542
        %5566 = vmatprep.subr.bf16.mxu0 0
        %5567 = vmatpush1.bf16.msra.mxu0 %v5543
        %5568 = vmatprep.subr.bf16.mxu0 0
        %5569 = vmatpush1.bf16.msra.mxu0 0
        %5570 = vmatprep.subr.bf16.mxu0 0
        %5571 = vmatpush1.bf16.msra.mxu0 0
        %5572 = vmatprep.subr.bf16.mxu0 0
        %5573 = vmatpush1.bf16.msra.mxu0 0
        %5574 = vmatprep.subr.bf16.mxu0 0
        %5575 = vmatpush1.bf16.msra.mxu0 0
        %5576 = vmatprep.subr.bf16.mxu0 0
        %5577 = vmatpush1.bf16.msra.mxu0 0
        %5578 = vmatprep.subr.bf16.mxu0 0
        %5579 = vmatpush1.bf16.msra.mxu0 0
        %5580 = vmatprep.subr.bf16.mxu0 0
        %5581 = vmatpush1.bf16.msra.mxu0 0
        %5582 = vmatprep.subr.bf16.mxu0 0
        %5583 = vmatpush1.bf16.msra.mxu0 0
        %5584 = vmatprep.mubr.bf16.mxu0 0
        %5585 = vmatmul.mubr.bf16.gmra.mrb[0].mxu0 %v5473
        %v5586 = vpop.f32.mrb[0].mxu0
        %v5587 = vadd.f32 %v5502, %v5586
        %v5588 = vpop.f32.mrb[0].mxu0
        %v5589 = vpop.f32.mrb[0].mxu0
        %v5590 = vadd.f32 %v5502, %v5589
        %v5591 = vpop.f32.mrb[0].mxu0
        %5592 = vmatprep.mubr.bf16.mxu0 0
        %5593 = vmatmul.mubr.bf16.gmra.mrb[0].mxu0 %v5474
        %v5594 = vpop.f32.mrb[0].mxu0
        %v5595 = vadd.f32 %v5502, %v5594
        %v5596 = vpop.f32.mrb[0].mxu0
        %v5597 = vpop.f32.mrb[0].mxu0
        %v5598 = vadd.f32 %v5502, %v5597
        %v5599 = vpop.f32.mrb[0].mxu0
        %5600 = vmatprep.mubr.bf16.mxu0 0
        %5601 = vmatmul.mubr.bf16.gmra.mrb[0].mxu0 %v5475
        %v5602 = vpop.f32.mrb[0].mxu0
        %v5603 = vadd.f32 %v5502, %v5602
        %v5604 = vpop.f32.mrb[0].mxu0
        %v5605 = vpop.f32.mrb[0].mxu0
        %v5606 = vadd.f32 %v5502, %v5605
        %v5607 = vpop.f32.mrb[0].mxu0
        %5608 = vmatprep.mubr.bf16.mxu0 0
        %5609 = vmatmul.mubr.bf16.gmra.mrb[0].mxu0 %v5476
        %v5610 = vpop.f32.mrb[0].mxu0
        %v5611 = vadd.f32 %v5502, %v5610
        %v5612 = vpop.f32.mrb[0].mxu0
        %v5613 = vpop.f32.mrb[0].mxu0
        %v5614 = vadd.f32 %v5502, %v5613
        %v5615 = vpop.f32.mrb[0].mxu0
        %5616 = vmatprep.mubr.bf16.mxu0 0
        %5617 = vmatmul.mubr.bf16.gmra.mrb[0].mxu0 %v5477
        %v5618 = vpop.f32.mrb[0].mxu0
        %v5619 = vadd.f32 %v5502, %v5618
        %v5620 = vpop.f32.mrb[0].mxu0
        %v5621 = vpop.f32.mrb[0].mxu0
        %v5622 = vadd.f32 %v5502, %v5621
        %v5623 = vpop.f32.mrb[0].mxu0
        %5624 = vmatprep.mubr.bf16.mxu0 0
        %5625 = vmatmul.mubr.bf16.gmra.mrb[0].mxu0 %v5478
        %v5626 = vpop.f32.mrb[0].mxu0
        %v5627 = vadd.f32 %v5502, %v5626
        %v5628 = vpop.f32.mrb[0].mxu0
        %v5629 = vpop.f32.mrb[0].mxu0
        %v5630 = vadd.f32 %v5502, %v5629
        %v5631 = vpop.f32.mrb[0].mxu0
        %5632 = vmatprep.mubr.bf16.mxu0 0
        %5633 = vmatmul.mubr.bf16.gmra.mrb[0].mxu0 %v5479
        %v5634 = vpop.f32.mrb[0].mxu0
        %v5635 = vadd.f32 %v5502, %v5634
        %v5636 = vpop.f32.mrb[0].mxu0
        %v5637 = vpop.f32.mrb[0].mxu0
        %v5638 = vadd.f32 %v5502, %v5637
        %v5639 = vpop.f32.mrb[0].mxu0
        %5640 = vmatprep.mubr.bf16.mxu0 0
        %5641 = vmatmul.mubr.bf16.gmra.mrb[0].mxu0 %v5480
        %v5642 = vpop.f32.mrb[0].mxu0
        %v5643 = vadd.f32 %v5502, %v5642
        %v5644 = vpop.f32.mrb[0].mxu0
        %v5645 = vpop.f32.mrb[0].mxu0
        %v5646 = vadd.f32 %v5502, %v5645
        %v5647 = vpop.f32.mrb[0].mxu0
        %5648 = vdwg.mxu0
        %v5649 = vmax.f32 %v5587, 0.0
        %v5650 = vmax.f32 %v5590, 0.0
        %v5651 = vmax.f32 %v5595, 0.0
        %v5652 = vmax.f32 %v5598, 0.0
        %v5653 = vmax.f32 %v5603, 0.0
        %v5654 = vmax.f32 %v5606, 0.0
        %v5655 = vmax.f32 %v5611, 0.0
        %v5656 = vmax.f32 %v5614, 0.0
        %v5657 = vmax.f32 %v5619, 0.0
        %v5658 = vmax.f32 %v5622, 0.0
        %v5659 = vmax.f32 %v5627, 0.0
        %v5660 = vmax.f32 %v5630, 0.0
        %v5661 = vmax.f32 %v5635, 0.0
        %v5662 = vmax.f32 %v5638, 0.0
        %v5663 = vmax.f32 %v5643, 0.0
        %v5664 = vmax.f32 %v5646, 0.0
        %v5665 = vpack.c.bf16 %v5650, %v5649
        %v5666 = vpack.c.bf16 %v5652, %v5651
        %v5667 = vpack.c.bf16 %v5654, %v5653
        %v5668 = vpack.c.bf16 %v5656, %v5655
        %v5669 = vpack.c.bf16 %v5658, %v5657
        %v5670 = vpack.c.bf16 %v5660, %v5659
        %v5671 = vpack.c.bf16 %v5662, %v5661
        %v5672 = vpack.c.bf16 %v5664, %v5663
        %v5673 = vld [vmem:[%s5] sm:$0xf]
        %v5674 = vld [vmem:[%s5 + $0x4] sm:$0xf]
        %v5675 = vld [vmem:[%s5 + $0x8] sm:$0xf]
        %v5676 = vld [vmem:[%s5 + $0xc] sm:$0xf]
        %v5677 = vld [vmem:[%s5 + $0x10] sm:$0xf]
        %v5678 = vld [vmem:[%s5 + $0x14] sm:$0xf]
        %v5679 = vld [vmem:[%s5 + $0x18] sm:$0xf]
        %v5680 = vld [vmem:[%s5 + $0x1c] sm:$0xf]
        %v5681 = vld [vmem:[%s6] sm:$0x1]
        %v5683 = vlaneseq
        %v5684 = vshrl.u32 %v5683, 7
        %v5685 = vsub.s32 0, %v5684
        %v5686 = vrot.slane %v5681, %v5685
        %v5696 = vunpack.c.l.b16 %v5673
        %v5697 = vunpack.c.l.b16 %v5674
        %v5698 = vunpack.c.l.b16 %v5675
        %v5699 = vunpack.c.l.b16 %v5676
        %v5700 = vunpack.c.l.b16 %v5677
        %v5701 = vunpack.c.l.b16 %v5678
        %v5702 = vunpack.c.l.b16 %v5679
        %v5703 = vunpack.c.l.b16 %v5680
        %v5704 = vpack.c.b16 %v5697, %v5696
        %v5705 = vpack.c.b16 %v5699, %v5698
        %v5706 = vpack.c.b16 %v5701, %v5700
        %v5707 = vpack.c.b16 %v5703, %v5702
        %v5713 = vsel %vm814, %v5665, 0
        %v5716 = vsel %vm814, %v5666, 0
        %v5719 = vsel %vm814, %v5667, 0
        %v5722 = vsel %vm814, %v5668, 0
        %v5725 = vsel %vm814, %v5669, 0
        %v5728 = vsel %vm814, %v5670, 0
        %v5731 = vsel %vm814, %v5671, 0
        %v5734 = vsel %vm814, %v5672, 0
        %5736 = vmatprep.subr.bf16.mxu0 0
        %5737 = vmatpush1.bf16.msra.mxu0 %v5704
        %5738 = vmatprep.subr.bf16.mxu0 0
        %5739 = vmatpush1.bf16.msra.mxu0 %v5705
        %5740 = vmatprep.subr.bf16.mxu0 0
        %5741 = vmatpush1.bf16.msra.mxu0 %v5706
        %5742 = vmatprep.subr.bf16.mxu0 0
        %5743 = vmatpush1.bf16.msra.mxu0 %v5707
        %5744 = vmatprep.subr.bf16.mxu0 0
        %5745 = vmatpush1.bf16.msra.mxu0 0
        %5746 = vmatprep.subr.bf16.mxu0 0
        %5747 = vmatpush1.bf16.msra.mxu0 0
        %5748 = vmatprep.subr.bf16.mxu0 0
        %5749 = vmatpush1.bf16.msra.mxu0 0
        %5750 = vmatprep.subr.bf16.mxu0 0
        %5751 = vmatpush1.bf16.msra.mxu0 0
        %5752 = vmatprep.subr.bf16.mxu0 0
        %5753 = vmatpush1.bf16.msra.mxu0 0
        %5754 = vmatprep.subr.bf16.mxu0 0
        %5755 = vmatpush1.bf16.msra.mxu0 0
        %5756 = vmatprep.subr.bf16.mxu0 0
        %5757 = vmatpush1.bf16.msra.mxu0 0
        %5758 = vmatprep.subr.bf16.mxu0 0
        %5759 = vmatpush1.bf16.msra.mxu0 0
        %5760 = vmatprep.subr.bf16.mxu0 0
        %5761 = vmatpush1.bf16.msra.mxu0 0
        %5762 = vmatprep.subr.bf16.mxu0 0
        %5763 = vmatpush1.bf16.msra.mxu0 0
        %5764 = vmatprep.subr.bf16.mxu0 0
        %5765 = vmatpush1.bf16.msra.mxu0 0
        %5766 = vmatprep.subr.bf16.mxu0 0
        %5767 = vmatpush1.bf16.msra.mxu0 0
        %5768 = vmatprep.mubr.bf16.mxu0 0
        %5769 = vmatmul.mubr.bf16.gmra.mrb[0].mxu0 %v5713
        %v5770 = vpop.f32.mrb[0].mxu0
        %v5771 = vadd.f32 %v5686, %v5770
        %v5772 = vpop.f32.mrb[0].mxu0
        %v5773 = vpop.f32.mrb[0].mxu0
        %v5774 = vadd.f32 %v5686, %v5773
        %v5775 = vpop.f32.mrb[0].mxu0
        %5776 = vmatprep.mubr.bf16.mxu0 0
        %5777 = vmatmul.mubr.bf16.gmra.mrb[0].mxu0 %v5716
        %v5778 = vpop.f32.mrb[0].mxu0
        %v5779 = vadd.f32 %v5686, %v5778
        %v5780 = vpop.f32.mrb[0].mxu0
        %v5781 = vpop.f32.mrb[0].mxu0
        %v5782 = vadd.f32 %v5686, %v5781
        %v5783 = vpop.f32.mrb[0].mxu0
        %5784 = vmatprep.mubr.bf16.mxu0 0
        %5785 = vmatmul.mubr.bf16.gmra.mrb[0].mxu0 %v5719
        %v5786 = vpop.f32.mrb[0].mxu0
        %v5787 = vadd.f32 %v5686, %v5786
        %v5788 = vpop.f32.mrb[0].mxu0
        %v5789 = vpop.f32.mrb[0].mxu0
        %v5790 = vadd.f32 %v5686, %v5789
        %v5791 = vpop.f32.mrb[0].mxu0
        %5792 = vmatprep.mubr.bf16.mxu0 0
        %5793 = vmatmul.mubr.bf16.gmra.mrb[0].mxu0 %v5722
        %v5794 = vpop.f32.mrb[0].mxu0
        %v5795 = vadd.f32 %v5686, %v5794
        %v5796 = vpop.f32.mrb[0].mxu0
        %v5797 = vpop.f32.mrb[0].mxu0
        %v5798 = vadd.f32 %v5686, %v5797
        %v5799 = vpop.f32.mrb[0].mxu0
        %5800 = vmatprep.mubr.bf16.mxu0 0
        %5801 = vmatmul.mubr.bf16.gmra.mrb[0].mxu0 %v5725
        %v5802 = vpop.f32.mrb[0].mxu0
        %v5803 = vadd.f32 %v5686, %v5802
        %v5804 = vpop.f32.mrb[0].mxu0
        %v5805 = vpop.f32.mrb[0].mxu0
        %v5806 = vadd.f32 %v5686, %v5805
        %v5807 = vpop.f32.mrb[0].mxu0
        %5808 = vmatprep.mubr.bf16.mxu0 0
        %5809 = vmatmul.mubr.bf16.gmra.mrb[0].mxu0 %v5728
        %v5810 = vpop.f32.mrb[0].mxu0
        %v5811 = vadd.f32 %v5686, %v5810
        %v5812 = vpop.f32.mrb[0].mxu0
        %v5813 = vpop.f32.mrb[0].mxu0
        %v5814 = vadd.f32 %v5686, %v5813
        %v5815 = vpop.f32.mrb[0].mxu0
        %5816 = vmatprep.mubr.bf16.mxu0 0
        %5817 = vmatmul.mubr.bf16.gmra.mrb[0].mxu0 %v5731
        %v5818 = vpop.f32.mrb[0].mxu0
        %v5819 = vadd.f32 %v5686, %v5818
        %v5820 = vpop.f32.mrb[0].mxu0
        %v5821 = vpop.f32.mrb[0].mxu0
        %v5822 = vadd.f32 %v5686, %v5821
        %v5823 = vpop.f32.mrb[0].mxu0
        %5824 = vmatprep.mubr.bf16.mxu0 0
        %5825 = vmatmul.mubr.bf16.gmra.mrb[0].mxu0 %v5734
        %v5826 = vpop.f32.mrb[0].mxu0
        %v5827 = vadd.f32 %v5686, %v5826
        %v5828 = vpop.f32.mrb[0].mxu0
        %v5829 = vpop.f32.mrb[0].mxu0
        %v5830 = vadd.f32 %v5686, %v5829
        %v5831 = vpop.f32.mrb[0].mxu0
        %5832 = vdwg.mxu0
        %v5833 = vmax.f32 %v5771, 0.0
        %v5834 = vmax.f32 %v5774, 0.0
        %v5835 = vmax.f32 %v5779, 0.0
        %v5836 = vmax.f32 %v5782, 0.0
        %v5837 = vmax.f32 %v5787, 0.0
        %v5838 = vmax.f32 %v5790, 0.0
        %v5839 = vmax.f32 %v5795, 0.0
        %v5840 = vmax.f32 %v5798, 0.0
        %v5841 = vmax.f32 %v5803, 0.0
        %v5842 = vmax.f32 %v5806, 0.0
        %v5843 = vmax.f32 %v5811, 0.0
        %v5844 = vmax.f32 %v5814, 0.0
        %v5845 = vmax.f32 %v5819, 0.0
        %v5846 = vmax.f32 %v5822, 0.0
        %v5847 = vmax.f32 %v5827, 0.0
        %v5848 = vmax.f32 %v5830, 0.0
        %v5849 = vpack.c.bf16 %v5834, %v5833
        %v5850 = vpack.c.bf16 %v5836, %v5835
        %v5851 = vpack.c.bf16 %v5838, %v5837
        %v5852 = vpack.c.bf16 %v5840, %v5839
        %v5853 = vpack.c.bf16 %v5842, %v5841
        %v5854 = vpack.c.bf16 %v5844, %v5843
        %v5855 = vpack.c.bf16 %v5846, %v5845
        %v5856 = vpack.c.bf16 %v5848, %v5847
        %v5857 = vld [vmem:[%s7] sm:$0xf]
        %v5858 = vld [vmem:[%s7 + $0x4] sm:$0xf]
        %v5859 = vld [vmem:[%s7 + $0x8] sm:$0xf]
        %v5860 = vld [vmem:[%s7 + $0xc] sm:$0xf]
        %v5861 = vld [vmem:[%s8] sm:$0x1]
        %v5863 = vlaneseq
        %v5864 = vshrl.u32 %v5863, 7
        %v5865 = vsub.s32 0, %v5864
        %v5866 = vrot.slane %v5861, %v5865
        %v5872 = vunpack.c.l.b16 %v5857
        %v5873 = vunpack.c.l.b16 %v5858
        %v5874 = vunpack.c.l.b16 %v5859
        %v5875 = vunpack.c.l.b16 %v5860
        %v5876 = vpack.c.b16 %v5873, %v5872
        %v5877 = vpack.c.b16 %v5875, %v5874
        %v5881 = vsel %vm437, %v5849, 0
        %v5884 = vsel %vm437, %v5850, 0
        %v5887 = vsel %vm437, %v5851, 0
        %v5890 = vsel %vm437, %v5852, 0
        %v5893 = vsel %vm437, %v5853, 0
        %v5896 = vsel %vm437, %v5854, 0
        %v5899 = vsel %vm437, %v5855, 0
        %v5902 = vsel %vm437, %v5856, 0
        %5904 = vmatprep.subr.bf16.mxu0 0
        %5905 = vmatpush1.bf16.msra.mxu0 %v5876
        %5906 = vmatprep.subr.bf16.mxu0 0
        %5907 = vmatpush1.bf16.msra.mxu0 %v5877
        %5908 = vmatprep.subr.bf16.mxu0 0
        %5909 = vmatpush1.bf16.msra.mxu0 0
        %5910 = vmatprep.subr.bf16.mxu0 0
        %5911 = vmatpush1.bf16.msra.mxu0 0
        %5912 = vmatprep.subr.bf16.mxu0 0
        %5913 = vmatpush1.bf16.msra.mxu0 0
        %5914 = vmatprep.subr.bf16.mxu0 0
        %5915 = vmatpush1.bf16.msra.mxu0 0
        %5916 = vmatprep.subr.bf16.mxu0 0
        %5917 = vmatpush1.bf16.msra.mxu0 0
        %5918 = vmatprep.subr.bf16.mxu0 0
        %5919 = vmatpush1.bf16.msra.mxu0 0
        %5920 = vmatprep.subr.bf16.mxu0 0
        %5921 = vmatpush1.bf16.msra.mxu0 0
        %5922 = vmatprep.subr.bf16.mxu0 0
        %5923 = vmatpush1.bf16.msra.mxu0 0
        %5924 = vmatprep.subr.bf16.mxu0 0
        %5925 = vmatpush1.bf16.msra.mxu0 0
        %5926 = vmatprep.subr.bf16.mxu0 0
        %5927 = vmatpush1.bf16.msra.mxu0 0
        %5928 = vmatprep.subr.bf16.mxu0 0
        %5929 = vmatpush1.bf16.msra.mxu0 0
        %5930 = vmatprep.subr.bf16.mxu0 0
        %5931 = vmatpush1.bf16.msra.mxu0 0
        %5932 = vmatprep.subr.bf16.mxu0 0
        %5933 = vmatpush1.bf16.msra.mxu0 0
        %5934 = vmatprep.subr.bf16.mxu0 0
        %5935 = vmatpush1.bf16.msra.mxu0 0
        %5936 = vmatprep.mubr.bf16.mxu0 0
        %5937 = vmatmul.mubr.bf16.gmra.mrb[0].mxu0 %v5881
        %v5938 = vpop.f32.mrb[0].mxu0
        %v5939 = vadd.f32 %v5866, %v5938
        %v5940 = vpop.f32.mrb[0].mxu0
        %v5941 = vpop.f32.mrb[0].mxu0
        %v5942 = vadd.f32 %v5866, %v5941
        %v5943 = vpop.f32.mrb[0].mxu0
        %5944 = vmatprep.mubr.bf16.mxu0 0
        %5945 = vmatmul.mubr.bf16.gmra.mrb[0].mxu0 %v5884
        %v5946 = vpop.f32.mrb[0].mxu0
        %v5947 = vadd.f32 %v5866, %v5946
        %v5948 = vpop.f32.mrb[0].mxu0
        %v5949 = vpop.f32.mrb[0].mxu0
        %v5950 = vadd.f32 %v5866, %v5949
        %v5951 = vpop.f32.mrb[0].mxu0
        %5952 = vmatprep.mubr.bf16.mxu0 0
        %5953 = vmatmul.mubr.bf16.gmra.mrb[0].mxu0 %v5887
        %v5954 = vpop.f32.mrb[0].mxu0
        %v5955 = vadd.f32 %v5866, %v5954
        %v5956 = vpop.f32.mrb[0].mxu0
        %v5957 = vpop.f32.mrb[0].mxu0
        %v5958 = vadd.f32 %v5866, %v5957
        %v5959 = vpop.f32.mrb[0].mxu0
        %5960 = vmatprep.mubr.bf16.mxu0 0
        %5961 = vmatmul.mubr.bf16.gmra.mrb[0].mxu0 %v5890
        %v5962 = vpop.f32.mrb[0].mxu0
        %v5963 = vadd.f32 %v5866, %v5962
        %v5964 = vpop.f32.mrb[0].mxu0
        %v5965 = vpop.f32.mrb[0].mxu0
        %v5966 = vadd.f32 %v5866, %v5965
        %v5967 = vpop.f32.mrb[0].mxu0
        %5968 = vmatprep.mubr.bf16.mxu0 0
        %5969 = vmatmul.mubr.bf16.gmra.mrb[0].mxu0 %v5893
        %v5970 = vpop.f32.mrb[0].mxu0
        %v5971 = vadd.f32 %v5866, %v5970
        %v5972 = vpop.f32.mrb[0].mxu0
        %v5973 = vpop.f32.mrb[0].mxu0
        %v5974 = vadd.f32 %v5866, %v5973
        %v5975 = vpop.f32.mrb[0].mxu0
        %5976 = vmatprep.mubr.bf16.mxu0 0
        %5977 = vmatmul.mubr.bf16.gmra.mrb[0].mxu0 %v5896
        %v5978 = vpop.f32.mrb[0].mxu0
        %v5979 = vadd.f32 %v5866, %v5978
        %v5980 = vpop.f32.mrb[0].mxu0
        %v5981 = vpop.f32.mrb[0].mxu0
        %v5982 = vadd.f32 %v5866, %v5981
        %v5983 = vpop.f32.mrb[0].mxu0
        %5984 = vmatprep.mubr.bf16.mxu0 0
        %5985 = vmatmul.mubr.bf16.gmra.mrb[0].mxu0 %v5899
        %v5986 = vpop.f32.mrb[0].mxu0
        %v5987 = vadd.f32 %v5866, %v5986
        %v5988 = vpop.f32.mrb[0].mxu0
        %v5989 = vpop.f32.mrb[0].mxu0
        %v5990 = vadd.f32 %v5866, %v5989
        %v5991 = vpop.f32.mrb[0].mxu0
        %5992 = vmatprep.mubr.bf16.mxu0 0
        %5993 = vmatmul.mubr.bf16.gmra.mrb[0].mxu0 %v5902
        %v5994 = vpop.f32.mrb[0].mxu0
        %v5995 = vadd.f32 %v5866, %v5994
        %v5996 = vpop.f32.mrb[0].mxu0
        %v5997 = vpop.f32.mrb[0].mxu0
        %v5998 = vadd.f32 %v5866, %v5997
        %v5999 = vpop.f32.mrb[0].mxu0
        %6000 = vdwg.mxu0
        %v6001 = vmax.f32 %v5939, 0.0
        %v6002 = vmax.f32 %v5942, 0.0
        %v6003 = vmax.f32 %v5947, 0.0
        %v6004 = vmax.f32 %v5950, 0.0
        %v6005 = vmax.f32 %v5955, 0.0
        %v6006 = vmax.f32 %v5958, 0.0
        %v6007 = vmax.f32 %v5963, 0.0
        %v6008 = vmax.f32 %v5966, 0.0
        %v6009 = vmax.f32 %v5971, 0.0
        %v6010 = vmax.f32 %v5974, 0.0
        %v6011 = vmax.f32 %v5979, 0.0
        %v6012 = vmax.f32 %v5982, 0.0
        %v6013 = vmax.f32 %v5987, 0.0
        %v6014 = vmax.f32 %v5990, 0.0
        %v6015 = vmax.f32 %v5995, 0.0
        %v6016 = vmax.f32 %v5998, 0.0
        %v6017 = vld [vmem:[%s9] sm:$0x1]
        %v6018 = vpack.c.bf16 %v6002, %v6001
        %v6019 = vpack.c.bf16 %v6004, %v6003
        %v6020 = vpack.c.bf16 %v6006, %v6005
        %v6021 = vpack.c.bf16 %v6008, %v6007
        %v6022 = vpack.c.bf16 %v6010, %v6009
        %v6023 = vpack.c.bf16 %v6012, %v6011
        %v6024 = vpack.c.bf16 %v6014, %v6013
        %v6025 = vpack.c.bf16 %v6016, %v6015
        %v6026 = vld [vmem:[#allocation2] sm:$0x1]
        %6028 = vset.pattern.permute.xlu0 0
        %6029 = vperm.xlu0 %6028, %v6026
        %v6030 = vpop.permute.xlu0 %6029
        %v6032 = vlaneseq
        %v6033 = vshrl.u32 %v6032, 7
        %v6034 = vsub.s32 0, %v6033
        %v6035 = vrot.slane %v6030, %v6034
        %v6037 = vsel %vm1139, %v6017, 0
        %v6040 = vsel %vm1139, %v6018, 0
        %v6043 = vsel %vm1139, %v6019, 0
        %v6046 = vsel %vm1139, %v6020, 0
        %v6049 = vsel %vm1139, %v6021, 0
        %v6052 = vsel %vm1139, %v6022, 0
        %v6055 = vsel %vm1139, %v6023, 0
        %v6058 = vsel %vm1139, %v6024, 0
        %v6061 = vsel %vm1139, %v6025, 0
        %6063 = vmatprep.subr.bf16.mxu0 0
        %6064 = vmatpush1.bf16.xpose.msra.mxu0 %v6040
        %6065 = vmatprep.subr.bf16.mxu0 0
        %6066 = vmatpush1.bf16.xpose.msra.mxu0 %v6043
        %6067 = vmatprep.subr.bf16.mxu0 0
        %6068 = vmatpush1.bf16.xpose.msra.mxu0 %v6046
        %6069 = vmatprep.subr.bf16.mxu0 0
        %6070 = vmatpush1.bf16.xpose.msra.mxu0 %v6049
        %6071 = vmatprep.subr.bf16.mxu0 0
        %6072 = vmatpush1.bf16.xpose.msra.mxu0 %v6052
        %6073 = vmatprep.subr.bf16.mxu0 0
        %6074 = vmatpush1.bf16.xpose.msra.mxu0 %v6055
        %6075 = vmatprep.subr.bf16.mxu0 0
        %6076 = vmatpush1.bf16.xpose.msra.mxu0 %v6058
        %6077 = vmatprep.subr.bf16.mxu0 0
        %6078 = vmatpush1.bf16.xpose.msra.mxu0 %v6061
        %6079 = vmatprep.subr.bf16.mxu0 0
        %6080 = vmatpush1.bf16.xpose.msra.mxu0 0
        %6081 = vmatprep.subr.bf16.mxu0 0
        %6082 = vmatpush1.bf16.xpose.msra.mxu0 0
        %6083 = vmatprep.subr.bf16.mxu0 0
        %6084 = vmatpush1.bf16.xpose.msra.mxu0 0
        %6085 = vmatprep.subr.bf16.mxu0 0
        %6086 = vmatpush1.bf16.xpose.msra.mxu0 0
        %6087 = vmatprep.subr.bf16.mxu0 0
        %6088 = vmatpush1.bf16.xpose.msra.mxu0 0
        %6089 = vmatprep.subr.bf16.mxu0 0
        %6090 = vmatpush1.bf16.xpose.msra.mxu0 0
        %6091 = vmatprep.subr.bf16.mxu0 0
        %6092 = vmatpush1.bf16.xpose.msra.mxu0 0
        %6093 = vmatprep.subr.bf16.mxu0 0
        %6094 = vmatpush1.bf16.xpose.msra.mxu0 0
        %6095 = vmatprep.mubr.bf16.mxu0 0
        %6096 = vmatmul.mubr.bf16.gmra.mrb[0].mxu0 %v6037
        %v6097 = vpop.f32.mrb[0].mxu0
        %v6098 = vadd.f32 %v6035, %v6097
        %v6099 = vpop.f32.mrb[0].mxu0
        %v6100 = vpop.f32.mrb[0].mxu0
        %v6101 = vpop.f32.mrb[0].mxu0
        %6102 = vdwg.mxu0
        %6103 = vst [vmem:[%s382 + $0x6] sm:$0x1] %v6098
        %s6104 = scalar_lea.vmem %s387, 896
        %v6105 = vld [vmem:[%s6104] sm:$0xff]
        %v6106 = vld [vmem:[%s6104 + $0x8] sm:$0xff]
        %v6107 = vld [vmem:[%s6104 + $0x10] sm:$0xff]
        %v6108 = vld [vmem:[%s6104 + $0x18] sm:$0xff]
        %v6109 = vld [vmem:[%s6104 + $0x20] sm:$0xff]
        %v6110 = vld [vmem:[%s6104 + $0x28] sm:$0xff]
        %v6111 = vld [vmem:[%s6104 + $0x30] sm:$0xff]
        %v6112 = vld [vmem:[%s6104 + $0x38] sm:$0xff]
        %v6113 = vld [vmem:[%s6104 + $0x40] sm:$0xff]
        %v6114 = vld [vmem:[%s6104 + $0x48] sm:$0xff]
        %v6115 = vld [vmem:[%s6104 + $0x50] sm:$0xff]
        %v6116 = vld [vmem:[%s6104 + $0x58] sm:$0xff]
        %v6117 = vld [vmem:[%s6104 + $0x60] sm:$0xff]
        %v6118 = vld [vmem:[%s6104 + $0x68] sm:$0xff]
        %v6119 = vld [vmem:[%s6104 + $0x70] sm:$0xff]
        %v6120 = vld [vmem:[%s6104 + $0x78] sm:$0xff]
        %v6121 = vpack.c.bf16 %v6106, %v6105
        %v6122 = vpack.c.bf16 %v6108, %v6107
        %v6123 = vpack.c.bf16 %v6110, %v6109
        %v6124 = vpack.c.bf16 %v6112, %v6111
        %v6125 = vpack.c.bf16 %v6114, %v6113
        %v6126 = vpack.c.bf16 %v6116, %v6115
        %v6127 = vpack.c.bf16 %v6118, %v6117
        %v6128 = vpack.c.bf16 %v6120, %v6119
        %v6129 = vld [vmem:[%s1] sm:$0xf]
        %v6130 = vld [vmem:[%s1 + $0x4] sm:$0xf]
        %v6131 = vld [vmem:[%s1 + $0x8] sm:$0xf]
        %v6132 = vld [vmem:[%s1 + $0xc] sm:$0xf]
        %v6133 = vld [vmem:[%s2] sm:$0x1]
        %v6135 = vlaneseq
        %v6136 = vshrl.u32 %v6135, 7
        %v6137 = vsub.s32 0, %v6136
        %v6138 = vrot.slane %v6133, %v6137
        %v6144 = vunpack.c.l.b16 %v6129
        %v6145 = vunpack.c.l.b16 %v6130
        %v6146 = vunpack.c.l.b16 %v6131
        %v6147 = vunpack.c.l.b16 %v6132
        %v6148 = vpack.c.b16 %v6145, %v6144
        %v6149 = vpack.c.b16 %v6147, %v6146
        %v6153 = vsel %vm437, %v6121, 0
        %v6156 = vsel %vm437, %v6122, 0
        %v6159 = vsel %vm437, %v6123, 0
        %v6162 = vsel %vm437, %v6124, 0
        %v6165 = vsel %vm437, %v6125, 0
        %v6168 = vsel %vm437, %v6126, 0
        %v6171 = vsel %vm437, %v6127, 0
        %v6174 = vsel %vm437, %v6128, 0
        %6176 = vmatprep.subr.bf16.mxu0 0
        %6177 = vmatpush1.bf16.msra.mxu0 %v6148
        %6178 = vmatprep.subr.bf16.mxu0 0
        %6179 = vmatpush1.bf16.msra.mxu0 %v6149
        %6180 = vmatprep.subr.bf16.mxu0 0
        %6181 = vmatpush1.bf16.msra.mxu0 0
        %6182 = vmatprep.subr.bf16.mxu0 0
        %6183 = vmatpush1.bf16.msra.mxu0 0
        %6184 = vmatprep.subr.bf16.mxu0 0
        %6185 = vmatpush1.bf16.msra.mxu0 0
        %6186 = vmatprep.subr.bf16.mxu0 0
        %6187 = vmatpush1.bf16.msra.mxu0 0
        %6188 = vmatprep.subr.bf16.mxu0 0
        %6189 = vmatpush1.bf16.msra.mxu0 0
        %6190 = vmatprep.subr.bf16.mxu0 0
        %6191 = vmatpush1.bf16.msra.mxu0 0
        %6192 = vmatprep.subr.bf16.mxu0 0
        %6193 = vmatpush1.bf16.msra.mxu0 0
        %6194 = vmatprep.subr.bf16.mxu0 0
        %6195 = vmatpush1.bf16.msra.mxu0 0
        %6196 = vmatprep.subr.bf16.mxu0 0
        %6197 = vmatpush1.bf16.msra.mxu0 0
        %6198 = vmatprep.subr.bf16.mxu0 0
        %6199 = vmatpush1.bf16.msra.mxu0 0
        %6200 = vmatprep.subr.bf16.mxu0 0
        %6201 = vmatpush1.bf16.msra.mxu0 0
        %6202 = vmatprep.subr.bf16.mxu0 0
        %6203 = vmatpush1.bf16.msra.mxu0 0
        %6204 = vmatprep.subr.bf16.mxu0 0
        %6205 = vmatpush1.bf16.msra.mxu0 0
        %6206 = vmatprep.subr.bf16.mxu0 0
        %6207 = vmatpush1.bf16.msra.mxu0 0
        %6208 = vmatprep.mubr.bf16.mxu0 0
        %6209 = vmatmul.mubr.bf16.gmra.mrb[0].mxu0 %v6153
        %v6210 = vpop.f32.mrb[0].mxu0
        %v6211 = vadd.f32 %v6138, %v6210
        %v6212 = vpop.f32.mrb[0].mxu0
        %v6213 = vpop.f32.mrb[0].mxu0
        %v6214 = vadd.f32 %v6138, %v6213
        %v6215 = vpop.f32.mrb[0].mxu0
        %6216 = vmatprep.mubr.bf16.mxu0 0
        %6217 = vmatmul.mubr.bf16.gmra.mrb[0].mxu0 %v6156
        %v6218 = vpop.f32.mrb[0].mxu0
        %v6219 = vadd.f32 %v6138, %v6218
        %v6220 = vpop.f32.mrb[0].mxu0
        %v6221 = vpop.f32.mrb[0].mxu0
        %v6222 = vadd.f32 %v6138, %v6221
        %v6223 = vpop.f32.mrb[0].mxu0
        %6224 = vmatprep.mubr.bf16.mxu0 0
        %6225 = vmatmul.mubr.bf16.gmra.mrb[0].mxu0 %v6159
        %v6226 = vpop.f32.mrb[0].mxu0
        %v6227 = vadd.f32 %v6138, %v6226
        %v6228 = vpop.f32.mrb[0].mxu0
        %v6229 = vpop.f32.mrb[0].mxu0
        %v6230 = vadd.f32 %v6138, %v6229
        %v6231 = vpop.f32.mrb[0].mxu0
        %6232 = vmatprep.mubr.bf16.mxu0 0
        %6233 = vmatmul.mubr.bf16.gmra.mrb[0].mxu0 %v6162
        %v6234 = vpop.f32.mrb[0].mxu0
        %v6235 = vadd.f32 %v6138, %v6234
        %v6236 = vpop.f32.mrb[0].mxu0
        %v6237 = vpop.f32.mrb[0].mxu0
        %v6238 = vadd.f32 %v6138, %v6237
        %v6239 = vpop.f32.mrb[0].mxu0
        %6240 = vmatprep.mubr.bf16.mxu0 0
        %6241 = vmatmul.mubr.bf16.gmra.mrb[0].mxu0 %v6165
        %v6242 = vpop.f32.mrb[0].mxu0
        %v6243 = vadd.f32 %v6138, %v6242
        %v6244 = vpop.f32.mrb[0].mxu0
        %v6245 = vpop.f32.mrb[0].mxu0
        %v6246 = vadd.f32 %v6138, %v6245
        %v6247 = vpop.f32.mrb[0].mxu0
        %6248 = vmatprep.mubr.bf16.mxu0 0
        %6249 = vmatmul.mubr.bf16.gmra.mrb[0].mxu0 %v6168
        %v6250 = vpop.f32.mrb[0].mxu0
        %v6251 = vadd.f32 %v6138, %v6250
        %v6252 = vpop.f32.mrb[0].mxu0
        %v6253 = vpop.f32.mrb[0].mxu0
        %v6254 = vadd.f32 %v6138, %v6253
        %v6255 = vpop.f32.mrb[0].mxu0
        %6256 = vmatprep.mubr.bf16.mxu0 0
        %6257 = vmatmul.mubr.bf16.gmra.mrb[0].mxu0 %v6171
        %v6258 = vpop.f32.mrb[0].mxu0
        %v6259 = vadd.f32 %v6138, %v6258
        %v6260 = vpop.f32.mrb[0].mxu0
        %v6261 = vpop.f32.mrb[0].mxu0
        %v6262 = vadd.f32 %v6138, %v6261
        %v6263 = vpop.f32.mrb[0].mxu0
        %6264 = vmatprep.mubr.bf16.mxu0 0
        %6265 = vmatmul.mubr.bf16.gmra.mrb[0].mxu0 %v6174
        %v6266 = vpop.f32.mrb[0].mxu0
        %v6267 = vadd.f32 %v6138, %v6266
        %v6268 = vpop.f32.mrb[0].mxu0
        %v6269 = vpop.f32.mrb[0].mxu0
        %v6270 = vadd.f32 %v6138, %v6269
        %v6271 = vpop.f32.mrb[0].mxu0
        %6272 = vdwg.mxu0
        %v6273 = vmax.f32 %v6211, 0.0
        %v6274 = vmax.f32 %v6214, 0.0
        %v6275 = vmax.f32 %v6219, 0.0
        %v6276 = vmax.f32 %v6222, 0.0
        %v6277 = vmax.f32 %v6227, 0.0
        %v6278 = vmax.f32 %v6230, 0.0
        %v6279 = vmax.f32 %v6235, 0.0
        %v6280 = vmax.f32 %v6238, 0.0
        %v6281 = vmax.f32 %v6243, 0.0
        %v6282 = vmax.f32 %v6246, 0.0
        %v6283 = vmax.f32 %v6251, 0.0
        %v6284 = vmax.f32 %v6254, 0.0
        %v6285 = vmax.f32 %v6259, 0.0
        %v6286 = vmax.f32 %v6262, 0.0
        %v6287 = vmax.f32 %v6267, 0.0
        %v6288 = vmax.f32 %v6270, 0.0
        %v6289 = vpack.c.bf16 %v6274, %v6273
        %v6290 = vpack.c.bf16 %v6276, %v6275
        %v6291 = vpack.c.bf16 %v6278, %v6277
        %v6292 = vpack.c.bf16 %v6280, %v6279
        %v6293 = vpack.c.bf16 %v6282, %v6281
        %v6294 = vpack.c.bf16 %v6284, %v6283
        %v6295 = vpack.c.bf16 %v6286, %v6285
        %v6296 = vpack.c.bf16 %v6288, %v6287
        %v6297 = vld [vmem:[%s3] sm:$0xf]
        %v6298 = vld [vmem:[%s3 + $0x4] sm:$0xf]
        %v6299 = vld [vmem:[%s3 + $0x8] sm:$0xf]
        %v6300 = vld [vmem:[%s3 + $0xc] sm:$0xf]
        %v6301 = vld [vmem:[%s3 + $0x10] sm:$0xf]
        %v6302 = vld [vmem:[%s3 + $0x14] sm:$0xf]
        %v6303 = vld [vmem:[%s3 + $0x18] sm:$0xf]
        %v6304 = vld [vmem:[%s3 + $0x1c] sm:$0xf]
        %v6305 = vld [vmem:[%s3 + $0x20] sm:$0xf]
        %v6306 = vld [vmem:[%s3 + $0x24] sm:$0xf]
        %v6307 = vld [vmem:[%s3 + $0x28] sm:$0xf]
        %v6308 = vld [vmem:[%s3 + $0x2c] sm:$0xf]
        %v6309 = vld [vmem:[%s3 + $0x30] sm:$0xf]
        %v6310 = vld [vmem:[%s3 + $0x34] sm:$0xf]
        %v6311 = vld [vmem:[%s3 + $0x38] sm:$0xf]
        %v6312 = vld [vmem:[%s3 + $0x3c] sm:$0xf]
        %v6313 = vld [vmem:[%s4] sm:$0x1]
        %v6315 = vlaneseq
        %v6316 = vshrl.u32 %v6315, 7
        %v6317 = vsub.s32 0, %v6316
        %v6318 = vrot.slane %v6313, %v6317
        %v6336 = vunpack.c.l.b16 %v6297
        %v6337 = vunpack.c.l.b16 %v6298
        %v6338 = vunpack.c.l.b16 %v6299
        %v6339 = vunpack.c.l.b16 %v6300
        %v6340 = vunpack.c.l.b16 %v6301
        %v6341 = vunpack.c.l.b16 %v6302
        %v6342 = vunpack.c.l.b16 %v6303
        %v6343 = vunpack.c.l.b16 %v6304
        %v6344 = vunpack.c.l.b16 %v6305
        %v6345 = vunpack.c.l.b16 %v6306
        %v6346 = vunpack.c.l.b16 %v6307
        %v6347 = vunpack.c.l.b16 %v6308
        %v6348 = vunpack.c.l.b16 %v6309
        %v6349 = vunpack.c.l.b16 %v6310
        %v6350 = vunpack.c.l.b16 %v6311
        %v6351 = vunpack.c.l.b16 %v6312
        %v6352 = vpack.c.b16 %v6337, %v6336
        %v6353 = vpack.c.b16 %v6339, %v6338
        %v6354 = vpack.c.b16 %v6341, %v6340
        %v6355 = vpack.c.b16 %v6343, %v6342
        %v6356 = vpack.c.b16 %v6345, %v6344
        %v6357 = vpack.c.b16 %v6347, %v6346
        %v6358 = vpack.c.b16 %v6349, %v6348
        %v6359 = vpack.c.b16 %v6351, %v6350
        %6368 = vmatprep.subr.bf16.mxu0 0
        %6369 = vmatpush1.bf16.msra.mxu0 %v6352
        %6370 = vmatprep.subr.bf16.mxu0 0
        %6371 = vmatpush1.bf16.msra.mxu0 %v6353
        %6372 = vmatprep.subr.bf16.mxu0 0
        %6373 = vmatpush1.bf16.msra.mxu0 %v6354
        %6374 = vmatprep.subr.bf16.mxu0 0
        %6375 = vmatpush1.bf16.msra.mxu0 %v6355
        %6376 = vmatprep.subr.bf16.mxu0 0
        %6377 = vmatpush1.bf16.msra.mxu0 %v6356
        %6378 = vmatprep.subr.bf16.mxu0 0
        %6379 = vmatpush1.bf16.msra.mxu0 %v6357
        %6380 = vmatprep.subr.bf16.mxu0 0
        %6381 = vmatpush1.bf16.msra.mxu0 %v6358
        %6382 = vmatprep.subr.bf16.mxu0 0
        %6383 = vmatpush1.bf16.msra.mxu0 %v6359
        %6384 = vmatprep.subr.bf16.mxu0 0
        %6385 = vmatpush1.bf16.msra.mxu0 0
        %6386 = vmatprep.subr.bf16.mxu0 0
        %6387 = vmatpush1.bf16.msra.mxu0 0
        %6388 = vmatprep.subr.bf16.mxu0 0
        %6389 = vmatpush1.bf16.msra.mxu0 0
        %6390 = vmatprep.subr.bf16.mxu0 0
        %6391 = vmatpush1.bf16.msra.mxu0 0
        %6392 = vmatprep.subr.bf16.mxu0 0
        %6393 = vmatpush1.bf16.msra.mxu0 0
        %6394 = vmatprep.subr.bf16.mxu0 0
        %6395 = vmatpush1.bf16.msra.mxu0 0
        %6396 = vmatprep.subr.bf16.mxu0 0
        %6397 = vmatpush1.bf16.msra.mxu0 0
        %6398 = vmatprep.subr.bf16.mxu0 0
        %6399 = vmatpush1.bf16.msra.mxu0 0
        %6400 = vmatprep.mubr.bf16.mxu0 0
        %6401 = vmatmul.mubr.bf16.gmra.mrb[0].mxu0 %v6289
        %v6402 = vpop.f32.mrb[0].mxu0
        %v6403 = vadd.f32 %v6318, %v6402
        %v6404 = vpop.f32.mrb[0].mxu0
        %v6405 = vpop.f32.mrb[0].mxu0
        %v6406 = vadd.f32 %v6318, %v6405
        %v6407 = vpop.f32.mrb[0].mxu0
        %6408 = vmatprep.mubr.bf16.mxu0 0
        %6409 = vmatmul.mubr.bf16.gmra.mrb[0].mxu0 %v6290
        %v6410 = vpop.f32.mrb[0].mxu0
        %v6411 = vadd.f32 %v6318, %v6410
        %v6412 = vpop.f32.mrb[0].mxu0
        %v6413 = vpop.f32.mrb[0].mxu0
        %v6414 = vadd.f32 %v6318, %v6413
        %v6415 = vpop.f32.mrb[0].mxu0
        %6416 = vmatprep.mubr.bf16.mxu0 0
        %6417 = vmatmul.mubr.bf16.gmra.mrb[0].mxu0 %v6291
        %v6418 = vpop.f32.mrb[0].mxu0
        %v6419 = vadd.f32 %v6318, %v6418
        %v6420 = vpop.f32.mrb[0].mxu0
        %v6421 = vpop.f32.mrb[0].mxu0
        %v6422 = vadd.f32 %v6318, %v6421
        %v6423 = vpop.f32.mrb[0].mxu0
        %6424 = vmatprep.mubr.bf16.mxu0 0
        %6425 = vmatmul.mubr.bf16.gmra.mrb[0].mxu0 %v6292
        %v6426 = vpop.f32.mrb[0].mxu0
        %v6427 = vadd.f32 %v6318, %v6426
        %v6428 = vpop.f32.mrb[0].mxu0
        %v6429 = vpop.f32.mrb[0].mxu0
        %v6430 = vadd.f32 %v6318, %v6429
        %v6431 = vpop.f32.mrb[0].mxu0
        %6432 = vmatprep.mubr.bf16.mxu0 0
        %6433 = vmatmul.mubr.bf16.gmra.mrb[0].mxu0 %v6293
        %v6434 = vpop.f32.mrb[0].mxu0
        %v6435 = vadd.f32 %v6318, %v6434
        %v6436 = vpop.f32.mrb[0].mxu0
        %v6437 = vpop.f32.mrb[0].mxu0
        %v6438 = vadd.f32 %v6318, %v6437
        %v6439 = vpop.f32.mrb[0].mxu0
        %6440 = vmatprep.mubr.bf16.mxu0 0
        %6441 = vmatmul.mubr.bf16.gmra.mrb[0].mxu0 %v6294
        %v6442 = vpop.f32.mrb[0].mxu0
        %v6443 = vadd.f32 %v6318, %v6442
        %v6444 = vpop.f32.mrb[0].mxu0
        %v6445 = vpop.f32.mrb[0].mxu0
        %v6446 = vadd.f32 %v6318, %v6445
        %v6447 = vpop.f32.mrb[0].mxu0
        %6448 = vmatprep.mubr.bf16.mxu0 0
        %6449 = vmatmul.mubr.bf16.gmra.mrb[0].mxu0 %v6295
        %v6450 = vpop.f32.mrb[0].mxu0
        %v6451 = vadd.f32 %v6318, %v6450
        %v6452 = vpop.f32.mrb[0].mxu0
        %v6453 = vpop.f32.mrb[0].mxu0
        %v6454 = vadd.f32 %v6318, %v6453
        %v6455 = vpop.f32.mrb[0].mxu0
        %6456 = vmatprep.mubr.bf16.mxu0 0
        %6457 = vmatmul.mubr.bf16.gmra.mrb[0].mxu0 %v6296
        %v6458 = vpop.f32.mrb[0].mxu0
        %v6459 = vadd.f32 %v6318, %v6458
        %v6460 = vpop.f32.mrb[0].mxu0
        %v6461 = vpop.f32.mrb[0].mxu0
        %v6462 = vadd.f32 %v6318, %v6461
        %v6463 = vpop.f32.mrb[0].mxu0
        %6464 = vdwg.mxu0
        %v6465 = vmax.f32 %v6403, 0.0
        %v6466 = vmax.f32 %v6406, 0.0
        %v6467 = vmax.f32 %v6411, 0.0
        %v6468 = vmax.f32 %v6414, 0.0
        %v6469 = vmax.f32 %v6419, 0.0
        %v6470 = vmax.f32 %v6422, 0.0
        %v6471 = vmax.f32 %v6427, 0.0
        %v6472 = vmax.f32 %v6430, 0.0
        %v6473 = vmax.f32 %v6435, 0.0
        %v6474 = vmax.f32 %v6438, 0.0
        %v6475 = vmax.f32 %v6443, 0.0
        %v6476 = vmax.f32 %v6446, 0.0
        %v6477 = vmax.f32 %v6451, 0.0
        %v6478 = vmax.f32 %v6454, 0.0
        %v6479 = vmax.f32 %v6459, 0.0
        %v6480 = vmax.f32 %v6462, 0.0
        %v6481 = vpack.c.bf16 %v6466, %v6465
        %v6482 = vpack.c.bf16 %v6468, %v6467
        %v6483 = vpack.c.bf16 %v6470, %v6469
        %v6484 = vpack.c.bf16 %v6472, %v6471
        %v6485 = vpack.c.bf16 %v6474, %v6473
        %v6486 = vpack.c.bf16 %v6476, %v6475
        %v6487 = vpack.c.bf16 %v6478, %v6477
        %v6488 = vpack.c.bf16 %v6480, %v6479
        %v6489 = vld [vmem:[%s5] sm:$0xf]
        %v6490 = vld [vmem:[%s5 + $0x4] sm:$0xf]
        %v6491 = vld [vmem:[%s5 + $0x8] sm:$0xf]
        %v6492 = vld [vmem:[%s5 + $0xc] sm:$0xf]
        %v6493 = vld [vmem:[%s5 + $0x10] sm:$0xf]
        %v6494 = vld [vmem:[%s5 + $0x14] sm:$0xf]
        %v6495 = vld [vmem:[%s5 + $0x18] sm:$0xf]
        %v6496 = vld [vmem:[%s5 + $0x1c] sm:$0xf]
        %v6497 = vld [vmem:[%s6] sm:$0x1]
        %v6499 = vlaneseq
        %v6500 = vshrl.u32 %v6499, 7
        %v6501 = vsub.s32 0, %v6500
        %v6502 = vrot.slane %v6497, %v6501
        %v6512 = vunpack.c.l.b16 %v6489
        %v6513 = vunpack.c.l.b16 %v6490
        %v6514 = vunpack.c.l.b16 %v6491
        %v6515 = vunpack.c.l.b16 %v6492
        %v6516 = vunpack.c.l.b16 %v6493
        %v6517 = vunpack.c.l.b16 %v6494
        %v6518 = vunpack.c.l.b16 %v6495
        %v6519 = vunpack.c.l.b16 %v6496
        %v6520 = vpack.c.b16 %v6513, %v6512
        %v6521 = vpack.c.b16 %v6515, %v6514
        %v6522 = vpack.c.b16 %v6517, %v6516
        %v6523 = vpack.c.b16 %v6519, %v6518
        %v6529 = vsel %vm814, %v6481, 0
        %v6532 = vsel %vm814, %v6482, 0
        %v6535 = vsel %vm814, %v6483, 0
        %v6538 = vsel %vm814, %v6484, 0
        %v6541 = vsel %vm814, %v6485, 0
        %v6544 = vsel %vm814, %v6486, 0
        %v6547 = vsel %vm814, %v6487, 0
        %v6550 = vsel %vm814, %v6488, 0
        %6552 = vmatprep.subr.bf16.mxu0 0
        %6553 = vmatpush1.bf16.msra.mxu0 %v6520
        %6554 = vmatprep.subr.bf16.mxu0 0
        %6555 = vmatpush1.bf16.msra.mxu0 %v6521
        %6556 = vmatprep.subr.bf16.mxu0 0
        %6557 = vmatpush1.bf16.msra.mxu0 %v6522
        %6558 = vmatprep.subr.bf16.mxu0 0
        %6559 = vmatpush1.bf16.msra.mxu0 %v6523
        %6560 = vmatprep.subr.bf16.mxu0 0
        %6561 = vmatpush1.bf16.msra.mxu0 0
        %6562 = vmatprep.subr.bf16.mxu0 0
        %6563 = vmatpush1.bf16.msra.mxu0 0
        %6564 = vmatprep.subr.bf16.mxu0 0
        %6565 = vmatpush1.bf16.msra.mxu0 0
        %6566 = vmatprep.subr.bf16.mxu0 0
        %6567 = vmatpush1.bf16.msra.mxu0 0
        %6568 = vmatprep.subr.bf16.mxu0 0
        %6569 = vmatpush1.bf16.msra.mxu0 0
        %6570 = vmatprep.subr.bf16.mxu0 0
        %6571 = vmatpush1.bf16.msra.mxu0 0
        %6572 = vmatprep.subr.bf16.mxu0 0
        %6573 = vmatpush1.bf16.msra.mxu0 0
        %6574 = vmatprep.subr.bf16.mxu0 0
        %6575 = vmatpush1.bf16.msra.mxu0 0
        %6576 = vmatprep.subr.bf16.mxu0 0
        %6577 = vmatpush1.bf16.msra.mxu0 0
        %6578 = vmatprep.subr.bf16.mxu0 0
        %6579 = vmatpush1.bf16.msra.mxu0 0
        %6580 = vmatprep.subr.bf16.mxu0 0
        %6581 = vmatpush1.bf16.msra.mxu0 0
        %6582 = vmatprep.subr.bf16.mxu0 0
        %6583 = vmatpush1.bf16.msra.mxu0 0
        %6584 = vmatprep.mubr.bf16.mxu0 0
        %6585 = vmatmul.mubr.bf16.gmra.mrb[0].mxu0 %v6529
        %v6586 = vpop.f32.mrb[0].mxu0
        %v6587 = vadd.f32 %v6502, %v6586
        %v6588 = vpop.f32.mrb[0].mxu0
        %v6589 = vpop.f32.mrb[0].mxu0
        %v6590 = vadd.f32 %v6502, %v6589
        %v6591 = vpop.f32.mrb[0].mxu0
        %6592 = vmatprep.mubr.bf16.mxu0 0
        %6593 = vmatmul.mubr.bf16.gmra.mrb[0].mxu0 %v6532
        %v6594 = vpop.f32.mrb[0].mxu0
        %v6595 = vadd.f32 %v6502, %v6594
        %v6596 = vpop.f32.mrb[0].mxu0
        %v6597 = vpop.f32.mrb[0].mxu0
        %v6598 = vadd.f32 %v6502, %v6597
        %v6599 = vpop.f32.mrb[0].mxu0
        %6600 = vmatprep.mubr.bf16.mxu0 0
        %6601 = vmatmul.mubr.bf16.gmra.mrb[0].mxu0 %v6535
        %v6602 = vpop.f32.mrb[0].mxu0
        %v6603 = vadd.f32 %v6502, %v6602
        %v6604 = vpop.f32.mrb[0].mxu0
        %v6605 = vpop.f32.mrb[0].mxu0
        %v6606 = vadd.f32 %v6502, %v6605
        %v6607 = vpop.f32.mrb[0].mxu0
        %6608 = vmatprep.mubr.bf16.mxu0 0
        %6609 = vmatmul.mubr.bf16.gmra.mrb[0].mxu0 %v6538
        %v6610 = vpop.f32.mrb[0].mxu0
        %v6611 = vadd.f32 %v6502, %v6610
        %v6612 = vpop.f32.mrb[0].mxu0
        %v6613 = vpop.f32.mrb[0].mxu0
        %v6614 = vadd.f32 %v6502, %v6613
        %v6615 = vpop.f32.mrb[0].mxu0
        %6616 = vmatprep.mubr.bf16.mxu0 0
        %6617 = vmatmul.mubr.bf16.gmra.mrb[0].mxu0 %v6541
        %v6618 = vpop.f32.mrb[0].mxu0
        %v6619 = vadd.f32 %v6502, %v6618
        %v6620 = vpop.f32.mrb[0].mxu0
        %v6621 = vpop.f32.mrb[0].mxu0
        %v6622 = vadd.f32 %v6502, %v6621
        %v6623 = vpop.f32.mrb[0].mxu0
        %6624 = vmatprep.mubr.bf16.mxu0 0
        %6625 = vmatmul.mubr.bf16.gmra.mrb[0].mxu0 %v6544
        %v6626 = vpop.f32.mrb[0].mxu0
        %v6627 = vadd.f32 %v6502, %v6626
        %v6628 = vpop.f32.mrb[0].mxu0
        %v6629 = vpop.f32.mrb[0].mxu0
        %v6630 = vadd.f32 %v6502, %v6629
        %v6631 = vpop.f32.mrb[0].mxu0
        %6632 = vmatprep.mubr.bf16.mxu0 0
        %6633 = vmatmul.mubr.bf16.gmra.mrb[0].mxu0 %v6547
        %v6634 = vpop.f32.mrb[0].mxu0
        %v6635 = vadd.f32 %v6502, %v6634
        %v6636 = vpop.f32.mrb[0].mxu0
        %v6637 = vpop.f32.mrb[0].mxu0
        %v6638 = vadd.f32 %v6502, %v6637
        %v6639 = vpop.f32.mrb[0].mxu0
        %6640 = vmatprep.mubr.bf16.mxu0 0
        %6641 = vmatmul.mubr.bf16.gmra.mrb[0].mxu0 %v6550
        %v6642 = vpop.f32.mrb[0].mxu0
        %v6643 = vadd.f32 %v6502, %v6642
        %v6644 = vpop.f32.mrb[0].mxu0
        %v6645 = vpop.f32.mrb[0].mxu0
        %v6646 = vadd.f32 %v6502, %v6645
        %v6647 = vpop.f32.mrb[0].mxu0
        %6648 = vdwg.mxu0
        %v6649 = vmax.f32 %v6587, 0.0
        %v6650 = vmax.f32 %v6590, 0.0
        %v6651 = vmax.f32 %v6595, 0.0
        %v6652 = vmax.f32 %v6598, 0.0
        %v6653 = vmax.f32 %v6603, 0.0
        %v6654 = vmax.f32 %v6606, 0.0
        %v6655 = vmax.f32 %v6611, 0.0
        %v6656 = vmax.f32 %v6614, 0.0
        %v6657 = vmax.f32 %v6619, 0.0
        %v6658 = vmax.f32 %v6622, 0.0
        %v6659 = vmax.f32 %v6627, 0.0
        %v6660 = vmax.f32 %v6630, 0.0
        %v6661 = vmax.f32 %v6635, 0.0
        %v6662 = vmax.f32 %v6638, 0.0
        %v6663 = vmax.f32 %v6643, 0.0
        %v6664 = vmax.f32 %v6646, 0.0
        %v6665 = vpack.c.bf16 %v6650, %v6649
        %v6666 = vpack.c.bf16 %v6652, %v6651
        %v6667 = vpack.c.bf16 %v6654, %v6653
        %v6668 = vpack.c.bf16 %v6656, %v6655
        %v6669 = vpack.c.bf16 %v6658, %v6657
        %v6670 = vpack.c.bf16 %v6660, %v6659
        %v6671 = vpack.c.bf16 %v6662, %v6661
        %v6672 = vpack.c.bf16 %v6664, %v6663
        %v6673 = vld [vmem:[%s7] sm:$0xf]
        %v6674 = vld [vmem:[%s7 + $0x4] sm:$0xf]
        %v6675 = vld [vmem:[%s7 + $0x8] sm:$0xf]
        %v6676 = vld [vmem:[%s7 + $0xc] sm:$0xf]
        %v6677 = vld [vmem:[%s8] sm:$0x1]
        %v6679 = vlaneseq
        %v6680 = vshrl.u32 %v6679, 7
        %v6681 = vsub.s32 0, %v6680
        %v6682 = vrot.slane %v6677, %v6681
        %v6688 = vunpack.c.l.b16 %v6673
        %v6689 = vunpack.c.l.b16 %v6674
        %v6690 = vunpack.c.l.b16 %v6675
        %v6691 = vunpack.c.l.b16 %v6676
        %v6692 = vpack.c.b16 %v6689, %v6688
        %v6693 = vpack.c.b16 %v6691, %v6690
        %v6697 = vsel %vm437, %v6665, 0
        %v6700 = vsel %vm437, %v6666, 0
        %v6703 = vsel %vm437, %v6667, 0
        %v6706 = vsel %vm437, %v6668, 0
        %v6709 = vsel %vm437, %v6669, 0
        %v6712 = vsel %vm437, %v6670, 0
        %v6715 = vsel %vm437, %v6671, 0
        %v6718 = vsel %vm437, %v6672, 0
        %6720 = vmatprep.subr.bf16.mxu0 0
        %6721 = vmatpush1.bf16.msra.mxu0 %v6692
        %6722 = vmatprep.subr.bf16.mxu0 0
        %6723 = vmatpush1.bf16.msra.mxu0 %v6693
        %6724 = vmatprep.subr.bf16.mxu0 0
        %6725 = vmatpush1.bf16.msra.mxu0 0
        %6726 = vmatprep.subr.bf16.mxu0 0
        %6727 = vmatpush1.bf16.msra.mxu0 0
        %6728 = vmatprep.subr.bf16.mxu0 0
        %6729 = vmatpush1.bf16.msra.mxu0 0
        %6730 = vmatprep.subr.bf16.mxu0 0
        %6731 = vmatpush1.bf16.msra.mxu0 0
        %6732 = vmatprep.subr.bf16.mxu0 0
        %6733 = vmatpush1.bf16.msra.mxu0 0
        %6734 = vmatprep.subr.bf16.mxu0 0
        %6735 = vmatpush1.bf16.msra.mxu0 0
        %6736 = vmatprep.subr.bf16.mxu0 0
        %6737 = vmatpush1.bf16.msra.mxu0 0
        %6738 = vmatprep.subr.bf16.mxu0 0
        %6739 = vmatpush1.bf16.msra.mxu0 0
        %6740 = vmatprep.subr.bf16.mxu0 0
        %6741 = vmatpush1.bf16.msra.mxu0 0
        %6742 = vmatprep.subr.bf16.mxu0 0
        %6743 = vmatpush1.bf16.msra.mxu0 0
        %6744 = vmatprep.subr.bf16.mxu0 0
        %6745 = vmatpush1.bf16.msra.mxu0 0
        %6746 = vmatprep.subr.bf16.mxu0 0
        %6747 = vmatpush1.bf16.msra.mxu0 0
        %6748 = vmatprep.subr.bf16.mxu0 0
        %6749 = vmatpush1.bf16.msra.mxu0 0
        %6750 = vmatprep.subr.bf16.mxu0 0
        %6751 = vmatpush1.bf16.msra.mxu0 0
        %6752 = vmatprep.mubr.bf16.mxu0 0
        %6753 = vmatmul.mubr.bf16.gmra.mrb[0].mxu0 %v6697
        %v6754 = vpop.f32.mrb[0].mxu0
        %v6755 = vadd.f32 %v6682, %v6754
        %v6756 = vpop.f32.mrb[0].mxu0
        %v6757 = vpop.f32.mrb[0].mxu0
        %v6758 = vadd.f32 %v6682, %v6757
        %v6759 = vpop.f32.mrb[0].mxu0
        %6760 = vmatprep.mubr.bf16.mxu0 0
        %6761 = vmatmul.mubr.bf16.gmra.mrb[0].mxu0 %v6700
        %v6762 = vpop.f32.mrb[0].mxu0
        %v6763 = vadd.f32 %v6682, %v6762
        %v6764 = vpop.f32.mrb[0].mxu0
        %v6765 = vpop.f32.mrb[0].mxu0
        %v6766 = vadd.f32 %v6682, %v6765
        %v6767 = vpop.f32.mrb[0].mxu0
        %6768 = vmatprep.mubr.bf16.mxu0 0
        %6769 = vmatmul.mubr.bf16.gmra.mrb[0].mxu0 %v6703
        %v6770 = vpop.f32.mrb[0].mxu0
        %v6771 = vadd.f32 %v6682, %v6770
        %v6772 = vpop.f32.mrb[0].mxu0
        %v6773 = vpop.f32.mrb[0].mxu0
        %v6774 = vadd.f32 %v6682, %v6773
        %v6775 = vpop.f32.mrb[0].mxu0
        %6776 = vmatprep.mubr.bf16.mxu0 0
        %6777 = vmatmul.mubr.bf16.gmra.mrb[0].mxu0 %v6706
        %v6778 = vpop.f32.mrb[0].mxu0
        %v6779 = vadd.f32 %v6682, %v6778
        %v6780 = vpop.f32.mrb[0].mxu0
        %v6781 = vpop.f32.mrb[0].mxu0
        %v6782 = vadd.f32 %v6682, %v6781
        %v6783 = vpop.f32.mrb[0].mxu0
        %6784 = vmatprep.mubr.bf16.mxu0 0
        %6785 = vmatmul.mubr.bf16.gmra.mrb[0].mxu0 %v6709
        %v6786 = vpop.f32.mrb[0].mxu0
        %v6787 = vadd.f32 %v6682, %v6786
        %v6788 = vpop.f32.mrb[0].mxu0
        %v6789 = vpop.f32.mrb[0].mxu0
        %v6790 = vadd.f32 %v6682, %v6789
        %v6791 = vpop.f32.mrb[0].mxu0
        %6792 = vmatprep.mubr.bf16.mxu0 0
        %6793 = vmatmul.mubr.bf16.gmra.mrb[0].mxu0 %v6712
        %v6794 = vpop.f32.mrb[0].mxu0
        %v6795 = vadd.f32 %v6682, %v6794
        %v6796 = vpop.f32.mrb[0].mxu0
        %v6797 = vpop.f32.mrb[0].mxu0
        %v6798 = vadd.f32 %v6682, %v6797
        %v6799 = vpop.f32.mrb[0].mxu0
        %6800 = vmatprep.mubr.bf16.mxu0 0
        %6801 = vmatmul.mubr.bf16.gmra.mrb[0].mxu0 %v6715
        %v6802 = vpop.f32.mrb[0].mxu0
        %v6803 = vadd.f32 %v6682, %v6802
        %v6804 = vpop.f32.mrb[0].mxu0
        %v6805 = vpop.f32.mrb[0].mxu0
        %v6806 = vadd.f32 %v6682, %v6805
        %v6807 = vpop.f32.mrb[0].mxu0
        %6808 = vmatprep.mubr.bf16.mxu0 0
        %6809 = vmatmul.mubr.bf16.gmra.mrb[0].mxu0 %v6718
        %v6810 = vpop.f32.mrb[0].mxu0
        %v6811 = vadd.f32 %v6682, %v6810
        %v6812 = vpop.f32.mrb[0].mxu0
        %v6813 = vpop.f32.mrb[0].mxu0
        %v6814 = vadd.f32 %v6682, %v6813
        %v6815 = vpop.f32.mrb[0].mxu0
        %6816 = vdwg.mxu0
        %v6817 = vmax.f32 %v6755, 0.0
        %v6818 = vmax.f32 %v6758, 0.0
        %v6819 = vmax.f32 %v6763, 0.0
        %v6820 = vmax.f32 %v6766, 0.0
        %v6821 = vmax.f32 %v6771, 0.0
        %v6822 = vmax.f32 %v6774, 0.0
        %v6823 = vmax.f32 %v6779, 0.0
        %v6824 = vmax.f32 %v6782, 0.0
        %v6825 = vmax.f32 %v6787, 0.0
        %v6826 = vmax.f32 %v6790, 0.0
        %v6827 = vmax.f32 %v6795, 0.0
        %v6828 = vmax.f32 %v6798, 0.0
        %v6829 = vmax.f32 %v6803, 0.0
        %v6830 = vmax.f32 %v6806, 0.0
        %v6831 = vmax.f32 %v6811, 0.0
        %v6832 = vmax.f32 %v6814, 0.0
        %v6833 = vld [vmem:[%s9] sm:$0x1]
        %v6834 = vpack.c.bf16 %v6818, %v6817
        %v6835 = vpack.c.bf16 %v6820, %v6819
        %v6836 = vpack.c.bf16 %v6822, %v6821
        %v6837 = vpack.c.bf16 %v6824, %v6823
        %v6838 = vpack.c.bf16 %v6826, %v6825
        %v6839 = vpack.c.bf16 %v6828, %v6827
        %v6840 = vpack.c.bf16 %v6830, %v6829
        %v6841 = vpack.c.bf16 %v6832, %v6831
        %v6842 = vld [vmem:[#allocation2] sm:$0x1]
        %6844 = vset.pattern.permute.xlu0 0
        %6845 = vperm.xlu0 %6844, %v6842
        %v6846 = vpop.permute.xlu0 %6845
        %v6848 = vlaneseq
        %v6849 = vshrl.u32 %v6848, 7
        %v6850 = vsub.s32 0, %v6849
        %v6851 = vrot.slane %v6846, %v6850
        %v6853 = vsel %vm1139, %v6833, 0
        %v6856 = vsel %vm1139, %v6834, 0
        %v6859 = vsel %vm1139, %v6835, 0
        %v6862 = vsel %vm1139, %v6836, 0
        %v6865 = vsel %vm1139, %v6837, 0
        %v6868 = vsel %vm1139, %v6838, 0
        %v6871 = vsel %vm1139, %v6839, 0
        %v6874 = vsel %vm1139, %v6840, 0
        %v6877 = vsel %vm1139, %v6841, 0
        %6879 = vmatprep.subr.bf16.mxu0 0
        %6880 = vmatpush1.bf16.xpose.msra.mxu0 %v6856
        %6881 = vmatprep.subr.bf16.mxu0 0
        %6882 = vmatpush1.bf16.xpose.msra.mxu0 %v6859
        %6883 = vmatprep.subr.bf16.mxu0 0
        %6884 = vmatpush1.bf16.xpose.msra.mxu0 %v6862
        %6885 = vmatprep.subr.bf16.mxu0 0
        %6886 = vmatpush1.bf16.xpose.msra.mxu0 %v6865
        %6887 = vmatprep.subr.bf16.mxu0 0
        %6888 = vmatpush1.bf16.xpose.msra.mxu0 %v6868
        %6889 = vmatprep.subr.bf16.mxu0 0
        %6890 = vmatpush1.bf16.xpose.msra.mxu0 %v6871
        %6891 = vmatprep.subr.bf16.mxu0 0
        %6892 = vmatpush1.bf16.xpose.msra.mxu0 %v6874
        %6893 = vmatprep.subr.bf16.mxu0 0
        %6894 = vmatpush1.bf16.xpose.msra.mxu0 %v6877
        %6895 = vmatprep.subr.bf16.mxu0 0
        %6896 = vmatpush1.bf16.xpose.msra.mxu0 0
        %6897 = vmatprep.subr.bf16.mxu0 0
        %6898 = vmatpush1.bf16.xpose.msra.mxu0 0
        %6899 = vmatprep.subr.bf16.mxu0 0
        %6900 = vmatpush1.bf16.xpose.msra.mxu0 0
        %6901 = vmatprep.subr.bf16.mxu0 0
        %6902 = vmatpush1.bf16.xpose.msra.mxu0 0
        %6903 = vmatprep.subr.bf16.mxu0 0
        %6904 = vmatpush1.bf16.xpose.msra.mxu0 0
        %6905 = vmatprep.subr.bf16.mxu0 0
        %6906 = vmatpush1.bf16.xpose.msra.mxu0 0
        %6907 = vmatprep.subr.bf16.mxu0 0
        %6908 = vmatpush1.bf16.xpose.msra.mxu0 0
        %6909 = vmatprep.subr.bf16.mxu0 0
        %6910 = vmatpush1.bf16.xpose.msra.mxu0 0
        %6911 = vmatprep.mubr.bf16.mxu0 0
        %6912 = vmatmul.mubr.bf16.gmra.mrb[0].mxu0 %v6853
        %v6913 = vpop.f32.mrb[0].mxu0
        %v6914 = vadd.f32 %v6851, %v6913
        %v6915 = vpop.f32.mrb[0].mxu0
        %v6916 = vpop.f32.mrb[0].mxu0
        %v6917 = vpop.f32.mrb[0].mxu0
        %6918 = vdwg.mxu0
        %6919 = vst [vmem:[%s382 + $0x7] sm:$0x1] %v6914
        %s6920 = sand.u32 %s271, 1
        %s6921 = scalar_lea.sflag [#allocation4], %s6920
        %s6922 = sand.u32 %s271, 1
        %s6923 = smul.addr %s6922, 8
        %s6924 = scalar_lea.vmem [#allocation3], %s6923
        // Predicated region
        $region65: #{tpu_custom_call.1} parent=63 // pred_check
          %p6925 = pneg %p281
        $region66: #{tpu_custom_call.1} parent=63 // pred_check_branch
          %6927 = sbr.rel (%p6925) target = $region68
        $region67: #{tpu_custom_call.1} parent=63 // pred_region
          %s6929 = ssub.s32 128, 128
          %6930 = vsyncadd %s6921, %s6929
          %s6931 = smul.addr %s27, 128
          %s6932 = scalar_lea.hbm %s11, %s6931
          %s6934 = sshll.u32 %s6924, 4
          %s6935 = int_to_ptr.vmem [resolvable:$true] %s6934
          %6937 = dma.vmem_to_hbm [thread:$0]  %s6935, 128, %s6932, %s6921
        $region68: #{tpu_custom_call.1} parent=63 // pred_fallthru
          _
      $region64: #{tpu_custom_call.1} parent=5 // pred_fallthru
        _
      %p6938 = scmp.le.s32.totalorder 2, %s22
      // Predicated region
      $region69: #{tpu_custom_call.1} parent=5 // pred_check
        %p6939 = pneg %p6938
      $region70: #{tpu_custom_call.1} parent=5 // pred_check_branch
        %6941 = sbr.rel (%p6939) target = $region72
      $region71: #{tpu_custom_call.1} parent=5 // pred_region
        %s6942 = ssub.s32 %s22, 2
        // Predicated region
        $region73: #{tpu_custom_call.1} parent=71 // pred_check
          %p6943 = pneg %p287
        $region74: #{tpu_custom_call.1} parent=71 // pred_check_branch
          %6945 = sbr.rel (%p6943) target = $region76
        $region75: #{tpu_custom_call.1} parent=71 // pred_region
          %s6946 = sand.u32 %s272, 1
          %s6947 = scalar_lea.sflag [#allocation4], %s6946
          %s6948 = sand.u32 %s272, 1
          %s6949 = smul.addr %s6948, 8
          %s6950 = scalar_lea.vmem [#allocation3], %s6949
          %6951 = dma.done %s6947, 128
        $region76: #{tpu_custom_call.1} parent=71 // pred_fallthru
          _
      $region72: #{tpu_custom_call.1} parent=5 // pred_fallthru
        _
    $region6: #{tpu_custom_call.1} parent=1 // loop_footer
      %s26 = sadd.s32 1, %s22
    $region7: #{tpu_custom_call.1} parent=1 // loop_footer_branch
      %21 = sbr.rel target = $region3
    $region8: #{tpu_custom_call.1} parent=1 // loop_exit
      _
    %6952 = vsyncpa [#allocation4], 1
    %s6953 = scalar_lea.sflag [#allocation4], 1
    %6954 = vsyncpa %s6953, 1

</llo_original>
